<compile_context>
chip_gen: v5e
topology: v5e:2x2
jax: 0.10.0
libtpu: 0.0.40
codegen_flags: <defaults>
</compile_context>

<pallas_src>
import functools

import jax
import jax.numpy as jnp
from jax.experimental import pallas as pl
from jax.experimental.pallas import tpu as pltpu


# ----------------------------- configuration -------------------------------


class Config:
    vocab_size = 100
    hidden = 32
    heads = 2
    head_dim = 16          # hidden // heads
    intermediate = 64
    layers = 2
    max_pos = 16
    type_vocab = 2
    ln_eps = 1e-12


HEAD_OUT = 128             # lane-dense head output width ([hidden | conf | pad])


# ----------------------------- Pallas kernel -------------------------------


def _layernorm(x, g, b, eps):
    mean = jnp.mean(x, axis=-1, keepdims=True)
    var = jnp.mean(jnp.square(x - mean), axis=-1, keepdims=True)
    return (x - mean) * jax.lax.rsqrt(var + eps) * g + b


def _zora_fused_kernel(emb_ref, mask_ref,
                       emb_ln_g_ref, emb_ln_b_ref,
                       wqkv_ref, bqkv_ref, wo_ref, bo_ref,
                       ln1_g_ref, ln1_b_ref,
                       w1_ref, b1_ref, w2_ref, b2_ref,
                       ln2_g_ref, ln2_b_ref,
                       head_w_ref, head_b_ref,
                       out_ref,
                       xs_ref,
                       *, cfg, block_b, seq):
    """Encoder + ZoraModel head for ONE block of `block_b` examples, in VMEM."""
    H, Hh, D, L = cfg.hidden, cfg.heads, cfg.head_dim, cfg.layers
    S = seq
    M = block_b * S
    eps = cfg.ln_eps
    scale = 1.0 / (D ** 0.5)
    bf16 = jnp.bfloat16

    # (block_b, S, H) -> (M, H): leading-dim merge only (no lane relayout).
    x = emb_ref[...].reshape(M, H).astype(jnp.float32)
    # additive mask (0 / -1e9), broadcast once over heads & query rows
    mask3 = mask_ref[...].reshape(block_b, 1, S)

    x = _layernorm(x, emb_ln_g_ref[...], emb_ln_b_ref[...], eps)

    for l in range(L):
        # ---- fused QKV projection: one M=block_b*S MXU matmul (bf16 in, f32 acc)
        qkv = (jnp.dot(x.astype(bf16), wqkv_ref[l],
                       preferred_element_type=jnp.float32)
               + bqkv_ref[l])                                    # (M, 3H) f32

        # ---- attention: batched over all examples per head; each head's
        #      context is accumulated straight into the output projection
        #      (no concat, residual + bias folded into the accumulator).
        attn = x + bo_ref[l]                                     # (M, H)
        for h in range(Hh):
            qh = qkv[:, h * D:(h + 1) * D].reshape(block_b, S, D)
            kh = qkv[:, H + h * D:H + (h + 1) * D].reshape(block_b, S, D)
            vh = qkv[:, 2 * H + h * D:2 * H + (h + 1) * D].reshape(block_b, S, D)
            s = jnp.einsum("bqd,bkd->bqk", qh, kh,
                           preferred_element_type=jnp.float32) * scale
            s = s + mask3
            s = s - jnp.max(s, axis=-1, keepdims=True)
            p = jnp.exp(s)
            p = p * pl.reciprocal(jnp.sum(p, axis=-1, keepdims=True),
                                  approx=True)
            ctx_h = jnp.einsum("bqk,bkd->bqd", p, vh,
                               preferred_element_type=jnp.float32)
            attn = attn + jnp.dot(ctx_h.reshape(M, D).astype(bf16),
                                  wo_ref[l, h * D:(h + 1) * D, :],
                                  preferred_element_type=jnp.float32)
        x = _layernorm(attn, ln1_g_ref[l], ln1_b_ref[l], eps)

        # ---- FFN: matmul + bias + GELU, matmul + bias + residual, LN ----
        h1 = jax.nn.gelu(
            jnp.dot(x.astype(bf16), w1_ref[l],
                    preferred_element_type=jnp.float32) + b1_ref[l],
            approximate=True)
        ffn = (jnp.dot(h1.astype(bf16), w2_ref[l],
                       preferred_element_type=jnp.float32)
               + b2_ref[l] + x)
        x = _layernorm(ffn, ln2_g_ref[l], ln2_b_ref[l], eps)

    # ---- ZoraModel head, fused to ONE matmul producing [hidden | conf | 0] --
    # gather the per-example CLS rows (row 0 of each example) via VMEM scratch
    xs_ref[...] = x.reshape(block_b, S, H)
    cls = xs_ref[:, 0, :]                                        # (block_b, H)
    head = (jnp.dot(cls.astype(bf16), head_w_ref[...],
                    preferred_element_type=jnp.float32)
            + head_b_ref[...])                                   # (block_b, 128)
    # apply sigmoid only to the confidence column (col H); rest stays raw
    lane = jax.lax.broadcasted_iota(jnp.int32, head.shape, 1)
    head = jnp.where(lane == H, jax.nn.sigmoid(head), head)
    out_ref[...] = head.astype(out_ref.dtype)                    # lane-dense store


# ----------------------------- model wrapper --------------------------------


def init_params(key, cfg):
    std = 0.02
    H, I, L = cfg.hidden, cfg.intermediate, cfg.layers
    bf16 = jnp.bfloat16

    def nrm(k, shape, dtype=jnp.float32):
        return (std * jax.random.normal(k, shape, dtype=jnp.float32)).astype(dtype)

    keys = iter(jax.random.split(key, 16))          # 9 needed; generous margin
    return {
        "word_emb": nrm(next(keys), (cfg.vocab_size, H)),
        "pos_emb": nrm(next(keys), (cfg.max_pos, H)),
        "type_emb": nrm(next(keys), (cfg.type_vocab, H)),
        "emb_ln_g": jnp.ones((1, H), jnp.float32),
        "emb_ln_b": jnp.zeros((1, H), jnp.float32),
        # per-layer weights stacked along a leading L axis; wq|wk|wv fused.
        # Matmul weights in bf16 (MXU-native); biases / LN params in f32.
        "wqkv": nrm(next(keys), (L, H, 3 * H), bf16),
        "bqkv": jnp.zeros((L, 1, 3 * H), jnp.float32),
        "wo": nrm(next(keys), (L, H, H), bf16),
        "bo": jnp.zeros((L, 1, H), jnp.float32),
        "ln1_g": jnp.ones((L, 1, H), jnp.float32),
        "ln1_b": jnp.zeros((L, 1, H), jnp.float32),
        "w1": nrm(next(keys), (L, H, I), bf16),
        "b1": jnp.zeros((L, 1, I), jnp.float32),
        "w2": nrm(next(keys), (L, I, H), bf16),
        "b2": jnp.zeros((L, 1, H), jnp.float32),
        "ln2_g": jnp.ones((L, 1, H), jnp.float32),
        "ln2_b": jnp.zeros((L, 1, H), jnp.float32),
        # ZoraModel head
        "fc_w": nrm(next(keys), (H, H), bf16),
        "fc_b": jnp.zeros((1, H), jnp.float32),
        "cls_w": nrm(next(keys), (H, 1), bf16),
        "cls_b": jnp.zeros((1, 1), jnp.float32),
    }


def zora_forward(params, input_ids, attention_mask, cfg, block_b=16):
    """block_b examples per grid step (M = block_b*S rows per matmul).
    block_b=16 -> M=128 (v5e-optimal); use block_b=32 -> M=256 on v6e/v7x."""
    B, S = input_ids.shape
    H = cfg.hidden
    assert H + 1 <= HEAD_OUT

    # ---- plain-JAX glue: embedding gathers + additive mask (no Pallas gather)
    word = jnp.take(params["word_emb"], input_ids, axis=0)          # (B, S, H)
    pos = params["pos_emb"][:S][None, :, :]                         # (1, S, H)
    typ = params["type_emb"][0][None, None, :]                      # (1, 1, H)
    emb = (word + pos + typ).astype(jnp.float32)                    # (B, S, H)
    add_mask = (1.0 - attention_mask.astype(jnp.float32)) * -1e9    # (B, S)

    # pad batch up to a multiple of block_b (padded rows are zeros, discarded)
    B_pad = ((B + block_b - 1) // block_b) * block_b
    if B_pad != B:
        emb = jnp.pad(emb, ((0, B_pad - B), (0, 0), (0, 0)))
        add_mask = jnp.pad(add_mask, ((0, B_pad - B), (0, 0)))
    grid = (B_pad // block_b,)

    # ---- fold the two head matmuls into one lane-dense (H, 128) weight ----
    f32 = jnp.float32
    fc_w = params["fc_w"].astype(f32)
    cls_w = params["cls_w"].astype(f32)
    fc_b, cls_b = params["fc_b"], params["cls_b"]
    head_w = jnp.concatenate([fc_w, fc_w @ cls_w], axis=1)          # (H, H+1)
    head_b = jnp.concatenate([fc_b, fc_b @ cls_w + cls_b], axis=1)  # (1, H+1)
    head_w = jnp.pad(head_w, ((0, 0), (0, HEAD_OUT - (H + 1)))).astype(jnp.bfloat16)
    head_b = jnp.pad(head_b, ((0, 0), (0, HEAD_OUT - (H + 1))))     # f32

    weights = (params["emb_ln_g"], params["emb_ln_b"],
               params["wqkv"], params["bqkv"], params["wo"], params["bo"],
               params["ln1_g"], params["ln1_b"],
               params["w1"], params["b1"], params["w2"], params["b2"],
               params["ln2_g"], params["ln2_b"],
               head_w, head_b)

    def full_spec(a):
        nd = a.ndim
        return pl.BlockSpec(a.shape, lambda i, _nd=nd: (0,) * _nd)

    out = pl.pallas_call(
        functools.partial(_zora_fused_kernel, cfg=cfg,
                          block_b=block_b, seq=S),
        out_shape=jax.ShapeDtypeStruct((B_pad, HEAD_OUT), jnp.float32),
        grid=grid,
        in_specs=[
            pl.BlockSpec((block_b, S, H), lambda i: (i, 0, 0)),   # emb block
            pl.BlockSpec((block_b, S), lambda i: (i, 0)),         # mask block
        ] + [full_spec(w) for w in weights],                      # resident weights
        out_specs=pl.BlockSpec((block_b, HEAD_OUT), lambda i: (i, 0)),
        scratch_shapes=[pltpu.VMEM((block_b, S, H), jnp.float32)],
        compiler_params=pltpu.CompilerParams(
            dimension_semantics=("parallel",)),
    )(emb, add_mask, *weights)

    hidden = out[:B, :H]                    # (B, H)
    conf = out[:B, H:H + 1]                 # (B, 1), already sigmoid'ed
    return hidden, conf


# --------------------------- pure-JAX reference -----------------------------


def zora_reference(params, input_ids, attention_mask, cfg):
    B, S = input_ids.shape
    H, Hh, D = cfg.hidden, cfg.heads, cfg.head_dim
    f32 = jnp.float32

    def ln(x, g, b):
        mean = jnp.mean(x, -1, keepdims=True)
        var = jnp.mean(jnp.square(x - mean), -1, keepdims=True)
        return (x - mean) * jax.lax.rsqrt(var + cfg.ln_eps) * g + b

    word = jnp.take(params["word_emb"], input_ids, axis=0)
    pos = params["pos_emb"][:S][None]
    typ = params["type_emb"][0][None, None]
    x = ln(word + pos + typ, params["emb_ln_g"], params["emb_ln_b"])
    add_mask = ((1.0 - attention_mask.astype(f32)) * -1e9)[:, None, None, :]
    scale = 1.0 / (D ** 0.5)

    for l in range(cfg.layers):
        qkv = x @ params["wqkv"][l].astype(f32) + params["bqkv"][l]
        q, k, v = jnp.split(qkv, 3, axis=-1)
        q = q.reshape(B, S, Hh, D).transpose(0, 2, 1, 3)
        k = k.reshape(B, S, Hh, D).transpose(0, 2, 1, 3)
        v = v.reshape(B, S, Hh, D).transpose(0, 2, 1, 3)
        s = jnp.einsum("bhqd,bhkd->bhqk", q, k) * scale + add_mask
        p = jax.nn.softmax(s, axis=-1)
        ctx = jnp.einsum("bhqk,bhkd->bhqd", p, v)
        ctx = ctx.transpose(0, 2, 1, 3).reshape(B, S, H)
        x = ln(ctx @ params["wo"][l].astype(f32) + params["bo"][l] + x,
               params["ln1_g"][l], params["ln1_b"][l])
        h1 = jax.nn.gelu(x @ params["w1"][l].astype(f32) + params["b1"][l],
                         approximate=True)
        x = ln(h1 @ params["w2"][l].astype(f32) + params["b2"][l] + x,
               params["ln2_g"][l], params["ln2_b"][l])

    cls = x[:, 0, :]
    hidden = cls @ params["fc_w"].astype(f32) + params["fc_b"]
    conf = jax.nn.sigmoid(hidden @ params["cls_w"].astype(f32) + params["cls_b"])
    return hidden, conf


# --------------------------------- driver ----------------------------------


if __name__ == "__main__":
    cfg = Config()
    B, S = 2, 8

    key = jax.random.PRNGKey(0)
    k_param, k_ids = jax.random.split(key)

    params = init_params(k_param, cfg)
    input_ids = jax.random.randint(k_ids, (B, S), 0, cfg.vocab_size,
                                   dtype=jnp.int32)
    # mask out the last 2 tokens of the second example
    attention_mask = jnp.array(
        [[1] * S, [1] * (S - 2) + [0] * 2], dtype=jnp.int32)

    hidden_state, confidence = zora_forward(params, input_ids,
                                            attention_mask, cfg, block_b=16)
    jax.block_until_ready((hidden_state, confidence))

    ref_hidden, ref_conf = zora_reference(params, input_ids,
                                          attention_mask, cfg)

    assert hidden_state.shape == (B, cfg.hidden)
    assert confidence.shape == (B, 1)
    assert bool(jnp.all(jnp.isfinite(hidden_state)))
    assert bool(jnp.all((confidence >= 0.0) & (confidence <= 1.0)))
    # tolerance covers bf16 MXU operands + EUP approximate reciprocal in softmax
    assert bool(jnp.allclose(hidden_state, ref_hidden, rtol=2e-2, atol=2e-2))
    assert bool(jnp.allclose(confidence, ref_conf, rtol=2e-2, atol=2e-2))
    print("KERNEL_OK")
</pallas_src>

<mosaic_0001>
module attributes {stable_mosaic.version = 11 : i64} {
  func.func @_zora_fused_kernel(%arg0: i32, %arg1: memref<16x8x32xf32, #tpu.memory_space<vmem>>, %arg2: memref<16x8xf32, #tpu.memory_space<vmem>>, %arg3: memref<1x32xf32, #tpu.memory_space<vmem>>, %arg4: memref<1x32xf32, #tpu.memory_space<vmem>>, %arg5: memref<2x32x96xbf16, #tpu.memory_space<vmem>>, %arg6: memref<2x1x96xf32, #tpu.memory_space<vmem>>, %arg7: memref<2x32x32xbf16, #tpu.memory_space<vmem>>, %arg8: memref<2x1x32xf32, #tpu.memory_space<vmem>>, %arg9: memref<2x1x32xf32, #tpu.memory_space<vmem>>, %arg10: memref<2x1x32xf32, #tpu.memory_space<vmem>>, %arg11: memref<2x32x64xbf16, #tpu.memory_space<vmem>>, %arg12: memref<2x1x64xf32, #tpu.memory_space<vmem>>, %arg13: memref<2x64x32xbf16, #tpu.memory_space<vmem>>, %arg14: memref<2x1x32xf32, #tpu.memory_space<vmem>>, %arg15: memref<2x1x32xf32, #tpu.memory_space<vmem>>, %arg16: memref<2x1x32xf32, #tpu.memory_space<vmem>>, %arg17: memref<32x128xbf16, #tpu.memory_space<vmem>>, %arg18: memref<1x128xf32, #tpu.memory_space<vmem>>, %arg19: memref<16x128xf32, #tpu.memory_space<vmem>>, %arg20: memref<16x8x32xf32, #tpu.memory_space<vmem>>) attributes {dimension_semantics = [#tpu.dimension_semantics<parallel>], iteration_bounds = array<i64: 1>, scalar_prefetch = 0 : i64, scratch_operands = 1 : i64, tpu.core_type = #tpu.core_type<tc>, window_params = [{transform_indices = @transform_0, window_bounds = array<i64: 16, 8, 32>}, {transform_indices = @transform_1, window_bounds = array<i64: 16, 8>}, {pipeline_mode = #tpu.pipeline_mode<synchronous>, transform_indices = @transform_2, window_bounds = array<i64: 1, 32>}, {pipeline_mode = #tpu.pipeline_mode<synchronous>, transform_indices = @transform_3, window_bounds = array<i64: 1, 32>}, {pipeline_mode = #tpu.pipeline_mode<synchronous>, transform_indices = @transform_4, window_bounds = array<i64: 2, 32, 96>}, {pipeline_mode = #tpu.pipeline_mode<synchronous>, transform_indices = @transform_5, window_bounds = array<i64: 2, 1, 96>}, {pipeline_mode = #tpu.pipeline_mode<synchronous>, transform_indices = @transform_6, window_bounds = array<i64: 2, 32, 32>}, {pipeline_mode = #tpu.pipeline_mode<synchronous>, transform_indices = @transform_7, window_bounds = array<i64: 2, 1, 32>}, {pipeline_mode = #tpu.pipeline_mode<synchronous>, transform_indices = @transform_8, window_bounds = array<i64: 2, 1, 32>}, {pipeline_mode = #tpu.pipeline_mode<synchronous>, transform_indices = @transform_9, window_bounds = array<i64: 2, 1, 32>}, {pipeline_mode = #tpu.pipeline_mode<synchronous>, transform_indices = @transform_10, window_bounds = array<i64: 2, 32, 64>}, {pipeline_mode = #tpu.pipeline_mode<synchronous>, transform_indices = @transform_11, window_bounds = array<i64: 2, 1, 64>}, {pipeline_mode = #tpu.pipeline_mode<synchronous>, transform_indices = @transform_12, window_bounds = array<i64: 2, 64, 32>}, {pipeline_mode = #tpu.pipeline_mode<synchronous>, transform_indices = @transform_13, window_bounds = array<i64: 2, 1, 32>}, {pipeline_mode = #tpu.pipeline_mode<synchronous>, transform_indices = @transform_14, window_bounds = array<i64: 2, 1, 32>}, {pipeline_mode = #tpu.pipeline_mode<synchronous>, transform_indices = @transform_15, window_bounds = array<i64: 2, 1, 32>}, {pipeline_mode = #tpu.pipeline_mode<synchronous>, transform_indices = @transform_16, window_bounds = array<i64: 32, 128>}, {pipeline_mode = #tpu.pipeline_mode<synchronous>, transform_indices = @transform_17, window_bounds = array<i64: 1, 128>}, {transform_indices = @transform_18, window_bounds = array<i64: 16, 128>}]} {
    %c0 = arith.constant 0 : index
    %c0_0 = arith.constant 0 : index
    %c0_1 = arith.constant 0 : index
    %0 = vector.load %arg1[%c0, %c0_0, %c0_1] : memref<16x8x32xf32, #tpu.memory_space<vmem>>, vector<16x8x32xf32>
    %1 = vector.shape_cast %0 : vector<16x8x32xf32> to vector<128x32xf32>
    %c0_2 = arith.constant 0 : index
    %c0_3 = arith.constant 0 : index
    %2 = vector.load %arg2[%c0_2, %c0_3] : memref<16x8xf32, #tpu.memory_space<vmem>>, vector<16x8xf32>
    %3 = vector.shape_cast %2 : vector<16x8xf32> to vector<16x1x8xf32>
    %c0_4 = arith.constant 0 : index
    %c0_5 = arith.constant 0 : index
    %4 = vector.load %arg3[%c0_4, %c0_5] : memref<1x32xf32, #tpu.memory_space<vmem>>, vector<1x32xf32>
    %c0_6 = arith.constant 0 : index
    %c0_7 = arith.constant 0 : index
    %5 = vector.load %arg4[%c0_6, %c0_7] : memref<1x32xf32, #tpu.memory_space<vmem>>, vector<1x32xf32>
    %cst = arith.constant dense<0.000000e+00> : vector<128xf32>
    %6 = vector.multi_reduction <add>, %1, %cst [1] : vector<128x32xf32> to vector<128xf32>
    %7 = vector.shape_cast %6 : vector<128xf32> to vector<128x1xf32>
    %cst_8 = arith.constant 3.200000e+01 : f32
    %8 = vector.broadcast %cst_8 : f32 to vector<128x1xf32>
    %9 = arith.divf %7, %8 : vector<128x1xf32>
    %10 = vector.broadcast %9 : vector<128x1xf32> to vector<128x32xf32>
    %11 = arith.subf %1, %10 : vector<128x32xf32>
    %12 = arith.mulf %11, %11 : vector<128x32xf32>
    %cst_9 = arith.constant dense<0.000000e+00> : vector<128xf32>
    %13 = vector.multi_reduction <add>, %12, %cst_9 [1] : vector<128x32xf32> to vector<128xf32>
    %14 = vector.shape_cast %13 : vector<128xf32> to vector<128x1xf32>
    %cst_10 = arith.constant 3.200000e+01 : f32
    %15 = vector.broadcast %cst_10 : f32 to vector<128x1xf32>
    %16 = arith.divf %14, %15 : vector<128x1xf32>
    %17 = vector.broadcast %9 : vector<128x1xf32> to vector<128x32xf32>
    %18 = arith.subf %1, %17 : vector<128x32xf32>
    %cst_11 = arith.constant 9.99999996E-13 : f32
    %19 = vector.broadcast %cst_11 : f32 to vector<128x1xf32>
    %20 = arith.addf %16, %19 : vector<128x1xf32>
    %21 = math.rsqrt %20 : vector<128x1xf32>
    %22 = vector.broadcast %21 : vector<128x1xf32> to vector<128x32xf32>
    %23 = arith.mulf %18, %22 : vector<128x32xf32>
    %24 = vector.broadcast %4 : vector<1x32xf32> to vector<128x32xf32>
    %25 = arith.mulf %23, %24 : vector<128x32xf32>
    %26 = vector.broadcast %5 : vector<1x32xf32> to vector<128x32xf32>
    %27 = arith.addf %25, %26 : vector<128x32xf32>
    %28 = arith.truncf %27 : vector<128x32xf32> to vector<128x32xbf16>
    %c0_12 = arith.constant 0 : index
    %c0_13 = arith.constant 0 : index
    %c0_14 = arith.constant 0 : index
    %29 = vector.load %arg5[%c0_12, %c0_13, %c0_14] : memref<2x32x96xbf16, #tpu.memory_space<vmem>>, vector<1x32x96xbf16>
    %30 = vector.shape_cast %29 : vector<1x32x96xbf16> to vector<32x96xbf16>
    %cst_15 = arith.constant dense<0.000000e+00> : vector<128x96xf32>
    %31 = tpu.matmul %28, %30, %cst_15 {dimension_numbers = #tpu.dot_dimension_numbers<[1], [0], [0], [1], [0, 0, 1, 1], [], []>} : vector<128x32xbf16>, vector<32x96xbf16>, vector<128x96xf32> -> vector<128x96xf32>
    %c0_16 = arith.constant 0 : index
    %c0_17 = arith.constant 0 : index
    %c0_18 = arith.constant 0 : index
    %32 = vector.load %arg6[%c0_16, %c0_17, %c0_18] : memref<2x1x96xf32, #tpu.memory_space<vmem>>, vector<1x1x96xf32>
    %33 = vector.shape_cast %32 : vector<1x1x96xf32> to vector<1x96xf32>
    %34 = vector.broadcast %33 : vector<1x96xf32> to vector<128x96xf32>
    %35 = arith.addf %31, %34 : vector<128x96xf32>
    %c0_19 = arith.constant 0 : index
    %c0_20 = arith.constant 0 : index
    %c0_21 = arith.constant 0 : index
    %36 = vector.load %arg8[%c0_19, %c0_20, %c0_21] : memref<2x1x32xf32, #tpu.memory_space<vmem>>, vector<1x1x32xf32>
    %37 = vector.shape_cast %36 : vector<1x1x32xf32> to vector<1x32xf32>
    %38 = vector.broadcast %37 : vector<1x32xf32> to vector<128x32xf32>
    %39 = arith.addf %27, %38 : vector<128x32xf32>
    %40 = vector.extract_strided_slice %35 {offsets = [0, 0], sizes = [128, 16], strides = [1, 1]} : vector<128x96xf32> to vector<128x16xf32>
    %41 = vector.shape_cast %40 : vector<128x16xf32> to vector<16x8x16xf32>
    %42 = vector.extract_strided_slice %35 {offsets = [0, 32], sizes = [128, 16], strides = [1, 1]} : vector<128x96xf32> to vector<128x16xf32>
    %43 = vector.shape_cast %42 : vector<128x16xf32> to vector<16x8x16xf32>
    %44 = vector.extract_strided_slice %35 {offsets = [0, 64], sizes = [128, 16], strides = [1, 1]} : vector<128x96xf32> to vector<128x16xf32>
    %45 = vector.shape_cast %44 : vector<128x16xf32> to vector<16x8x16xf32>
    "tpu.trace_start"() <{level = 10 : i32, message = "bqd,bkd->bqk"}> : () -> ()
    %cst_22 = arith.constant dense<0.000000e+00> : vector<16x8x8xf32>
    %46 = tpu.matmul %41, %43, %cst_22 {dimension_numbers = #tpu.dot_dimension_numbers<[2], [2], [1], [1], [0, 0, 0, 1, 1, 1], [0], [0]>} : vector<16x8x16xf32>, vector<16x8x16xf32>, vector<16x8x8xf32> -> vector<16x8x8xf32>
    "tpu.trace_stop"() : () -> ()
    %cst_23 = arith.constant 2.500000e-01 : f32
    %47 = vector.broadcast %cst_23 : f32 to vector<16x8x8xf32>
    %48 = arith.mulf %46, %47 : vector<16x8x8xf32>
    %49 = vector.broadcast %3 : vector<16x1x8xf32> to vector<16x8x8xf32>
    %50 = arith.addf %48, %49 : vector<16x8x8xf32>
    %cst_24 = arith.constant dense<0xFF800000> : vector<16x8xf32>
    %51 = vector.multi_reduction <maximumf>, %50, %cst_24 [2] : vector<16x8x8xf32> to vector<16x8xf32>
    %52 = vector.shape_cast %51 : vector<16x8xf32> to vector<16x8x1xf32>
    %53 = vector.broadcast %52 : vector<16x8x1xf32> to vector<16x8x8xf32>
    %54 = arith.subf %50, %53 : vector<16x8x8xf32>
    %55 = math.exp %54 : vector<16x8x8xf32>
    %cst_25 = arith.constant dense<0.000000e+00> : vector<16x8xf32>
    %56 = vector.multi_reduction <add>, %55, %cst_25 [2] : vector<16x8x8xf32> to vector<16x8xf32>
    %57 = vector.shape_cast %56 : vector<16x8xf32> to vector<16x8x1xf32>
    %58 = tpu.reciprocal %57 {approx = true} : vector<16x8x1xf32> -> vector<16x8x1xf32>
    %59 = vector.broadcast %58 : vector<16x8x1xf32> to vector<16x8x8xf32>
    %60 = arith.mulf %55, %59 : vector<16x8x8xf32>
    "tpu.trace_start"() <{level = 10 : i32, message = "bqk,bkd->bqd"}> : () -> ()
    %cst_26 = arith.constant dense<0.000000e+00> : vector<16x8x16xf32>
    %61 = tpu.matmul %60, %45, %cst_26 {dimension_numbers = #tpu.dot_dimension_numbers<[2], [1], [1], [2], [0, 0, 0, 1, 1, 2], [0], [0]>} : vector<16x8x8xf32>, vector<16x8x16xf32>, vector<16x8x16xf32> -> vector<16x8x16xf32>
    "tpu.trace_stop"() : () -> ()
    %62 = vector.shape_cast %61 : vector<16x8x16xf32> to vector<128x16xf32>
    %63 = arith.truncf %62 : vector<128x16xf32> to vector<128x16xbf16>
    %c0_27 = arith.constant 0 : index
    %c0_28 = arith.constant 0 : index
    %c0_29 = arith.constant 0 : index
    %64 = vector.load %arg7[%c0_27, %c0_28, %c0_29] : memref<2x32x32xbf16, #tpu.memory_space<vmem>>, vector<1x16x32xbf16>
    %65 = vector.shape_cast %64 : vector<1x16x32xbf16> to vector<16x32xbf16>
    %cst_30 = arith.constant dense<0.000000e+00> : vector<128x32xf32>
    %66 = tpu.matmul %63, %65, %cst_30 {dimension_numbers = #tpu.dot_dimension_numbers<[1], [0], [0], [1], [0, 0, 1, 1], [], []>} : vector<128x16xbf16>, vector<16x32xbf16>, vector<128x32xf32> -> vector<128x32xf32>
    %67 = arith.addf %39, %66 : vector<128x32xf32>
    %68 = vector.extract_strided_slice %35 {offsets = [0, 16], sizes = [128, 16], strides = [1, 1]} : vector<128x96xf32> to vector<128x16xf32>
    %69 = vector.shape_cast %68 : vector<128x16xf32> to vector<16x8x16xf32>
    %70 = vector.extract_strided_slice %35 {offsets = [0, 48], sizes = [128, 16], strides = [1, 1]} : vector<128x96xf32> to vector<128x16xf32>
    %71 = vector.shape_cast %70 : vector<128x16xf32> to vector<16x8x16xf32>
    %72 = vector.extract_strided_slice %35 {offsets = [0, 80], sizes = [128, 16], strides = [1, 1]} : vector<128x96xf32> to vector<128x16xf32>
    %73 = vector.shape_cast %72 : vector<128x16xf32> to vector<16x8x16xf32>
    "tpu.trace_start"() <{level = 10 : i32, message = "bqd,bkd->bqk"}> : () -> ()
    %cst_31 = arith.constant dense<0.000000e+00> : vector<16x8x8xf32>
    %74 = tpu.matmul %69, %71, %cst_31 {dimension_numbers = #tpu.dot_dimension_numbers<[2], [2], [1], [1], [0, 0, 0, 1, 1, 1], [0], [0]>} : vector<16x8x16xf32>, vector<16x8x16xf32>, vector<16x8x8xf32> -> vector<16x8x8xf32>
    "tpu.trace_stop"() : () -> ()
    %cst_32 = arith.constant 2.500000e-01 : f32
    %75 = vector.broadcast %cst_32 : f32 to vector<16x8x8xf32>
    %76 = arith.mulf %74, %75 : vector<16x8x8xf32>
    %77 = vector.broadcast %3 : vector<16x1x8xf32> to vector<16x8x8xf32>
    %78 = arith.addf %76, %77 : vector<16x8x8xf32>
    %cst_33 = arith.constant dense<0xFF800000> : vector<16x8xf32>
    %79 = vector.multi_reduction <maximumf>, %78, %cst_33 [2] : vector<16x8x8xf32> to vector<16x8xf32>
    %80 = vector.shape_cast %79 : vector<16x8xf32> to vector<16x8x1xf32>
    %81 = vector.broadcast %80 : vector<16x8x1xf32> to vector<16x8x8xf32>
    %82 = arith.subf %78, %81 : vector<16x8x8xf32>
    %83 = math.exp %82 : vector<16x8x8xf32>
    %cst_34 = arith.constant dense<0.000000e+00> : vector<16x8xf32>
    %84 = vector.multi_reduction <add>, %83, %cst_34 [2] : vector<16x8x8xf32> to vector<16x8xf32>
    %85 = vector.shape_cast %84 : vector<16x8xf32> to vector<16x8x1xf32>
    %86 = tpu.reciprocal %85 {approx = true} : vector<16x8x1xf32> -> vector<16x8x1xf32>
    %87 = vector.broadcast %86 : vector<16x8x1xf32> to vector<16x8x8xf32>
    %88 = arith.mulf %83, %87 : vector<16x8x8xf32>
    "tpu.trace_start"() <{level = 10 : i32, message = "bqk,bkd->bqd"}> : () -> ()
    %cst_35 = arith.constant dense<0.000000e+00> : vector<16x8x16xf32>
    %89 = tpu.matmul %88, %73, %cst_35 {dimension_numbers = #tpu.dot_dimension_numbers<[2], [1], [1], [2], [0, 0, 0, 1, 1, 2], [0], [0]>} : vector<16x8x8xf32>, vector<16x8x16xf32>, vector<16x8x16xf32> -> vector<16x8x16xf32>
    "tpu.trace_stop"() : () -> ()
    %90 = vector.shape_cast %89 : vector<16x8x16xf32> to vector<128x16xf32>
    %91 = arith.truncf %90 : vector<128x16xf32> to vector<128x16xbf16>
    %c0_36 = arith.constant 0 : index
    %c16 = arith.constant 16 : index
    %c0_37 = arith.constant 0 : index
    %92 = vector.load %arg7[%c0_36, %c16, %c0_37] : memref<2x32x32xbf16, #tpu.memory_space<vmem>>, vector<1x16x32xbf16>
    %93 = vector.shape_cast %92 : vector<1x16x32xbf16> to vector<16x32xbf16>
    %cst_38 = arith.constant dense<0.000000e+00> : vector<128x32xf32>
    %94 = tpu.matmul %91, %93, %cst_38 {dimension_numbers = #tpu.dot_dimension_numbers<[1], [0], [0], [1], [0, 0, 1, 1], [], []>} : vector<128x16xbf16>, vector<16x32xbf16>, vector<128x32xf32> -> vector<128x32xf32>
    %95 = arith.addf %67, %94 : vector<128x32xf32>
    %c0_39 = arith.constant 0 : index
    %c0_40 = arith.constant 0 : index
    %c0_41 = arith.constant 0 : index
    %96 = vector.load %arg9[%c0_39, %c0_40, %c0_41] : memref<2x1x32xf32, #tpu.memory_space<vmem>>, vector<1x1x32xf32>
    %97 = vector.shape_cast %96 : vector<1x1x32xf32> to vector<1x32xf32>
    %c0_42 = arith.constant 0 : index
    %c0_43 = arith.constant 0 : index
    %c0_44 = arith.constant 0 : index
    %98 = vector.load %arg10[%c0_42, %c0_43, %c0_44] : memref<2x1x32xf32, #tpu.memory_space<vmem>>, vector<1x1x32xf32>
    %99 = vector.shape_cast %98 : vector<1x1x32xf32> to vector<1x32xf32>
    %cst_45 = arith.constant dense<0.000000e+00> : vector<128xf32>
    %100 = vector.multi_reduction <add>, %95, %cst_45 [1] : vector<128x32xf32> to vector<128xf32>
    %101 = vector.shape_cast %100 : vector<128xf32> to vector<128x1xf32>
    %cst_46 = arith.constant 3.200000e+01 : f32
    %102 = vector.broadcast %cst_46 : f32 to vector<128x1xf32>
    %103 = arith.divf %101, %102 : vector<128x1xf32>
    %104 = vector.broadcast %103 : vector<128x1xf32> to vector<128x32xf32>
    %105 = arith.subf %95, %104 : vector<128x32xf32>
    %106 = arith.mulf %105, %105 : vector<128x32xf32>
    %cst_47 = arith.constant dense<0.000000e+00> : vector<128xf32>
    %107 = vector.multi_reduction <add>, %106, %cst_47 [1] : vector<128x32xf32> to vector<128xf32>
    %108 = vector.shape_cast %107 : vector<128xf32> to vector<128x1xf32>
    %cst_48 = arith.constant 3.200000e+01 : f32
    %109 = vector.broadcast %cst_48 : f32 to vector<128x1xf32>
    %110 = arith.divf %108, %109 : vector<128x1xf32>
    %111 = vector.broadcast %103 : vector<128x1xf32> to vector<128x32xf32>
    %112 = arith.subf %95, %111 : vector<128x32xf32>
    %cst_49 = arith.constant 9.99999996E-13 : f32
    %113 = vector.broadcast %cst_49 : f32 to vector<128x1xf32>
    %114 = arith.addf %110, %113 : vector<128x1xf32>
    %115 = math.rsqrt %114 : vector<128x1xf32>
    %116 = vector.broadcast %115 : vector<128x1xf32> to vector<128x32xf32>
    %117 = arith.mulf %112, %116 : vector<128x32xf32>
    %118 = vector.broadcast %97 : vector<1x32xf32> to vector<128x32xf32>
    %119 = arith.mulf %117, %118 : vector<128x32xf32>
    %120 = vector.broadcast %99 : vector<1x32xf32> to vector<128x32xf32>
    %121 = arith.addf %119, %120 : vector<128x32xf32>
    %122 = arith.truncf %121 : vector<128x32xf32> to vector<128x32xbf16>
    %c0_50 = arith.constant 0 : index
    %c0_51 = arith.constant 0 : index
    %c0_52 = arith.constant 0 : index
    %123 = vector.load %arg11[%c0_50, %c0_51, %c0_52] : memref<2x32x64xbf16, #tpu.memory_space<vmem>>, vector<1x32x64xbf16>
    %124 = vector.shape_cast %123 : vector<1x32x64xbf16> to vector<32x64xbf16>
    %cst_53 = arith.constant dense<0.000000e+00> : vector<128x64xf32>
    %125 = tpu.matmul %122, %124, %cst_53 {dimension_numbers = #tpu.dot_dimension_numbers<[1], [0], [0], [1], [0, 0, 1, 1], [], []>} : vector<128x32xbf16>, vector<32x64xbf16>, vector<128x64xf32> -> vector<128x64xf32>
    %c0_54 = arith.constant 0 : index
    %c0_55 = arith.constant 0 : index
    %c0_56 = arith.constant 0 : index
    %126 = vector.load %arg12[%c0_54, %c0_55, %c0_56] : memref<2x1x64xf32, #tpu.memory_space<vmem>>, vector<1x1x64xf32>
    %127 = vector.shape_cast %126 : vector<1x1x64xf32> to vector<1x64xf32>
    %128 = vector.broadcast %127 : vector<1x64xf32> to vector<128x64xf32>
    %129 = arith.addf %125, %128 : vector<128x64xf32>
    %130 = arith.mulf %129, %129 : vector<128x64xf32>
    %131 = arith.mulf %129, %130 : vector<128x64xf32>
    %cst_57 = arith.constant 4.471500e-02 : f32
    %132 = vector.broadcast %cst_57 : f32 to vector<128x64xf32>
    %133 = arith.mulf %132, %131 : vector<128x64xf32>
    %134 = arith.addf %129, %133 : vector<128x64xf32>
    %cst_58 = arith.constant 0.797884583 : f32
    %135 = vector.broadcast %cst_58 : f32 to vector<128x64xf32>
    %136 = arith.mulf %135, %134 : vector<128x64xf32>
    %137 = math.tanh %136 : vector<128x64xf32>
    %cst_59 = arith.constant 1.000000e+00 : f32
    %138 = vector.broadcast %cst_59 : f32 to vector<128x64xf32>
    %139 = arith.addf %138, %137 : vector<128x64xf32>
    %cst_60 = arith.constant 5.000000e-01 : f32
    %140 = vector.broadcast %cst_60 : f32 to vector<128x64xf32>
    %141 = arith.mulf %140, %139 : vector<128x64xf32>
    %142 = arith.mulf %129, %141 : vector<128x64xf32>
    %143 = arith.truncf %142 : vector<128x64xf32> to vector<128x64xbf16>
    %c0_61 = arith.constant 0 : index
    %c0_62 = arith.constant 0 : index
    %c0_63 = arith.constant 0 : index
    %144 = vector.load %arg13[%c0_61, %c0_62, %c0_63] : memref<2x64x32xbf16, #tpu.memory_space<vmem>>, vector<1x64x32xbf16>
    %145 = vector.shape_cast %144 : vector<1x64x32xbf16> to vector<64x32xbf16>
    %cst_64 = arith.constant dense<0.000000e+00> : vector<128x32xf32>
    %146 = tpu.matmul %143, %145, %cst_64 {dimension_numbers = #tpu.dot_dimension_numbers<[1], [0], [0], [1], [0, 0, 1, 1], [], []>} : vector<128x64xbf16>, vector<64x32xbf16>, vector<128x32xf32> -> vector<128x32xf32>
    %c0_65 = arith.constant 0 : index
    %c0_66 = arith.constant 0 : index
    %c0_67 = arith.constant 0 : index
    %147 = vector.load %arg14[%c0_65, %c0_66, %c0_67] : memref<2x1x32xf32, #tpu.memory_space<vmem>>, vector<1x1x32xf32>
    %148 = vector.shape_cast %147 : vector<1x1x32xf32> to vector<1x32xf32>
    %149 = vector.broadcast %148 : vector<1x32xf32> to vector<128x32xf32>
    %150 = arith.addf %146, %149 : vector<128x32xf32>
    %151 = arith.addf %150, %121 : vector<128x32xf32>
    %c0_68 = arith.constant 0 : index
    %c0_69 = arith.constant 0 : index
    %c0_70 = arith.constant 0 : index
    %152 = vector.load %arg15[%c0_68, %c0_69, %c0_70] : memref<2x1x32xf32, #tpu.memory_space<vmem>>, vector<1x1x32xf32>
    %153 = vector.shape_cast %152 : vector<1x1x32xf32> to vector<1x32xf32>
    %c0_71 = arith.constant 0 : index
    %c0_72 = arith.constant 0 : index
    %c0_73 = arith.constant 0 : index
    %154 = vector.load %arg16[%c0_71, %c0_72, %c0_73] : memref<2x1x32xf32, #tpu.memory_space<vmem>>, vector<1x1x32xf32>
    %155 = vector.shape_cast %154 : vector<1x1x32xf32> to vector<1x32xf32>
    %cst_74 = arith.constant dense<0.000000e+00> : vector<128xf32>
    %156 = vector.multi_reduction <add>, %151, %cst_74 [1] : vector<128x32xf32> to vector<128xf32>
    %157 = vector.shape_cast %156 : vector<128xf32> to vector<128x1xf32>
    %cst_75 = arith.constant 3.200000e+01 : f32
    %158 = vector.broadcast %cst_75 : f32 to vector<128x1xf32>
    %159 = arith.divf %157, %158 : vector<128x1xf32>
    %160 = vector.broadcast %159 : vector<128x1xf32> to vector<128x32xf32>
    %161 = arith.subf %151, %160 : vector<128x32xf32>
    %162 = arith.mulf %161, %161 : vector<128x32xf32>
    %cst_76 = arith.constant dense<0.000000e+00> : vector<128xf32>
    %163 = vector.multi_reduction <add>, %162, %cst_76 [1] : vector<128x32xf32> to vector<128xf32>
    %164 = vector.shape_cast %163 : vector<128xf32> to vector<128x1xf32>
    %cst_77 = arith.constant 3.200000e+01 : f32
    %165 = vector.broadcast %cst_77 : f32 to vector<128x1xf32>
    %166 = arith.divf %164, %165 : vector<128x1xf32>
    %167 = vector.broadcast %159 : vector<128x1xf32> to vector<128x32xf32>
    %168 = arith.subf %151, %167 : vector<128x32xf32>
    %cst_78 = arith.constant 9.99999996E-13 : f32
    %169 = vector.broadcast %cst_78 : f32 to vector<128x1xf32>
    %170 = arith.addf %166, %169 : vector<128x1xf32>
    %171 = math.rsqrt %170 : vector<128x1xf32>
    %172 = vector.broadcast %171 : vector<128x1xf32> to vector<128x32xf32>
    %173 = arith.mulf %168, %172 : vector<128x32xf32>
    %174 = vector.broadcast %153 : vector<1x32xf32> to vector<128x32xf32>
    %175 = arith.mulf %173, %174 : vector<128x32xf32>
    %176 = vector.broadcast %155 : vector<1x32xf32> to vector<128x32xf32>
    %177 = arith.addf %175, %176 : vector<128x32xf32>
    %178 = arith.truncf %177 : vector<128x32xf32> to vector<128x32xbf16>
    %c1 = arith.constant 1 : index
    %c0_79 = arith.constant 0 : index
    %c0_80 = arith.constant 0 : index
    %179 = vector.load %arg5[%c1, %c0_79, %c0_80] : memref<2x32x96xbf16, #tpu.memory_space<vmem>>, vector<1x32x96xbf16>
    %180 = vector.shape_cast %179 : vector<1x32x96xbf16> to vector<32x96xbf16>
    %cst_81 = arith.constant dense<0.000000e+00> : vector<128x96xf32>
    %181 = tpu.matmul %178, %180, %cst_81 {dimension_numbers = #tpu.dot_dimension_numbers<[1], [0], [0], [1], [0, 0, 1, 1], [], []>} : vector<128x32xbf16>, vector<32x96xbf16>, vector<128x96xf32> -> vector<128x96xf32>
    %c1_82 = arith.constant 1 : index
    %c0_83 = arith.constant 0 : index
    %c0_84 = arith.constant 0 : index
    %182 = vector.load %arg6[%c1_82, %c0_83, %c0_84] : memref<2x1x96xf32, #tpu.memory_space<vmem>>, vector<1x1x96xf32>
    %183 = vector.shape_cast %182 : vector<1x1x96xf32> to vector<1x96xf32>
    %184 = vector.broadcast %183 : vector<1x96xf32> to vector<128x96xf32>
    %185 = arith.addf %181, %184 : vector<128x96xf32>
    %c1_85 = arith.constant 1 : index
    %c0_86 = arith.constant 0 : index
    %c0_87 = arith.constant 0 : index
    %186 = vector.load %arg8[%c1_85, %c0_86, %c0_87] : memref<2x1x32xf32, #tpu.memory_space<vmem>>, vector<1x1x32xf32>
    %187 = vector.shape_cast %186 : vector<1x1x32xf32> to vector<1x32xf32>
    %188 = vector.broadcast %187 : vector<1x32xf32> to vector<128x32xf32>
    %189 = arith.addf %177, %188 : vector<128x32xf32>
    %190 = vector.extract_strided_slice %185 {offsets = [0, 0], sizes = [128, 16], strides = [1, 1]} : vector<128x96xf32> to vector<128x16xf32>
    %191 = vector.shape_cast %190 : vector<128x16xf32> to vector<16x8x16xf32>
    %192 = vector.extract_strided_slice %185 {offsets = [0, 32], sizes = [128, 16], strides = [1, 1]} : vector<128x96xf32> to vector<128x16xf32>
    %193 = vector.shape_cast %192 : vector<128x16xf32> to vector<16x8x16xf32>
    %194 = vector.extract_strided_slice %185 {offsets = [0, 64], sizes = [128, 16], strides = [1, 1]} : vector<128x96xf32> to vector<128x16xf32>
    %195 = vector.shape_cast %194 : vector<128x16xf32> to vector<16x8x16xf32>
    "tpu.trace_start"() <{level = 10 : i32, message = "bqd,bkd->bqk"}> : () -> ()
    %cst_88 = arith.constant dense<0.000000e+00> : vector<16x8x8xf32>
    %196 = tpu.matmul %191, %193, %cst_88 {dimension_numbers = #tpu.dot_dimension_numbers<[2], [2], [1], [1], [0, 0, 0, 1, 1, 1], [0], [0]>} : vector<16x8x16xf32>, vector<16x8x16xf32>, vector<16x8x8xf32> -> vector<16x8x8xf32>
    "tpu.trace_stop"() : () -> ()
    %cst_89 = arith.constant 2.500000e-01 : f32
    %197 = vector.broadcast %cst_89 : f32 to vector<16x8x8xf32>
    %198 = arith.mulf %196, %197 : vector<16x8x8xf32>
    %199 = vector.broadcast %3 : vector<16x1x8xf32> to vector<16x8x8xf32>
    %200 = arith.addf %198, %199 : vector<16x8x8xf32>
    %cst_90 = arith.constant dense<0xFF800000> : vector<16x8xf32>
    %201 = vector.multi_reduction <maximumf>, %200, %cst_90 [2] : vector<16x8x8xf32> to vector<16x8xf32>
    %202 = vector.shape_cast %201 : vector<16x8xf32> to vector<16x8x1xf32>
    %203 = vector.broadcast %202 : vector<16x8x1xf32> to vector<16x8x8xf32>
    %204 = arith.subf %200, %203 : vector<16x8x8xf32>
    %205 = math.exp %204 : vector<16x8x8xf32>
    %cst_91 = arith.constant dense<0.000000e+00> : vector<16x8xf32>
    %206 = vector.multi_reduction <add>, %205, %cst_91 [2] : vector<16x8x8xf32> to vector<16x8xf32>
    %207 = vector.shape_cast %206 : vector<16x8xf32> to vector<16x8x1xf32>
    %208 = tpu.reciprocal %207 {approx = true} : vector<16x8x1xf32> -> vector<16x8x1xf32>
    %209 = vector.broadcast %208 : vector<16x8x1xf32> to vector<16x8x8xf32>
    %210 = arith.mulf %205, %209 : vector<16x8x8xf32>
    "tpu.trace_start"() <{level = 10 : i32, message = "bqk,bkd->bqd"}> : () -> ()
    %cst_92 = arith.constant dense<0.000000e+00> : vector<16x8x16xf32>
    %211 = tpu.matmul %210, %195, %cst_92 {dimension_numbers = #tpu.dot_dimension_numbers<[2], [1], [1], [2], [0, 0, 0, 1, 1, 2], [0], [0]>} : vector<16x8x8xf32>, vector<16x8x16xf32>, vector<16x8x16xf32> -> vector<16x8x16xf32>
    "tpu.trace_stop"() : () -> ()
    %212 = vector.shape_cast %211 : vector<16x8x16xf32> to vector<128x16xf32>
    %213 = arith.truncf %212 : vector<128x16xf32> to vector<128x16xbf16>
    %c1_93 = arith.constant 1 : index
    %c0_94 = arith.constant 0 : index
    %c0_95 = arith.constant 0 : index
    %214 = vector.load %arg7[%c1_93, %c0_94, %c0_95] : memref<2x32x32xbf16, #tpu.memory_space<vmem>>, vector<1x16x32xbf16>
    %215 = vector.shape_cast %214 : vector<1x16x32xbf16> to vector<16x32xbf16>
    %cst_96 = arith.constant dense<0.000000e+00> : vector<128x32xf32>
    %216 = tpu.matmul %213, %215, %cst_96 {dimension_numbers = #tpu.dot_dimension_numbers<[1], [0], [0], [1], [0, 0, 1, 1], [], []>} : vector<128x16xbf16>, vector<16x32xbf16>, vector<128x32xf32> -> vector<128x32xf32>
    %217 = arith.addf %189, %216 : vector<128x32xf32>
    %218 = vector.extract_strided_slice %185 {offsets = [0, 16], sizes = [128, 16], strides = [1, 1]} : vector<128x96xf32> to vector<128x16xf32>
    %219 = vector.shape_cast %218 : vector<128x16xf32> to vector<16x8x16xf32>
    %220 = vector.extract_strided_slice %185 {offsets = [0, 48], sizes = [128, 16], strides = [1, 1]} : vector<128x96xf32> to vector<128x16xf32>
    %221 = vector.shape_cast %220 : vector<128x16xf32> to vector<16x8x16xf32>
    %222 = vector.extract_strided_slice %185 {offsets = [0, 80], sizes = [128, 16], strides = [1, 1]} : vector<128x96xf32> to vector<128x16xf32>
    %223 = vector.shape_cast %222 : vector<128x16xf32> to vector<16x8x16xf32>
    "tpu.trace_start"() <{level = 10 : i32, message = "bqd,bkd->bqk"}> : () -> ()
    %cst_97 = arith.constant dense<0.000000e+00> : vector<16x8x8xf32>
    %224 = tpu.matmul %219, %221, %cst_97 {dimension_numbers = #tpu.dot_dimension_numbers<[2], [2], [1], [1], [0, 0, 0, 1, 1, 1], [0], [0]>} : vector<16x8x16xf32>, vector<16x8x16xf32>, vector<16x8x8xf32> -> vector<16x8x8xf32>
    "tpu.trace_stop"() : () -> ()
    %cst_98 = arith.constant 2.500000e-01 : f32
    %225 = vector.broadcast %cst_98 : f32 to vector<16x8x8xf32>
    %226 = arith.mulf %224, %225 : vector<16x8x8xf32>
    %227 = vector.broadcast %3 : vector<16x1x8xf32> to vector<16x8x8xf32>
    %228 = arith.addf %226, %227 : vector<16x8x8xf32>
    %cst_99 = arith.constant dense<0xFF800000> : vector<16x8xf32>
    %229 = vector.multi_reduction <maximumf>, %228, %cst_99 [2] : vector<16x8x8xf32> to vector<16x8xf32>
    %230 = vector.shape_cast %229 : vector<16x8xf32> to vector<16x8x1xf32>
    %231 = vector.broadcast %230 : vector<16x8x1xf32> to vector<16x8x8xf32>
    %232 = arith.subf %228, %231 : vector<16x8x8xf32>
    %233 = math.exp %232 : vector<16x8x8xf32>
    %cst_100 = arith.constant dense<0.000000e+00> : vector<16x8xf32>
    %234 = vector.multi_reduction <add>, %233, %cst_100 [2] : vector<16x8x8xf32> to vector<16x8xf32>
    %235 = vector.shape_cast %234 : vector<16x8xf32> to vector<16x8x1xf32>
    %236 = tpu.reciprocal %235 {approx = true} : vector<16x8x1xf32> -> vector<16x8x1xf32>
    %237 = vector.broadcast %236 : vector<16x8x1xf32> to vector<16x8x8xf32>
    %238 = arith.mulf %233, %237 : vector<16x8x8xf32>
    "tpu.trace_start"() <{level = 10 : i32, message = "bqk,bkd->bqd"}> : () -> ()
    %cst_101 = arith.constant dense<0.000000e+00> : vector<16x8x16xf32>
    %239 = tpu.matmul %238, %223, %cst_101 {dimension_numbers = #tpu.dot_dimension_numbers<[2], [1], [1], [2], [0, 0, 0, 1, 1, 2], [0], [0]>} : vector<16x8x8xf32>, vector<16x8x16xf32>, vector<16x8x16xf32> -> vector<16x8x16xf32>
    "tpu.trace_stop"() : () -> ()
    %240 = vector.shape_cast %239 : vector<16x8x16xf32> to vector<128x16xf32>
    %241 = arith.truncf %240 : vector<128x16xf32> to vector<128x16xbf16>
    %c1_102 = arith.constant 1 : index
    %c16_103 = arith.constant 16 : index
    %c0_104 = arith.constant 0 : index
    %242 = vector.load %arg7[%c1_102, %c16_103, %c0_104] : memref<2x32x32xbf16, #tpu.memory_space<vmem>>, vector<1x16x32xbf16>
    %243 = vector.shape_cast %242 : vector<1x16x32xbf16> to vector<16x32xbf16>
    %cst_105 = arith.constant dense<0.000000e+00> : vector<128x32xf32>
    %244 = tpu.matmul %241, %243, %cst_105 {dimension_numbers = #tpu.dot_dimension_numbers<[1], [0], [0], [1], [0, 0, 1, 1], [], []>} : vector<128x16xbf16>, vector<16x32xbf16>, vector<128x32xf32> -> vector<128x32xf32>
    %245 = arith.addf %217, %244 : vector<128x32xf32>
    %c1_106 = arith.constant 1 : index
    %c0_107 = arith.constant 0 : index
    %c0_108 = arith.constant 0 : index
    %246 = vector.load %arg9[%c1_106, %c0_107, %c0_108] : memref<2x1x32xf32, #tpu.memory_space<vmem>>, vector<1x1x32xf32>
    %247 = vector.shape_cast %246 : vector<1x1x32xf32> to vector<1x32xf32>
    %c1_109 = arith.constant 1 : index
    %c0_110 = arith.constant 0 : index
    %c0_111 = arith.constant 0 : index
    %248 = vector.load %arg10[%c1_109, %c0_110, %c0_111] : memref<2x1x32xf32, #tpu.memory_space<vmem>>, vector<1x1x32xf32>
    %249 = vector.shape_cast %248 : vector<1x1x32xf32> to vector<1x32xf32>
    %cst_112 = arith.constant dense<0.000000e+00> : vector<128xf32>
    %250 = vector.multi_reduction <add>, %245, %cst_112 [1] : vector<128x32xf32> to vector<128xf32>
    %251 = vector.shape_cast %250 : vector<128xf32> to vector<128x1xf32>
    %cst_113 = arith.constant 3.200000e+01 : f32
    %252 = vector.broadcast %cst_113 : f32 to vector<128x1xf32>
    %253 = arith.divf %251, %252 : vector<128x1xf32>
    %254 = vector.broadcast %253 : vector<128x1xf32> to vector<128x32xf32>
    %255 = arith.subf %245, %254 : vector<128x32xf32>
    %256 = arith.mulf %255, %255 : vector<128x32xf32>
    %cst_114 = arith.constant dense<0.000000e+00> : vector<128xf32>
    %257 = vector.multi_reduction <add>, %256, %cst_114 [1] : vector<128x32xf32> to vector<128xf32>
    %258 = vector.shape_cast %257 : vector<128xf32> to vector<128x1xf32>
    %cst_115 = arith.constant 3.200000e+01 : f32
    %259 = vector.broadcast %cst_115 : f32 to vector<128x1xf32>
    %260 = arith.divf %258, %259 : vector<128x1xf32>
    %261 = vector.broadcast %253 : vector<128x1xf32> to vector<128x32xf32>
    %262 = arith.subf %245, %261 : vector<128x32xf32>
    %cst_116 = arith.constant 9.99999996E-13 : f32
    %263 = vector.broadcast %cst_116 : f32 to vector<128x1xf32>
    %264 = arith.addf %260, %263 : vector<128x1xf32>
    %265 = math.rsqrt %264 : vector<128x1xf32>
    %266 = vector.broadcast %265 : vector<128x1xf32> to vector<128x32xf32>
    %267 = arith.mulf %262, %266 : vector<128x32xf32>
    %268 = vector.broadcast %247 : vector<1x32xf32> to vector<128x32xf32>
    %269 = arith.mulf %267, %268 : vector<128x32xf32>
    %270 = vector.broadcast %249 : vector<1x32xf32> to vector<128x32xf32>
    %271 = arith.addf %269, %270 : vector<128x32xf32>
    %272 = arith.truncf %271 : vector<128x32xf32> to vector<128x32xbf16>
    %c1_117 = arith.constant 1 : index
    %c0_118 = arith.constant 0 : index
    %c0_119 = arith.constant 0 : index
    %273 = vector.load %arg11[%c1_117, %c0_118, %c0_119] : memref<2x32x64xbf16, #tpu.memory_space<vmem>>, vector<1x32x64xbf16>
    %274 = vector.shape_cast %273 : vector<1x32x64xbf16> to vector<32x64xbf16>
    %cst_120 = arith.constant dense<0.000000e+00> : vector<128x64xf32>
    %275 = tpu.matmul %272, %274, %cst_120 {dimension_numbers = #tpu.dot_dimension_numbers<[1], [0], [0], [1], [0, 0, 1, 1], [], []>} : vector<128x32xbf16>, vector<32x64xbf16>, vector<128x64xf32> -> vector<128x64xf32>
    %c1_121 = arith.constant 1 : index
    %c0_122 = arith.constant 0 : index
    %c0_123 = arith.constant 0 : index
    %276 = vector.load %arg12[%c1_121, %c0_122, %c0_123] : memref<2x1x64xf32, #tpu.memory_space<vmem>>, vector<1x1x64xf32>
    %277 = vector.shape_cast %276 : vector<1x1x64xf32> to vector<1x64xf32>
    %278 = vector.broadcast %277 : vector<1x64xf32> to vector<128x64xf32>
    %279 = arith.addf %275, %278 : vector<128x64xf32>
    %280 = arith.mulf %279, %279 : vector<128x64xf32>
    %281 = arith.mulf %279, %280 : vector<128x64xf32>
    %cst_124 = arith.constant 4.471500e-02 : f32
    %282 = vector.broadcast %cst_124 : f32 to vector<128x64xf32>
    %283 = arith.mulf %282, %281 : vector<128x64xf32>
    %284 = arith.addf %279, %283 : vector<128x64xf32>
    %cst_125 = arith.constant 0.797884583 : f32
    %285 = vector.broadcast %cst_125 : f32 to vector<128x64xf32>
    %286 = arith.mulf %285, %284 : vector<128x64xf32>
    %287 = math.tanh %286 : vector<128x64xf32>
    %cst_126 = arith.constant 1.000000e+00 : f32
    %288 = vector.broadcast %cst_126 : f32 to vector<128x64xf32>
    %289 = arith.addf %288, %287 : vector<128x64xf32>
    %cst_127 = arith.constant 5.000000e-01 : f32
    %290 = vector.broadcast %cst_127 : f32 to vector<128x64xf32>
    %291 = arith.mulf %290, %289 : vector<128x64xf32>
    %292 = arith.mulf %279, %291 : vector<128x64xf32>
    %293 = arith.truncf %292 : vector<128x64xf32> to vector<128x64xbf16>
    %c1_128 = arith.constant 1 : index
    %c0_129 = arith.constant 0 : index
    %c0_130 = arith.constant 0 : index
    %294 = vector.load %arg13[%c1_128, %c0_129, %c0_130] : memref<2x64x32xbf16, #tpu.memory_space<vmem>>, vector<1x64x32xbf16>
    %295 = vector.shape_cast %294 : vector<1x64x32xbf16> to vector<64x32xbf16>
    %cst_131 = arith.constant dense<0.000000e+00> : vector<128x32xf32>
    %296 = tpu.matmul %293, %295, %cst_131 {dimension_numbers = #tpu.dot_dimension_numbers<[1], [0], [0], [1], [0, 0, 1, 1], [], []>} : vector<128x64xbf16>, vector<64x32xbf16>, vector<128x32xf32> -> vector<128x32xf32>
    %c1_132 = arith.constant 1 : index
    %c0_133 = arith.constant 0 : index
    %c0_134 = arith.constant 0 : index
    %297 = vector.load %arg14[%c1_132, %c0_133, %c0_134] : memref<2x1x32xf32, #tpu.memory_space<vmem>>, vector<1x1x32xf32>
    %298 = vector.shape_cast %297 : vector<1x1x32xf32> to vector<1x32xf32>
    %299 = vector.broadcast %298 : vector<1x32xf32> to vector<128x32xf32>
    %300 = arith.addf %296, %299 : vector<128x32xf32>
    %301 = arith.addf %300, %271 : vector<128x32xf32>
    %c1_135 = arith.constant 1 : index
    %c0_136 = arith.constant 0 : index
    %c0_137 = arith.constant 0 : index
    %302 = vector.load %arg15[%c1_135, %c0_136, %c0_137] : memref<2x1x32xf32, #tpu.memory_space<vmem>>, vector<1x1x32xf32>
    %303 = vector.shape_cast %302 : vector<1x1x32xf32> to vector<1x32xf32>
    %c1_138 = arith.constant 1 : index
    %c0_139 = arith.constant 0 : index
    %c0_140 = arith.constant 0 : index
    %304 = vector.load %arg16[%c1_138, %c0_139, %c0_140] : memref<2x1x32xf32, #tpu.memory_space<vmem>>, vector<1x1x32xf32>
    %305 = vector.shape_cast %304 : vector<1x1x32xf32> to vector<1x32xf32>
    %cst_141 = arith.constant dense<0.000000e+00> : vector<128xf32>
    %306 = vector.multi_reduction <add>, %301, %cst_141 [1] : vector<128x32xf32> to vector<128xf32>
    %307 = vector.shape_cast %306 : vector<128xf32> to vector<128x1xf32>
    %cst_142 = arith.constant 3.200000e+01 : f32
    %308 = vector.broadcast %cst_142 : f32 to vector<128x1xf32>
    %309 = arith.divf %307, %308 : vector<128x1xf32>
    %310 = vector.broadcast %309 : vector<128x1xf32> to vector<128x32xf32>
    %311 = arith.subf %301, %310 : vector<128x32xf32>
    %312 = arith.mulf %311, %311 : vector<128x32xf32>
    %cst_143 = arith.constant dense<0.000000e+00> : vector<128xf32>
    %313 = vector.multi_reduction <add>, %312, %cst_143 [1] : vector<128x32xf32> to vector<128xf32>
    %314 = vector.shape_cast %313 : vector<128xf32> to vector<128x1xf32>
    %cst_144 = arith.constant 3.200000e+01 : f32
    %315 = vector.broadcast %cst_144 : f32 to vector<128x1xf32>
    %316 = arith.divf %314, %315 : vector<128x1xf32>
    %317 = vector.broadcast %309 : vector<128x1xf32> to vector<128x32xf32>
    %318 = arith.subf %301, %317 : vector<128x32xf32>
    %cst_145 = arith.constant 9.99999996E-13 : f32
    %319 = vector.broadcast %cst_145 : f32 to vector<128x1xf32>
    %320 = arith.addf %316, %319 : vector<128x1xf32>
    %321 = math.rsqrt %320 : vector<128x1xf32>
    %322 = vector.broadcast %321 : vector<128x1xf32> to vector<128x32xf32>
    %323 = arith.mulf %318, %322 : vector<128x32xf32>
    %324 = vector.broadcast %303 : vector<1x32xf32> to vector<128x32xf32>
    %325 = arith.mulf %323, %324 : vector<128x32xf32>
    %326 = vector.broadcast %305 : vector<1x32xf32> to vector<128x32xf32>
    %327 = arith.addf %325, %326 : vector<128x32xf32>
    %328 = vector.shape_cast %327 : vector<128x32xf32> to vector<16x8x32xf32>
    %c0_146 = arith.constant 0 : index
    %c0_147 = arith.constant 0 : index
    %c0_148 = arith.constant 0 : index
    %329 = vector.load %arg20[%c0_146, %c0_147, %c0_148] : memref<16x8x32xf32, #tpu.memory_space<vmem>>, vector<16x8x32xf32>
    tpu.vector_store %arg20[%c0_146, %c0_147, %c0_148], %328 {strides = array<i32>} : memref<16x8x32xf32, #tpu.memory_space<vmem>>, vector<16x8x32xf32>,
    %c0_149 = arith.constant 0 : index
    %c0_150 = arith.constant 0 : index
    %c0_151 = arith.constant 0 : index
    %330 = vector.load %arg20[%c0_149, %c0_150, %c0_151] : memref<16x8x32xf32, #tpu.memory_space<vmem>>, vector<16x1x32xf32>
    %331 = vector.shape_cast %330 : vector<16x1x32xf32> to vector<16x32xf32>
    %332 = arith.truncf %331 : vector<16x32xf32> to vector<16x32xbf16>
    %c0_152 = arith.constant 0 : index
    %c0_153 = arith.constant 0 : index
    %333 = vector.load %arg17[%c0_152, %c0_153] : memref<32x128xbf16, #tpu.memory_space<vmem>>, vector<32x128xbf16>
    %cst_154 = arith.constant dense<0.000000e+00> : vector<16x128xf32>
    %334 = tpu.matmul %332, %333, %cst_154 {dimension_numbers = #tpu.dot_dimension_numbers<[1], [0], [0], [1], [0, 0, 1, 1], [], []>} : vector<16x32xbf16>, vector<32x128xbf16>, vector<16x128xf32> -> vector<16x128xf32>
    %c0_155 = arith.constant 0 : index
    %c0_156 = arith.constant 0 : index
    %335 = vector.load %arg18[%c0_155, %c0_156] : memref<1x128xf32, #tpu.memory_space<vmem>>, vector<1x128xf32>
    %336 = vector.broadcast %335 : vector<1x128xf32> to vector<16x128xf32>
    %337 = arith.addf %334, %336 : vector<16x128xf32>
    %338 = tpu.iota {dimensions = array<i32: 1>} : vector<16x128xi32>
    %c32_i32 = arith.constant 32 : i32
    %339 = vector.broadcast %c32_i32 : i32 to vector<16x128xi32>
    %340 = arith.cmpi eq, %338, %339 : vector<16x128xi32>
    %341 = arith.negf %337 : vector<16x128xf32>
    %342 = math.exp %341 : vector<16x128xf32>
    %cst_157 = arith.constant 1.000000e+00 : f32
    %343 = vector.broadcast %cst_157 : f32 to vector<16x128xf32>
    %344 = arith.addf %343, %342 : vector<16x128xf32>
    %345 = arith.divf %343, %344 : vector<16x128xf32>
    %346 = arith.select %340, %345, %337 : vector<16x128xi1>, vector<16x128xf32>
    %c0_158 = arith.constant 0 : index
    %c0_159 = arith.constant 0 : index
    %347 = vector.load %arg19[%c0_158, %c0_159] : memref<16x128xf32, #tpu.memory_space<vmem>>, vector<16x128xf32>
    tpu.vector_store %arg19[%c0_158, %c0_159], %346 {strides = array<i32>} : memref<16x128xf32, #tpu.memory_space<vmem>>, vector<16x128xf32>,
    return
  }
  func.func @transform_0(%arg0: i32) -> (i32, i32, i32) {
    %c0_i32 = arith.constant 0 : i32
    %c0_i32_0 = arith.constant 0 : i32
    %c0_i32_1 = arith.constant 0 : i32
    return %arg0, %c0_i32, %c0_i32_0 : i32, i32, i32
  }
  func.func @transform_1(%arg0: i32) -> (i32, i32) {
    %c0_i32 = arith.constant 0 : i32
    %c0_i32_0 = arith.constant 0 : i32
    return %arg0, %c0_i32 : i32, i32
  }
  func.func @transform_2(%arg0: i32) -> (i32, i32) {
    %c0_i32 = arith.constant 0 : i32
    %c0_i32_0 = arith.constant 0 : i32
    %c0_i32_1 = arith.constant 0 : i32
    return %c0_i32, %c0_i32_0 : i32, i32
  }
  func.func @transform_3(%arg0: i32) -> (i32, i32) {
    %c0_i32 = arith.constant 0 : i32
    %c0_i32_0 = arith.constant 0 : i32
    %c0_i32_1 = arith.constant 0 : i32
    return %c0_i32, %c0_i32_0 : i32, i32
  }
  func.func @transform_4(%arg0: i32) -> (i32, i32, i32) {
    %c0_i32 = arith.constant 0 : i32
    %c0_i32_0 = arith.constant 0 : i32
    %c0_i32_1 = arith.constant 0 : i32
    %c0_i32_2 = arith.constant 0 : i32
    return %c0_i32, %c0_i32_0, %c0_i32_1 : i32, i32, i32
  }
  func.func @transform_5(%arg0: i32) -> (i32, i32, i32) {
    %c0_i32 = arith.constant 0 : i32
    %c0_i32_0 = arith.constant 0 : i32
    %c0_i32_1 = arith.constant 0 : i32
    %c0_i32_2 = arith.constant 0 : i32
    return %c0_i32, %c0_i32_0, %c0_i32_1 : i32, i32, i32
  }
  func.func @transform_6(%arg0: i32) -> (i32, i32, i32) {
    %c0_i32 = arith.constant 0 : i32
    %c0_i32_0 = arith.constant 0 : i32
    %c0_i32_1 = arith.constant 0 : i32
    %c0_i32_2 = arith.constant 0 : i32
    return %c0_i32, %c0_i32_0, %c0_i32_1 : i32, i32, i32
  }
  func.func @transform_7(%arg0: i32) -> (i32, i32, i32) {
    %c0_i32 = arith.constant 0 : i32
    %c0_i32_0 = arith.constant 0 : i32
    %c0_i32_1 = arith.constant 0 : i32
    %c0_i32_2 = arith.constant 0 : i32
    return %c0_i32, %c0_i32_0, %c0_i32_1 : i32, i32, i32
  }
  func.func @transform_8(%arg0: i32) -> (i32, i32, i32) {
    %c0_i32 = arith.constant 0 : i32
    %c0_i32_0 = arith.constant 0 : i32
    %c0_i32_1 = arith.constant 0 : i32
    %c0_i32_2 = arith.constant 0 : i32
    return %c0_i32, %c0_i32_0, %c0_i32_1 : i32, i32, i32
  }
  func.func @transform_9(%arg0: i32) -> (i32, i32, i32) {
    %c0_i32 = arith.constant 0 : i32
    %c0_i32_0 = arith.constant 0 : i32
    %c0_i32_1 = arith.constant 0 : i32
    %c0_i32_2 = arith.constant 0 : i32
    return %c0_i32, %c0_i32_0, %c0_i32_1 : i32, i32, i32
  }
  func.func @transform_10(%arg0: i32) -> (i32, i32, i32) {
    %c0_i32 = arith.constant 0 : i32
    %c0_i32_0 = arith.constant 0 : i32
    %c0_i32_1 = arith.constant 0 : i32
    %c0_i32_2 = arith.constant 0 : i32
    return %c0_i32, %c0_i32_0, %c0_i32_1 : i32, i32, i32
  }
  func.func @transform_11(%arg0: i32) -> (i32, i32, i32) {
    %c0_i32 = arith.constant 0 : i32
    %c0_i32_0 = arith.constant 0 : i32
    %c0_i32_1 = arith.constant 0 : i32
    %c0_i32_2 = arith.constant 0 : i32
    return %c0_i32, %c0_i32_0, %c0_i32_1 : i32, i32, i32
  }
  func.func @transform_12(%arg0: i32) -> (i32, i32, i32) {
    %c0_i32 = arith.constant 0 : i32
    %c0_i32_0 = arith.constant 0 : i32
    %c0_i32_1 = arith.constant 0 : i32
    %c0_i32_2 = arith.constant 0 : i32
    return %c0_i32, %c0_i32_0, %c0_i32_1 : i32, i32, i32
  }
  func.func @transform_13(%arg0: i32) -> (i32, i32, i32) {
    %c0_i32 = arith.constant 0 : i32
    %c0_i32_0 = arith.constant 0 : i32
    %c0_i32_1 = arith.constant 0 : i32
    %c0_i32_2 = arith.constant 0 : i32
    return %c0_i32, %c0_i32_0, %c0_i32_1 : i32, i32, i32
  }
  func.func @transform_14(%arg0: i32) -> (i32, i32, i32) {
    %c0_i32 = arith.constant 0 : i32
    %c0_i32_0 = arith.constant 0 : i32
    %c0_i32_1 = arith.constant 0 : i32
    %c0_i32_2 = arith.constant 0 : i32
    return %c0_i32, %c0_i32_0, %c0_i32_1 : i32, i32, i32
  }
  func.func @transform_15(%arg0: i32) -> (i32, i32, i32) {
    %c0_i32 = arith.constant 0 : i32
    %c0_i32_0 = arith.constant 0 : i32
    %c0_i32_1 = arith.constant 0 : i32
    %c0_i32_2 = arith.constant 0 : i32
    return %c0_i32, %c0_i32_0, %c0_i32_1 : i32, i32, i32
  }
  func.func @transform_16(%arg0: i32) -> (i32, i32) {
    %c0_i32 = arith.constant 0 : i32
    %c0_i32_0 = arith.constant 0 : i32
    %c0_i32_1 = arith.constant 0 : i32
    return %c0_i32, %c0_i32_0 : i32, i32
  }
  func.func @transform_17(%arg0: i32) -> (i32, i32) {
    %c0_i32 = arith.constant 0 : i32
    %c0_i32_0 = arith.constant 0 : i32
    %c0_i32_1 = arith.constant 0 : i32
    return %c0_i32, %c0_i32_0 : i32, i32
  }
  func.func @transform_18(%arg0: i32) -> (i32, i32) {
    %c0_i32 = arith.constant 0 : i32
    %c0_i32_0 = arith.constant 0 : i32
    return %arg0, %c0_i32 : i32, i32
  }
}

</mosaic_0001>

<llo_original>
// kernel: tpu_custom_call.1
$region0: #{tpu_custom_call.1}
  #allocation0 [shape = 'u32[]', space=smem, size = 0x4, offset = 0x4, fixed_abs, tag = 'smem constant byte address 0x4 - core index']
  #allocation1 [shape = 'u32[72,128]{1,0:T(1,128)}', space=vmem, size = 0x9000, scoped, tag = 'internal scratch']
  #allocation2 [shape = 'f32[16,8,32]{2,1,0:T(8,128)}', space=vmem, size = 0x10000, scoped, tag = 'scratch operand']
  %s0 = inlined_call_operand.hbm [shape: f32[16,8,32], index: 0, kind: input, shape index: {}]
  %s1 = inlined_call_operand.vmem [shape: f32[16,8], index: 1, kind: input, shape index: {}]
  %s2 = inlined_call_operand.vmem [shape: f32[1,32], index: 2, kind: input, shape index: {}]
  %s3 = inlined_call_operand.hbm [shape: f32[1,32], index: 3, kind: input, shape index: {}]
  %s4 = inlined_call_operand.vmem [shape: bf16[2,32,96], index: 4, kind: input, shape index: {}]
  %s5 = inlined_call_operand.vmem [shape: f32[2,1,96], index: 5, kind: input, shape index: {}]
  %s6 = inlined_call_operand.vmem [shape: bf16[2,32,32], index: 6, kind: input, shape index: {}]
  %s7 = inlined_call_operand.hbm [shape: f32[2,1,32], index: 7, kind: input, shape index: {}]
  %s8 = inlined_call_operand.hbm [shape: f32[2,1,32], index: 8, kind: input, shape index: {}]
  %s9 = inlined_call_operand.hbm [shape: f32[2,1,32], index: 9, kind: input, shape index: {}]
  %s10 = inlined_call_operand.vmem [shape: bf16[2,32,64], index: 10, kind: input, shape index: {}]
  %s11 = inlined_call_operand.hbm [shape: f32[2,1,64], index: 11, kind: input, shape index: {}]
  %s12 = inlined_call_operand.vmem [shape: bf16[2,64,32], index: 12, kind: input, shape index: {}]
  %s13 = inlined_call_operand.hbm [shape: f32[2,1,32], index: 13, kind: input, shape index: {}]
  %s14 = inlined_call_operand.vmem [shape: f32[2,1,32], index: 14, kind: input, shape index: {}]
  %s15 = inlined_call_operand.hbm [shape: f32[2,1,32], index: 15, kind: input, shape index: {}]
  %s16 = inlined_call_operand.hbm [shape: bf16[32,128], index: 16, kind: input, shape index: {}]
  %s17 = inlined_call_operand.vmem [shape: f32[1,128], index: 17, kind: input, shape index: {}]
  %s18 = inlined_call_operand.hbm [shape: f32[16,128], index: 18, kind: output, shape index: {}]
  %s19 = sld [smem:[#allocation0]]
  $region118: #{tpu_custom_call.1} parent=0
    _
  %s21 = ssub.s32 1, %s19
  %s22 = scalar_select 0, %s21, %s19
  $region1: #{tpu_custom_call.1} parent=0
    #allocation3 [shape = 'u8[65536]{0}', space=vmem, size = 0x10000, scoped, tag = 'input window, operand 0, single buffered']
    #allocation4 [shape = 's32[1]{0}', space=sflag, size = 0x4, scoped, tag = 'scoped memory for tpu_custom_call.1']
    #allocation5 [shape = 's32[1]{0}', space=sflag, size = 0x4, scoped, tag = 'scoped memory for tpu_custom_call.1']
    #allocation6 [shape = 'u8[512]{0}', space=vmem, size = 0x400, scoped, tag = 'input window, operand 3, single buffered']
    #allocation7 [shape = 's32[1]{0}', space=sflag, size = 0x4, scoped, tag = 'scoped memory for tpu_custom_call.1']
    #allocation8 [shape = 'u8[1024]{0}', space=vmem, size = 0x400, scoped, tag = 'input window, operand 7, single buffered']
    #allocation9 [shape = 'u8[1024]{0}', space=vmem, size = 0x400, scoped, tag = 'input window, operand 8, single buffered']
    #allocation10 [shape = 's32[1]{0}', space=sflag, size = 0x4, scoped, tag = 'scoped memory for tpu_custom_call.1']
    #allocation11 [shape = 'u8[1024]{0}', space=vmem, size = 0x400, scoped, tag = 'input window, operand 9, single buffered']
    #allocation12 [shape = 'u8[1024]{0}', space=vmem, size = 0x400, scoped, tag = 'input window, operand 11, single buffered']
    #allocation13 [shape = 's32[1]{0}', space=sflag, size = 0x4, scoped, tag = 'scoped memory for tpu_custom_call.1']
    #allocation14 [shape = 'u8[1024]{0}', space=vmem, size = 0x400, scoped, tag = 'input window, operand 13, single buffered']
    #allocation15 [shape = 'u8[1024]{0}', space=vmem, size = 0x400, scoped, tag = 'input window, operand 15, single buffered']
    #allocation16 [shape = 's32[1]{0}', space=sflag, size = 0x4, scoped, tag = 'scoped memory for tpu_custom_call.1']
    #allocation17 [shape = 'u8[8192]{0}', space=vmem, size = 0x2000, scoped, tag = 'input window, operand 16, single buffered']
    #allocation18 [shape = 'u8[8192]{0}', space=vmem, size = 0x2000, scoped, tag = 'output window, operand 0, single buffered']
    %23 = vsyncpa [#allocation4], 0
    %24 = vsyncpa [#allocation7], 0
    %25 = vsyncpa [#allocation10], 0
    %26 = vsyncpa [#allocation13], 0
    %27 = vsyncpa [#allocation16], 0
    %28 = vsyncpa [#allocation5], 0
    // Predicated region
    $region2: #{tpu_custom_call.1} parent=1 // pred_check
      _
    $region3: #{tpu_custom_call.1} parent=1 // pred_check_branch
      %30 = sbr.rel (0) target = $region5
    $region4: #{tpu_custom_call.1} parent=1 // pred_region
      %32 = vsyncadd [#allocation4], 0
      %s33 = sshll.u32 %s0, 4
      %s34 = int_to_ptr.hbm [resolvable:$true] %s33
      %s35 = sshll.u32 [#allocation3], 4
      %s36 = int_to_ptr.vmem [resolvable:$true] %s35
      %41 = dma.hbm_to_vmem [thread:$0]  %s34, 2048, %s36, [#allocation4], 128, 128, 8
    $region5: #{tpu_custom_call.1} parent=1 // pred_fallthru
      _
    // Predicated region
    $region6: #{tpu_custom_call.1} parent=1 // pred_check
      _
    $region7: #{tpu_custom_call.1} parent=1 // pred_check_branch
      %43 = sbr.rel (0) target = $region9
    $region8: #{tpu_custom_call.1} parent=1 // pred_region
      _
    $region9: #{tpu_custom_call.1} parent=1 // pred_fallthru
      _
    // Predicated region
    $region10: #{tpu_custom_call.1} parent=1 // pred_check
      _
    $region11: #{tpu_custom_call.1} parent=1 // pred_check_branch
      %45 = sbr.rel (0) target = $region13
    $region12: #{tpu_custom_call.1} parent=1 // pred_region
      _
    $region13: #{tpu_custom_call.1} parent=1 // pred_fallthru
      _
    // Predicated region
    $region14: #{tpu_custom_call.1} parent=1 // pred_check
      _
    $region15: #{tpu_custom_call.1} parent=1 // pred_check_branch
      %47 = sbr.rel (0) target = $region17
    $region16: #{tpu_custom_call.1} parent=1 // pred_region
      %49 = vsyncadd [#allocation7], 0
      %s51 = sshll.u32 %s3, 4
      %s52 = int_to_ptr.hbm [resolvable:$true] %s51
      %s53 = sshll.u32 [#allocation6], 4
      %s54 = int_to_ptr.vmem [resolvable:$true] %s53
      %56 = dma.hbm_to_vmem [thread:$0]  %s52, 16, %s54, [#allocation7]
    $region17: #{tpu_custom_call.1} parent=1 // pred_fallthru
      _
    // Predicated region
    $region18: #{tpu_custom_call.1} parent=1 // pred_check
      _
    $region19: #{tpu_custom_call.1} parent=1 // pred_check_branch
      %58 = sbr.rel (0) target = $region21
    $region20: #{tpu_custom_call.1} parent=1 // pred_region
      _
    $region21: #{tpu_custom_call.1} parent=1 // pred_fallthru
      _
    // Predicated region
    $region22: #{tpu_custom_call.1} parent=1 // pred_check
      _
    $region23: #{tpu_custom_call.1} parent=1 // pred_check_branch
      %60 = sbr.rel (0) target = $region25
    $region24: #{tpu_custom_call.1} parent=1 // pred_region
      _
    $region25: #{tpu_custom_call.1} parent=1 // pred_fallthru
      _
    // Predicated region
    $region26: #{tpu_custom_call.1} parent=1 // pred_check
      _
    $region27: #{tpu_custom_call.1} parent=1 // pred_check_branch
      %62 = sbr.rel (0) target = $region29
    $region28: #{tpu_custom_call.1} parent=1 // pred_region
      _
    $region29: #{tpu_custom_call.1} parent=1 // pred_fallthru
      _
    // Predicated region
    $region30: #{tpu_custom_call.1} parent=1 // pred_check
      _
    $region31: #{tpu_custom_call.1} parent=1 // pred_check_branch
      %64 = sbr.rel (0) target = $region33
    $region32: #{tpu_custom_call.1} parent=1 // pred_region
      %66 = vsyncadd [#allocation7], 0
      %s67 = sshll.u32 %s7, 4
      %s68 = int_to_ptr.hbm [resolvable:$true] %s67
      %s69 = sshll.u32 [#allocation8], 4
      %s70 = int_to_ptr.vmem [resolvable:$true] %s69
      %75 = dma.hbm_to_vmem [thread:$0]  %s68, 32, %s70, [#allocation7], 16, 16, 1
    $region33: #{tpu_custom_call.1} parent=1 // pred_fallthru
      _
    // Predicated region
    $region34: #{tpu_custom_call.1} parent=1 // pred_check
      _
    $region35: #{tpu_custom_call.1} parent=1 // pred_check_branch
      %77 = sbr.rel (0) target = $region37
    $region36: #{tpu_custom_call.1} parent=1 // pred_region
      %79 = vsyncadd [#allocation10], 0
      %s80 = sshll.u32 %s8, 4
      %s81 = int_to_ptr.hbm [resolvable:$true] %s80
      %s82 = sshll.u32 [#allocation9], 4
      %s83 = int_to_ptr.vmem [resolvable:$true] %s82
      %88 = dma.hbm_to_vmem [thread:$0]  %s81, 32, %s83, [#allocation10], 16, 16, 1
    $region37: #{tpu_custom_call.1} parent=1 // pred_fallthru
      _
    // Predicated region
    $region38: #{tpu_custom_call.1} parent=1 // pred_check
      _
    $region39: #{tpu_custom_call.1} parent=1 // pred_check_branch
      %90 = sbr.rel (0) target = $region41
    $region40: #{tpu_custom_call.1} parent=1 // pred_region
      %92 = vsyncadd [#allocation10], 0
      %s93 = sshll.u32 %s9, 4
      %s94 = int_to_ptr.hbm [resolvable:$true] %s93
      %s95 = sshll.u32 [#allocation11], 4
      %s96 = int_to_ptr.vmem [resolvable:$true] %s95
      %101 = dma.hbm_to_vmem [thread:$0]  %s94, 32, %s96, [#allocation10], 16, 16, 1
    $region41: #{tpu_custom_call.1} parent=1 // pred_fallthru
      _
    // Predicated region
    $region42: #{tpu_custom_call.1} parent=1 // pred_check
      _
    $region43: #{tpu_custom_call.1} parent=1 // pred_check_branch
      %103 = sbr.rel (0) target = $region45
    $region44: #{tpu_custom_call.1} parent=1 // pred_region
      _
    $region45: #{tpu_custom_call.1} parent=1 // pred_fallthru
      _
    // Predicated region
    $region46: #{tpu_custom_call.1} parent=1 // pred_check
      _
    $region47: #{tpu_custom_call.1} parent=1 // pred_check_branch
      %105 = sbr.rel (0) target = $region49
    $region48: #{tpu_custom_call.1} parent=1 // pred_region
      %107 = vsyncadd [#allocation13], 0
      %s108 = sshll.u32 %s11, 4
      %s109 = int_to_ptr.hbm [resolvable:$true] %s108
      %s110 = sshll.u32 [#allocation12], 4
      %s111 = int_to_ptr.vmem [resolvable:$true] %s110
      %116 = dma.hbm_to_vmem [thread:$0]  %s109, 32, %s111, [#allocation13], 16, 16, 1
    $region49: #{tpu_custom_call.1} parent=1 // pred_fallthru
      _
    // Predicated region
    $region50: #{tpu_custom_call.1} parent=1 // pred_check
      _
    $region51: #{tpu_custom_call.1} parent=1 // pred_check_branch
      %118 = sbr.rel (0) target = $region53
    $region52: #{tpu_custom_call.1} parent=1 // pred_region
      _
    $region53: #{tpu_custom_call.1} parent=1 // pred_fallthru
      _
    // Predicated region
    $region54: #{tpu_custom_call.1} parent=1 // pred_check
      _
    $region55: #{tpu_custom_call.1} parent=1 // pred_check_branch
      %120 = sbr.rel (0) target = $region57
    $region56: #{tpu_custom_call.1} parent=1 // pred_region
      %122 = vsyncadd [#allocation13], 0
      %s123 = sshll.u32 %s13, 4
      %s124 = int_to_ptr.hbm [resolvable:$true] %s123
      %s125 = sshll.u32 [#allocation14], 4
      %s126 = int_to_ptr.vmem [resolvable:$true] %s125
      %131 = dma.hbm_to_vmem [thread:$0]  %s124, 32, %s126, [#allocation13], 16, 16, 1
    $region57: #{tpu_custom_call.1} parent=1 // pred_fallthru
      _
    // Predicated region
    $region58: #{tpu_custom_call.1} parent=1 // pred_check
      _
    $region59: #{tpu_custom_call.1} parent=1 // pred_check_branch
      %133 = sbr.rel (0) target = $region61
    $region60: #{tpu_custom_call.1} parent=1 // pred_region
      _
    $region61: #{tpu_custom_call.1} parent=1 // pred_fallthru
      _
    // Predicated region
    $region62: #{tpu_custom_call.1} parent=1 // pred_check
      _
    $region63: #{tpu_custom_call.1} parent=1 // pred_check_branch
      %135 = sbr.rel (0) target = $region65
    $region64: #{tpu_custom_call.1} parent=1 // pred_region
      %137 = vsyncadd [#allocation16], 0
      %s138 = sshll.u32 %s15, 4
      %s139 = int_to_ptr.hbm [resolvable:$true] %s138
      %s140 = sshll.u32 [#allocation15], 4
      %s141 = int_to_ptr.vmem [resolvable:$true] %s140
      %146 = dma.hbm_to_vmem [thread:$0]  %s139, 32, %s141, [#allocation16], 16, 16, 1
    $region65: #{tpu_custom_call.1} parent=1 // pred_fallthru
      _
    // Predicated region
    $region66: #{tpu_custom_call.1} parent=1 // pred_check
      _
    $region67: #{tpu_custom_call.1} parent=1 // pred_check_branch
      %148 = sbr.rel (0) target = $region69
    $region68: #{tpu_custom_call.1} parent=1 // pred_region
      %150 = vsyncadd [#allocation16], 0
      %s151 = sshll.u32 %s16, 4
      %s152 = int_to_ptr.hbm [resolvable:$true] %s151
      %s153 = sshll.u32 [#allocation17], 4
      %s154 = int_to_ptr.vmem [resolvable:$true] %s153
      %159 = dma.hbm_to_vmem [thread:$0]  %s152, 256, %s154, [#allocation16], 64, 64, 4
    $region69: #{tpu_custom_call.1} parent=1 // pred_fallthru
      _
    // Predicated region
    $region70: #{tpu_custom_call.1} parent=1 // pred_check
      _
    $region71: #{tpu_custom_call.1} parent=1 // pred_check_branch
      %161 = sbr.rel (0) target = $region73
    $region72: #{tpu_custom_call.1} parent=1 // pred_region
      _
    $region73: #{tpu_custom_call.1} parent=1 // pred_fallthru
      _
    // Predicated region
    $region74: #{tpu_custom_call.1} parent=1 // pred_check
      _
    $region75: #{tpu_custom_call.1} parent=1 // pred_check_branch
      %163 = sbr.rel (0) target = $region77
    $region76: #{tpu_custom_call.1} parent=1 // pred_region
      %165 = dma.done [#allocation4], 2048
    $region77: #{tpu_custom_call.1} parent=1 // pred_fallthru
      _
    // Predicated region
    $region78: #{tpu_custom_call.1} parent=1 // pred_check
      _
    $region79: #{tpu_custom_call.1} parent=1 // pred_check_branch
      %167 = sbr.rel (0) target = $region81
    $region80: #{tpu_custom_call.1} parent=1 // pred_region
      %169 = dma.done [#allocation7], 16
    $region81: #{tpu_custom_call.1} parent=1 // pred_fallthru
      _
    // Predicated region
    $region82: #{tpu_custom_call.1} parent=1 // pred_check
      _
    $region83: #{tpu_custom_call.1} parent=1 // pred_check_branch
      %171 = sbr.rel (0) target = $region85
    $region84: #{tpu_custom_call.1} parent=1 // pred_region
      %173 = dma.done [#allocation7], 32
    $region85: #{tpu_custom_call.1} parent=1 // pred_fallthru
      _
    // Predicated region
    $region86: #{tpu_custom_call.1} parent=1 // pred_check
      _
    $region87: #{tpu_custom_call.1} parent=1 // pred_check_branch
      %175 = sbr.rel (0) target = $region89
    $region88: #{tpu_custom_call.1} parent=1 // pred_region
      %177 = dma.done [#allocation10], 32
    $region89: #{tpu_custom_call.1} parent=1 // pred_fallthru
      _
    // Predicated region
    $region90: #{tpu_custom_call.1} parent=1 // pred_check
      _
    $region91: #{tpu_custom_call.1} parent=1 // pred_check_branch
      %179 = sbr.rel (0) target = $region93
    $region92: #{tpu_custom_call.1} parent=1 // pred_region
      %181 = dma.done [#allocation10], 32
    $region93: #{tpu_custom_call.1} parent=1 // pred_fallthru
      _
    // Predicated region
    $region94: #{tpu_custom_call.1} parent=1 // pred_check
      _
    $region95: #{tpu_custom_call.1} parent=1 // pred_check_branch
      %183 = sbr.rel (0) target = $region97
    $region96: #{tpu_custom_call.1} parent=1 // pred_region
      %185 = dma.done [#allocation13], 32
    $region97: #{tpu_custom_call.1} parent=1 // pred_fallthru
      _
    // Predicated region
    $region98: #{tpu_custom_call.1} parent=1 // pred_check
      _
    $region99: #{tpu_custom_call.1} parent=1 // pred_check_branch
      %187 = sbr.rel (0) target = $region101
    $region100: #{tpu_custom_call.1} parent=1 // pred_region
      %189 = dma.done [#allocation13], 32
    $region101: #{tpu_custom_call.1} parent=1 // pred_fallthru
      _
    // Predicated region
    $region102: #{tpu_custom_call.1} parent=1 // pred_check
      _
    $region103: #{tpu_custom_call.1} parent=1 // pred_check_branch
      %191 = sbr.rel (0) target = $region105
    $region104: #{tpu_custom_call.1} parent=1 // pred_region
      %193 = dma.done [#allocation16], 32
    $region105: #{tpu_custom_call.1} parent=1 // pred_fallthru
      _
    // Predicated region
    $region106: #{tpu_custom_call.1} parent=1 // pred_check
      _
    $region107: #{tpu_custom_call.1} parent=1 // pred_check_branch
      %195 = sbr.rel (0) target = $region109
    $region108: #{tpu_custom_call.1} parent=1 // pred_region
      %197 = dma.done [#allocation16], 256
    $region109: #{tpu_custom_call.1} parent=1 // pred_fallthru
      _
    %v199 = vld [vmem:[#allocation3] sm:$0xff]
    %v200 = vld [vmem:[#allocation3 + $0x8] sm:$0xff]
    %v201 = vld [vmem:[#allocation3 + $0x10] sm:$0xff]
    %v202 = vld [vmem:[#allocation3 + $0x18] sm:$0xff]
    %v203 = vld [vmem:[#allocation3 + $0x20] sm:$0xff]
    %v204 = vld [vmem:[#allocation3 + $0x28] sm:$0xff]
    %v205 = vld [vmem:[#allocation3 + $0x30] sm:$0xff]
    %v206 = vld [vmem:[#allocation3 + $0x38] sm:$0xff]
    %v207 = vld [vmem:[#allocation3 + $0x40] sm:$0xff]
    %v208 = vld [vmem:[#allocation3 + $0x48] sm:$0xff]
    %v209 = vld [vmem:[#allocation3 + $0x50] sm:$0xff]
    %v210 = vld [vmem:[#allocation3 + $0x58] sm:$0xff]
    %v211 = vld [vmem:[#allocation3 + $0x60] sm:$0xff]
    %v212 = vld [vmem:[#allocation3 + $0x68] sm:$0xff]
    %v213 = vld [vmem:[#allocation3 + $0x70] sm:$0xff]
    %v214 = vld [vmem:[#allocation3 + $0x78] sm:$0xff]
    %v215 = vld [vmem:[%s1] sm:$0xff]
    %v216 = vld [vmem:[%s1 + $0x8] sm:$0xff]
    %v219 = vrot.slane %v215, 1
    %v220 = vrot.slane %v215, 2
    %v221 = vrot.slane %v215, 3
    %v222 = vrot.slane %v215, 4
    %v223 = vrot.slane %v215, 5
    %v224 = vrot.slane %v215, 6
    %v225 = vrot.slane %v215, 7
    %v226 = vrot.slane %v216, 1
    %v227 = vrot.slane %v216, 2
    %v228 = vrot.slane %v216, 3
    %v229 = vrot.slane %v216, 4
    %v230 = vrot.slane %v216, 5
    %v231 = vrot.slane %v216, 6
    %v232 = vrot.slane %v216, 7
    %v233 = vld [vmem:[%s2] sm:$0x1]
    %v234 = vld [vmem:[#allocation6] sm:$0x1]
    %vm235 = vcmask 261120
    %v236 = vsel %vm235, %v199, 0.0
    %237 = vadd.xlane.f32.xlu0 %v236
    %v238 = vpop.xlane.xlu0 %237
    %v239 = vsel %vm235, %v200, 0.0
    %240 = vadd.xlane.f32.xlu0 %v239
    %v241 = vpop.xlane.xlu0 %240
    %v242 = vsel %vm235, %v201, 0.0
    %243 = vadd.xlane.f32.xlu0 %v242
    %v244 = vpop.xlane.xlu0 %243
    %v245 = vsel %vm235, %v202, 0.0
    %246 = vadd.xlane.f32.xlu0 %v245
    %v247 = vpop.xlane.xlu0 %246
    %v248 = vsel %vm235, %v203, 0.0
    %249 = vadd.xlane.f32.xlu0 %v248
    %v250 = vpop.xlane.xlu0 %249
    %v251 = vsel %vm235, %v204, 0.0
    %252 = vadd.xlane.f32.xlu0 %v251
    %v253 = vpop.xlane.xlu0 %252
    %v254 = vsel %vm235, %v205, 0.0
    %255 = vadd.xlane.f32.xlu0 %v254
    %v256 = vpop.xlane.xlu0 %255
    %v257 = vsel %vm235, %v206, 0.0
    %258 = vadd.xlane.f32.xlu0 %v257
    %v259 = vpop.xlane.xlu0 %258
    %v260 = vsel %vm235, %v207, 0.0
    %261 = vadd.xlane.f32.xlu0 %v260
    %v262 = vpop.xlane.xlu0 %261
    %v263 = vsel %vm235, %v208, 0.0
    %264 = vadd.xlane.f32.xlu0 %v263
    %v265 = vpop.xlane.xlu0 %264
    %v266 = vsel %vm235, %v209, 0.0
    %267 = vadd.xlane.f32.xlu0 %v266
    %v268 = vpop.xlane.xlu0 %267
    %v269 = vsel %vm235, %v210, 0.0
    %270 = vadd.xlane.f32.xlu0 %v269
    %v271 = vpop.xlane.xlu0 %270
    %v272 = vsel %vm235, %v211, 0.0
    %273 = vadd.xlane.f32.xlu0 %v272
    %v274 = vpop.xlane.xlu0 %273
    %v275 = vsel %vm235, %v212, 0.0
    %276 = vadd.xlane.f32.xlu0 %v275
    %v277 = vpop.xlane.xlu0 %276
    %v278 = vsel %vm235, %v213, 0.0
    %279 = vadd.xlane.f32.xlu0 %v278
    %v280 = vpop.xlane.xlu0 %279
    %v281 = vsel %vm235, %v214, 0.0
    %282 = vadd.xlane.f32.xlu0 %v281
    %v283 = vpop.xlane.xlu0 %282
    %v284 = vrcp.pop 32.0
    %v285 = vmul.f32 32.0, %v284
    %v286 = vsub.f32 1.0, %v285
    %v287 = vmul.f32 %v284, %v286
    %v288 = vadd.f32 %v284, %v287
    %vm289 = vweird.f32 %v284
    %v290 = vsel %vm289, %v284, %v288
    %v291 = vmul.f32 %v238, %v290
    %v292 = vmul.f32 %v241, %v290
    %v293 = vmul.f32 %v244, %v290
    %v294 = vmul.f32 %v247, %v290
    %v295 = vmul.f32 %v250, %v290
    %v296 = vmul.f32 %v253, %v290
    %v297 = vmul.f32 %v256, %v290
    %v298 = vmul.f32 %v259, %v290
    %v299 = vmul.f32 %v262, %v290
    %v300 = vmul.f32 %v265, %v290
    %v301 = vmul.f32 %v268, %v290
    %v302 = vmul.f32 %v271, %v290
    %v303 = vmul.f32 %v274, %v290
    %v304 = vmul.f32 %v277, %v290
    %v305 = vmul.f32 %v280, %v290
    %v306 = vmul.f32 %v283, %v290
    %v307 = vsub.f32 %v199, %v291
    %v308 = vsub.f32 %v200, %v292
    %v309 = vsub.f32 %v201, %v293
    %v310 = vsub.f32 %v202, %v294
    %v311 = vsub.f32 %v203, %v295
    %v312 = vsub.f32 %v204, %v296
    %v313 = vsub.f32 %v205, %v297
    %v314 = vsub.f32 %v206, %v298
    %v315 = vsub.f32 %v207, %v299
    %v316 = vsub.f32 %v208, %v300
    %v317 = vsub.f32 %v209, %v301
    %v318 = vsub.f32 %v210, %v302
    %v319 = vsub.f32 %v211, %v303
    %v320 = vsub.f32 %v212, %v304
    %v321 = vsub.f32 %v213, %v305
    %v322 = vsub.f32 %v214, %v306
    %v323 = vmul.f32 %v307, %v307
    %v324 = vmul.f32 %v308, %v308
    %v325 = vmul.f32 %v309, %v309
    %v326 = vmul.f32 %v310, %v310
    %v327 = vmul.f32 %v311, %v311
    %v328 = vmul.f32 %v312, %v312
    %v329 = vmul.f32 %v313, %v313
    %v330 = vmul.f32 %v314, %v314
    %v331 = vmul.f32 %v315, %v315
    %v332 = vmul.f32 %v316, %v316
    %v333 = vmul.f32 %v317, %v317
    %v334 = vmul.f32 %v318, %v318
    %v335 = vmul.f32 %v319, %v319
    %v336 = vmul.f32 %v320, %v320
    %v337 = vmul.f32 %v321, %v321
    %v338 = vmul.f32 %v322, %v322
    %v339 = vsel %vm235, %v323, 0.0
    %340 = vadd.xlane.f32.xlu0 %v339
    %v341 = vpop.xlane.xlu0 %340
    %v342 = vsel %vm235, %v324, 0.0
    %343 = vadd.xlane.f32.xlu0 %v342
    %v344 = vpop.xlane.xlu0 %343
    %v345 = vsel %vm235, %v325, 0.0
    %346 = vadd.xlane.f32.xlu0 %v345
    %v347 = vpop.xlane.xlu0 %346
    %v348 = vsel %vm235, %v326, 0.0
    %349 = vadd.xlane.f32.xlu0 %v348
    %v350 = vpop.xlane.xlu0 %349
    %v351 = vsel %vm235, %v327, 0.0
    %352 = vadd.xlane.f32.xlu0 %v351
    %v353 = vpop.xlane.xlu0 %352
    %v354 = vsel %vm235, %v328, 0.0
    %355 = vadd.xlane.f32.xlu0 %v354
    %v356 = vpop.xlane.xlu0 %355
    %v357 = vsel %vm235, %v329, 0.0
    %358 = vadd.xlane.f32.xlu0 %v357
    %v359 = vpop.xlane.xlu0 %358
    %v360 = vsel %vm235, %v330, 0.0
    %361 = vadd.xlane.f32.xlu0 %v360
    %v362 = vpop.xlane.xlu0 %361
    %v363 = vsel %vm235, %v331, 0.0
    %364 = vadd.xlane.f32.xlu0 %v363
    %v365 = vpop.xlane.xlu0 %364
    %v366 = vsel %vm235, %v332, 0.0
    %367 = vadd.xlane.f32.xlu0 %v366
    %v368 = vpop.xlane.xlu0 %367
    %v369 = vsel %vm235, %v333, 0.0
    %370 = vadd.xlane.f32.xlu0 %v369
    %v371 = vpop.xlane.xlu0 %370
    %v372 = vsel %vm235, %v334, 0.0
    %373 = vadd.xlane.f32.xlu0 %v372
    %v374 = vpop.xlane.xlu0 %373
    %v375 = vsel %vm235, %v335, 0.0
    %376 = vadd.xlane.f32.xlu0 %v375
    %v377 = vpop.xlane.xlu0 %376
    %v378 = vsel %vm235, %v336, 0.0
    %379 = vadd.xlane.f32.xlu0 %v378
    %v380 = vpop.xlane.xlu0 %379
    %v381 = vsel %vm235, %v337, 0.0
    %382 = vadd.xlane.f32.xlu0 %v381
    %v383 = vpop.xlane.xlu0 %382
    %v384 = vsel %vm235, %v338, 0.0
    %385 = vadd.xlane.f32.xlu0 %v384
    %v386 = vpop.xlane.xlu0 %385
    %v387 = vmul.f32 %v341, %v290
    %v388 = vmul.f32 %v344, %v290
    %v389 = vmul.f32 %v347, %v290
    %v390 = vmul.f32 %v350, %v290
    %v391 = vmul.f32 %v353, %v290
    %v392 = vmul.f32 %v356, %v290
    %v393 = vmul.f32 %v359, %v290
    %v394 = vmul.f32 %v362, %v290
    %v395 = vmul.f32 %v365, %v290
    %v396 = vmul.f32 %v368, %v290
    %v397 = vmul.f32 %v371, %v290
    %v398 = vmul.f32 %v374, %v290
    %v399 = vmul.f32 %v377, %v290
    %v400 = vmul.f32 %v380, %v290
    %v401 = vmul.f32 %v383, %v290
    %v402 = vmul.f32 %v386, %v290
    %v403 = vadd.f32 %v387, 1e-12
    %v404 = vadd.f32 %v388, 1e-12
    %v405 = vadd.f32 %v389, 1e-12
    %v406 = vadd.f32 %v390, 1e-12
    %v407 = vadd.f32 %v391, 1e-12
    %v408 = vadd.f32 %v392, 1e-12
    %v409 = vadd.f32 %v393, 1e-12
    %v410 = vadd.f32 %v394, 1e-12
    %v411 = vadd.f32 %v395, 1e-12
    %v412 = vadd.f32 %v396, 1e-12
    %v413 = vadd.f32 %v397, 1e-12
    %v414 = vadd.f32 %v398, 1e-12
    %v415 = vadd.f32 %v399, 1e-12
    %v416 = vadd.f32 %v400, 1e-12
    %v417 = vadd.f32 %v401, 1e-12
    %v418 = vadd.f32 %v402, 1e-12
    %v419 = vrsqrt.pop %v403
    %v420 = vmul.f32 %v419, %v403
    %v421 = vmul.f32 %v420, %v419
    %v422 = vmul.f32 0.5, %v421
    %v423 = vsub.f32 1.5, %v422
    %v424 = vmul.f32 %v419, %v423
    %vm425 = vweird.f32 %v403
    %vm426 = vweird.f32 %v419
    %vm427 = vmor %vm425, %vm426
    %v428 = vsel %vm427, %v419, %v424
    %v429 = vrsqrt.pop %v404
    %v430 = vmul.f32 %v429, %v404
    %v431 = vmul.f32 %v430, %v429
    %v432 = vmul.f32 0.5, %v431
    %v433 = vsub.f32 1.5, %v432
    %v434 = vmul.f32 %v429, %v433
    %vm435 = vweird.f32 %v404
    %vm436 = vweird.f32 %v429
    %vm437 = vmor %vm435, %vm436
    %v438 = vsel %vm437, %v429, %v434
    %v439 = vrsqrt.pop %v405
    %v440 = vmul.f32 %v439, %v405
    %v441 = vmul.f32 %v440, %v439
    %v442 = vmul.f32 0.5, %v441
    %v443 = vsub.f32 1.5, %v442
    %v444 = vmul.f32 %v439, %v443
    %vm445 = vweird.f32 %v405
    %vm446 = vweird.f32 %v439
    %vm447 = vmor %vm445, %vm446
    %v448 = vsel %vm447, %v439, %v444
    %v449 = vrsqrt.pop %v406
    %v450 = vmul.f32 %v449, %v406
    %v451 = vmul.f32 %v450, %v449
    %v452 = vmul.f32 0.5, %v451
    %v453 = vsub.f32 1.5, %v452
    %v454 = vmul.f32 %v449, %v453
    %vm455 = vweird.f32 %v406
    %vm456 = vweird.f32 %v449
    %vm457 = vmor %vm455, %vm456
    %v458 = vsel %vm457, %v449, %v454
    %v459 = vrsqrt.pop %v407
    %v460 = vmul.f32 %v459, %v407
    %v461 = vmul.f32 %v460, %v459
    %v462 = vmul.f32 0.5, %v461
    %v463 = vsub.f32 1.5, %v462
    %v464 = vmul.f32 %v459, %v463
    %vm465 = vweird.f32 %v407
    %vm466 = vweird.f32 %v459
    %vm467 = vmor %vm465, %vm466
    %v468 = vsel %vm467, %v459, %v464
    %v469 = vrsqrt.pop %v408
    %v470 = vmul.f32 %v469, %v408
    %v471 = vmul.f32 %v470, %v469
    %v472 = vmul.f32 0.5, %v471
    %v473 = vsub.f32 1.5, %v472
    %v474 = vmul.f32 %v469, %v473
    %vm475 = vweird.f32 %v408
    %vm476 = vweird.f32 %v469
    %vm477 = vmor %vm475, %vm476
    %v478 = vsel %vm477, %v469, %v474
    %v479 = vrsqrt.pop %v409
    %v480 = vmul.f32 %v479, %v409
    %v481 = vmul.f32 %v480, %v479
    %v482 = vmul.f32 0.5, %v481
    %v483 = vsub.f32 1.5, %v482
    %v484 = vmul.f32 %v479, %v483
    %vm485 = vweird.f32 %v409
    %vm486 = vweird.f32 %v479
    %vm487 = vmor %vm485, %vm486
    %v488 = vsel %vm487, %v479, %v484
    %v489 = vrsqrt.pop %v410
    %v490 = vmul.f32 %v489, %v410
    %v491 = vmul.f32 %v490, %v489
    %v492 = vmul.f32 0.5, %v491
    %v493 = vsub.f32 1.5, %v492
    %v494 = vmul.f32 %v489, %v493
    %vm495 = vweird.f32 %v410
    %vm496 = vweird.f32 %v489
    %vm497 = vmor %vm495, %vm496
    %v498 = vsel %vm497, %v489, %v494
    %v499 = vrsqrt.pop %v411
    %v500 = vmul.f32 %v499, %v411
    %v501 = vmul.f32 %v500, %v499
    %v502 = vmul.f32 0.5, %v501
    %v503 = vsub.f32 1.5, %v502
    %v504 = vmul.f32 %v499, %v503
    %vm505 = vweird.f32 %v411
    %vm506 = vweird.f32 %v499
    %vm507 = vmor %vm505, %vm506
    %v508 = vsel %vm507, %v499, %v504
    %v509 = vrsqrt.pop %v412
    %v510 = vmul.f32 %v509, %v412
    %v511 = vmul.f32 %v510, %v509
    %v512 = vmul.f32 0.5, %v511
    %v513 = vsub.f32 1.5, %v512
    %v514 = vmul.f32 %v509, %v513
    %vm515 = vweird.f32 %v412
    %vm516 = vweird.f32 %v509
    %vm517 = vmor %vm515, %vm516
    %v518 = vsel %vm517, %v509, %v514
    %v519 = vrsqrt.pop %v413
    %v520 = vmul.f32 %v519, %v413
    %v521 = vmul.f32 %v520, %v519
    %v522 = vmul.f32 0.5, %v521
    %v523 = vsub.f32 1.5, %v522
    %v524 = vmul.f32 %v519, %v523
    %vm525 = vweird.f32 %v413
    %vm526 = vweird.f32 %v519
    %vm527 = vmor %vm525, %vm526
    %v528 = vsel %vm527, %v519, %v524
    %v529 = vrsqrt.pop %v414
    %v530 = vmul.f32 %v529, %v414
    %v531 = vmul.f32 %v530, %v529
    %v532 = vmul.f32 0.5, %v531
    %v533 = vsub.f32 1.5, %v532
    %v534 = vmul.f32 %v529, %v533
    %vm535 = vweird.f32 %v414
    %vm536 = vweird.f32 %v529
    %vm537 = vmor %vm535, %vm536
    %v538 = vsel %vm537, %v529, %v534
    %v539 = vrsqrt.pop %v415
    %v540 = vmul.f32 %v539, %v415
    %v541 = vmul.f32 %v540, %v539
    %v542 = vmul.f32 0.5, %v541
    %v543 = vsub.f32 1.5, %v542
    %v544 = vmul.f32 %v539, %v543
    %vm545 = vweird.f32 %v415
    %vm546 = vweird.f32 %v539
    %vm547 = vmor %vm545, %vm546
    %v548 = vsel %vm547, %v539, %v544
    %v549 = vrsqrt.pop %v416
    %v550 = vmul.f32 %v549, %v416
    %v551 = vmul.f32 %v550, %v549
    %v552 = vmul.f32 0.5, %v551
    %v553 = vsub.f32 1.5, %v552
    %v554 = vmul.f32 %v549, %v553
    %vm555 = vweird.f32 %v416
    %vm556 = vweird.f32 %v549
    %vm557 = vmor %vm555, %vm556
    %v558 = vsel %vm557, %v549, %v554
    %v559 = vrsqrt.pop %v417
    %v560 = vmul.f32 %v559, %v417
    %v561 = vmul.f32 %v560, %v559
    %v562 = vmul.f32 0.5, %v561
    %v563 = vsub.f32 1.5, %v562
    %v564 = vmul.f32 %v559, %v563
    %vm565 = vweird.f32 %v417
    %vm566 = vweird.f32 %v559
    %vm567 = vmor %vm565, %vm566
    %v568 = vsel %vm567, %v559, %v564
    %v569 = vrsqrt.pop %v418
    %v570 = vmul.f32 %v569, %v418
    %v571 = vmul.f32 %v570, %v569
    %v572 = vmul.f32 0.5, %v571
    %v573 = vsub.f32 1.5, %v572
    %v574 = vmul.f32 %v569, %v573
    %vm575 = vweird.f32 %v418
    %vm576 = vweird.f32 %v569
    %vm577 = vmor %vm575, %vm576
    %v578 = vsel %vm577, %v569, %v574
    %v579 = vmul.f32 %v307, %v428
    %v580 = vmul.f32 %v308, %v438
    %v581 = vmul.f32 %v309, %v448
    %v582 = vmul.f32 %v310, %v458
    %v583 = vmul.f32 %v311, %v468
    %v584 = vmul.f32 %v312, %v478
    %v585 = vmul.f32 %v313, %v488
    %v586 = vmul.f32 %v314, %v498
    %v587 = vmul.f32 %v315, %v508
    %v588 = vmul.f32 %v316, %v518
    %v589 = vmul.f32 %v317, %v528
    %v590 = vmul.f32 %v318, %v538
    %v591 = vmul.f32 %v319, %v548
    %v592 = vmul.f32 %v320, %v558
    %v593 = vmul.f32 %v321, %v568
    %v594 = vmul.f32 %v322, %v578
    %v596 = vperm.slane %v233, 0
    %v598 = vmul.f32 %v579, %v596
    %v599 = vmul.f32 %v580, %v596
    %v600 = vmul.f32 %v581, %v596
    %v601 = vmul.f32 %v582, %v596
    %v602 = vmul.f32 %v583, %v596
    %v603 = vmul.f32 %v584, %v596
    %v604 = vmul.f32 %v585, %v596
    %v605 = vmul.f32 %v586, %v596
    %v606 = vmul.f32 %v587, %v596
    %v607 = vmul.f32 %v588, %v596
    %v608 = vmul.f32 %v589, %v596
    %v609 = vmul.f32 %v590, %v596
    %v610 = vmul.f32 %v591, %v596
    %v611 = vmul.f32 %v592, %v596
    %v612 = vmul.f32 %v593, %v596
    %v613 = vmul.f32 %v594, %v596
    %v615 = vperm.slane %v234, 0
    %v617 = vadd.f32 %v598, %v615
    %v618 = vadd.f32 %v599, %v615
    %v619 = vadd.f32 %v600, %v615
    %v620 = vadd.f32 %v601, %v615
    %v621 = vadd.f32 %v602, %v615
    %v622 = vadd.f32 %v603, %v615
    %v623 = vadd.f32 %v604, %v615
    %v624 = vadd.f32 %v605, %v615
    %v625 = vadd.f32 %v606, %v615
    %v626 = vadd.f32 %v607, %v615
    %v627 = vadd.f32 %v608, %v615
    %v628 = vadd.f32 %v609, %v615
    %v629 = vadd.f32 %v610, %v615
    %v630 = vadd.f32 %v611, %v615
    %v631 = vadd.f32 %v612, %v615
    %v632 = vadd.f32 %v613, %v615
    %v633 = vpack.c.bf16 %v618, %v617
    %v634 = vpack.c.bf16 %v620, %v619
    %v635 = vpack.c.bf16 %v622, %v621
    %v636 = vpack.c.bf16 %v624, %v623
    %v637 = vpack.c.bf16 %v626, %v625
    %v638 = vpack.c.bf16 %v628, %v627
    %v639 = vpack.c.bf16 %v630, %v629
    %v640 = vpack.c.bf16 %v632, %v631
    %v641 = vld [vmem:[%s4] sm:$0xf]
    %v642 = vld [vmem:[%s4 + $0x4] sm:$0xf]
    %v643 = vld [vmem:[%s4 + $0x8] sm:$0xf]
    %v644 = vld [vmem:[%s4 + $0xc] sm:$0xf]
    %v645 = vld [vmem:[%s5] sm:$0x1]
    %v647 = vperm.slane %v645, 0
    %v653 = vunpack.c.l.b16 %v641
    %v654 = vunpack.c.l.b16 %v642
    %v655 = vunpack.c.l.b16 %v643
    %v656 = vunpack.c.l.b16 %v644
    %v657 = vpack.c.b16 %v654, %v653
    %v658 = vpack.c.b16 %v656, %v655
    %v662 = vsel %vm235, %v633, 0
    %v665 = vsel %vm235, %v634, 0
    %v668 = vsel %vm235, %v635, 0
    %v671 = vsel %vm235, %v636, 0
    %v674 = vsel %vm235, %v637, 0
    %v677 = vsel %vm235, %v638, 0
    %v680 = vsel %vm235, %v639, 0
    %v683 = vsel %vm235, %v640, 0
    %685 = vmatpush.bf16.msra.mxu0 0
    %686 = vmatpush.bf16.msra.mxu0 0
    %687 = vmatpush.bf16.msra.mxu0 0
    %688 = vmatpush.bf16.msra.mxu0 0
    %689 = vmatpush.bf16.msra.mxu0 0
    %690 = vmatpush.bf16.msra.mxu0 0
    %691 = vmatpush.bf16.msra.mxu0 %v658
    %692 = vmatpush.bf16.msra.mxu0 %v657
    %693 = vmatmul.bf16.gmra.mxu0 %v662
    %v694 = vpop.f32.mrf.mxu0
    %v695 = vadd.f32 %v647, %v694
    %v696 = vpop.f32.mrf.mxu0
    %v697 = vadd.f32 %v647, %v696
    %698 = vmatmul.bf16.gmra.mxu0 %v665
    %v699 = vpop.f32.mrf.mxu0
    %v700 = vadd.f32 %v647, %v699
    %v701 = vpop.f32.mrf.mxu0
    %v702 = vadd.f32 %v647, %v701
    %703 = vmatmul.bf16.gmra.mxu0 %v668
    %v704 = vpop.f32.mrf.mxu0
    %v705 = vadd.f32 %v647, %v704
    %v706 = vpop.f32.mrf.mxu0
    %v707 = vadd.f32 %v647, %v706
    %708 = vmatmul.bf16.gmra.mxu0 %v671
    %v709 = vpop.f32.mrf.mxu0
    %v710 = vadd.f32 %v647, %v709
    %v711 = vpop.f32.mrf.mxu0
    %v712 = vadd.f32 %v647, %v711
    %713 = vmatmul.bf16.gmra.mxu0 %v674
    %v714 = vpop.f32.mrf.mxu0
    %v715 = vadd.f32 %v647, %v714
    %v716 = vpop.f32.mrf.mxu0
    %v717 = vadd.f32 %v647, %v716
    %718 = vmatmul.bf16.gmra.mxu0 %v677
    %v719 = vpop.f32.mrf.mxu0
    %v720 = vadd.f32 %v647, %v719
    %v721 = vpop.f32.mrf.mxu0
    %v722 = vadd.f32 %v647, %v721
    %723 = vmatmul.bf16.gmra.mxu0 %v680
    %v724 = vpop.f32.mrf.mxu0
    %v725 = vadd.f32 %v647, %v724
    %v726 = vpop.f32.mrf.mxu0
    %v727 = vadd.f32 %v647, %v726
    %728 = vmatmul.bf16.gmra.mxu0 %v683
    %v729 = vpop.f32.mrf.mxu0
    %v730 = vadd.f32 %v647, %v729
    %v731 = vpop.f32.mrf.mxu0
    %v732 = vadd.f32 %v647, %v731
    %733 = vdwg.mxu0
    %v734 = vld [vmem:[#allocation8] sm:$0x1]
    %v736 = vperm.slane %v734, 0
    %v738 = vadd.f32 %v617, %v736
    %v739 = vadd.f32 %v618, %v736
    %v740 = vadd.f32 %v619, %v736
    %v741 = vadd.f32 %v620, %v736
    %v742 = vadd.f32 %v621, %v736
    %v743 = vadd.f32 %v622, %v736
    %v744 = vadd.f32 %v623, %v736
    %v745 = vadd.f32 %v624, %v736
    %v746 = vadd.f32 %v625, %v736
    %v747 = vadd.f32 %v626, %v736
    %v748 = vadd.f32 %v627, %v736
    %v749 = vadd.f32 %v628, %v736
    %v750 = vadd.f32 %v629, %v736
    %v751 = vadd.f32 %v630, %v736
    %v752 = vadd.f32 %v631, %v736
    %v753 = vadd.f32 %v632, %v736
    %755 = vrot.lane.b32.xlu0 %v695, 96
    %v756 = vpop.permute.xlu0 %755
    %vm757 = vcmask 130048
    %v758 = vsel %vm757, %v695, 0
    %v760 = vsel %vm757, %v756, 0
    %762 = vmatpush.xpose.msra.mxu0 0.0
    %763 = vmatpush.xpose.msra.mxu0 0.0
    %764 = vmatpush.xpose.msra.mxu0 0.0
    %765 = vmatpush.xpose.msra.mxu0 0.0
    %766 = vmatpush.xpose.msra.mxu0 0.0
    %767 = vmatpush.xpose.msra.mxu0 0.0
    %768 = vmatpush.xpose.msra.mxu0 0.0
    %769 = vmatpush.xpose.msra.mxu0 0.0
    %770 = vmatpush.xpose.msra.mxu0 0.0
    %771 = vmatpush.xpose.msra.mxu0 0.0
    %772 = vmatpush.xpose.msra.mxu0 0.0
    %773 = vmatpush.xpose.msra.mxu0 0.0
    %774 = vmatpush.xpose.msra.mxu0 0.0
    %775 = vmatpush.xpose.msra.mxu0 0.0
    %776 = vmatpush.xpose.msra.mxu0 0.0
    %777 = vmatpush.xpose.msra.mxu0 %v760
    %778 = vmatmul.f32.gmra.mxu0 %v758
    %v779 = vpop.f32.mrf.mxu0
    %v780 = vadd.f32 0.0, %v779
    %781 = vdwg.mxu0
    %783 = vrot.lane.b32.xlu0 %v697, 96
    %v784 = vpop.permute.xlu0 %783
    %v785 = vsel %vm757, %v697, 0
    %v787 = vsel %vm757, %v784, 0
    %789 = vmatpush.xpose.msra.mxu0 0.0
    %790 = vmatpush.xpose.msra.mxu0 0.0
    %791 = vmatpush.xpose.msra.mxu0 0.0
    %792 = vmatpush.xpose.msra.mxu0 0.0
    %793 = vmatpush.xpose.msra.mxu0 0.0
    %794 = vmatpush.xpose.msra.mxu0 0.0
    %795 = vmatpush.xpose.msra.mxu0 0.0
    %796 = vmatpush.xpose.msra.mxu0 0.0
    %797 = vmatpush.xpose.msra.mxu0 0.0
    %798 = vmatpush.xpose.msra.mxu0 0.0
    %799 = vmatpush.xpose.msra.mxu0 0.0
    %800 = vmatpush.xpose.msra.mxu0 0.0
    %801 = vmatpush.xpose.msra.mxu0 0.0
    %802 = vmatpush.xpose.msra.mxu0 0.0
    %803 = vmatpush.xpose.msra.mxu0 0.0
    %804 = vmatpush.xpose.msra.mxu0 %v787
    %805 = vmatmul.f32.gmra.mxu0 %v785
    %v806 = vpop.f32.mrf.mxu0
    %v807 = vadd.f32 0.0, %v806
    %808 = vdwg.mxu0
    %810 = vrot.lane.b32.xlu0 %v700, 96
    %v811 = vpop.permute.xlu0 %810
    %v812 = vsel %vm757, %v700, 0
    %v814 = vsel %vm757, %v811, 0
    %816 = vmatpush.xpose.msra.mxu0 0.0
    %817 = vmatpush.xpose.msra.mxu0 0.0
    %818 = vmatpush.xpose.msra.mxu0 0.0
    %819 = vmatpush.xpose.msra.mxu0 0.0
    %820 = vmatpush.xpose.msra.mxu0 0.0
    %821 = vmatpush.xpose.msra.mxu0 0.0
    %822 = vmatpush.xpose.msra.mxu0 0.0
    %823 = vmatpush.xpose.msra.mxu0 0.0
    %824 = vmatpush.xpose.msra.mxu0 0.0
    %825 = vmatpush.xpose.msra.mxu0 0.0
    %826 = vmatpush.xpose.msra.mxu0 0.0
    %827 = vmatpush.xpose.msra.mxu0 0.0
    %828 = vmatpush.xpose.msra.mxu0 0.0
    %829 = vmatpush.xpose.msra.mxu0 0.0
    %830 = vmatpush.xpose.msra.mxu0 0.0
    %831 = vmatpush.xpose.msra.mxu0 %v814
    %832 = vmatmul.f32.gmra.mxu0 %v812
    %v833 = vpop.f32.mrf.mxu0
    %v834 = vadd.f32 0.0, %v833
    %835 = vdwg.mxu0
    %837 = vrot.lane.b32.xlu0 %v702, 96
    %v838 = vpop.permute.xlu0 %837
    %v839 = vsel %vm757, %v702, 0
    %v841 = vsel %vm757, %v838, 0
    %843 = vmatpush.xpose.msra.mxu0 0.0
    %844 = vmatpush.xpose.msra.mxu0 0.0
    %845 = vmatpush.xpose.msra.mxu0 0.0
    %846 = vmatpush.xpose.msra.mxu0 0.0
    %847 = vmatpush.xpose.msra.mxu0 0.0
    %848 = vmatpush.xpose.msra.mxu0 0.0
    %849 = vmatpush.xpose.msra.mxu0 0.0
    %850 = vmatpush.xpose.msra.mxu0 0.0
    %851 = vmatpush.xpose.msra.mxu0 0.0
    %852 = vmatpush.xpose.msra.mxu0 0.0
    %853 = vmatpush.xpose.msra.mxu0 0.0
    %854 = vmatpush.xpose.msra.mxu0 0.0
    %855 = vmatpush.xpose.msra.mxu0 0.0
    %856 = vmatpush.xpose.msra.mxu0 0.0
    %857 = vmatpush.xpose.msra.mxu0 0.0
    %858 = vmatpush.xpose.msra.mxu0 %v841
    %859 = vmatmul.f32.gmra.mxu0 %v839
    %v860 = vpop.f32.mrf.mxu0
    %v861 = vadd.f32 0.0, %v860
    %862 = vdwg.mxu0
    %864 = vrot.lane.b32.xlu0 %v705, 96
    %v865 = vpop.permute.xlu0 %864
    %v866 = vsel %vm757, %v705, 0
    %v868 = vsel %vm757, %v865, 0
    %870 = vmatpush.xpose.msra.mxu0 0.0
    %871 = vmatpush.xpose.msra.mxu0 0.0
    %872 = vmatpush.xpose.msra.mxu0 0.0
    %873 = vmatpush.xpose.msra.mxu0 0.0
    %874 = vmatpush.xpose.msra.mxu0 0.0
    %875 = vmatpush.xpose.msra.mxu0 0.0
    %876 = vmatpush.xpose.msra.mxu0 0.0
    %877 = vmatpush.xpose.msra.mxu0 0.0
    %878 = vmatpush.xpose.msra.mxu0 0.0
    %879 = vmatpush.xpose.msra.mxu0 0.0
    %880 = vmatpush.xpose.msra.mxu0 0.0
    %881 = vmatpush.xpose.msra.mxu0 0.0
    %882 = vmatpush.xpose.msra.mxu0 0.0
    %883 = vmatpush.xpose.msra.mxu0 0.0
    %884 = vmatpush.xpose.msra.mxu0 0.0
    %885 = vmatpush.xpose.msra.mxu0 %v868
    %886 = vmatmul.f32.gmra.mxu0 %v866
    %v887 = vpop.f32.mrf.mxu0
    %v888 = vadd.f32 0.0, %v887
    %889 = vdwg.mxu0
    %891 = vrot.lane.b32.xlu0 %v707, 96
    %v892 = vpop.permute.xlu0 %891
    %v893 = vsel %vm757, %v707, 0
    %v895 = vsel %vm757, %v892, 0
    %897 = vmatpush.xpose.msra.mxu0 0.0
    %898 = vmatpush.xpose.msra.mxu0 0.0
    %899 = vmatpush.xpose.msra.mxu0 0.0
    %900 = vmatpush.xpose.msra.mxu0 0.0
    %901 = vmatpush.xpose.msra.mxu0 0.0
    %902 = vmatpush.xpose.msra.mxu0 0.0
    %903 = vmatpush.xpose.msra.mxu0 0.0
    %904 = vmatpush.xpose.msra.mxu0 0.0
    %905 = vmatpush.xpose.msra.mxu0 0.0
    %906 = vmatpush.xpose.msra.mxu0 0.0
    %907 = vmatpush.xpose.msra.mxu0 0.0
    %908 = vmatpush.xpose.msra.mxu0 0.0
    %909 = vmatpush.xpose.msra.mxu0 0.0
    %910 = vmatpush.xpose.msra.mxu0 0.0
    %911 = vmatpush.xpose.msra.mxu0 0.0
    %912 = vmatpush.xpose.msra.mxu0 %v895
    %913 = vmatmul.f32.gmra.mxu0 %v893
    %v914 = vpop.f32.mrf.mxu0
    %v915 = vadd.f32 0.0, %v914
    %916 = vdwg.mxu0
    %918 = vrot.lane.b32.xlu0 %v710, 96
    %v919 = vpop.permute.xlu0 %918
    %v920 = vsel %vm757, %v710, 0
    %v922 = vsel %vm757, %v919, 0
    %924 = vmatpush.xpose.msra.mxu0 0.0
    %925 = vmatpush.xpose.msra.mxu0 0.0
    %926 = vmatpush.xpose.msra.mxu0 0.0
    %927 = vmatpush.xpose.msra.mxu0 0.0
    %928 = vmatpush.xpose.msra.mxu0 0.0
    %929 = vmatpush.xpose.msra.mxu0 0.0
    %930 = vmatpush.xpose.msra.mxu0 0.0
    %931 = vmatpush.xpose.msra.mxu0 0.0
    %932 = vmatpush.xpose.msra.mxu0 0.0
    %933 = vmatpush.xpose.msra.mxu0 0.0
    %934 = vmatpush.xpose.msra.mxu0 0.0
    %935 = vmatpush.xpose.msra.mxu0 0.0
    %936 = vmatpush.xpose.msra.mxu0 0.0
    %937 = vmatpush.xpose.msra.mxu0 0.0
    %938 = vmatpush.xpose.msra.mxu0 0.0
    %939 = vmatpush.xpose.msra.mxu0 %v922
    %940 = vmatmul.f32.gmra.mxu0 %v920
    %v941 = vpop.f32.mrf.mxu0
    %v942 = vadd.f32 0.0, %v941
    %943 = vdwg.mxu0
    %945 = vrot.lane.b32.xlu0 %v712, 96
    %v946 = vpop.permute.xlu0 %945
    %v947 = vsel %vm757, %v712, 0
    %v949 = vsel %vm757, %v946, 0
    %951 = vmatpush.xpose.msra.mxu0 0.0
    %952 = vmatpush.xpose.msra.mxu0 0.0
    %953 = vmatpush.xpose.msra.mxu0 0.0
    %954 = vmatpush.xpose.msra.mxu0 0.0
    %955 = vmatpush.xpose.msra.mxu0 0.0
    %956 = vmatpush.xpose.msra.mxu0 0.0
    %957 = vmatpush.xpose.msra.mxu0 0.0
    %958 = vmatpush.xpose.msra.mxu0 0.0
    %959 = vmatpush.xpose.msra.mxu0 0.0
    %960 = vmatpush.xpose.msra.mxu0 0.0
    %961 = vmatpush.xpose.msra.mxu0 0.0
    %962 = vmatpush.xpose.msra.mxu0 0.0
    %963 = vmatpush.xpose.msra.mxu0 0.0
    %964 = vmatpush.xpose.msra.mxu0 0.0
    %965 = vmatpush.xpose.msra.mxu0 0.0
    %966 = vmatpush.xpose.msra.mxu0 %v949
    %967 = vmatmul.f32.gmra.mxu0 %v947
    %v968 = vpop.f32.mrf.mxu0
    %v969 = vadd.f32 0.0, %v968
    %970 = vdwg.mxu0
    %972 = vrot.lane.b32.xlu0 %v715, 96
    %v973 = vpop.permute.xlu0 %972
    %v974 = vsel %vm757, %v715, 0
    %v976 = vsel %vm757, %v973, 0
    %978 = vmatpush.xpose.msra.mxu0 0.0
    %979 = vmatpush.xpose.msra.mxu0 0.0
    %980 = vmatpush.xpose.msra.mxu0 0.0
    %981 = vmatpush.xpose.msra.mxu0 0.0
    %982 = vmatpush.xpose.msra.mxu0 0.0
    %983 = vmatpush.xpose.msra.mxu0 0.0
    %984 = vmatpush.xpose.msra.mxu0 0.0
    %985 = vmatpush.xpose.msra.mxu0 0.0
    %986 = vmatpush.xpose.msra.mxu0 0.0
    %987 = vmatpush.xpose.msra.mxu0 0.0
    %988 = vmatpush.xpose.msra.mxu0 0.0
    %989 = vmatpush.xpose.msra.mxu0 0.0
    %990 = vmatpush.xpose.msra.mxu0 0.0
    %991 = vmatpush.xpose.msra.mxu0 0.0
    %992 = vmatpush.xpose.msra.mxu0 0.0
    %993 = vmatpush.xpose.msra.mxu0 %v976
    %994 = vmatmul.f32.gmra.mxu0 %v974
    %v995 = vpop.f32.mrf.mxu0
    %v996 = vadd.f32 0.0, %v995
    %997 = vdwg.mxu0
    %999 = vrot.lane.b32.xlu0 %v717, 96
    %v1000 = vpop.permute.xlu0 %999
    %v1001 = vsel %vm757, %v717, 0
    %v1003 = vsel %vm757, %v1000, 0
    %1005 = vmatpush.xpose.msra.mxu0 0.0
    %1006 = vmatpush.xpose.msra.mxu0 0.0
    %1007 = vmatpush.xpose.msra.mxu0 0.0
    %1008 = vmatpush.xpose.msra.mxu0 0.0
    %1009 = vmatpush.xpose.msra.mxu0 0.0
    %1010 = vmatpush.xpose.msra.mxu0 0.0
    %1011 = vmatpush.xpose.msra.mxu0 0.0
    %1012 = vmatpush.xpose.msra.mxu0 0.0
    %1013 = vmatpush.xpose.msra.mxu0 0.0
    %1014 = vmatpush.xpose.msra.mxu0 0.0
    %1015 = vmatpush.xpose.msra.mxu0 0.0
    %1016 = vmatpush.xpose.msra.mxu0 0.0
    %1017 = vmatpush.xpose.msra.mxu0 0.0
    %1018 = vmatpush.xpose.msra.mxu0 0.0
    %1019 = vmatpush.xpose.msra.mxu0 0.0
    %1020 = vmatpush.xpose.msra.mxu0 %v1003
    %1021 = vmatmul.f32.gmra.mxu0 %v1001
    %v1022 = vpop.f32.mrf.mxu0
    %v1023 = vadd.f32 0.0, %v1022
    %1024 = vdwg.mxu0
    %1026 = vrot.lane.b32.xlu0 %v720, 96
    %v1027 = vpop.permute.xlu0 %1026
    %v1028 = vsel %vm757, %v720, 0
    %v1030 = vsel %vm757, %v1027, 0
    %1032 = vmatpush.xpose.msra.mxu0 0.0
    %1033 = vmatpush.xpose.msra.mxu0 0.0
    %1034 = vmatpush.xpose.msra.mxu0 0.0
    %1035 = vmatpush.xpose.msra.mxu0 0.0
    %1036 = vmatpush.xpose.msra.mxu0 0.0
    %1037 = vmatpush.xpose.msra.mxu0 0.0
    %1038 = vmatpush.xpose.msra.mxu0 0.0
    %1039 = vmatpush.xpose.msra.mxu0 0.0
    %1040 = vmatpush.xpose.msra.mxu0 0.0
    %1041 = vmatpush.xpose.msra.mxu0 0.0
    %1042 = vmatpush.xpose.msra.mxu0 0.0
    %1043 = vmatpush.xpose.msra.mxu0 0.0
    %1044 = vmatpush.xpose.msra.mxu0 0.0
    %1045 = vmatpush.xpose.msra.mxu0 0.0
    %1046 = vmatpush.xpose.msra.mxu0 0.0
    %1047 = vmatpush.xpose.msra.mxu0 %v1030
    %1048 = vmatmul.f32.gmra.mxu0 %v1028
    %v1049 = vpop.f32.mrf.mxu0
    %v1050 = vadd.f32 0.0, %v1049
    %1051 = vdwg.mxu0
    %1053 = vrot.lane.b32.xlu0 %v722, 96
    %v1054 = vpop.permute.xlu0 %1053
    %v1055 = vsel %vm757, %v722, 0
    %v1057 = vsel %vm757, %v1054, 0
    %1059 = vmatpush.xpose.msra.mxu0 0.0
    %1060 = vmatpush.xpose.msra.mxu0 0.0
    %1061 = vmatpush.xpose.msra.mxu0 0.0
    %1062 = vmatpush.xpose.msra.mxu0 0.0
    %1063 = vmatpush.xpose.msra.mxu0 0.0
    %1064 = vmatpush.xpose.msra.mxu0 0.0
    %1065 = vmatpush.xpose.msra.mxu0 0.0
    %1066 = vmatpush.xpose.msra.mxu0 0.0
    %1067 = vmatpush.xpose.msra.mxu0 0.0
    %1068 = vmatpush.xpose.msra.mxu0 0.0
    %1069 = vmatpush.xpose.msra.mxu0 0.0
    %1070 = vmatpush.xpose.msra.mxu0 0.0
    %1071 = vmatpush.xpose.msra.mxu0 0.0
    %1072 = vmatpush.xpose.msra.mxu0 0.0
    %1073 = vmatpush.xpose.msra.mxu0 0.0
    %1074 = vmatpush.xpose.msra.mxu0 %v1057
    %1075 = vmatmul.f32.gmra.mxu0 %v1055
    %v1076 = vpop.f32.mrf.mxu0
    %v1077 = vadd.f32 0.0, %v1076
    %1078 = vdwg.mxu0
    %1080 = vrot.lane.b32.xlu0 %v725, 96
    %v1081 = vpop.permute.xlu0 %1080
    %v1082 = vsel %vm757, %v725, 0
    %v1084 = vsel %vm757, %v1081, 0
    %1086 = vmatpush.xpose.msra.mxu0 0.0
    %1087 = vmatpush.xpose.msra.mxu0 0.0
    %1088 = vmatpush.xpose.msra.mxu0 0.0
    %1089 = vmatpush.xpose.msra.mxu0 0.0
    %1090 = vmatpush.xpose.msra.mxu0 0.0
    %1091 = vmatpush.xpose.msra.mxu0 0.0
    %1092 = vmatpush.xpose.msra.mxu0 0.0
    %1093 = vmatpush.xpose.msra.mxu0 0.0
    %1094 = vmatpush.xpose.msra.mxu0 0.0
    %1095 = vmatpush.xpose.msra.mxu0 0.0
    %1096 = vmatpush.xpose.msra.mxu0 0.0
    %1097 = vmatpush.xpose.msra.mxu0 0.0
    %1098 = vmatpush.xpose.msra.mxu0 0.0
    %1099 = vmatpush.xpose.msra.mxu0 0.0
    %1100 = vmatpush.xpose.msra.mxu0 0.0
    %1101 = vmatpush.xpose.msra.mxu0 %v1084
    %1102 = vmatmul.f32.gmra.mxu0 %v1082
    %v1103 = vpop.f32.mrf.mxu0
    %v1104 = vadd.f32 0.0, %v1103
    %1105 = vdwg.mxu0
    %1107 = vrot.lane.b32.xlu0 %v727, 96
    %v1108 = vpop.permute.xlu0 %1107
    %v1109 = vsel %vm757, %v727, 0
    %v1111 = vsel %vm757, %v1108, 0
    %1113 = vmatpush.xpose.msra.mxu0 0.0
    %1114 = vmatpush.xpose.msra.mxu0 0.0
    %1115 = vmatpush.xpose.msra.mxu0 0.0
    %1116 = vmatpush.xpose.msra.mxu0 0.0
    %1117 = vmatpush.xpose.msra.mxu0 0.0
    %1118 = vmatpush.xpose.msra.mxu0 0.0
    %1119 = vmatpush.xpose.msra.mxu0 0.0
    %1120 = vmatpush.xpose.msra.mxu0 0.0
    %1121 = vmatpush.xpose.msra.mxu0 0.0
    %1122 = vmatpush.xpose.msra.mxu0 0.0
    %1123 = vmatpush.xpose.msra.mxu0 0.0
    %1124 = vmatpush.xpose.msra.mxu0 0.0
    %1125 = vmatpush.xpose.msra.mxu0 0.0
    %1126 = vmatpush.xpose.msra.mxu0 0.0
    %1127 = vmatpush.xpose.msra.mxu0 0.0
    %1128 = vmatpush.xpose.msra.mxu0 %v1111
    %1129 = vmatmul.f32.gmra.mxu0 %v1109
    %v1130 = vpop.f32.mrf.mxu0
    %v1131 = vadd.f32 0.0, %v1130
    %1132 = vdwg.mxu0
    %1134 = vrot.lane.b32.xlu0 %v730, 96
    %v1135 = vpop.permute.xlu0 %1134
    %v1136 = vsel %vm757, %v730, 0
    %v1138 = vsel %vm757, %v1135, 0
    %1140 = vmatpush.xpose.msra.mxu0 0.0
    %1141 = vmatpush.xpose.msra.mxu0 0.0
    %1142 = vmatpush.xpose.msra.mxu0 0.0
    %1143 = vmatpush.xpose.msra.mxu0 0.0
    %1144 = vmatpush.xpose.msra.mxu0 0.0
    %1145 = vmatpush.xpose.msra.mxu0 0.0
    %1146 = vmatpush.xpose.msra.mxu0 0.0
    %1147 = vmatpush.xpose.msra.mxu0 0.0
    %1148 = vmatpush.xpose.msra.mxu0 0.0
    %1149 = vmatpush.xpose.msra.mxu0 0.0
    %1150 = vmatpush.xpose.msra.mxu0 0.0
    %1151 = vmatpush.xpose.msra.mxu0 0.0
    %1152 = vmatpush.xpose.msra.mxu0 0.0
    %1153 = vmatpush.xpose.msra.mxu0 0.0
    %1154 = vmatpush.xpose.msra.mxu0 0.0
    %1155 = vmatpush.xpose.msra.mxu0 %v1138
    %1156 = vmatmul.f32.gmra.mxu0 %v1136
    %v1157 = vpop.f32.mrf.mxu0
    %v1158 = vadd.f32 0.0, %v1157
    %1159 = vdwg.mxu0
    %1161 = vrot.lane.b32.xlu0 %v732, 96
    %v1162 = vpop.permute.xlu0 %1161
    %v1163 = vsel %vm757, %v732, 0
    %v1165 = vsel %vm757, %v1162, 0
    %1167 = vmatpush.xpose.msra.mxu0 0.0
    %1168 = vmatpush.xpose.msra.mxu0 0.0
    %1169 = vmatpush.xpose.msra.mxu0 0.0
    %1170 = vmatpush.xpose.msra.mxu0 0.0
    %1171 = vmatpush.xpose.msra.mxu0 0.0
    %1172 = vmatpush.xpose.msra.mxu0 0.0
    %1173 = vmatpush.xpose.msra.mxu0 0.0
    %1174 = vmatpush.xpose.msra.mxu0 0.0
    %1175 = vmatpush.xpose.msra.mxu0 0.0
    %1176 = vmatpush.xpose.msra.mxu0 0.0
    %1177 = vmatpush.xpose.msra.mxu0 0.0
    %1178 = vmatpush.xpose.msra.mxu0 0.0
    %1179 = vmatpush.xpose.msra.mxu0 0.0
    %1180 = vmatpush.xpose.msra.mxu0 0.0
    %1181 = vmatpush.xpose.msra.mxu0 0.0
    %1182 = vmatpush.xpose.msra.mxu0 %v1165
    %1183 = vmatmul.f32.gmra.mxu0 %v1163
    %v1184 = vpop.f32.mrf.mxu0
    %v1185 = vadd.f32 0.0, %v1184
    %1186 = vdwg.mxu0
    %v1187 = vmul.f32 %v780, 0.25
    %v1188 = vmul.f32 %v807, 0.25
    %v1189 = vmul.f32 %v834, 0.25
    %v1190 = vmul.f32 %v861, 0.25
    %v1191 = vmul.f32 %v888, 0.25
    %v1192 = vmul.f32 %v915, 0.25
    %v1193 = vmul.f32 %v942, 0.25
    %v1194 = vmul.f32 %v969, 0.25
    %v1195 = vmul.f32 %v996, 0.25
    %v1196 = vmul.f32 %v1023, 0.25
    %v1197 = vmul.f32 %v1050, 0.25
    %v1198 = vmul.f32 %v1077, 0.25
    %v1199 = vmul.f32 %v1104, 0.25
    %v1200 = vmul.f32 %v1131, 0.25
    %v1201 = vmul.f32 %v1158, 0.25
    %v1202 = vmul.f32 %v1185, 0.25
    %v1203 = vperm.slane %v215, 0
    %v1204 = vperm.slane %v219, 0
    %v1205 = vperm.slane %v220, 0
    %v1206 = vperm.slane %v221, 0
    %v1207 = vperm.slane %v222, 0
    %v1208 = vperm.slane %v223, 0
    %v1209 = vperm.slane %v224, 0
    %v1210 = vperm.slane %v225, 0
    %v1211 = vperm.slane %v216, 0
    %v1212 = vperm.slane %v226, 0
    %v1213 = vperm.slane %v227, 0
    %v1214 = vperm.slane %v228, 0
    %v1215 = vperm.slane %v229, 0
    %v1216 = vperm.slane %v230, 0
    %v1217 = vperm.slane %v231, 0
    %v1218 = vperm.slane %v232, 0
    %v1235 = vadd.f32 %v1187, %v1203
    %v1236 = vadd.f32 %v1188, %v1204
    %v1237 = vadd.f32 %v1189, %v1205
    %v1238 = vadd.f32 %v1190, %v1206
    %v1239 = vadd.f32 %v1191, %v1207
    %v1240 = vadd.f32 %v1192, %v1208
    %v1241 = vadd.f32 %v1193, %v1209
    %v1242 = vadd.f32 %v1194, %v1210
    %v1243 = vadd.f32 %v1195, %v1211
    %v1244 = vadd.f32 %v1196, %v1212
    %v1245 = vadd.f32 %v1197, %v1213
    %v1246 = vadd.f32 %v1198, %v1214
    %v1247 = vadd.f32 %v1199, %v1215
    %v1248 = vadd.f32 %v1200, %v1216
    %v1249 = vadd.f32 %v1201, %v1217
    %v1250 = vadd.f32 %v1202, %v1218
    %vm1251 = vcmask 64512
    %v1252 = vsel %vm1251, %v1235, -inf
    %1253 = vmax.xlane.f32.xlu0 %v1252
    %v1254 = vpop.xlane.xlu0 %1253
    %v1255 = vsel %vm1251, %v1236, -inf
    %1256 = vmax.xlane.f32.xlu0 %v1255
    %v1257 = vpop.xlane.xlu0 %1256
    %v1258 = vsel %vm1251, %v1237, -inf
    %1259 = vmax.xlane.f32.xlu0 %v1258
    %v1260 = vpop.xlane.xlu0 %1259
    %v1261 = vsel %vm1251, %v1238, -inf
    %1262 = vmax.xlane.f32.xlu0 %v1261
    %v1263 = vpop.xlane.xlu0 %1262
    %v1264 = vsel %vm1251, %v1239, -inf
    %1265 = vmax.xlane.f32.xlu0 %v1264
    %v1266 = vpop.xlane.xlu0 %1265
    %v1267 = vsel %vm1251, %v1240, -inf
    %1268 = vmax.xlane.f32.xlu0 %v1267
    %v1269 = vpop.xlane.xlu0 %1268
    %v1270 = vsel %vm1251, %v1241, -inf
    %1271 = vmax.xlane.f32.xlu0 %v1270
    %v1272 = vpop.xlane.xlu0 %1271
    %v1273 = vsel %vm1251, %v1242, -inf
    %1274 = vmax.xlane.f32.xlu0 %v1273
    %v1275 = vpop.xlane.xlu0 %1274
    %v1276 = vsel %vm1251, %v1243, -inf
    %1277 = vmax.xlane.f32.xlu0 %v1276
    %v1278 = vpop.xlane.xlu0 %1277
    %v1279 = vsel %vm1251, %v1244, -inf
    %1280 = vmax.xlane.f32.xlu0 %v1279
    %v1281 = vpop.xlane.xlu0 %1280
    %v1282 = vsel %vm1251, %v1245, -inf
    %1283 = vmax.xlane.f32.xlu0 %v1282
    %v1284 = vpop.xlane.xlu0 %1283
    %v1285 = vsel %vm1251, %v1246, -inf
    %1286 = vmax.xlane.f32.xlu0 %v1285
    %v1287 = vpop.xlane.xlu0 %1286
    %v1288 = vsel %vm1251, %v1247, -inf
    %1289 = vmax.xlane.f32.xlu0 %v1288
    %v1290 = vpop.xlane.xlu0 %1289
    %v1291 = vsel %vm1251, %v1248, -inf
    %1292 = vmax.xlane.f32.xlu0 %v1291
    %v1293 = vpop.xlane.xlu0 %1292
    %v1294 = vsel %vm1251, %v1249, -inf
    %1295 = vmax.xlane.f32.xlu0 %v1294
    %v1296 = vpop.xlane.xlu0 %1295
    %v1297 = vsel %vm1251, %v1250, -inf
    %1298 = vmax.xlane.f32.xlu0 %v1297
    %v1299 = vpop.xlane.xlu0 %1298
    %v1300 = vsub.f32 %v1235, %v1254
    %v1301 = vsub.f32 %v1236, %v1257
    %v1302 = vsub.f32 %v1237, %v1260
    %v1303 = vsub.f32 %v1238, %v1263
    %v1304 = vsub.f32 %v1239, %v1266
    %v1305 = vsub.f32 %v1240, %v1269
    %v1306 = vsub.f32 %v1241, %v1272
    %v1307 = vsub.f32 %v1242, %v1275
    %v1308 = vsub.f32 %v1243, %v1278
    %v1309 = vsub.f32 %v1244, %v1281
    %v1310 = vsub.f32 %v1245, %v1284
    %v1311 = vsub.f32 %v1246, %v1287
    %v1312 = vsub.f32 %v1247, %v1290
    %v1313 = vsub.f32 %v1248, %v1293
    %v1314 = vsub.f32 %v1249, %v1296
    %v1315 = vsub.f32 %v1250, %v1299
    %v1316 = vmul.f32 %v1300, 1.442695
    %v1317 = vpow.pop %v1316
    %v1318 = vmul.f32 %v1301, 1.442695
    %v1319 = vpow.pop %v1318
    %v1320 = vmul.f32 %v1302, 1.442695
    %v1321 = vpow.pop %v1320
    %v1322 = vmul.f32 %v1303, 1.442695
    %v1323 = vpow.pop %v1322
    %v1324 = vmul.f32 %v1304, 1.442695
    %v1325 = vpow.pop %v1324
    %v1326 = vmul.f32 %v1305, 1.442695
    %v1327 = vpow.pop %v1326
    %v1328 = vmul.f32 %v1306, 1.442695
    %v1329 = vpow.pop %v1328
    %v1330 = vmul.f32 %v1307, 1.442695
    %v1331 = vpow.pop %v1330
    %v1332 = vmul.f32 %v1308, 1.442695
    %v1333 = vpow.pop %v1332
    %v1334 = vmul.f32 %v1309, 1.442695
    %v1335 = vpow.pop %v1334
    %v1336 = vmul.f32 %v1310, 1.442695
    %v1337 = vpow.pop %v1336
    %v1338 = vmul.f32 %v1311, 1.442695
    %v1339 = vpow.pop %v1338
    %v1340 = vmul.f32 %v1312, 1.442695
    %v1341 = vpow.pop %v1340
    %v1342 = vmul.f32 %v1313, 1.442695
    %v1343 = vpow.pop %v1342
    %v1344 = vmul.f32 %v1314, 1.442695
    %v1345 = vpow.pop %v1344
    %v1346 = vmul.f32 %v1315, 1.442695
    %v1347 = vpow.pop %v1346
    %v1348 = vsel %vm1251, %v1317, 0.0
    %1349 = vadd.xlane.f32.xlu0 %v1348
    %v1350 = vpop.xlane.xlu0 %1349
    %v1351 = vsel %vm1251, %v1319, 0.0
    %1352 = vadd.xlane.f32.xlu0 %v1351
    %v1353 = vpop.xlane.xlu0 %1352
    %v1354 = vsel %vm1251, %v1321, 0.0
    %1355 = vadd.xlane.f32.xlu0 %v1354
    %v1356 = vpop.xlane.xlu0 %1355
    %v1357 = vsel %vm1251, %v1323, 0.0
    %1358 = vadd.xlane.f32.xlu0 %v1357
    %v1359 = vpop.xlane.xlu0 %1358
    %v1360 = vsel %vm1251, %v1325, 0.0
    %1361 = vadd.xlane.f32.xlu0 %v1360
    %v1362 = vpop.xlane.xlu0 %1361
    %v1363 = vsel %vm1251, %v1327, 0.0
    %1364 = vadd.xlane.f32.xlu0 %v1363
    %v1365 = vpop.xlane.xlu0 %1364
    %v1366 = vsel %vm1251, %v1329, 0.0
    %1367 = vadd.xlane.f32.xlu0 %v1366
    %v1368 = vpop.xlane.xlu0 %1367
    %v1369 = vsel %vm1251, %v1331, 0.0
    %1370 = vadd.xlane.f32.xlu0 %v1369
    %v1371 = vpop.xlane.xlu0 %1370
    %v1372 = vsel %vm1251, %v1333, 0.0
    %1373 = vadd.xlane.f32.xlu0 %v1372
    %v1374 = vpop.xlane.xlu0 %1373
    %v1375 = vsel %vm1251, %v1335, 0.0
    %1376 = vadd.xlane.f32.xlu0 %v1375
    %v1377 = vpop.xlane.xlu0 %1376
    %v1378 = vsel %vm1251, %v1337, 0.0
    %1379 = vadd.xlane.f32.xlu0 %v1378
    %v1380 = vpop.xlane.xlu0 %1379
    %v1381 = vsel %vm1251, %v1339, 0.0
    %1382 = vadd.xlane.f32.xlu0 %v1381
    %v1383 = vpop.xlane.xlu0 %1382
    %v1384 = vsel %vm1251, %v1341, 0.0
    %1385 = vadd.xlane.f32.xlu0 %v1384
    %v1386 = vpop.xlane.xlu0 %1385
    %v1387 = vsel %vm1251, %v1343, 0.0
    %1388 = vadd.xlane.f32.xlu0 %v1387
    %v1389 = vpop.xlane.xlu0 %1388
    %v1390 = vsel %vm1251, %v1345, 0.0
    %1391 = vadd.xlane.f32.xlu0 %v1390
    %v1392 = vpop.xlane.xlu0 %1391
    %v1393 = vsel %vm1251, %v1347, 0.0
    %1394 = vadd.xlane.f32.xlu0 %v1393
    %v1395 = vpop.xlane.xlu0 %1394
    %v1396 = vrcp.pop %v1350
    %v1397 = vrcp.pop %v1353
    %v1398 = vrcp.pop %v1356
    %v1399 = vrcp.pop %v1359
    %v1400 = vrcp.pop %v1362
    %v1401 = vrcp.pop %v1365
    %v1402 = vrcp.pop %v1368
    %v1403 = vrcp.pop %v1371
    %v1404 = vrcp.pop %v1374
    %v1405 = vrcp.pop %v1377
    %v1406 = vrcp.pop %v1380
    %v1407 = vrcp.pop %v1383
    %v1408 = vrcp.pop %v1386
    %v1409 = vrcp.pop %v1389
    %v1410 = vrcp.pop %v1392
    %v1411 = vrcp.pop %v1395
    %v1412 = vmul.f32 %v1317, %v1396
    %v1413 = vmul.f32 %v1319, %v1397
    %v1414 = vmul.f32 %v1321, %v1398
    %v1415 = vmul.f32 %v1323, %v1399
    %v1416 = vmul.f32 %v1325, %v1400
    %v1417 = vmul.f32 %v1327, %v1401
    %v1418 = vmul.f32 %v1329, %v1402
    %v1419 = vmul.f32 %v1331, %v1403
    %v1420 = vmul.f32 %v1333, %v1404
    %v1421 = vmul.f32 %v1335, %v1405
    %v1422 = vmul.f32 %v1337, %v1406
    %v1423 = vmul.f32 %v1339, %v1407
    %v1424 = vmul.f32 %v1341, %v1408
    %v1425 = vmul.f32 %v1343, %v1409
    %v1426 = vmul.f32 %v1345, %v1410
    %v1427 = vmul.f32 %v1347, %v1411
    %1428 = vrot.lane.b32.xlu0 %v695, 64
    %v1429 = vpop.permute.xlu0 %1428
    %v1432 = vsel %vm1251, %v1412, 0
    %1434 = vmatpush.msra.mxu0 0.0
    %1435 = vmatpush.msra.mxu0 0.0
    %1436 = vmatpush.msra.mxu0 0.0
    %1437 = vmatpush.msra.mxu0 0.0
    %1438 = vmatpush.msra.mxu0 0.0
    %1439 = vmatpush.msra.mxu0 0.0
    %1440 = vmatpush.msra.mxu0 0.0
    %1441 = vmatpush.msra.mxu0 0.0
    %1442 = vmatpush.msra.mxu0 0.0
    %1443 = vmatpush.msra.mxu0 0.0
    %1444 = vmatpush.msra.mxu0 0.0
    %1445 = vmatpush.msra.mxu0 0.0
    %1446 = vmatpush.msra.mxu0 0.0
    %1447 = vmatpush.msra.mxu0 0.0
    %1448 = vmatpush.msra.mxu0 0.0
    %1449 = vmatpush.msra.mxu0 %v1429
    %1450 = vmatmul.f32.gmra.mxu0 %v1432
    %v1451 = vpop.f32.mrf.mxu0
    %v1452 = vadd.f32 0.0, %v1451
    %1453 = vdwg.mxu0
    %1454 = vrot.lane.b32.xlu0 %v697, 64
    %v1455 = vpop.permute.xlu0 %1454
    %v1458 = vsel %vm1251, %v1413, 0
    %1460 = vmatpush.msra.mxu0 0.0
    %1461 = vmatpush.msra.mxu0 0.0
    %1462 = vmatpush.msra.mxu0 0.0
    %1463 = vmatpush.msra.mxu0 0.0
    %1464 = vmatpush.msra.mxu0 0.0
    %1465 = vmatpush.msra.mxu0 0.0
    %1466 = vmatpush.msra.mxu0 0.0
    %1467 = vmatpush.msra.mxu0 0.0
    %1468 = vmatpush.msra.mxu0 0.0
    %1469 = vmatpush.msra.mxu0 0.0
    %1470 = vmatpush.msra.mxu0 0.0
    %1471 = vmatpush.msra.mxu0 0.0
    %1472 = vmatpush.msra.mxu0 0.0
    %1473 = vmatpush.msra.mxu0 0.0
    %1474 = vmatpush.msra.mxu0 0.0
    %1475 = vmatpush.msra.mxu0 %v1455
    %1476 = vmatmul.f32.gmra.mxu0 %v1458
    %v1477 = vpop.f32.mrf.mxu0
    %v1478 = vadd.f32 0.0, %v1477
    %1479 = vdwg.mxu0
    %1480 = vrot.lane.b32.xlu0 %v700, 64
    %v1481 = vpop.permute.xlu0 %1480
    %v1484 = vsel %vm1251, %v1414, 0
    %1486 = vmatpush.msra.mxu0 0.0
    %1487 = vmatpush.msra.mxu0 0.0
    %1488 = vmatpush.msra.mxu0 0.0
    %1489 = vmatpush.msra.mxu0 0.0
    %1490 = vmatpush.msra.mxu0 0.0
    %1491 = vmatpush.msra.mxu0 0.0
    %1492 = vmatpush.msra.mxu0 0.0
    %1493 = vmatpush.msra.mxu0 0.0
    %1494 = vmatpush.msra.mxu0 0.0
    %1495 = vmatpush.msra.mxu0 0.0
    %1496 = vmatpush.msra.mxu0 0.0
    %1497 = vmatpush.msra.mxu0 0.0
    %1498 = vmatpush.msra.mxu0 0.0
    %1499 = vmatpush.msra.mxu0 0.0
    %1500 = vmatpush.msra.mxu0 0.0
    %1501 = vmatpush.msra.mxu0 %v1481
    %1502 = vmatmul.f32.gmra.mxu0 %v1484
    %v1503 = vpop.f32.mrf.mxu0
    %v1504 = vadd.f32 0.0, %v1503
    %1505 = vdwg.mxu0
    %1506 = vrot.lane.b32.xlu0 %v702, 64
    %v1507 = vpop.permute.xlu0 %1506
    %v1510 = vsel %vm1251, %v1415, 0
    %1512 = vmatpush.msra.mxu0 0.0
    %1513 = vmatpush.msra.mxu0 0.0
    %1514 = vmatpush.msra.mxu0 0.0
    %1515 = vmatpush.msra.mxu0 0.0
    %1516 = vmatpush.msra.mxu0 0.0
    %1517 = vmatpush.msra.mxu0 0.0
    %1518 = vmatpush.msra.mxu0 0.0
    %1519 = vmatpush.msra.mxu0 0.0
    %1520 = vmatpush.msra.mxu0 0.0
    %1521 = vmatpush.msra.mxu0 0.0
    %1522 = vmatpush.msra.mxu0 0.0
    %1523 = vmatpush.msra.mxu0 0.0
    %1524 = vmatpush.msra.mxu0 0.0
    %1525 = vmatpush.msra.mxu0 0.0
    %1526 = vmatpush.msra.mxu0 0.0
    %1527 = vmatpush.msra.mxu0 %v1507
    %1528 = vmatmul.f32.gmra.mxu0 %v1510
    %v1529 = vpop.f32.mrf.mxu0
    %v1530 = vadd.f32 0.0, %v1529
    %1531 = vdwg.mxu0
    %1532 = vrot.lane.b32.xlu0 %v705, 64
    %v1533 = vpop.permute.xlu0 %1532
    %v1536 = vsel %vm1251, %v1416, 0
    %1538 = vmatpush.msra.mxu0 0.0
    %1539 = vmatpush.msra.mxu0 0.0
    %1540 = vmatpush.msra.mxu0 0.0
    %1541 = vmatpush.msra.mxu0 0.0
    %1542 = vmatpush.msra.mxu0 0.0
    %1543 = vmatpush.msra.mxu0 0.0
    %1544 = vmatpush.msra.mxu0 0.0
    %1545 = vmatpush.msra.mxu0 0.0
    %1546 = vmatpush.msra.mxu0 0.0
    %1547 = vmatpush.msra.mxu0 0.0
    %1548 = vmatpush.msra.mxu0 0.0
    %1549 = vmatpush.msra.mxu0 0.0
    %1550 = vmatpush.msra.mxu0 0.0
    %1551 = vmatpush.msra.mxu0 0.0
    %1552 = vmatpush.msra.mxu0 0.0
    %1553 = vmatpush.msra.mxu0 %v1533
    %1554 = vmatmul.f32.gmra.mxu0 %v1536
    %v1555 = vpop.f32.mrf.mxu0
    %v1556 = vadd.f32 0.0, %v1555
    %1557 = vdwg.mxu0
    %1558 = vrot.lane.b32.xlu0 %v707, 64
    %v1559 = vpop.permute.xlu0 %1558
    %v1562 = vsel %vm1251, %v1417, 0
    %1564 = vmatpush.msra.mxu0 0.0
    %1565 = vmatpush.msra.mxu0 0.0
    %1566 = vmatpush.msra.mxu0 0.0
    %1567 = vmatpush.msra.mxu0 0.0
    %1568 = vmatpush.msra.mxu0 0.0
    %1569 = vmatpush.msra.mxu0 0.0
    %1570 = vmatpush.msra.mxu0 0.0
    %1571 = vmatpush.msra.mxu0 0.0
    %1572 = vmatpush.msra.mxu0 0.0
    %1573 = vmatpush.msra.mxu0 0.0
    %1574 = vmatpush.msra.mxu0 0.0
    %1575 = vmatpush.msra.mxu0 0.0
    %1576 = vmatpush.msra.mxu0 0.0
    %1577 = vmatpush.msra.mxu0 0.0
    %1578 = vmatpush.msra.mxu0 0.0
    %1579 = vmatpush.msra.mxu0 %v1559
    %1580 = vmatmul.f32.gmra.mxu0 %v1562
    %v1581 = vpop.f32.mrf.mxu0
    %v1582 = vadd.f32 0.0, %v1581
    %1583 = vdwg.mxu0
    %1584 = vrot.lane.b32.xlu0 %v710, 64
    %v1585 = vpop.permute.xlu0 %1584
    %v1588 = vsel %vm1251, %v1418, 0
    %1590 = vmatpush.msra.mxu0 0.0
    %1591 = vmatpush.msra.mxu0 0.0
    %1592 = vmatpush.msra.mxu0 0.0
    %1593 = vmatpush.msra.mxu0 0.0
    %1594 = vmatpush.msra.mxu0 0.0
    %1595 = vmatpush.msra.mxu0 0.0
    %1596 = vmatpush.msra.mxu0 0.0
    %1597 = vmatpush.msra.mxu0 0.0
    %1598 = vmatpush.msra.mxu0 0.0
    %1599 = vmatpush.msra.mxu0 0.0
    %1600 = vmatpush.msra.mxu0 0.0
    %1601 = vmatpush.msra.mxu0 0.0
    %1602 = vmatpush.msra.mxu0 0.0
    %1603 = vmatpush.msra.mxu0 0.0
    %1604 = vmatpush.msra.mxu0 0.0
    %1605 = vmatpush.msra.mxu0 %v1585
    %1606 = vmatmul.f32.gmra.mxu0 %v1588
    %v1607 = vpop.f32.mrf.mxu0
    %v1608 = vadd.f32 0.0, %v1607
    %1609 = vdwg.mxu0
    %1610 = vrot.lane.b32.xlu0 %v712, 64
    %v1611 = vpop.permute.xlu0 %1610
    %v1614 = vsel %vm1251, %v1419, 0
    %1616 = vmatpush.msra.mxu0 0.0
    %1617 = vmatpush.msra.mxu0 0.0
    %1618 = vmatpush.msra.mxu0 0.0
    %1619 = vmatpush.msra.mxu0 0.0
    %1620 = vmatpush.msra.mxu0 0.0
    %1621 = vmatpush.msra.mxu0 0.0
    %1622 = vmatpush.msra.mxu0 0.0
    %1623 = vmatpush.msra.mxu0 0.0
    %1624 = vmatpush.msra.mxu0 0.0
    %1625 = vmatpush.msra.mxu0 0.0
    %1626 = vmatpush.msra.mxu0 0.0
    %1627 = vmatpush.msra.mxu0 0.0
    %1628 = vmatpush.msra.mxu0 0.0
    %1629 = vmatpush.msra.mxu0 0.0
    %1630 = vmatpush.msra.mxu0 0.0
    %1631 = vmatpush.msra.mxu0 %v1611
    %1632 = vmatmul.f32.gmra.mxu0 %v1614
    %v1633 = vpop.f32.mrf.mxu0
    %v1634 = vadd.f32 0.0, %v1633
    %1635 = vdwg.mxu0
    %1636 = vrot.lane.b32.xlu0 %v715, 64
    %v1637 = vpop.permute.xlu0 %1636
    %v1640 = vsel %vm1251, %v1420, 0
    %1642 = vmatpush.msra.mxu0 0.0
    %1643 = vmatpush.msra.mxu0 0.0
    %1644 = vmatpush.msra.mxu0 0.0
    %1645 = vmatpush.msra.mxu0 0.0
    %1646 = vmatpush.msra.mxu0 0.0
    %1647 = vmatpush.msra.mxu0 0.0
    %1648 = vmatpush.msra.mxu0 0.0
    %1649 = vmatpush.msra.mxu0 0.0
    %1650 = vmatpush.msra.mxu0 0.0
    %1651 = vmatpush.msra.mxu0 0.0
    %1652 = vmatpush.msra.mxu0 0.0
    %1653 = vmatpush.msra.mxu0 0.0
    %1654 = vmatpush.msra.mxu0 0.0
    %1655 = vmatpush.msra.mxu0 0.0
    %1656 = vmatpush.msra.mxu0 0.0
    %1657 = vmatpush.msra.mxu0 %v1637
    %1658 = vmatmul.f32.gmra.mxu0 %v1640
    %v1659 = vpop.f32.mrf.mxu0
    %v1660 = vadd.f32 0.0, %v1659
    %1661 = vdwg.mxu0
    %1662 = vrot.lane.b32.xlu0 %v717, 64
    %v1663 = vpop.permute.xlu0 %1662
    %v1666 = vsel %vm1251, %v1421, 0
    %1668 = vmatpush.msra.mxu0 0.0
    %1669 = vmatpush.msra.mxu0 0.0
    %1670 = vmatpush.msra.mxu0 0.0
    %1671 = vmatpush.msra.mxu0 0.0
    %1672 = vmatpush.msra.mxu0 0.0
    %1673 = vmatpush.msra.mxu0 0.0
    %1674 = vmatpush.msra.mxu0 0.0
    %1675 = vmatpush.msra.mxu0 0.0
    %1676 = vmatpush.msra.mxu0 0.0
    %1677 = vmatpush.msra.mxu0 0.0
    %1678 = vmatpush.msra.mxu0 0.0
    %1679 = vmatpush.msra.mxu0 0.0
    %1680 = vmatpush.msra.mxu0 0.0
    %1681 = vmatpush.msra.mxu0 0.0
    %1682 = vmatpush.msra.mxu0 0.0
    %1683 = vmatpush.msra.mxu0 %v1663
    %1684 = vmatmul.f32.gmra.mxu0 %v1666
    %v1685 = vpop.f32.mrf.mxu0
    %v1686 = vadd.f32 0.0, %v1685
    %1687 = vdwg.mxu0
    %1688 = vrot.lane.b32.xlu0 %v720, 64
    %v1689 = vpop.permute.xlu0 %1688
    %v1692 = vsel %vm1251, %v1422, 0
    %1694 = vmatpush.msra.mxu0 0.0
    %1695 = vmatpush.msra.mxu0 0.0
    %1696 = vmatpush.msra.mxu0 0.0
    %1697 = vmatpush.msra.mxu0 0.0
    %1698 = vmatpush.msra.mxu0 0.0
    %1699 = vmatpush.msra.mxu0 0.0
    %1700 = vmatpush.msra.mxu0 0.0
    %1701 = vmatpush.msra.mxu0 0.0
    %1702 = vmatpush.msra.mxu0 0.0
    %1703 = vmatpush.msra.mxu0 0.0
    %1704 = vmatpush.msra.mxu0 0.0
    %1705 = vmatpush.msra.mxu0 0.0
    %1706 = vmatpush.msra.mxu0 0.0
    %1707 = vmatpush.msra.mxu0 0.0
    %1708 = vmatpush.msra.mxu0 0.0
    %1709 = vmatpush.msra.mxu0 %v1689
    %1710 = vmatmul.f32.gmra.mxu0 %v1692
    %v1711 = vpop.f32.mrf.mxu0
    %v1712 = vadd.f32 0.0, %v1711
    %1713 = vdwg.mxu0
    %1714 = vrot.lane.b32.xlu0 %v722, 64
    %v1715 = vpop.permute.xlu0 %1714
    %v1718 = vsel %vm1251, %v1423, 0
    %1720 = vmatpush.msra.mxu0 0.0
    %1721 = vmatpush.msra.mxu0 0.0
    %1722 = vmatpush.msra.mxu0 0.0
    %1723 = vmatpush.msra.mxu0 0.0
    %1724 = vmatpush.msra.mxu0 0.0
    %1725 = vmatpush.msra.mxu0 0.0
    %1726 = vmatpush.msra.mxu0 0.0
    %1727 = vmatpush.msra.mxu0 0.0
    %1728 = vmatpush.msra.mxu0 0.0
    %1729 = vmatpush.msra.mxu0 0.0
    %1730 = vmatpush.msra.mxu0 0.0
    %1731 = vmatpush.msra.mxu0 0.0
    %1732 = vmatpush.msra.mxu0 0.0
    %1733 = vmatpush.msra.mxu0 0.0
    %1734 = vmatpush.msra.mxu0 0.0
    %1735 = vmatpush.msra.mxu0 %v1715
    %1736 = vmatmul.f32.gmra.mxu0 %v1718
    %v1737 = vpop.f32.mrf.mxu0
    %v1738 = vadd.f32 0.0, %v1737
    %1739 = vdwg.mxu0
    %1740 = vrot.lane.b32.xlu0 %v725, 64
    %v1741 = vpop.permute.xlu0 %1740
    %v1744 = vsel %vm1251, %v1424, 0
    %1746 = vmatpush.msra.mxu0 0.0
    %1747 = vmatpush.msra.mxu0 0.0
    %1748 = vmatpush.msra.mxu0 0.0
    %1749 = vmatpush.msra.mxu0 0.0
    %1750 = vmatpush.msra.mxu0 0.0
    %1751 = vmatpush.msra.mxu0 0.0
    %1752 = vmatpush.msra.mxu0 0.0
    %1753 = vmatpush.msra.mxu0 0.0
    %1754 = vmatpush.msra.mxu0 0.0
    %1755 = vmatpush.msra.mxu0 0.0
    %1756 = vmatpush.msra.mxu0 0.0
    %1757 = vmatpush.msra.mxu0 0.0
    %1758 = vmatpush.msra.mxu0 0.0
    %1759 = vmatpush.msra.mxu0 0.0
    %1760 = vmatpush.msra.mxu0 0.0
    %1761 = vmatpush.msra.mxu0 %v1741
    %1762 = vmatmul.f32.gmra.mxu0 %v1744
    %v1763 = vpop.f32.mrf.mxu0
    %v1764 = vadd.f32 0.0, %v1763
    %1765 = vdwg.mxu0
    %1766 = vrot.lane.b32.xlu0 %v727, 64
    %v1767 = vpop.permute.xlu0 %1766
    %v1770 = vsel %vm1251, %v1425, 0
    %1772 = vmatpush.msra.mxu0 0.0
    %1773 = vmatpush.msra.mxu0 0.0
    %1774 = vmatpush.msra.mxu0 0.0
    %1775 = vmatpush.msra.mxu0 0.0
    %1776 = vmatpush.msra.mxu0 0.0
    %1777 = vmatpush.msra.mxu0 0.0
    %1778 = vmatpush.msra.mxu0 0.0
    %1779 = vmatpush.msra.mxu0 0.0
    %1780 = vmatpush.msra.mxu0 0.0
    %1781 = vmatpush.msra.mxu0 0.0
    %1782 = vmatpush.msra.mxu0 0.0
    %1783 = vmatpush.msra.mxu0 0.0
    %1784 = vmatpush.msra.mxu0 0.0
    %1785 = vmatpush.msra.mxu0 0.0
    %1786 = vmatpush.msra.mxu0 0.0
    %1787 = vmatpush.msra.mxu0 %v1767
    %1788 = vmatmul.f32.gmra.mxu0 %v1770
    %v1789 = vpop.f32.mrf.mxu0
    %v1790 = vadd.f32 0.0, %v1789
    %1791 = vdwg.mxu0
    %1792 = vrot.lane.b32.xlu0 %v730, 64
    %v1793 = vpop.permute.xlu0 %1792
    %v1796 = vsel %vm1251, %v1426, 0
    %1798 = vmatpush.msra.mxu0 0.0
    %1799 = vmatpush.msra.mxu0 0.0
    %1800 = vmatpush.msra.mxu0 0.0
    %1801 = vmatpush.msra.mxu0 0.0
    %1802 = vmatpush.msra.mxu0 0.0
    %1803 = vmatpush.msra.mxu0 0.0
    %1804 = vmatpush.msra.mxu0 0.0
    %1805 = vmatpush.msra.mxu0 0.0
    %1806 = vmatpush.msra.mxu0 0.0
    %1807 = vmatpush.msra.mxu0 0.0
    %1808 = vmatpush.msra.mxu0 0.0
    %1809 = vmatpush.msra.mxu0 0.0
    %1810 = vmatpush.msra.mxu0 0.0
    %1811 = vmatpush.msra.mxu0 0.0
    %1812 = vmatpush.msra.mxu0 0.0
    %1813 = vmatpush.msra.mxu0 %v1793
    %1814 = vmatmul.f32.gmra.mxu0 %v1796
    %v1815 = vpop.f32.mrf.mxu0
    %v1816 = vadd.f32 0.0, %v1815
    %1817 = vdwg.mxu0
    %1818 = vrot.lane.b32.xlu0 %v732, 64
    %v1819 = vpop.permute.xlu0 %1818
    %v1822 = vsel %vm1251, %v1427, 0
    %1824 = vmatpush.msra.mxu0 0.0
    %1825 = vmatpush.msra.mxu0 0.0
    %1826 = vmatpush.msra.mxu0 0.0
    %1827 = vmatpush.msra.mxu0 0.0
    %1828 = vmatpush.msra.mxu0 0.0
    %1829 = vmatpush.msra.mxu0 0.0
    %1830 = vmatpush.msra.mxu0 0.0
    %1831 = vmatpush.msra.mxu0 0.0
    %1832 = vmatpush.msra.mxu0 0.0
    %1833 = vmatpush.msra.mxu0 0.0
    %1834 = vmatpush.msra.mxu0 0.0
    %1835 = vmatpush.msra.mxu0 0.0
    %1836 = vmatpush.msra.mxu0 0.0
    %1837 = vmatpush.msra.mxu0 0.0
    %1838 = vmatpush.msra.mxu0 0.0
    %1839 = vmatpush.msra.mxu0 %v1819
    %1840 = vmatmul.f32.gmra.mxu0 %v1822
    %v1841 = vpop.f32.mrf.mxu0
    %v1842 = vadd.f32 0.0, %v1841
    %1843 = vdwg.mxu0
    %v1844 = vpack.c.bf16 %v1478, %v1452
    %v1845 = vpack.c.bf16 %v1530, %v1504
    %v1846 = vpack.c.bf16 %v1582, %v1556
    %v1847 = vpack.c.bf16 %v1634, %v1608
    %v1848 = vpack.c.bf16 %v1686, %v1660
    %v1849 = vpack.c.bf16 %v1738, %v1712
    %v1850 = vpack.c.bf16 %v1790, %v1764
    %v1851 = vpack.c.bf16 %v1842, %v1816
    %v1852 = vld [vmem:[%s6] sm:$0xf]
    %v1853 = vld [vmem:[%s6 + $0x4] sm:$0xf]
    %v1856 = vunpack.c.l.b16 %v1852
    %v1857 = vunpack.c.l.b16 %v1853
    %v1858 = vpack.c.b16 %v1857, %v1856
    %v1861 = vsel %vm757, %v1844, 0
    %v1864 = vsel %vm757, %v1845, 0
    %v1867 = vsel %vm757, %v1846, 0
    %v1870 = vsel %vm757, %v1847, 0
    %v1873 = vsel %vm757, %v1848, 0
    %v1876 = vsel %vm757, %v1849, 0
    %v1879 = vsel %vm757, %v1850, 0
    %v1882 = vsel %vm757, %v1851, 0
    %1884 = vmatpush.bf16.msra.mxu0 0
    %1885 = vmatpush.bf16.msra.mxu0 0
    %1886 = vmatpush.bf16.msra.mxu0 0
    %1887 = vmatpush.bf16.msra.mxu0 0
    %1888 = vmatpush.bf16.msra.mxu0 0
    %1889 = vmatpush.bf16.msra.mxu0 0
    %1890 = vmatpush.bf16.msra.mxu0 0
    %1891 = vmatpush.bf16.msra.mxu0 %v1858
    %1892 = vmatmul.bf16.gmra.mxu0 %v1861
    %v1893 = vpop.f32.mrf.mxu0
    %v1894 = vadd.f32 0.0, %v1893
    %v1895 = vpop.f32.mrf.mxu0
    %v1896 = vadd.f32 0.0, %v1895
    %1897 = vmatmul.bf16.gmra.mxu0 %v1864
    %v1898 = vpop.f32.mrf.mxu0
    %v1899 = vadd.f32 0.0, %v1898
    %v1900 = vpop.f32.mrf.mxu0
    %v1901 = vadd.f32 0.0, %v1900
    %1902 = vmatmul.bf16.gmra.mxu0 %v1867
    %v1903 = vpop.f32.mrf.mxu0
    %v1904 = vadd.f32 0.0, %v1903
    %v1905 = vpop.f32.mrf.mxu0
    %v1906 = vadd.f32 0.0, %v1905
    %1907 = vmatmul.bf16.gmra.mxu0 %v1870
    %v1908 = vpop.f32.mrf.mxu0
    %v1909 = vadd.f32 0.0, %v1908
    %v1910 = vpop.f32.mrf.mxu0
    %v1911 = vadd.f32 0.0, %v1910
    %1912 = vmatmul.bf16.gmra.mxu0 %v1873
    %v1913 = vpop.f32.mrf.mxu0
    %v1914 = vadd.f32 0.0, %v1913
    %v1915 = vpop.f32.mrf.mxu0
    %v1916 = vadd.f32 0.0, %v1915
    %1917 = vmatmul.bf16.gmra.mxu0 %v1876
    %v1918 = vpop.f32.mrf.mxu0
    %v1919 = vadd.f32 0.0, %v1918
    %v1920 = vpop.f32.mrf.mxu0
    %v1921 = vadd.f32 0.0, %v1920
    %1922 = vmatmul.bf16.gmra.mxu0 %v1879
    %v1923 = vpop.f32.mrf.mxu0
    %v1924 = vadd.f32 0.0, %v1923
    %v1925 = vpop.f32.mrf.mxu0
    %v1926 = vadd.f32 0.0, %v1925
    %1927 = vmatmul.bf16.gmra.mxu0 %v1882
    %v1928 = vpop.f32.mrf.mxu0
    %v1929 = vadd.f32 0.0, %v1928
    %v1930 = vpop.f32.mrf.mxu0
    %v1931 = vadd.f32 0.0, %v1930
    %1932 = vdwg.mxu0
    %v1933 = vadd.f32 %v738, %v1894
    %v1934 = vadd.f32 %v739, %v1896
    %v1935 = vadd.f32 %v740, %v1899
    %v1936 = vadd.f32 %v741, %v1901
    %v1937 = vadd.f32 %v742, %v1904
    %v1938 = vadd.f32 %v743, %v1906
    %v1939 = vadd.f32 %v744, %v1909
    %v1940 = vadd.f32 %v745, %v1911
    %v1941 = vadd.f32 %v746, %v1914
    %v1942 = vadd.f32 %v747, %v1916
    %v1943 = vadd.f32 %v748, %v1919
    %v1944 = vadd.f32 %v749, %v1921
    %v1945 = vadd.f32 %v750, %v1924
    %v1946 = vadd.f32 %v751, %v1926
    %v1947 = vadd.f32 %v752, %v1929
    %v1948 = vadd.f32 %v753, %v1931
    %1949 = vrot.lane.b32.xlu0 %v695, 112
    %v1950 = vpop.permute.xlu0 %1949
    %1951 = vrot.lane.b32.xlu0 %v695, 80
    %v1952 = vpop.permute.xlu0 %1951
    %v1953 = vsel %vm757, %v1950, 0
    %v1955 = vsel %vm757, %v1952, 0
    %1957 = vmatpush.xpose.msra.mxu0 0.0
    %1958 = vmatpush.xpose.msra.mxu0 0.0
    %1959 = vmatpush.xpose.msra.mxu0 0.0
    %1960 = vmatpush.xpose.msra.mxu0 0.0
    %1961 = vmatpush.xpose.msra.mxu0 0.0
    %1962 = vmatpush.xpose.msra.mxu0 0.0
    %1963 = vmatpush.xpose.msra.mxu0 0.0
    %1964 = vmatpush.xpose.msra.mxu0 0.0
    %1965 = vmatpush.xpose.msra.mxu0 0.0
    %1966 = vmatpush.xpose.msra.mxu0 0.0
    %1967 = vmatpush.xpose.msra.mxu0 0.0
    %1968 = vmatpush.xpose.msra.mxu0 0.0
    %1969 = vmatpush.xpose.msra.mxu0 0.0
    %1970 = vmatpush.xpose.msra.mxu0 0.0
    %1971 = vmatpush.xpose.msra.mxu0 0.0
    %1972 = vmatpush.xpose.msra.mxu0 %v1955
    %1973 = vmatmul.f32.gmra.mxu0 %v1953
    %v1974 = vpop.f32.mrf.mxu0
    %v1975 = vadd.f32 0.0, %v1974
    %1976 = vdwg.mxu0
    %1977 = vrot.lane.b32.xlu0 %v697, 112
    %v1978 = vpop.permute.xlu0 %1977
    %1979 = vrot.lane.b32.xlu0 %v697, 80
    %v1980 = vpop.permute.xlu0 %1979
    %v1981 = vsel %vm757, %v1978, 0
    %v1983 = vsel %vm757, %v1980, 0
    %1985 = vmatpush.xpose.msra.mxu0 0.0
    %1986 = vmatpush.xpose.msra.mxu0 0.0
    %1987 = vmatpush.xpose.msra.mxu0 0.0
    %1988 = vmatpush.xpose.msra.mxu0 0.0
    %1989 = vmatpush.xpose.msra.mxu0 0.0
    %1990 = vmatpush.xpose.msra.mxu0 0.0
    %1991 = vmatpush.xpose.msra.mxu0 0.0
    %1992 = vmatpush.xpose.msra.mxu0 0.0
    %1993 = vmatpush.xpose.msra.mxu0 0.0
    %1994 = vmatpush.xpose.msra.mxu0 0.0
    %1995 = vmatpush.xpose.msra.mxu0 0.0
    %1996 = vmatpush.xpose.msra.mxu0 0.0
    %1997 = vmatpush.xpose.msra.mxu0 0.0
    %1998 = vmatpush.xpose.msra.mxu0 0.0
    %1999 = vmatpush.xpose.msra.mxu0 0.0
    %2000 = vmatpush.xpose.msra.mxu0 %v1983
    %2001 = vmatmul.f32.gmra.mxu0 %v1981
    %v2002 = vpop.f32.mrf.mxu0
    %v2003 = vadd.f32 0.0, %v2002
    %2004 = vdwg.mxu0
    %2005 = vrot.lane.b32.xlu0 %v700, 112
    %v2006 = vpop.permute.xlu0 %2005
    %2007 = vrot.lane.b32.xlu0 %v700, 80
    %v2008 = vpop.permute.xlu0 %2007
    %v2009 = vsel %vm757, %v2006, 0
    %v2011 = vsel %vm757, %v2008, 0
    %2013 = vmatpush.xpose.msra.mxu0 0.0
    %2014 = vmatpush.xpose.msra.mxu0 0.0
    %2015 = vmatpush.xpose.msra.mxu0 0.0
    %2016 = vmatpush.xpose.msra.mxu0 0.0
    %2017 = vmatpush.xpose.msra.mxu0 0.0
    %2018 = vmatpush.xpose.msra.mxu0 0.0
    %2019 = vmatpush.xpose.msra.mxu0 0.0
    %2020 = vmatpush.xpose.msra.mxu0 0.0
    %2021 = vmatpush.xpose.msra.mxu0 0.0
    %2022 = vmatpush.xpose.msra.mxu0 0.0
    %2023 = vmatpush.xpose.msra.mxu0 0.0
    %2024 = vmatpush.xpose.msra.mxu0 0.0
    %2025 = vmatpush.xpose.msra.mxu0 0.0
    %2026 = vmatpush.xpose.msra.mxu0 0.0
    %2027 = vmatpush.xpose.msra.mxu0 0.0
    %2028 = vmatpush.xpose.msra.mxu0 %v2011
    %2029 = vmatmul.f32.gmra.mxu0 %v2009
    %v2030 = vpop.f32.mrf.mxu0
    %v2031 = vadd.f32 0.0, %v2030
    %2032 = vdwg.mxu0
    %2033 = vrot.lane.b32.xlu0 %v702, 112
    %v2034 = vpop.permute.xlu0 %2033
    %2035 = vrot.lane.b32.xlu0 %v702, 80
    %v2036 = vpop.permute.xlu0 %2035
    %v2037 = vsel %vm757, %v2034, 0
    %v2039 = vsel %vm757, %v2036, 0
    %2041 = vmatpush.xpose.msra.mxu0 0.0
    %2042 = vmatpush.xpose.msra.mxu0 0.0
    %2043 = vmatpush.xpose.msra.mxu0 0.0
    %2044 = vmatpush.xpose.msra.mxu0 0.0
    %2045 = vmatpush.xpose.msra.mxu0 0.0
    %2046 = vmatpush.xpose.msra.mxu0 0.0
    %2047 = vmatpush.xpose.msra.mxu0 0.0
    %2048 = vmatpush.xpose.msra.mxu0 0.0
    %2049 = vmatpush.xpose.msra.mxu0 0.0
    %2050 = vmatpush.xpose.msra.mxu0 0.0
    %2051 = vmatpush.xpose.msra.mxu0 0.0
    %2052 = vmatpush.xpose.msra.mxu0 0.0
    %2053 = vmatpush.xpose.msra.mxu0 0.0
    %2054 = vmatpush.xpose.msra.mxu0 0.0
    %2055 = vmatpush.xpose.msra.mxu0 0.0
    %2056 = vmatpush.xpose.msra.mxu0 %v2039
    %2057 = vmatmul.f32.gmra.mxu0 %v2037
    %v2058 = vpop.f32.mrf.mxu0
    %v2059 = vadd.f32 0.0, %v2058
    %2060 = vdwg.mxu0
    %2061 = vrot.lane.b32.xlu0 %v705, 112
    %v2062 = vpop.permute.xlu0 %2061
    %2063 = vrot.lane.b32.xlu0 %v705, 80
    %v2064 = vpop.permute.xlu0 %2063
    %v2065 = vsel %vm757, %v2062, 0
    %v2067 = vsel %vm757, %v2064, 0
    %2069 = vmatpush.xpose.msra.mxu0 0.0
    %2070 = vmatpush.xpose.msra.mxu0 0.0
    %2071 = vmatpush.xpose.msra.mxu0 0.0
    %2072 = vmatpush.xpose.msra.mxu0 0.0
    %2073 = vmatpush.xpose.msra.mxu0 0.0
    %2074 = vmatpush.xpose.msra.mxu0 0.0
    %2075 = vmatpush.xpose.msra.mxu0 0.0
    %2076 = vmatpush.xpose.msra.mxu0 0.0
    %2077 = vmatpush.xpose.msra.mxu0 0.0
    %2078 = vmatpush.xpose.msra.mxu0 0.0
    %2079 = vmatpush.xpose.msra.mxu0 0.0
    %2080 = vmatpush.xpose.msra.mxu0 0.0
    %2081 = vmatpush.xpose.msra.mxu0 0.0
    %2082 = vmatpush.xpose.msra.mxu0 0.0
    %2083 = vmatpush.xpose.msra.mxu0 0.0
    %2084 = vmatpush.xpose.msra.mxu0 %v2067
    %2085 = vmatmul.f32.gmra.mxu0 %v2065
    %v2086 = vpop.f32.mrf.mxu0
    %v2087 = vadd.f32 0.0, %v2086
    %2088 = vdwg.mxu0
    %2089 = vrot.lane.b32.xlu0 %v707, 112
    %v2090 = vpop.permute.xlu0 %2089
    %2091 = vrot.lane.b32.xlu0 %v707, 80
    %v2092 = vpop.permute.xlu0 %2091
    %v2093 = vsel %vm757, %v2090, 0
    %v2095 = vsel %vm757, %v2092, 0
    %2097 = vmatpush.xpose.msra.mxu0 0.0
    %2098 = vmatpush.xpose.msra.mxu0 0.0
    %2099 = vmatpush.xpose.msra.mxu0 0.0
    %2100 = vmatpush.xpose.msra.mxu0 0.0
    %2101 = vmatpush.xpose.msra.mxu0 0.0
    %2102 = vmatpush.xpose.msra.mxu0 0.0
    %2103 = vmatpush.xpose.msra.mxu0 0.0
    %2104 = vmatpush.xpose.msra.mxu0 0.0
    %2105 = vmatpush.xpose.msra.mxu0 0.0
    %2106 = vmatpush.xpose.msra.mxu0 0.0
    %2107 = vmatpush.xpose.msra.mxu0 0.0
    %2108 = vmatpush.xpose.msra.mxu0 0.0
    %2109 = vmatpush.xpose.msra.mxu0 0.0
    %2110 = vmatpush.xpose.msra.mxu0 0.0
    %2111 = vmatpush.xpose.msra.mxu0 0.0
    %2112 = vmatpush.xpose.msra.mxu0 %v2095
    %2113 = vmatmul.f32.gmra.mxu0 %v2093
    %v2114 = vpop.f32.mrf.mxu0
    %v2115 = vadd.f32 0.0, %v2114
    %2116 = vdwg.mxu0
    %2117 = vrot.lane.b32.xlu0 %v710, 112
    %v2118 = vpop.permute.xlu0 %2117
    %2119 = vrot.lane.b32.xlu0 %v710, 80
    %v2120 = vpop.permute.xlu0 %2119
    %v2121 = vsel %vm757, %v2118, 0
    %v2123 = vsel %vm757, %v2120, 0
    %2125 = vmatpush.xpose.msra.mxu0 0.0
    %2126 = vmatpush.xpose.msra.mxu0 0.0
    %2127 = vmatpush.xpose.msra.mxu0 0.0
    %2128 = vmatpush.xpose.msra.mxu0 0.0
    %2129 = vmatpush.xpose.msra.mxu0 0.0
    %2130 = vmatpush.xpose.msra.mxu0 0.0
    %2131 = vmatpush.xpose.msra.mxu0 0.0
    %2132 = vmatpush.xpose.msra.mxu0 0.0
    %2133 = vmatpush.xpose.msra.mxu0 0.0
    %2134 = vmatpush.xpose.msra.mxu0 0.0
    %2135 = vmatpush.xpose.msra.mxu0 0.0
    %2136 = vmatpush.xpose.msra.mxu0 0.0
    %2137 = vmatpush.xpose.msra.mxu0 0.0
    %2138 = vmatpush.xpose.msra.mxu0 0.0
    %2139 = vmatpush.xpose.msra.mxu0 0.0
    %2140 = vmatpush.xpose.msra.mxu0 %v2123
    %2141 = vmatmul.f32.gmra.mxu0 %v2121
    %v2142 = vpop.f32.mrf.mxu0
    %v2143 = vadd.f32 0.0, %v2142
    %2144 = vdwg.mxu0
    %2145 = vrot.lane.b32.xlu0 %v712, 112
    %v2146 = vpop.permute.xlu0 %2145
    %2147 = vrot.lane.b32.xlu0 %v712, 80
    %v2148 = vpop.permute.xlu0 %2147
    %v2149 = vsel %vm757, %v2146, 0
    %v2151 = vsel %vm757, %v2148, 0
    %2153 = vmatpush.xpose.msra.mxu0 0.0
    %2154 = vmatpush.xpose.msra.mxu0 0.0
    %2155 = vmatpush.xpose.msra.mxu0 0.0
    %2156 = vmatpush.xpose.msra.mxu0 0.0
    %2157 = vmatpush.xpose.msra.mxu0 0.0
    %2158 = vmatpush.xpose.msra.mxu0 0.0
    %2159 = vmatpush.xpose.msra.mxu0 0.0
    %2160 = vmatpush.xpose.msra.mxu0 0.0
    %2161 = vmatpush.xpose.msra.mxu0 0.0
    %2162 = vmatpush.xpose.msra.mxu0 0.0
    %2163 = vmatpush.xpose.msra.mxu0 0.0
    %2164 = vmatpush.xpose.msra.mxu0 0.0
    %2165 = vmatpush.xpose.msra.mxu0 0.0
    %2166 = vmatpush.xpose.msra.mxu0 0.0
    %2167 = vmatpush.xpose.msra.mxu0 0.0
    %2168 = vmatpush.xpose.msra.mxu0 %v2151
    %2169 = vmatmul.f32.gmra.mxu0 %v2149
    %v2170 = vpop.f32.mrf.mxu0
    %v2171 = vadd.f32 0.0, %v2170
    %2172 = vdwg.mxu0
    %2173 = vrot.lane.b32.xlu0 %v715, 112
    %v2174 = vpop.permute.xlu0 %2173
    %2175 = vrot.lane.b32.xlu0 %v715, 80
    %v2176 = vpop.permute.xlu0 %2175
    %v2177 = vsel %vm757, %v2174, 0
    %v2179 = vsel %vm757, %v2176, 0
    %2181 = vmatpush.xpose.msra.mxu0 0.0
    %2182 = vmatpush.xpose.msra.mxu0 0.0
    %2183 = vmatpush.xpose.msra.mxu0 0.0
    %2184 = vmatpush.xpose.msra.mxu0 0.0
    %2185 = vmatpush.xpose.msra.mxu0 0.0
    %2186 = vmatpush.xpose.msra.mxu0 0.0
    %2187 = vmatpush.xpose.msra.mxu0 0.0
    %2188 = vmatpush.xpose.msra.mxu0 0.0
    %2189 = vmatpush.xpose.msra.mxu0 0.0
    %2190 = vmatpush.xpose.msra.mxu0 0.0
    %2191 = vmatpush.xpose.msra.mxu0 0.0
    %2192 = vmatpush.xpose.msra.mxu0 0.0
    %2193 = vmatpush.xpose.msra.mxu0 0.0
    %2194 = vmatpush.xpose.msra.mxu0 0.0
    %2195 = vmatpush.xpose.msra.mxu0 0.0
    %2196 = vmatpush.xpose.msra.mxu0 %v2179
    %2197 = vmatmul.f32.gmra.mxu0 %v2177
    %v2198 = vpop.f32.mrf.mxu0
    %v2199 = vadd.f32 0.0, %v2198
    %2200 = vdwg.mxu0
    %2201 = vrot.lane.b32.xlu0 %v717, 112
    %v2202 = vpop.permute.xlu0 %2201
    %2203 = vrot.lane.b32.xlu0 %v717, 80
    %v2204 = vpop.permute.xlu0 %2203
    %v2205 = vsel %vm757, %v2202, 0
    %v2207 = vsel %vm757, %v2204, 0
    %2209 = vmatpush.xpose.msra.mxu0 0.0
    %2210 = vmatpush.xpose.msra.mxu0 0.0
    %2211 = vmatpush.xpose.msra.mxu0 0.0
    %2212 = vmatpush.xpose.msra.mxu0 0.0
    %2213 = vmatpush.xpose.msra.mxu0 0.0
    %2214 = vmatpush.xpose.msra.mxu0 0.0
    %2215 = vmatpush.xpose.msra.mxu0 0.0
    %2216 = vmatpush.xpose.msra.mxu0 0.0
    %2217 = vmatpush.xpose.msra.mxu0 0.0
    %2218 = vmatpush.xpose.msra.mxu0 0.0
    %2219 = vmatpush.xpose.msra.mxu0 0.0
    %2220 = vmatpush.xpose.msra.mxu0 0.0
    %2221 = vmatpush.xpose.msra.mxu0 0.0
    %2222 = vmatpush.xpose.msra.mxu0 0.0
    %2223 = vmatpush.xpose.msra.mxu0 0.0
    %2224 = vmatpush.xpose.msra.mxu0 %v2207
    %2225 = vmatmul.f32.gmra.mxu0 %v2205
    %v2226 = vpop.f32.mrf.mxu0
    %v2227 = vadd.f32 0.0, %v2226
    %2228 = vdwg.mxu0
    %2229 = vrot.lane.b32.xlu0 %v720, 112
    %v2230 = vpop.permute.xlu0 %2229
    %2231 = vrot.lane.b32.xlu0 %v720, 80
    %v2232 = vpop.permute.xlu0 %2231
    %v2233 = vsel %vm757, %v2230, 0
    %v2235 = vsel %vm757, %v2232, 0
    %2237 = vmatpush.xpose.msra.mxu0 0.0
    %2238 = vmatpush.xpose.msra.mxu0 0.0
    %2239 = vmatpush.xpose.msra.mxu0 0.0
    %2240 = vmatpush.xpose.msra.mxu0 0.0
    %2241 = vmatpush.xpose.msra.mxu0 0.0
    %2242 = vmatpush.xpose.msra.mxu0 0.0
    %2243 = vmatpush.xpose.msra.mxu0 0.0
    %2244 = vmatpush.xpose.msra.mxu0 0.0
    %2245 = vmatpush.xpose.msra.mxu0 0.0
    %2246 = vmatpush.xpose.msra.mxu0 0.0
    %2247 = vmatpush.xpose.msra.mxu0 0.0
    %2248 = vmatpush.xpose.msra.mxu0 0.0
    %2249 = vmatpush.xpose.msra.mxu0 0.0
    %2250 = vmatpush.xpose.msra.mxu0 0.0
    %2251 = vmatpush.xpose.msra.mxu0 0.0
    %2252 = vmatpush.xpose.msra.mxu0 %v2235
    %2253 = vmatmul.f32.gmra.mxu0 %v2233
    %v2254 = vpop.f32.mrf.mxu0
    %v2255 = vadd.f32 0.0, %v2254
    %2256 = vdwg.mxu0
    %2257 = vrot.lane.b32.xlu0 %v722, 112
    %v2258 = vpop.permute.xlu0 %2257
    %2259 = vrot.lane.b32.xlu0 %v722, 80
    %v2260 = vpop.permute.xlu0 %2259
    %v2261 = vsel %vm757, %v2258, 0
    %v2263 = vsel %vm757, %v2260, 0
    %2265 = vmatpush.xpose.msra.mxu0 0.0
    %2266 = vmatpush.xpose.msra.mxu0 0.0
    %2267 = vmatpush.xpose.msra.mxu0 0.0
    %2268 = vmatpush.xpose.msra.mxu0 0.0
    %2269 = vmatpush.xpose.msra.mxu0 0.0
    %2270 = vmatpush.xpose.msra.mxu0 0.0
    %2271 = vmatpush.xpose.msra.mxu0 0.0
    %2272 = vmatpush.xpose.msra.mxu0 0.0
    %2273 = vmatpush.xpose.msra.mxu0 0.0
    %2274 = vmatpush.xpose.msra.mxu0 0.0
    %2275 = vmatpush.xpose.msra.mxu0 0.0
    %2276 = vmatpush.xpose.msra.mxu0 0.0
    %2277 = vmatpush.xpose.msra.mxu0 0.0
    %2278 = vmatpush.xpose.msra.mxu0 0.0
    %2279 = vmatpush.xpose.msra.mxu0 0.0
    %2280 = vmatpush.xpose.msra.mxu0 %v2263
    %2281 = vmatmul.f32.gmra.mxu0 %v2261
    %v2282 = vpop.f32.mrf.mxu0
    %v2283 = vadd.f32 0.0, %v2282
    %2284 = vdwg.mxu0
    %2285 = vrot.lane.b32.xlu0 %v725, 112
    %v2286 = vpop.permute.xlu0 %2285
    %2287 = vrot.lane.b32.xlu0 %v725, 80
    %v2288 = vpop.permute.xlu0 %2287
    %v2289 = vsel %vm757, %v2286, 0
    %v2291 = vsel %vm757, %v2288, 0
    %2293 = vmatpush.xpose.msra.mxu0 0.0
    %2294 = vmatpush.xpose.msra.mxu0 0.0
    %2295 = vmatpush.xpose.msra.mxu0 0.0
    %2296 = vmatpush.xpose.msra.mxu0 0.0
    %2297 = vmatpush.xpose.msra.mxu0 0.0
    %2298 = vmatpush.xpose.msra.mxu0 0.0
    %2299 = vmatpush.xpose.msra.mxu0 0.0
    %2300 = vmatpush.xpose.msra.mxu0 0.0
    %2301 = vmatpush.xpose.msra.mxu0 0.0
    %2302 = vmatpush.xpose.msra.mxu0 0.0
    %2303 = vmatpush.xpose.msra.mxu0 0.0
    %2304 = vmatpush.xpose.msra.mxu0 0.0
    %2305 = vmatpush.xpose.msra.mxu0 0.0
    %2306 = vmatpush.xpose.msra.mxu0 0.0
    %2307 = vmatpush.xpose.msra.mxu0 0.0
    %2308 = vmatpush.xpose.msra.mxu0 %v2291
    %2309 = vmatmul.f32.gmra.mxu0 %v2289
    %v2310 = vpop.f32.mrf.mxu0
    %v2311 = vadd.f32 0.0, %v2310
    %2312 = vdwg.mxu0
    %2313 = vrot.lane.b32.xlu0 %v727, 112
    %v2314 = vpop.permute.xlu0 %2313
    %2315 = vrot.lane.b32.xlu0 %v727, 80
    %v2316 = vpop.permute.xlu0 %2315
    %v2317 = vsel %vm757, %v2314, 0
    %v2319 = vsel %vm757, %v2316, 0
    %2321 = vmatpush.xpose.msra.mxu0 0.0
    %2322 = vmatpush.xpose.msra.mxu0 0.0
    %2323 = vmatpush.xpose.msra.mxu0 0.0
    %2324 = vmatpush.xpose.msra.mxu0 0.0
    %2325 = vmatpush.xpose.msra.mxu0 0.0
    %2326 = vmatpush.xpose.msra.mxu0 0.0
    %2327 = vmatpush.xpose.msra.mxu0 0.0
    %2328 = vmatpush.xpose.msra.mxu0 0.0
    %2329 = vmatpush.xpose.msra.mxu0 0.0
    %2330 = vmatpush.xpose.msra.mxu0 0.0
    %2331 = vmatpush.xpose.msra.mxu0 0.0
    %2332 = vmatpush.xpose.msra.mxu0 0.0
    %2333 = vmatpush.xpose.msra.mxu0 0.0
    %2334 = vmatpush.xpose.msra.mxu0 0.0
    %2335 = vmatpush.xpose.msra.mxu0 0.0
    %2336 = vmatpush.xpose.msra.mxu0 %v2319
    %2337 = vmatmul.f32.gmra.mxu0 %v2317
    %v2338 = vpop.f32.mrf.mxu0
    %v2339 = vadd.f32 0.0, %v2338
    %2340 = vdwg.mxu0
    %2341 = vrot.lane.b32.xlu0 %v730, 112
    %v2342 = vpop.permute.xlu0 %2341
    %2343 = vrot.lane.b32.xlu0 %v730, 80
    %v2344 = vpop.permute.xlu0 %2343
    %v2345 = vsel %vm757, %v2342, 0
    %v2347 = vsel %vm757, %v2344, 0
    %2349 = vmatpush.xpose.msra.mxu0 0.0
    %2350 = vmatpush.xpose.msra.mxu0 0.0
    %2351 = vmatpush.xpose.msra.mxu0 0.0
    %2352 = vmatpush.xpose.msra.mxu0 0.0
    %2353 = vmatpush.xpose.msra.mxu0 0.0
    %2354 = vmatpush.xpose.msra.mxu0 0.0
    %2355 = vmatpush.xpose.msra.mxu0 0.0
    %2356 = vmatpush.xpose.msra.mxu0 0.0
    %2357 = vmatpush.xpose.msra.mxu0 0.0
    %2358 = vmatpush.xpose.msra.mxu0 0.0
    %2359 = vmatpush.xpose.msra.mxu0 0.0
    %2360 = vmatpush.xpose.msra.mxu0 0.0
    %2361 = vmatpush.xpose.msra.mxu0 0.0
    %2362 = vmatpush.xpose.msra.mxu0 0.0
    %2363 = vmatpush.xpose.msra.mxu0 0.0
    %2364 = vmatpush.xpose.msra.mxu0 %v2347
    %2365 = vmatmul.f32.gmra.mxu0 %v2345
    %v2366 = vpop.f32.mrf.mxu0
    %v2367 = vadd.f32 0.0, %v2366
    %2368 = vdwg.mxu0
    %2369 = vrot.lane.b32.xlu0 %v732, 112
    %v2370 = vpop.permute.xlu0 %2369
    %2371 = vrot.lane.b32.xlu0 %v732, 80
    %v2372 = vpop.permute.xlu0 %2371
    %v2373 = vsel %vm757, %v2370, 0
    %v2375 = vsel %vm757, %v2372, 0
    %2377 = vmatpush.xpose.msra.mxu0 0.0
    %2378 = vmatpush.xpose.msra.mxu0 0.0
    %2379 = vmatpush.xpose.msra.mxu0 0.0
    %2380 = vmatpush.xpose.msra.mxu0 0.0
    %2381 = vmatpush.xpose.msra.mxu0 0.0
    %2382 = vmatpush.xpose.msra.mxu0 0.0
    %2383 = vmatpush.xpose.msra.mxu0 0.0
    %2384 = vmatpush.xpose.msra.mxu0 0.0
    %2385 = vmatpush.xpose.msra.mxu0 0.0
    %2386 = vmatpush.xpose.msra.mxu0 0.0
    %2387 = vmatpush.xpose.msra.mxu0 0.0
    %2388 = vmatpush.xpose.msra.mxu0 0.0
    %2389 = vmatpush.xpose.msra.mxu0 0.0
    %2390 = vmatpush.xpose.msra.mxu0 0.0
    %2391 = vmatpush.xpose.msra.mxu0 0.0
    %2392 = vmatpush.xpose.msra.mxu0 %v2375
    %2393 = vmatmul.f32.gmra.mxu0 %v2373
    %v2394 = vpop.f32.mrf.mxu0
    %v2395 = vadd.f32 0.0, %v2394
    %2396 = vdwg.mxu0
    %v2397 = vmul.f32 %v1975, 0.25
    %v2398 = vmul.f32 %v2003, 0.25
    %v2399 = vmul.f32 %v2031, 0.25
    %v2400 = vmul.f32 %v2059, 0.25
    %v2401 = vmul.f32 %v2087, 0.25
    %v2402 = vmul.f32 %v2115, 0.25
    %v2403 = vmul.f32 %v2143, 0.25
    %v2404 = vmul.f32 %v2171, 0.25
    %v2405 = vmul.f32 %v2199, 0.25
    %v2406 = vmul.f32 %v2227, 0.25
    %v2407 = vmul.f32 %v2255, 0.25
    %v2408 = vmul.f32 %v2283, 0.25
    %v2409 = vmul.f32 %v2311, 0.25
    %v2410 = vmul.f32 %v2339, 0.25
    %v2411 = vmul.f32 %v2367, 0.25
    %v2412 = vmul.f32 %v2395, 0.25
    %v2413 = vadd.f32 %v2397, %v1203
    %v2414 = vadd.f32 %v2398, %v1204
    %v2415 = vadd.f32 %v2399, %v1205
    %v2416 = vadd.f32 %v2400, %v1206
    %v2417 = vadd.f32 %v2401, %v1207
    %v2418 = vadd.f32 %v2402, %v1208
    %v2419 = vadd.f32 %v2403, %v1209
    %v2420 = vadd.f32 %v2404, %v1210
    %v2421 = vadd.f32 %v2405, %v1211
    %v2422 = vadd.f32 %v2406, %v1212
    %v2423 = vadd.f32 %v2407, %v1213
    %v2424 = vadd.f32 %v2408, %v1214
    %v2425 = vadd.f32 %v2409, %v1215
    %v2426 = vadd.f32 %v2410, %v1216
    %v2427 = vadd.f32 %v2411, %v1217
    %v2428 = vadd.f32 %v2412, %v1218
    %v2429 = vsel %vm1251, %v2413, -inf
    %2430 = vmax.xlane.f32.xlu0 %v2429
    %v2431 = vpop.xlane.xlu0 %2430
    %v2432 = vsel %vm1251, %v2414, -inf
    %2433 = vmax.xlane.f32.xlu0 %v2432
    %v2434 = vpop.xlane.xlu0 %2433
    %v2435 = vsel %vm1251, %v2415, -inf
    %2436 = vmax.xlane.f32.xlu0 %v2435
    %v2437 = vpop.xlane.xlu0 %2436
    %v2438 = vsel %vm1251, %v2416, -inf
    %2439 = vmax.xlane.f32.xlu0 %v2438
    %v2440 = vpop.xlane.xlu0 %2439
    %v2441 = vsel %vm1251, %v2417, -inf
    %2442 = vmax.xlane.f32.xlu0 %v2441
    %v2443 = vpop.xlane.xlu0 %2442
    %v2444 = vsel %vm1251, %v2418, -inf
    %2445 = vmax.xlane.f32.xlu0 %v2444
    %v2446 = vpop.xlane.xlu0 %2445
    %v2447 = vsel %vm1251, %v2419, -inf
    %2448 = vmax.xlane.f32.xlu0 %v2447
    %v2449 = vpop.xlane.xlu0 %2448
    %v2450 = vsel %vm1251, %v2420, -inf
    %2451 = vmax.xlane.f32.xlu0 %v2450
    %v2452 = vpop.xlane.xlu0 %2451
    %v2453 = vsel %vm1251, %v2421, -inf
    %2454 = vmax.xlane.f32.xlu0 %v2453
    %v2455 = vpop.xlane.xlu0 %2454
    %v2456 = vsel %vm1251, %v2422, -inf
    %2457 = vmax.xlane.f32.xlu0 %v2456
    %v2458 = vpop.xlane.xlu0 %2457
    %v2459 = vsel %vm1251, %v2423, -inf
    %2460 = vmax.xlane.f32.xlu0 %v2459
    %v2461 = vpop.xlane.xlu0 %2460
    %v2462 = vsel %vm1251, %v2424, -inf
    %2463 = vmax.xlane.f32.xlu0 %v2462
    %v2464 = vpop.xlane.xlu0 %2463
    %v2465 = vsel %vm1251, %v2425, -inf
    %2466 = vmax.xlane.f32.xlu0 %v2465
    %v2467 = vpop.xlane.xlu0 %2466
    %v2468 = vsel %vm1251, %v2426, -inf
    %2469 = vmax.xlane.f32.xlu0 %v2468
    %v2470 = vpop.xlane.xlu0 %2469
    %v2471 = vsel %vm1251, %v2427, -inf
    %2472 = vmax.xlane.f32.xlu0 %v2471
    %v2473 = vpop.xlane.xlu0 %2472
    %v2474 = vsel %vm1251, %v2428, -inf
    %2475 = vmax.xlane.f32.xlu0 %v2474
    %v2476 = vpop.xlane.xlu0 %2475
    %v2477 = vsub.f32 %v2413, %v2431
    %v2478 = vsub.f32 %v2414, %v2434
    %v2479 = vsub.f32 %v2415, %v2437
    %v2480 = vsub.f32 %v2416, %v2440
    %v2481 = vsub.f32 %v2417, %v2443
    %v2482 = vsub.f32 %v2418, %v2446
    %v2483 = vsub.f32 %v2419, %v2449
    %v2484 = vsub.f32 %v2420, %v2452
    %v2485 = vsub.f32 %v2421, %v2455
    %v2486 = vsub.f32 %v2422, %v2458
    %v2487 = vsub.f32 %v2423, %v2461
    %v2488 = vsub.f32 %v2424, %v2464
    %v2489 = vsub.f32 %v2425, %v2467
    %v2490 = vsub.f32 %v2426, %v2470
    %v2491 = vsub.f32 %v2427, %v2473
    %v2492 = vsub.f32 %v2428, %v2476
    %v2493 = vmul.f32 %v2477, 1.442695
    %v2494 = vpow.pop %v2493
    %v2495 = vmul.f32 %v2478, 1.442695
    %v2496 = vpow.pop %v2495
    %v2497 = vmul.f32 %v2479, 1.442695
    %v2498 = vpow.pop %v2497
    %v2499 = vmul.f32 %v2480, 1.442695
    %v2500 = vpow.pop %v2499
    %v2501 = vmul.f32 %v2481, 1.442695
    %v2502 = vpow.pop %v2501
    %v2503 = vmul.f32 %v2482, 1.442695
    %v2504 = vpow.pop %v2503
    %v2505 = vmul.f32 %v2483, 1.442695
    %v2506 = vpow.pop %v2505
    %v2507 = vmul.f32 %v2484, 1.442695
    %v2508 = vpow.pop %v2507
    %v2509 = vmul.f32 %v2485, 1.442695
    %v2510 = vpow.pop %v2509
    %v2511 = vmul.f32 %v2486, 1.442695
    %v2512 = vpow.pop %v2511
    %v2513 = vmul.f32 %v2487, 1.442695
    %v2514 = vpow.pop %v2513
    %v2515 = vmul.f32 %v2488, 1.442695
    %v2516 = vpow.pop %v2515
    %v2517 = vmul.f32 %v2489, 1.442695
    %v2518 = vpow.pop %v2517
    %v2519 = vmul.f32 %v2490, 1.442695
    %v2520 = vpow.pop %v2519
    %v2521 = vmul.f32 %v2491, 1.442695
    %v2522 = vpow.pop %v2521
    %v2523 = vmul.f32 %v2492, 1.442695
    %v2524 = vpow.pop %v2523
    %v2525 = vsel %vm1251, %v2494, 0.0
    %2526 = vadd.xlane.f32.xlu0 %v2525
    %v2527 = vpop.xlane.xlu0 %2526
    %v2528 = vsel %vm1251, %v2496, 0.0
    %2529 = vadd.xlane.f32.xlu0 %v2528
    %v2530 = vpop.xlane.xlu0 %2529
    %v2531 = vsel %vm1251, %v2498, 0.0
    %2532 = vadd.xlane.f32.xlu0 %v2531
    %v2533 = vpop.xlane.xlu0 %2532
    %v2534 = vsel %vm1251, %v2500, 0.0
    %2535 = vadd.xlane.f32.xlu0 %v2534
    %v2536 = vpop.xlane.xlu0 %2535
    %v2537 = vsel %vm1251, %v2502, 0.0
    %2538 = vadd.xlane.f32.xlu0 %v2537
    %v2539 = vpop.xlane.xlu0 %2538
    %v2540 = vsel %vm1251, %v2504, 0.0
    %2541 = vadd.xlane.f32.xlu0 %v2540
    %v2542 = vpop.xlane.xlu0 %2541
    %v2543 = vsel %vm1251, %v2506, 0.0
    %2544 = vadd.xlane.f32.xlu0 %v2543
    %v2545 = vpop.xlane.xlu0 %2544
    %v2546 = vsel %vm1251, %v2508, 0.0
    %2547 = vadd.xlane.f32.xlu0 %v2546
    %v2548 = vpop.xlane.xlu0 %2547
    %v2549 = vsel %vm1251, %v2510, 0.0
    %2550 = vadd.xlane.f32.xlu0 %v2549
    %v2551 = vpop.xlane.xlu0 %2550
    %v2552 = vsel %vm1251, %v2512, 0.0
    %2553 = vadd.xlane.f32.xlu0 %v2552
    %v2554 = vpop.xlane.xlu0 %2553
    %v2555 = vsel %vm1251, %v2514, 0.0
    %2556 = vadd.xlane.f32.xlu0 %v2555
    %v2557 = vpop.xlane.xlu0 %2556
    %v2558 = vsel %vm1251, %v2516, 0.0
    %2559 = vadd.xlane.f32.xlu0 %v2558
    %v2560 = vpop.xlane.xlu0 %2559
    %v2561 = vsel %vm1251, %v2518, 0.0
    %2562 = vadd.xlane.f32.xlu0 %v2561
    %v2563 = vpop.xlane.xlu0 %2562
    %v2564 = vsel %vm1251, %v2520, 0.0
    %2565 = vadd.xlane.f32.xlu0 %v2564
    %v2566 = vpop.xlane.xlu0 %2565
    %v2567 = vsel %vm1251, %v2522, 0.0
    %2568 = vadd.xlane.f32.xlu0 %v2567
    %v2569 = vpop.xlane.xlu0 %2568
    %v2570 = vsel %vm1251, %v2524, 0.0
    %2571 = vadd.xlane.f32.xlu0 %v2570
    %v2572 = vpop.xlane.xlu0 %2571
    %v2573 = vrcp.pop %v2527
    %v2574 = vrcp.pop %v2530
    %v2575 = vrcp.pop %v2533
    %v2576 = vrcp.pop %v2536
    %v2577 = vrcp.pop %v2539
    %v2578 = vrcp.pop %v2542
    %v2579 = vrcp.pop %v2545
    %v2580 = vrcp.pop %v2548
    %v2581 = vrcp.pop %v2551
    %v2582 = vrcp.pop %v2554
    %v2583 = vrcp.pop %v2557
    %v2584 = vrcp.pop %v2560
    %v2585 = vrcp.pop %v2563
    %v2586 = vrcp.pop %v2566
    %v2587 = vrcp.pop %v2569
    %v2588 = vrcp.pop %v2572
    %v2589 = vmul.f32 %v2494, %v2573
    %v2590 = vmul.f32 %v2496, %v2574
    %v2591 = vmul.f32 %v2498, %v2575
    %v2592 = vmul.f32 %v2500, %v2576
    %v2593 = vmul.f32 %v2502, %v2577
    %v2594 = vmul.f32 %v2504, %v2578
    %v2595 = vmul.f32 %v2506, %v2579
    %v2596 = vmul.f32 %v2508, %v2580
    %v2597 = vmul.f32 %v2510, %v2581
    %v2598 = vmul.f32 %v2512, %v2582
    %v2599 = vmul.f32 %v2514, %v2583
    %v2600 = vmul.f32 %v2516, %v2584
    %v2601 = vmul.f32 %v2518, %v2585
    %v2602 = vmul.f32 %v2520, %v2586
    %v2603 = vmul.f32 %v2522, %v2587
    %v2604 = vmul.f32 %v2524, %v2588
    %2605 = vrot.lane.b32.xlu0 %v695, 48
    %v2606 = vpop.permute.xlu0 %2605
    %v2609 = vsel %vm1251, %v2589, 0
    %2611 = vmatpush.msra.mxu0 0.0
    %2612 = vmatpush.msra.mxu0 0.0
    %2613 = vmatpush.msra.mxu0 0.0
    %2614 = vmatpush.msra.mxu0 0.0
    %2615 = vmatpush.msra.mxu0 0.0
    %2616 = vmatpush.msra.mxu0 0.0
    %2617 = vmatpush.msra.mxu0 0.0
    %2618 = vmatpush.msra.mxu0 0.0
    %2619 = vmatpush.msra.mxu0 0.0
    %2620 = vmatpush.msra.mxu0 0.0
    %2621 = vmatpush.msra.mxu0 0.0
    %2622 = vmatpush.msra.mxu0 0.0
    %2623 = vmatpush.msra.mxu0 0.0
    %2624 = vmatpush.msra.mxu0 0.0
    %2625 = vmatpush.msra.mxu0 0.0
    %2626 = vmatpush.msra.mxu0 %v2606
    %2627 = vmatmul.f32.gmra.mxu0 %v2609
    %v2628 = vpop.f32.mrf.mxu0
    %v2629 = vadd.f32 0.0, %v2628
    %2630 = vdwg.mxu0
    %2631 = vrot.lane.b32.xlu0 %v697, 48
    %v2632 = vpop.permute.xlu0 %2631
    %v2635 = vsel %vm1251, %v2590, 0
    %2637 = vmatpush.msra.mxu0 0.0
    %2638 = vmatpush.msra.mxu0 0.0
    %2639 = vmatpush.msra.mxu0 0.0
    %2640 = vmatpush.msra.mxu0 0.0
    %2641 = vmatpush.msra.mxu0 0.0
    %2642 = vmatpush.msra.mxu0 0.0
    %2643 = vmatpush.msra.mxu0 0.0
    %2644 = vmatpush.msra.mxu0 0.0
    %2645 = vmatpush.msra.mxu0 0.0
    %2646 = vmatpush.msra.mxu0 0.0
    %2647 = vmatpush.msra.mxu0 0.0
    %2648 = vmatpush.msra.mxu0 0.0
    %2649 = vmatpush.msra.mxu0 0.0
    %2650 = vmatpush.msra.mxu0 0.0
    %2651 = vmatpush.msra.mxu0 0.0
    %2652 = vmatpush.msra.mxu0 %v2632
    %2653 = vmatmul.f32.gmra.mxu0 %v2635
    %v2654 = vpop.f32.mrf.mxu0
    %v2655 = vadd.f32 0.0, %v2654
    %2656 = vdwg.mxu0
    %2657 = vrot.lane.b32.xlu0 %v700, 48
    %v2658 = vpop.permute.xlu0 %2657
    %v2661 = vsel %vm1251, %v2591, 0
    %2663 = vmatpush.msra.mxu0 0.0
    %2664 = vmatpush.msra.mxu0 0.0
    %2665 = vmatpush.msra.mxu0 0.0
    %2666 = vmatpush.msra.mxu0 0.0
    %2667 = vmatpush.msra.mxu0 0.0
    %2668 = vmatpush.msra.mxu0 0.0
    %2669 = vmatpush.msra.mxu0 0.0
    %2670 = vmatpush.msra.mxu0 0.0
    %2671 = vmatpush.msra.mxu0 0.0
    %2672 = vmatpush.msra.mxu0 0.0
    %2673 = vmatpush.msra.mxu0 0.0
    %2674 = vmatpush.msra.mxu0 0.0
    %2675 = vmatpush.msra.mxu0 0.0
    %2676 = vmatpush.msra.mxu0 0.0
    %2677 = vmatpush.msra.mxu0 0.0
    %2678 = vmatpush.msra.mxu0 %v2658
    %2679 = vmatmul.f32.gmra.mxu0 %v2661
    %v2680 = vpop.f32.mrf.mxu0
    %v2681 = vadd.f32 0.0, %v2680
    %2682 = vdwg.mxu0
    %2683 = vrot.lane.b32.xlu0 %v702, 48
    %v2684 = vpop.permute.xlu0 %2683
    %v2687 = vsel %vm1251, %v2592, 0
    %2689 = vmatpush.msra.mxu0 0.0
    %2690 = vmatpush.msra.mxu0 0.0
    %2691 = vmatpush.msra.mxu0 0.0
    %2692 = vmatpush.msra.mxu0 0.0
    %2693 = vmatpush.msra.mxu0 0.0
    %2694 = vmatpush.msra.mxu0 0.0
    %2695 = vmatpush.msra.mxu0 0.0
    %2696 = vmatpush.msra.mxu0 0.0
    %2697 = vmatpush.msra.mxu0 0.0
    %2698 = vmatpush.msra.mxu0 0.0
    %2699 = vmatpush.msra.mxu0 0.0
    %2700 = vmatpush.msra.mxu0 0.0
    %2701 = vmatpush.msra.mxu0 0.0
    %2702 = vmatpush.msra.mxu0 0.0
    %2703 = vmatpush.msra.mxu0 0.0
    %2704 = vmatpush.msra.mxu0 %v2684
    %2705 = vmatmul.f32.gmra.mxu0 %v2687
    %v2706 = vpop.f32.mrf.mxu0
    %v2707 = vadd.f32 0.0, %v2706
    %2708 = vdwg.mxu0
    %2709 = vrot.lane.b32.xlu0 %v705, 48
    %v2710 = vpop.permute.xlu0 %2709
    %v2713 = vsel %vm1251, %v2593, 0
    %2715 = vmatpush.msra.mxu0 0.0
    %2716 = vmatpush.msra.mxu0 0.0
    %2717 = vmatpush.msra.mxu0 0.0
    %2718 = vmatpush.msra.mxu0 0.0
    %2719 = vmatpush.msra.mxu0 0.0
    %2720 = vmatpush.msra.mxu0 0.0
    %2721 = vmatpush.msra.mxu0 0.0
    %2722 = vmatpush.msra.mxu0 0.0
    %2723 = vmatpush.msra.mxu0 0.0
    %2724 = vmatpush.msra.mxu0 0.0
    %2725 = vmatpush.msra.mxu0 0.0
    %2726 = vmatpush.msra.mxu0 0.0
    %2727 = vmatpush.msra.mxu0 0.0
    %2728 = vmatpush.msra.mxu0 0.0
    %2729 = vmatpush.msra.mxu0 0.0
    %2730 = vmatpush.msra.mxu0 %v2710
    %2731 = vmatmul.f32.gmra.mxu0 %v2713
    %v2732 = vpop.f32.mrf.mxu0
    %v2733 = vadd.f32 0.0, %v2732
    %2734 = vdwg.mxu0
    %2735 = vrot.lane.b32.xlu0 %v707, 48
    %v2736 = vpop.permute.xlu0 %2735
    %v2739 = vsel %vm1251, %v2594, 0
    %2741 = vmatpush.msra.mxu0 0.0
    %2742 = vmatpush.msra.mxu0 0.0
    %2743 = vmatpush.msra.mxu0 0.0
    %2744 = vmatpush.msra.mxu0 0.0
    %2745 = vmatpush.msra.mxu0 0.0
    %2746 = vmatpush.msra.mxu0 0.0
    %2747 = vmatpush.msra.mxu0 0.0
    %2748 = vmatpush.msra.mxu0 0.0
    %2749 = vmatpush.msra.mxu0 0.0
    %2750 = vmatpush.msra.mxu0 0.0
    %2751 = vmatpush.msra.mxu0 0.0
    %2752 = vmatpush.msra.mxu0 0.0
    %2753 = vmatpush.msra.mxu0 0.0
    %2754 = vmatpush.msra.mxu0 0.0
    %2755 = vmatpush.msra.mxu0 0.0
    %2756 = vmatpush.msra.mxu0 %v2736
    %2757 = vmatmul.f32.gmra.mxu0 %v2739
    %v2758 = vpop.f32.mrf.mxu0
    %v2759 = vadd.f32 0.0, %v2758
    %2760 = vdwg.mxu0
    %2761 = vrot.lane.b32.xlu0 %v710, 48
    %v2762 = vpop.permute.xlu0 %2761
    %v2765 = vsel %vm1251, %v2595, 0
    %2767 = vmatpush.msra.mxu0 0.0
    %2768 = vmatpush.msra.mxu0 0.0
    %2769 = vmatpush.msra.mxu0 0.0
    %2770 = vmatpush.msra.mxu0 0.0
    %2771 = vmatpush.msra.mxu0 0.0
    %2772 = vmatpush.msra.mxu0 0.0
    %2773 = vmatpush.msra.mxu0 0.0
    %2774 = vmatpush.msra.mxu0 0.0
    %2775 = vmatpush.msra.mxu0 0.0
    %2776 = vmatpush.msra.mxu0 0.0
    %2777 = vmatpush.msra.mxu0 0.0
    %2778 = vmatpush.msra.mxu0 0.0
    %2779 = vmatpush.msra.mxu0 0.0
    %2780 = vmatpush.msra.mxu0 0.0
    %2781 = vmatpush.msra.mxu0 0.0
    %2782 = vmatpush.msra.mxu0 %v2762
    %2783 = vmatmul.f32.gmra.mxu0 %v2765
    %v2784 = vpop.f32.mrf.mxu0
    %v2785 = vadd.f32 0.0, %v2784
    %2786 = vdwg.mxu0
    %2787 = vrot.lane.b32.xlu0 %v712, 48
    %v2788 = vpop.permute.xlu0 %2787
    %v2791 = vsel %vm1251, %v2596, 0
    %2793 = vmatpush.msra.mxu0 0.0
    %2794 = vmatpush.msra.mxu0 0.0
    %2795 = vmatpush.msra.mxu0 0.0
    %2796 = vmatpush.msra.mxu0 0.0
    %2797 = vmatpush.msra.mxu0 0.0
    %2798 = vmatpush.msra.mxu0 0.0
    %2799 = vmatpush.msra.mxu0 0.0
    %2800 = vmatpush.msra.mxu0 0.0
    %2801 = vmatpush.msra.mxu0 0.0
    %2802 = vmatpush.msra.mxu0 0.0
    %2803 = vmatpush.msra.mxu0 0.0
    %2804 = vmatpush.msra.mxu0 0.0
    %2805 = vmatpush.msra.mxu0 0.0
    %2806 = vmatpush.msra.mxu0 0.0
    %2807 = vmatpush.msra.mxu0 0.0
    %2808 = vmatpush.msra.mxu0 %v2788
    %2809 = vmatmul.f32.gmra.mxu0 %v2791
    %v2810 = vpop.f32.mrf.mxu0
    %v2811 = vadd.f32 0.0, %v2810
    %2812 = vdwg.mxu0
    %2813 = vrot.lane.b32.xlu0 %v715, 48
    %v2814 = vpop.permute.xlu0 %2813
    %v2817 = vsel %vm1251, %v2597, 0
    %2819 = vmatpush.msra.mxu0 0.0
    %2820 = vmatpush.msra.mxu0 0.0
    %2821 = vmatpush.msra.mxu0 0.0
    %2822 = vmatpush.msra.mxu0 0.0
    %2823 = vmatpush.msra.mxu0 0.0
    %2824 = vmatpush.msra.mxu0 0.0
    %2825 = vmatpush.msra.mxu0 0.0
    %2826 = vmatpush.msra.mxu0 0.0
    %2827 = vmatpush.msra.mxu0 0.0
    %2828 = vmatpush.msra.mxu0 0.0
    %2829 = vmatpush.msra.mxu0 0.0
    %2830 = vmatpush.msra.mxu0 0.0
    %2831 = vmatpush.msra.mxu0 0.0
    %2832 = vmatpush.msra.mxu0 0.0
    %2833 = vmatpush.msra.mxu0 0.0
    %2834 = vmatpush.msra.mxu0 %v2814
    %2835 = vmatmul.f32.gmra.mxu0 %v2817
    %v2836 = vpop.f32.mrf.mxu0
    %v2837 = vadd.f32 0.0, %v2836
    %2838 = vdwg.mxu0
    %2839 = vrot.lane.b32.xlu0 %v717, 48
    %v2840 = vpop.permute.xlu0 %2839
    %v2843 = vsel %vm1251, %v2598, 0
    %2845 = vmatpush.msra.mxu0 0.0
    %2846 = vmatpush.msra.mxu0 0.0
    %2847 = vmatpush.msra.mxu0 0.0
    %2848 = vmatpush.msra.mxu0 0.0
    %2849 = vmatpush.msra.mxu0 0.0
    %2850 = vmatpush.msra.mxu0 0.0
    %2851 = vmatpush.msra.mxu0 0.0
    %2852 = vmatpush.msra.mxu0 0.0
    %2853 = vmatpush.msra.mxu0 0.0
    %2854 = vmatpush.msra.mxu0 0.0
    %2855 = vmatpush.msra.mxu0 0.0
    %2856 = vmatpush.msra.mxu0 0.0
    %2857 = vmatpush.msra.mxu0 0.0
    %2858 = vmatpush.msra.mxu0 0.0
    %2859 = vmatpush.msra.mxu0 0.0
    %2860 = vmatpush.msra.mxu0 %v2840
    %2861 = vmatmul.f32.gmra.mxu0 %v2843
    %v2862 = vpop.f32.mrf.mxu0
    %v2863 = vadd.f32 0.0, %v2862
    %2864 = vdwg.mxu0
    %2865 = vrot.lane.b32.xlu0 %v720, 48
    %v2866 = vpop.permute.xlu0 %2865
    %v2869 = vsel %vm1251, %v2599, 0
    %2871 = vmatpush.msra.mxu0 0.0
    %2872 = vmatpush.msra.mxu0 0.0
    %2873 = vmatpush.msra.mxu0 0.0
    %2874 = vmatpush.msra.mxu0 0.0
    %2875 = vmatpush.msra.mxu0 0.0
    %2876 = vmatpush.msra.mxu0 0.0
    %2877 = vmatpush.msra.mxu0 0.0
    %2878 = vmatpush.msra.mxu0 0.0
    %2879 = vmatpush.msra.mxu0 0.0
    %2880 = vmatpush.msra.mxu0 0.0
    %2881 = vmatpush.msra.mxu0 0.0
    %2882 = vmatpush.msra.mxu0 0.0
    %2883 = vmatpush.msra.mxu0 0.0
    %2884 = vmatpush.msra.mxu0 0.0
    %2885 = vmatpush.msra.mxu0 0.0
    %2886 = vmatpush.msra.mxu0 %v2866
    %2887 = vmatmul.f32.gmra.mxu0 %v2869
    %v2888 = vpop.f32.mrf.mxu0
    %v2889 = vadd.f32 0.0, %v2888
    %2890 = vdwg.mxu0
    %2891 = vrot.lane.b32.xlu0 %v722, 48
    %v2892 = vpop.permute.xlu0 %2891
    %v2895 = vsel %vm1251, %v2600, 0
    %2897 = vmatpush.msra.mxu0 0.0
    %2898 = vmatpush.msra.mxu0 0.0
    %2899 = vmatpush.msra.mxu0 0.0
    %2900 = vmatpush.msra.mxu0 0.0
    %2901 = vmatpush.msra.mxu0 0.0
    %2902 = vmatpush.msra.mxu0 0.0
    %2903 = vmatpush.msra.mxu0 0.0
    %2904 = vmatpush.msra.mxu0 0.0
    %2905 = vmatpush.msra.mxu0 0.0
    %2906 = vmatpush.msra.mxu0 0.0
    %2907 = vmatpush.msra.mxu0 0.0
    %2908 = vmatpush.msra.mxu0 0.0
    %2909 = vmatpush.msra.mxu0 0.0
    %2910 = vmatpush.msra.mxu0 0.0
    %2911 = vmatpush.msra.mxu0 0.0
    %2912 = vmatpush.msra.mxu0 %v2892
    %2913 = vmatmul.f32.gmra.mxu0 %v2895
    %v2914 = vpop.f32.mrf.mxu0
    %v2915 = vadd.f32 0.0, %v2914
    %2916 = vdwg.mxu0
    %2917 = vrot.lane.b32.xlu0 %v725, 48
    %v2918 = vpop.permute.xlu0 %2917
    %v2921 = vsel %vm1251, %v2601, 0
    %2923 = vmatpush.msra.mxu0 0.0
    %2924 = vmatpush.msra.mxu0 0.0
    %2925 = vmatpush.msra.mxu0 0.0
    %2926 = vmatpush.msra.mxu0 0.0
    %2927 = vmatpush.msra.mxu0 0.0
    %2928 = vmatpush.msra.mxu0 0.0
    %2929 = vmatpush.msra.mxu0 0.0
    %2930 = vmatpush.msra.mxu0 0.0
    %2931 = vmatpush.msra.mxu0 0.0
    %2932 = vmatpush.msra.mxu0 0.0
    %2933 = vmatpush.msra.mxu0 0.0
    %2934 = vmatpush.msra.mxu0 0.0
    %2935 = vmatpush.msra.mxu0 0.0
    %2936 = vmatpush.msra.mxu0 0.0
    %2937 = vmatpush.msra.mxu0 0.0
    %2938 = vmatpush.msra.mxu0 %v2918
    %2939 = vmatmul.f32.gmra.mxu0 %v2921
    %v2940 = vpop.f32.mrf.mxu0
    %v2941 = vadd.f32 0.0, %v2940
    %2942 = vdwg.mxu0
    %2943 = vrot.lane.b32.xlu0 %v727, 48
    %v2944 = vpop.permute.xlu0 %2943
    %v2947 = vsel %vm1251, %v2602, 0
    %2949 = vmatpush.msra.mxu0 0.0
    %2950 = vmatpush.msra.mxu0 0.0
    %2951 = vmatpush.msra.mxu0 0.0
    %2952 = vmatpush.msra.mxu0 0.0
    %2953 = vmatpush.msra.mxu0 0.0
    %2954 = vmatpush.msra.mxu0 0.0
    %2955 = vmatpush.msra.mxu0 0.0
    %2956 = vmatpush.msra.mxu0 0.0
    %2957 = vmatpush.msra.mxu0 0.0
    %2958 = vmatpush.msra.mxu0 0.0
    %2959 = vmatpush.msra.mxu0 0.0
    %2960 = vmatpush.msra.mxu0 0.0
    %2961 = vmatpush.msra.mxu0 0.0
    %2962 = vmatpush.msra.mxu0 0.0
    %2963 = vmatpush.msra.mxu0 0.0
    %2964 = vmatpush.msra.mxu0 %v2944
    %2965 = vmatmul.f32.gmra.mxu0 %v2947
    %v2966 = vpop.f32.mrf.mxu0
    %v2967 = vadd.f32 0.0, %v2966
    %2968 = vdwg.mxu0
    %2969 = vrot.lane.b32.xlu0 %v730, 48
    %v2970 = vpop.permute.xlu0 %2969
    %v2973 = vsel %vm1251, %v2603, 0
    %2975 = vmatpush.msra.mxu0 0.0
    %2976 = vmatpush.msra.mxu0 0.0
    %2977 = vmatpush.msra.mxu0 0.0
    %2978 = vmatpush.msra.mxu0 0.0
    %2979 = vmatpush.msra.mxu0 0.0
    %2980 = vmatpush.msra.mxu0 0.0
    %2981 = vmatpush.msra.mxu0 0.0
    %2982 = vmatpush.msra.mxu0 0.0
    %2983 = vmatpush.msra.mxu0 0.0
    %2984 = vmatpush.msra.mxu0 0.0
    %2985 = vmatpush.msra.mxu0 0.0
    %2986 = vmatpush.msra.mxu0 0.0
    %2987 = vmatpush.msra.mxu0 0.0
    %2988 = vmatpush.msra.mxu0 0.0
    %2989 = vmatpush.msra.mxu0 0.0
    %2990 = vmatpush.msra.mxu0 %v2970
    %2991 = vmatmul.f32.gmra.mxu0 %v2973
    %v2992 = vpop.f32.mrf.mxu0
    %v2993 = vadd.f32 0.0, %v2992
    %2994 = vdwg.mxu0
    %2995 = vrot.lane.b32.xlu0 %v732, 48
    %v2996 = vpop.permute.xlu0 %2995
    %v2999 = vsel %vm1251, %v2604, 0
    %3001 = vmatpush.msra.mxu0 0.0
    %3002 = vmatpush.msra.mxu0 0.0
    %3003 = vmatpush.msra.mxu0 0.0
    %3004 = vmatpush.msra.mxu0 0.0
    %3005 = vmatpush.msra.mxu0 0.0
    %3006 = vmatpush.msra.mxu0 0.0
    %3007 = vmatpush.msra.mxu0 0.0
    %3008 = vmatpush.msra.mxu0 0.0
    %3009 = vmatpush.msra.mxu0 0.0
    %3010 = vmatpush.msra.mxu0 0.0
    %3011 = vmatpush.msra.mxu0 0.0
    %3012 = vmatpush.msra.mxu0 0.0
    %3013 = vmatpush.msra.mxu0 0.0
    %3014 = vmatpush.msra.mxu0 0.0
    %3015 = vmatpush.msra.mxu0 0.0
    %3016 = vmatpush.msra.mxu0 %v2996
    %3017 = vmatmul.f32.gmra.mxu0 %v2999
    %v3018 = vpop.f32.mrf.mxu0
    %v3019 = vadd.f32 0.0, %v3018
    %3020 = vdwg.mxu0
    %v3021 = vpack.c.bf16 %v2655, %v2629
    %v3022 = vpack.c.bf16 %v2707, %v2681
    %v3023 = vpack.c.bf16 %v2759, %v2733
    %v3024 = vpack.c.bf16 %v2811, %v2785
    %v3025 = vpack.c.bf16 %v2863, %v2837
    %v3026 = vpack.c.bf16 %v2915, %v2889
    %v3027 = vpack.c.bf16 %v2967, %v2941
    %v3028 = vpack.c.bf16 %v3019, %v2993
    %v3029 = vld [vmem:[%s6 + $0x8] sm:$0xf]
    %v3030 = vld [vmem:[%s6 + $0xc] sm:$0xf]
    %v3033 = vunpack.c.l.b16 %v3029
    %v3034 = vunpack.c.l.b16 %v3030
    %v3035 = vpack.c.b16 %v3034, %v3033
    %v3038 = vsel %vm757, %v3021, 0
    %v3041 = vsel %vm757, %v3022, 0
    %v3044 = vsel %vm757, %v3023, 0
    %v3047 = vsel %vm757, %v3024, 0
    %v3050 = vsel %vm757, %v3025, 0
    %v3053 = vsel %vm757, %v3026, 0
    %v3056 = vsel %vm757, %v3027, 0
    %v3059 = vsel %vm757, %v3028, 0
    %3061 = vmatpush.bf16.msra.mxu0 0
    %3062 = vmatpush.bf16.msra.mxu0 0
    %3063 = vmatpush.bf16.msra.mxu0 0
    %3064 = vmatpush.bf16.msra.mxu0 0
    %3065 = vmatpush.bf16.msra.mxu0 0
    %3066 = vmatpush.bf16.msra.mxu0 0
    %3067 = vmatpush.bf16.msra.mxu0 0
    %3068 = vmatpush.bf16.msra.mxu0 %v3035
    %3069 = vmatmul.bf16.gmra.mxu0 %v3038
    %v3070 = vpop.f32.mrf.mxu0
    %v3071 = vadd.f32 0.0, %v3070
    %v3072 = vpop.f32.mrf.mxu0
    %v3073 = vadd.f32 0.0, %v3072
    %3074 = vmatmul.bf16.gmra.mxu0 %v3041
    %v3075 = vpop.f32.mrf.mxu0
    %v3076 = vadd.f32 0.0, %v3075
    %v3077 = vpop.f32.mrf.mxu0
    %v3078 = vadd.f32 0.0, %v3077
    %3079 = vmatmul.bf16.gmra.mxu0 %v3044
    %v3080 = vpop.f32.mrf.mxu0
    %v3081 = vadd.f32 0.0, %v3080
    %v3082 = vpop.f32.mrf.mxu0
    %v3083 = vadd.f32 0.0, %v3082
    %3084 = vmatmul.bf16.gmra.mxu0 %v3047
    %v3085 = vpop.f32.mrf.mxu0
    %v3086 = vadd.f32 0.0, %v3085
    %v3087 = vpop.f32.mrf.mxu0
    %v3088 = vadd.f32 0.0, %v3087
    %3089 = vmatmul.bf16.gmra.mxu0 %v3050
    %v3090 = vpop.f32.mrf.mxu0
    %v3091 = vadd.f32 0.0, %v3090
    %v3092 = vpop.f32.mrf.mxu0
    %v3093 = vadd.f32 0.0, %v3092
    %3094 = vmatmul.bf16.gmra.mxu0 %v3053
    %v3095 = vpop.f32.mrf.mxu0
    %v3096 = vadd.f32 0.0, %v3095
    %v3097 = vpop.f32.mrf.mxu0
    %v3098 = vadd.f32 0.0, %v3097
    %3099 = vmatmul.bf16.gmra.mxu0 %v3056
    %v3100 = vpop.f32.mrf.mxu0
    %v3101 = vadd.f32 0.0, %v3100
    %v3102 = vpop.f32.mrf.mxu0
    %v3103 = vadd.f32 0.0, %v3102
    %3104 = vmatmul.bf16.gmra.mxu0 %v3059
    %v3105 = vpop.f32.mrf.mxu0
    %v3106 = vadd.f32 0.0, %v3105
    %v3107 = vpop.f32.mrf.mxu0
    %v3108 = vadd.f32 0.0, %v3107
    %3109 = vdwg.mxu0
    %v3110 = vadd.f32 %v1933, %v3071
    %v3111 = vadd.f32 %v1934, %v3073
    %v3112 = vadd.f32 %v1935, %v3076
    %v3113 = vadd.f32 %v1936, %v3078
    %v3114 = vadd.f32 %v1937, %v3081
    %v3115 = vadd.f32 %v1938, %v3083
    %v3116 = vadd.f32 %v1939, %v3086
    %v3117 = vadd.f32 %v1940, %v3088
    %v3118 = vadd.f32 %v1941, %v3091
    %v3119 = vadd.f32 %v1942, %v3093
    %v3120 = vadd.f32 %v1943, %v3096
    %v3121 = vadd.f32 %v1944, %v3098
    %v3122 = vadd.f32 %v1945, %v3101
    %v3123 = vadd.f32 %v1946, %v3103
    %v3124 = vadd.f32 %v1947, %v3106
    %v3125 = vadd.f32 %v1948, %v3108
    %v3126 = vld [vmem:[#allocation9] sm:$0x1]
    %v3127 = vld [vmem:[#allocation11] sm:$0x1]
    %v3128 = vsel %vm235, %v3110, 0.0
    %3129 = vadd.xlane.f32.xlu0 %v3128
    %v3130 = vpop.xlane.xlu0 %3129
    %v3131 = vsel %vm235, %v3111, 0.0
    %3132 = vadd.xlane.f32.xlu0 %v3131
    %v3133 = vpop.xlane.xlu0 %3132
    %v3134 = vsel %vm235, %v3112, 0.0
    %3135 = vadd.xlane.f32.xlu0 %v3134
    %v3136 = vpop.xlane.xlu0 %3135
    %v3137 = vsel %vm235, %v3113, 0.0
    %3138 = vadd.xlane.f32.xlu0 %v3137
    %v3139 = vpop.xlane.xlu0 %3138
    %v3140 = vsel %vm235, %v3114, 0.0
    %3141 = vadd.xlane.f32.xlu0 %v3140
    %v3142 = vpop.xlane.xlu0 %3141
    %v3143 = vsel %vm235, %v3115, 0.0
    %3144 = vadd.xlane.f32.xlu0 %v3143
    %v3145 = vpop.xlane.xlu0 %3144
    %v3146 = vsel %vm235, %v3116, 0.0
    %3147 = vadd.xlane.f32.xlu0 %v3146
    %v3148 = vpop.xlane.xlu0 %3147
    %v3149 = vsel %vm235, %v3117, 0.0
    %3150 = vadd.xlane.f32.xlu0 %v3149
    %v3151 = vpop.xlane.xlu0 %3150
    %v3152 = vsel %vm235, %v3118, 0.0
    %3153 = vadd.xlane.f32.xlu0 %v3152
    %v3154 = vpop.xlane.xlu0 %3153
    %v3155 = vsel %vm235, %v3119, 0.0
    %3156 = vadd.xlane.f32.xlu0 %v3155
    %v3157 = vpop.xlane.xlu0 %3156
    %v3158 = vsel %vm235, %v3120, 0.0
    %3159 = vadd.xlane.f32.xlu0 %v3158
    %v3160 = vpop.xlane.xlu0 %3159
    %v3161 = vsel %vm235, %v3121, 0.0
    %3162 = vadd.xlane.f32.xlu0 %v3161
    %v3163 = vpop.xlane.xlu0 %3162
    %v3164 = vsel %vm235, %v3122, 0.0
    %3165 = vadd.xlane.f32.xlu0 %v3164
    %v3166 = vpop.xlane.xlu0 %3165
    %v3167 = vsel %vm235, %v3123, 0.0
    %3168 = vadd.xlane.f32.xlu0 %v3167
    %v3169 = vpop.xlane.xlu0 %3168
    %v3170 = vsel %vm235, %v3124, 0.0
    %3171 = vadd.xlane.f32.xlu0 %v3170
    %v3172 = vpop.xlane.xlu0 %3171
    %v3173 = vsel %vm235, %v3125, 0.0
    %3174 = vadd.xlane.f32.xlu0 %v3173
    %v3175 = vpop.xlane.xlu0 %3174
    %v3176 = vmul.f32 %v3130, %v290
    %v3177 = vmul.f32 %v3133, %v290
    %v3178 = vmul.f32 %v3136, %v290
    %v3179 = vmul.f32 %v3139, %v290
    %v3180 = vmul.f32 %v3142, %v290
    %v3181 = vmul.f32 %v3145, %v290
    %v3182 = vmul.f32 %v3148, %v290
    %v3183 = vmul.f32 %v3151, %v290
    %v3184 = vmul.f32 %v3154, %v290
    %v3185 = vmul.f32 %v3157, %v290
    %v3186 = vmul.f32 %v3160, %v290
    %v3187 = vmul.f32 %v3163, %v290
    %v3188 = vmul.f32 %v3166, %v290
    %v3189 = vmul.f32 %v3169, %v290
    %v3190 = vmul.f32 %v3172, %v290
    %v3191 = vmul.f32 %v3175, %v290
    %v3192 = vsub.f32 %v3110, %v3176
    %v3193 = vsub.f32 %v3111, %v3177
    %v3194 = vsub.f32 %v3112, %v3178
    %v3195 = vsub.f32 %v3113, %v3179
    %v3196 = vsub.f32 %v3114, %v3180
    %v3197 = vsub.f32 %v3115, %v3181
    %v3198 = vsub.f32 %v3116, %v3182
    %v3199 = vsub.f32 %v3117, %v3183
    %v3200 = vsub.f32 %v3118, %v3184
    %v3201 = vsub.f32 %v3119, %v3185
    %v3202 = vsub.f32 %v3120, %v3186
    %v3203 = vsub.f32 %v3121, %v3187
    %v3204 = vsub.f32 %v3122, %v3188
    %v3205 = vsub.f32 %v3123, %v3189
    %v3206 = vsub.f32 %v3124, %v3190
    %v3207 = vsub.f32 %v3125, %v3191
    %v3208 = vmul.f32 %v3192, %v3192
    %v3209 = vmul.f32 %v3193, %v3193
    %v3210 = vmul.f32 %v3194, %v3194
    %v3211 = vmul.f32 %v3195, %v3195
    %v3212 = vmul.f32 %v3196, %v3196
    %v3213 = vmul.f32 %v3197, %v3197
    %v3214 = vmul.f32 %v3198, %v3198
    %v3215 = vmul.f32 %v3199, %v3199
    %v3216 = vmul.f32 %v3200, %v3200
    %v3217 = vmul.f32 %v3201, %v3201
    %v3218 = vmul.f32 %v3202, %v3202
    %v3219 = vmul.f32 %v3203, %v3203
    %v3220 = vmul.f32 %v3204, %v3204
    %v3221 = vmul.f32 %v3205, %v3205
    %v3222 = vmul.f32 %v3206, %v3206
    %v3223 = vmul.f32 %v3207, %v3207
    %v3224 = vsel %vm235, %v3208, 0.0
    %3225 = vadd.xlane.f32.xlu0 %v3224
    %v3226 = vpop.xlane.xlu0 %3225
    %v3227 = vsel %vm235, %v3209, 0.0
    %3228 = vadd.xlane.f32.xlu0 %v3227
    %v3229 = vpop.xlane.xlu0 %3228
    %v3230 = vsel %vm235, %v3210, 0.0
    %3231 = vadd.xlane.f32.xlu0 %v3230
    %v3232 = vpop.xlane.xlu0 %3231
    %v3233 = vsel %vm235, %v3211, 0.0
    %3234 = vadd.xlane.f32.xlu0 %v3233
    %v3235 = vpop.xlane.xlu0 %3234
    %v3236 = vsel %vm235, %v3212, 0.0
    %3237 = vadd.xlane.f32.xlu0 %v3236
    %v3238 = vpop.xlane.xlu0 %3237
    %v3239 = vsel %vm235, %v3213, 0.0
    %3240 = vadd.xlane.f32.xlu0 %v3239
    %v3241 = vpop.xlane.xlu0 %3240
    %v3242 = vsel %vm235, %v3214, 0.0
    %3243 = vadd.xlane.f32.xlu0 %v3242
    %v3244 = vpop.xlane.xlu0 %3243
    %v3245 = vsel %vm235, %v3215, 0.0
    %3246 = vadd.xlane.f32.xlu0 %v3245
    %v3247 = vpop.xlane.xlu0 %3246
    %v3248 = vsel %vm235, %v3216, 0.0
    %3249 = vadd.xlane.f32.xlu0 %v3248
    %v3250 = vpop.xlane.xlu0 %3249
    %v3251 = vsel %vm235, %v3217, 0.0
    %3252 = vadd.xlane.f32.xlu0 %v3251
    %v3253 = vpop.xlane.xlu0 %3252
    %v3254 = vsel %vm235, %v3218, 0.0
    %3255 = vadd.xlane.f32.xlu0 %v3254
    %v3256 = vpop.xlane.xlu0 %3255
    %v3257 = vsel %vm235, %v3219, 0.0
    %3258 = vadd.xlane.f32.xlu0 %v3257
    %v3259 = vpop.xlane.xlu0 %3258
    %v3260 = vsel %vm235, %v3220, 0.0
    %3261 = vadd.xlane.f32.xlu0 %v3260
    %v3262 = vpop.xlane.xlu0 %3261
    %v3263 = vsel %vm235, %v3221, 0.0
    %3264 = vadd.xlane.f32.xlu0 %v3263
    %v3265 = vpop.xlane.xlu0 %3264
    %v3266 = vsel %vm235, %v3222, 0.0
    %3267 = vadd.xlane.f32.xlu0 %v3266
    %v3268 = vpop.xlane.xlu0 %3267
    %v3269 = vsel %vm235, %v3223, 0.0
    %3270 = vadd.xlane.f32.xlu0 %v3269
    %v3271 = vpop.xlane.xlu0 %3270
    %v3272 = vmul.f32 %v3226, %v290
    %v3273 = vmul.f32 %v3229, %v290
    %v3274 = vmul.f32 %v3232, %v290
    %v3275 = vmul.f32 %v3235, %v290
    %v3276 = vmul.f32 %v3238, %v290
    %v3277 = vmul.f32 %v3241, %v290
    %v3278 = vmul.f32 %v3244, %v290
    %v3279 = vmul.f32 %v3247, %v290
    %v3280 = vmul.f32 %v3250, %v290
    %v3281 = vmul.f32 %v3253, %v290
    %v3282 = vmul.f32 %v3256, %v290
    %v3283 = vmul.f32 %v3259, %v290
    %v3284 = vmul.f32 %v3262, %v290
    %v3285 = vmul.f32 %v3265, %v290
    %v3286 = vmul.f32 %v3268, %v290
    %v3287 = vmul.f32 %v3271, %v290
    %v3288 = vadd.f32 %v3272, 1e-12
    %v3289 = vadd.f32 %v3273, 1e-12
    %v3290 = vadd.f32 %v3274, 1e-12
    %v3291 = vadd.f32 %v3275, 1e-12
    %v3292 = vadd.f32 %v3276, 1e-12
    %v3293 = vadd.f32 %v3277, 1e-12
    %v3294 = vadd.f32 %v3278, 1e-12
    %v3295 = vadd.f32 %v3279, 1e-12
    %v3296 = vadd.f32 %v3280, 1e-12
    %v3297 = vadd.f32 %v3281, 1e-12
    %v3298 = vadd.f32 %v3282, 1e-12
    %v3299 = vadd.f32 %v3283, 1e-12
    %v3300 = vadd.f32 %v3284, 1e-12
    %v3301 = vadd.f32 %v3285, 1e-12
    %v3302 = vadd.f32 %v3286, 1e-12
    %v3303 = vadd.f32 %v3287, 1e-12
    %v3304 = vrsqrt.pop %v3288
    %v3305 = vmul.f32 %v3304, %v3288
    %v3306 = vmul.f32 %v3305, %v3304
    %v3307 = vmul.f32 0.5, %v3306
    %v3308 = vsub.f32 1.5, %v3307
    %v3309 = vmul.f32 %v3304, %v3308
    %vm3310 = vweird.f32 %v3288
    %vm3311 = vweird.f32 %v3304
    %vm3312 = vmor %vm3310, %vm3311
    %v3313 = vsel %vm3312, %v3304, %v3309
    %v3314 = vrsqrt.pop %v3289
    %v3315 = vmul.f32 %v3314, %v3289
    %v3316 = vmul.f32 %v3315, %v3314
    %v3317 = vmul.f32 0.5, %v3316
    %v3318 = vsub.f32 1.5, %v3317
    %v3319 = vmul.f32 %v3314, %v3318
    %vm3320 = vweird.f32 %v3289
    %vm3321 = vweird.f32 %v3314
    %vm3322 = vmor %vm3320, %vm3321
    %v3323 = vsel %vm3322, %v3314, %v3319
    %v3324 = vrsqrt.pop %v3290
    %v3325 = vmul.f32 %v3324, %v3290
    %v3326 = vmul.f32 %v3325, %v3324
    %v3327 = vmul.f32 0.5, %v3326
    %v3328 = vsub.f32 1.5, %v3327
    %v3329 = vmul.f32 %v3324, %v3328
    %vm3330 = vweird.f32 %v3290
    %vm3331 = vweird.f32 %v3324
    %vm3332 = vmor %vm3330, %vm3331
    %v3333 = vsel %vm3332, %v3324, %v3329
    %v3334 = vrsqrt.pop %v3291
    %v3335 = vmul.f32 %v3334, %v3291
    %v3336 = vmul.f32 %v3335, %v3334
    %v3337 = vmul.f32 0.5, %v3336
    %v3338 = vsub.f32 1.5, %v3337
    %v3339 = vmul.f32 %v3334, %v3338
    %vm3340 = vweird.f32 %v3291
    %vm3341 = vweird.f32 %v3334
    %vm3342 = vmor %vm3340, %vm3341
    %v3343 = vsel %vm3342, %v3334, %v3339
    %v3344 = vrsqrt.pop %v3292
    %v3345 = vmul.f32 %v3344, %v3292
    %v3346 = vmul.f32 %v3345, %v3344
    %v3347 = vmul.f32 0.5, %v3346
    %v3348 = vsub.f32 1.5, %v3347
    %v3349 = vmul.f32 %v3344, %v3348
    %vm3350 = vweird.f32 %v3292
    %vm3351 = vweird.f32 %v3344
    %vm3352 = vmor %vm3350, %vm3351
    %v3353 = vsel %vm3352, %v3344, %v3349
    %v3354 = vrsqrt.pop %v3293
    %v3355 = vmul.f32 %v3354, %v3293
    %v3356 = vmul.f32 %v3355, %v3354
    %v3357 = vmul.f32 0.5, %v3356
    %v3358 = vsub.f32 1.5, %v3357
    %v3359 = vmul.f32 %v3354, %v3358
    %vm3360 = vweird.f32 %v3293
    %vm3361 = vweird.f32 %v3354
    %vm3362 = vmor %vm3360, %vm3361
    %v3363 = vsel %vm3362, %v3354, %v3359
    %v3364 = vrsqrt.pop %v3294
    %v3365 = vmul.f32 %v3364, %v3294
    %v3366 = vmul.f32 %v3365, %v3364
    %v3367 = vmul.f32 0.5, %v3366
    %v3368 = vsub.f32 1.5, %v3367
    %v3369 = vmul.f32 %v3364, %v3368
    %vm3370 = vweird.f32 %v3294
    %vm3371 = vweird.f32 %v3364
    %vm3372 = vmor %vm3370, %vm3371
    %v3373 = vsel %vm3372, %v3364, %v3369
    %v3374 = vrsqrt.pop %v3295
    %v3375 = vmul.f32 %v3374, %v3295
    %v3376 = vmul.f32 %v3375, %v3374
    %v3377 = vmul.f32 0.5, %v3376
    %v3378 = vsub.f32 1.5, %v3377
    %v3379 = vmul.f32 %v3374, %v3378
    %vm3380 = vweird.f32 %v3295
    %vm3381 = vweird.f32 %v3374
    %vm3382 = vmor %vm3380, %vm3381
    %v3383 = vsel %vm3382, %v3374, %v3379
    %v3384 = vrsqrt.pop %v3296
    %v3385 = vmul.f32 %v3384, %v3296
    %v3386 = vmul.f32 %v3385, %v3384
    %v3387 = vmul.f32 0.5, %v3386
    %v3388 = vsub.f32 1.5, %v3387
    %v3389 = vmul.f32 %v3384, %v3388
    %vm3390 = vweird.f32 %v3296
    %vm3391 = vweird.f32 %v3384
    %vm3392 = vmor %vm3390, %vm3391
    %v3393 = vsel %vm3392, %v3384, %v3389
    %v3394 = vrsqrt.pop %v3297
    %v3395 = vmul.f32 %v3394, %v3297
    %v3396 = vmul.f32 %v3395, %v3394
    %v3397 = vmul.f32 0.5, %v3396
    %v3398 = vsub.f32 1.5, %v3397
    %v3399 = vmul.f32 %v3394, %v3398
    %vm3400 = vweird.f32 %v3297
    %vm3401 = vweird.f32 %v3394
    %vm3402 = vmor %vm3400, %vm3401
    %v3403 = vsel %vm3402, %v3394, %v3399
    %v3404 = vrsqrt.pop %v3298
    %v3405 = vmul.f32 %v3404, %v3298
    %v3406 = vmul.f32 %v3405, %v3404
    %v3407 = vmul.f32 0.5, %v3406
    %v3408 = vsub.f32 1.5, %v3407
    %v3409 = vmul.f32 %v3404, %v3408
    %vm3410 = vweird.f32 %v3298
    %vm3411 = vweird.f32 %v3404
    %vm3412 = vmor %vm3410, %vm3411
    %v3413 = vsel %vm3412, %v3404, %v3409
    %v3414 = vrsqrt.pop %v3299
    %v3415 = vmul.f32 %v3414, %v3299
    %v3416 = vmul.f32 %v3415, %v3414
    %v3417 = vmul.f32 0.5, %v3416
    %v3418 = vsub.f32 1.5, %v3417
    %v3419 = vmul.f32 %v3414, %v3418
    %vm3420 = vweird.f32 %v3299
    %vm3421 = vweird.f32 %v3414
    %vm3422 = vmor %vm3420, %vm3421
    %v3423 = vsel %vm3422, %v3414, %v3419
    %v3424 = vrsqrt.pop %v3300
    %v3425 = vmul.f32 %v3424, %v3300
    %v3426 = vmul.f32 %v3425, %v3424
    %v3427 = vmul.f32 0.5, %v3426
    %v3428 = vsub.f32 1.5, %v3427
    %v3429 = vmul.f32 %v3424, %v3428
    %vm3430 = vweird.f32 %v3300
    %vm3431 = vweird.f32 %v3424
    %vm3432 = vmor %vm3430, %vm3431
    %v3433 = vsel %vm3432, %v3424, %v3429
    %v3434 = vrsqrt.pop %v3301
    %v3435 = vmul.f32 %v3434, %v3301
    %v3436 = vmul.f32 %v3435, %v3434
    %v3437 = vmul.f32 0.5, %v3436
    %v3438 = vsub.f32 1.5, %v3437
    %v3439 = vmul.f32 %v3434, %v3438
    %vm3440 = vweird.f32 %v3301
    %vm3441 = vweird.f32 %v3434
    %vm3442 = vmor %vm3440, %vm3441
    %v3443 = vsel %vm3442, %v3434, %v3439
    %v3444 = vrsqrt.pop %v3302
    %v3445 = vmul.f32 %v3444, %v3302
    %v3446 = vmul.f32 %v3445, %v3444
    %v3447 = vmul.f32 0.5, %v3446
    %v3448 = vsub.f32 1.5, %v3447
    %v3449 = vmul.f32 %v3444, %v3448
    %vm3450 = vweird.f32 %v3302
    %vm3451 = vweird.f32 %v3444
    %vm3452 = vmor %vm3450, %vm3451
    %v3453 = vsel %vm3452, %v3444, %v3449
    %v3454 = vrsqrt.pop %v3303
    %v3455 = vmul.f32 %v3454, %v3303
    %v3456 = vmul.f32 %v3455, %v3454
    %v3457 = vmul.f32 0.5, %v3456
    %v3458 = vsub.f32 1.5, %v3457
    %v3459 = vmul.f32 %v3454, %v3458
    %vm3460 = vweird.f32 %v3303
    %vm3461 = vweird.f32 %v3454
    %vm3462 = vmor %vm3460, %vm3461
    %v3463 = vsel %vm3462, %v3454, %v3459
    %v3464 = vmul.f32 %v3192, %v3313
    %v3465 = vmul.f32 %v3193, %v3323
    %v3466 = vmul.f32 %v3194, %v3333
    %v3467 = vmul.f32 %v3195, %v3343
    %v3468 = vmul.f32 %v3196, %v3353
    %v3469 = vmul.f32 %v3197, %v3363
    %v3470 = vmul.f32 %v3198, %v3373
    %v3471 = vmul.f32 %v3199, %v3383
    %v3472 = vmul.f32 %v3200, %v3393
    %v3473 = vmul.f32 %v3201, %v3403
    %v3474 = vmul.f32 %v3202, %v3413
    %v3475 = vmul.f32 %v3203, %v3423
    %v3476 = vmul.f32 %v3204, %v3433
    %v3477 = vmul.f32 %v3205, %v3443
    %v3478 = vmul.f32 %v3206, %v3453
    %v3479 = vmul.f32 %v3207, %v3463
    %v3481 = vperm.slane %v3126, 0
    %v3483 = vmul.f32 %v3464, %v3481
    %v3484 = vmul.f32 %v3465, %v3481
    %v3485 = vmul.f32 %v3466, %v3481
    %v3486 = vmul.f32 %v3467, %v3481
    %v3487 = vmul.f32 %v3468, %v3481
    %v3488 = vmul.f32 %v3469, %v3481
    %v3489 = vmul.f32 %v3470, %v3481
    %v3490 = vmul.f32 %v3471, %v3481
    %v3491 = vmul.f32 %v3472, %v3481
    %v3492 = vmul.f32 %v3473, %v3481
    %v3493 = vmul.f32 %v3474, %v3481
    %v3494 = vmul.f32 %v3475, %v3481
    %v3495 = vmul.f32 %v3476, %v3481
    %v3496 = vmul.f32 %v3477, %v3481
    %v3497 = vmul.f32 %v3478, %v3481
    %v3498 = vmul.f32 %v3479, %v3481
    %v3500 = vperm.slane %v3127, 0
    %v3502 = vadd.f32 %v3483, %v3500
    %v3503 = vadd.f32 %v3484, %v3500
    %v3504 = vadd.f32 %v3485, %v3500
    %v3505 = vadd.f32 %v3486, %v3500
    %v3506 = vadd.f32 %v3487, %v3500
    %v3507 = vadd.f32 %v3488, %v3500
    %v3508 = vadd.f32 %v3489, %v3500
    %v3509 = vadd.f32 %v3490, %v3500
    %v3510 = vadd.f32 %v3491, %v3500
    %v3511 = vadd.f32 %v3492, %v3500
    %v3512 = vadd.f32 %v3493, %v3500
    %v3513 = vadd.f32 %v3494, %v3500
    %v3514 = vadd.f32 %v3495, %v3500
    %v3515 = vadd.f32 %v3496, %v3500
    %v3516 = vadd.f32 %v3497, %v3500
    %v3517 = vadd.f32 %v3498, %v3500
    %v3518 = vpack.c.bf16 %v3503, %v3502
    %v3519 = vpack.c.bf16 %v3505, %v3504
    %v3520 = vpack.c.bf16 %v3507, %v3506
    %v3521 = vpack.c.bf16 %v3509, %v3508
    %v3522 = vpack.c.bf16 %v3511, %v3510
    %v3523 = vpack.c.bf16 %v3513, %v3512
    %v3524 = vpack.c.bf16 %v3515, %v3514
    %v3525 = vpack.c.bf16 %v3517, %v3516
    %v3526 = vld [vmem:[%s10] sm:$0xf]
    %v3527 = vld [vmem:[%s10 + $0x4] sm:$0xf]
    %v3528 = vld [vmem:[%s10 + $0x8] sm:$0xf]
    %v3529 = vld [vmem:[%s10 + $0xc] sm:$0xf]
    %v3530 = vld [vmem:[#allocation12] sm:$0x1]
    %v3532 = vperm.slane %v3530, 0
    %v3538 = vunpack.c.l.b16 %v3526
    %v3539 = vunpack.c.l.b16 %v3527
    %v3540 = vunpack.c.l.b16 %v3528
    %v3541 = vunpack.c.l.b16 %v3529
    %v3542 = vpack.c.b16 %v3539, %v3538
    %v3543 = vpack.c.b16 %v3541, %v3540
    %v3547 = vsel %vm235, %v3518, 0
    %v3550 = vsel %vm235, %v3519, 0
    %v3553 = vsel %vm235, %v3520, 0
    %v3556 = vsel %vm235, %v3521, 0
    %v3559 = vsel %vm235, %v3522, 0
    %v3562 = vsel %vm235, %v3523, 0
    %v3565 = vsel %vm235, %v3524, 0
    %v3568 = vsel %vm235, %v3525, 0
    %3570 = vmatpush.bf16.msra.mxu0 0
    %3571 = vmatpush.bf16.msra.mxu0 0
    %3572 = vmatpush.bf16.msra.mxu0 0
    %3573 = vmatpush.bf16.msra.mxu0 0
    %3574 = vmatpush.bf16.msra.mxu0 0
    %3575 = vmatpush.bf16.msra.mxu0 0
    %3576 = vmatpush.bf16.msra.mxu0 %v3543
    %3577 = vmatpush.bf16.msra.mxu0 %v3542
    %3578 = vmatmul.bf16.gmra.mxu0 %v3547
    %v3579 = vpop.f32.mrf.mxu0
    %v3580 = vadd.f32 %v3532, %v3579
    %v3581 = vpop.f32.mrf.mxu0
    %v3582 = vadd.f32 %v3532, %v3581
    %3583 = vmatmul.bf16.gmra.mxu0 %v3550
    %v3584 = vpop.f32.mrf.mxu0
    %v3585 = vadd.f32 %v3532, %v3584
    %v3586 = vpop.f32.mrf.mxu0
    %v3587 = vadd.f32 %v3532, %v3586
    %3588 = vmatmul.bf16.gmra.mxu0 %v3553
    %v3589 = vpop.f32.mrf.mxu0
    %v3590 = vadd.f32 %v3532, %v3589
    %v3591 = vpop.f32.mrf.mxu0
    %v3592 = vadd.f32 %v3532, %v3591
    %3593 = vmatmul.bf16.gmra.mxu0 %v3556
    %v3594 = vpop.f32.mrf.mxu0
    %v3595 = vadd.f32 %v3532, %v3594
    %v3596 = vpop.f32.mrf.mxu0
    %v3597 = vadd.f32 %v3532, %v3596
    %3598 = vmatmul.bf16.gmra.mxu0 %v3559
    %v3599 = vpop.f32.mrf.mxu0
    %v3600 = vadd.f32 %v3532, %v3599
    %v3601 = vpop.f32.mrf.mxu0
    %v3602 = vadd.f32 %v3532, %v3601
    %3603 = vmatmul.bf16.gmra.mxu0 %v3562
    %v3604 = vpop.f32.mrf.mxu0
    %v3605 = vadd.f32 %v3532, %v3604
    %v3606 = vpop.f32.mrf.mxu0
    %v3607 = vadd.f32 %v3532, %v3606
    %3608 = vmatmul.bf16.gmra.mxu0 %v3565
    %v3609 = vpop.f32.mrf.mxu0
    %v3610 = vadd.f32 %v3532, %v3609
    %v3611 = vpop.f32.mrf.mxu0
    %v3612 = vadd.f32 %v3532, %v3611
    %3613 = vmatmul.bf16.gmra.mxu0 %v3568
    %v3614 = vpop.f32.mrf.mxu0
    %v3615 = vadd.f32 %v3532, %v3614
    %v3616 = vpop.f32.mrf.mxu0
    %v3617 = vadd.f32 %v3532, %v3616
    %3618 = vdwg.mxu0
    %v3619 = vmul.f32 %v3580, %v3580
    %v3620 = vmul.f32 %v3582, %v3582
    %v3621 = vmul.f32 %v3585, %v3585
    %v3622 = vmul.f32 %v3587, %v3587
    %v3623 = vmul.f32 %v3590, %v3590
    %v3624 = vmul.f32 %v3592, %v3592
    %v3625 = vmul.f32 %v3595, %v3595
    %v3626 = vmul.f32 %v3597, %v3597
    %v3627 = vmul.f32 %v3600, %v3600
    %v3628 = vmul.f32 %v3602, %v3602
    %v3629 = vmul.f32 %v3605, %v3605
    %v3630 = vmul.f32 %v3607, %v3607
    %v3631 = vmul.f32 %v3610, %v3610
    %v3632 = vmul.f32 %v3612, %v3612
    %v3633 = vmul.f32 %v3615, %v3615
    %v3634 = vmul.f32 %v3617, %v3617
    %v3635 = vmul.f32 %v3580, %v3619
    %v3636 = vmul.f32 %v3582, %v3620
    %v3637 = vmul.f32 %v3585, %v3621
    %v3638 = vmul.f32 %v3587, %v3622
    %v3639 = vmul.f32 %v3590, %v3623
    %v3640 = vmul.f32 %v3592, %v3624
    %v3641 = vmul.f32 %v3595, %v3625
    %v3642 = vmul.f32 %v3597, %v3626
    %v3643 = vmul.f32 %v3600, %v3627
    %v3644 = vmul.f32 %v3602, %v3628
    %v3645 = vmul.f32 %v3605, %v3629
    %v3646 = vmul.f32 %v3607, %v3630
    %v3647 = vmul.f32 %v3610, %v3631
    %v3648 = vmul.f32 %v3612, %v3632
    %v3649 = vmul.f32 %v3615, %v3633
    %v3650 = vmul.f32 %v3617, %v3634
    %v3651 = vmul.f32 %v3635, 0.044715
    %v3652 = vmul.f32 %v3636, 0.044715
    %v3653 = vmul.f32 %v3637, 0.044715
    %v3654 = vmul.f32 %v3638, 0.044715
    %v3655 = vmul.f32 %v3639, 0.044715
    %v3656 = vmul.f32 %v3640, 0.044715
    %v3657 = vmul.f32 %v3641, 0.044715
    %v3658 = vmul.f32 %v3642, 0.044715
    %v3659 = vmul.f32 %v3643, 0.044715
    %v3660 = vmul.f32 %v3644, 0.044715
    %v3661 = vmul.f32 %v3645, 0.044715
    %v3662 = vmul.f32 %v3646, 0.044715
    %v3663 = vmul.f32 %v3647, 0.044715
    %v3664 = vmul.f32 %v3648, 0.044715
    %v3665 = vmul.f32 %v3649, 0.044715
    %v3666 = vmul.f32 %v3650, 0.044715
    %v3667 = vadd.f32 %v3580, %v3651
    %v3668 = vadd.f32 %v3582, %v3652
    %v3669 = vadd.f32 %v3585, %v3653
    %v3670 = vadd.f32 %v3587, %v3654
    %v3671 = vadd.f32 %v3590, %v3655
    %v3672 = vadd.f32 %v3592, %v3656
    %v3673 = vadd.f32 %v3595, %v3657
    %v3674 = vadd.f32 %v3597, %v3658
    %v3675 = vadd.f32 %v3600, %v3659
    %v3676 = vadd.f32 %v3602, %v3660
    %v3677 = vadd.f32 %v3605, %v3661
    %v3678 = vadd.f32 %v3607, %v3662
    %v3679 = vadd.f32 %v3610, %v3663
    %v3680 = vadd.f32 %v3612, %v3664
    %v3681 = vadd.f32 %v3615, %v3665
    %v3682 = vadd.f32 %v3617, %v3666
    %v3683 = vmul.f32 %v3667, 0.7978846
    %v3684 = vmul.f32 %v3668, 0.7978846
    %v3685 = vmul.f32 %v3669, 0.7978846
    %v3686 = vmul.f32 %v3670, 0.7978846
    %v3687 = vmul.f32 %v3671, 0.7978846
    %v3688 = vmul.f32 %v3672, 0.7978846
    %v3689 = vmul.f32 %v3673, 0.7978846
    %v3690 = vmul.f32 %v3674, 0.7978846
    %v3691 = vmul.f32 %v3675, 0.7978846
    %v3692 = vmul.f32 %v3676, 0.7978846
    %v3693 = vmul.f32 %v3677, 0.7978846
    %v3694 = vmul.f32 %v3678, 0.7978846
    %v3695 = vmul.f32 %v3679, 0.7978846
    %v3696 = vmul.f32 %v3680, 0.7978846
    %v3697 = vmul.f32 %v3681, 0.7978846
    %v3698 = vmul.f32 %v3682, 0.7978846
    %v3699 = vtanh.pop %v3683
    %v3700 = vtanh.pop %v3684
    %v3701 = vtanh.pop %v3685
    %v3702 = vtanh.pop %v3686
    %v3703 = vtanh.pop %v3687
    %v3704 = vtanh.pop %v3688
    %v3705 = vtanh.pop %v3689
    %v3706 = vtanh.pop %v3690
    %v3707 = vtanh.pop %v3691
    %v3708 = vtanh.pop %v3692
    %v3709 = vtanh.pop %v3693
    %v3710 = vtanh.pop %v3694
    %v3711 = vtanh.pop %v3695
    %v3712 = vtanh.pop %v3696
    %v3713 = vtanh.pop %v3697
    %v3714 = vtanh.pop %v3698
    %v3715 = vadd.f32 %v3699, 1.0
    %v3716 = vadd.f32 %v3700, 1.0
    %v3717 = vadd.f32 %v3701, 1.0
    %v3718 = vadd.f32 %v3702, 1.0
    %v3719 = vadd.f32 %v3703, 1.0
    %v3720 = vadd.f32 %v3704, 1.0
    %v3721 = vadd.f32 %v3705, 1.0
    %v3722 = vadd.f32 %v3706, 1.0
    %v3723 = vadd.f32 %v3707, 1.0
    %v3724 = vadd.f32 %v3708, 1.0
    %v3725 = vadd.f32 %v3709, 1.0
    %v3726 = vadd.f32 %v3710, 1.0
    %v3727 = vadd.f32 %v3711, 1.0
    %v3728 = vadd.f32 %v3712, 1.0
    %v3729 = vadd.f32 %v3713, 1.0
    %v3730 = vadd.f32 %v3714, 1.0
    %v3731 = vmul.f32 %v3715, 0.5
    %v3732 = vmul.f32 %v3716, 0.5
    %v3733 = vmul.f32 %v3717, 0.5
    %v3734 = vmul.f32 %v3718, 0.5
    %v3735 = vmul.f32 %v3719, 0.5
    %v3736 = vmul.f32 %v3720, 0.5
    %v3737 = vmul.f32 %v3721, 0.5
    %v3738 = vmul.f32 %v3722, 0.5
    %v3739 = vmul.f32 %v3723, 0.5
    %v3740 = vmul.f32 %v3724, 0.5
    %v3741 = vmul.f32 %v3725, 0.5
    %v3742 = vmul.f32 %v3726, 0.5
    %v3743 = vmul.f32 %v3727, 0.5
    %v3744 = vmul.f32 %v3728, 0.5
    %v3745 = vmul.f32 %v3729, 0.5
    %v3746 = vmul.f32 %v3730, 0.5
    %v3747 = vmul.f32 %v3580, %v3731
    %v3748 = vmul.f32 %v3582, %v3732
    %v3749 = vmul.f32 %v3585, %v3733
    %v3750 = vmul.f32 %v3587, %v3734
    %v3751 = vmul.f32 %v3590, %v3735
    %v3752 = vmul.f32 %v3592, %v3736
    %v3753 = vmul.f32 %v3595, %v3737
    %v3754 = vmul.f32 %v3597, %v3738
    %v3755 = vmul.f32 %v3600, %v3739
    %v3756 = vmul.f32 %v3602, %v3740
    %v3757 = vmul.f32 %v3605, %v3741
    %v3758 = vmul.f32 %v3607, %v3742
    %v3759 = vmul.f32 %v3610, %v3743
    %v3760 = vmul.f32 %v3612, %v3744
    %v3761 = vmul.f32 %v3615, %v3745
    %v3762 = vmul.f32 %v3617, %v3746
    %v3763 = vpack.c.bf16 %v3748, %v3747
    %v3764 = vpack.c.bf16 %v3750, %v3749
    %v3765 = vpack.c.bf16 %v3752, %v3751
    %v3766 = vpack.c.bf16 %v3754, %v3753
    %v3767 = vpack.c.bf16 %v3756, %v3755
    %v3768 = vpack.c.bf16 %v3758, %v3757
    %v3769 = vpack.c.bf16 %v3760, %v3759
    %v3770 = vpack.c.bf16 %v3762, %v3761
    %v3771 = vld [vmem:[%s12] sm:$0xf]
    %v3772 = vld [vmem:[%s12 + $0x4] sm:$0xf]
    %v3773 = vld [vmem:[%s12 + $0x8] sm:$0xf]
    %v3774 = vld [vmem:[%s12 + $0xc] sm:$0xf]
    %v3775 = vld [vmem:[%s12 + $0x10] sm:$0xf]
    %v3776 = vld [vmem:[%s12 + $0x14] sm:$0xf]
    %v3777 = vld [vmem:[%s12 + $0x18] sm:$0xf]
    %v3778 = vld [vmem:[%s12 + $0x1c] sm:$0xf]
    %v3779 = vld [vmem:[#allocation14] sm:$0x1]
    %v3781 = vperm.slane %v3779, 0
    %v3791 = vunpack.c.l.b16 %v3771
    %v3792 = vunpack.c.l.b16 %v3772
    %v3793 = vunpack.c.l.b16 %v3773
    %v3794 = vunpack.c.l.b16 %v3774
    %v3795 = vunpack.c.l.b16 %v3775
    %v3796 = vunpack.c.l.b16 %v3776
    %v3797 = vunpack.c.l.b16 %v3777
    %v3798 = vunpack.c.l.b16 %v3778
    %v3799 = vpack.c.b16 %v3792, %v3791
    %v3800 = vpack.c.b16 %v3794, %v3793
    %v3801 = vpack.c.b16 %v3796, %v3795
    %v3802 = vpack.c.b16 %v3798, %v3797
    %vm3807 = vcmask 523264
    %v3809 = vsel %vm3807, %v3763, 0
    %v3812 = vsel %vm3807, %v3764, 0
    %v3815 = vsel %vm3807, %v3765, 0
    %v3818 = vsel %vm3807, %v3766, 0
    %v3821 = vsel %vm3807, %v3767, 0
    %v3824 = vsel %vm3807, %v3768, 0
    %v3827 = vsel %vm3807, %v3769, 0
    %v3830 = vsel %vm3807, %v3770, 0
    %3832 = vmatpush.bf16.msra.mxu0 0
    %3833 = vmatpush.bf16.msra.mxu0 0
    %3834 = vmatpush.bf16.msra.mxu0 0
    %3835 = vmatpush.bf16.msra.mxu0 0
    %3836 = vmatpush.bf16.msra.mxu0 %v3802
    %3837 = vmatpush.bf16.msra.mxu0 %v3801
    %3838 = vmatpush.bf16.msra.mxu0 %v3800
    %3839 = vmatpush.bf16.msra.mxu0 %v3799
    %3840 = vmatmul.bf16.gmra.mxu0 %v3809
    %v3841 = vpop.f32.mrf.mxu0
    %v3842 = vadd.f32 %v3781, %v3841
    %v3843 = vpop.f32.mrf.mxu0
    %v3844 = vadd.f32 %v3781, %v3843
    %3845 = vmatmul.bf16.gmra.mxu0 %v3812
    %v3846 = vpop.f32.mrf.mxu0
    %v3847 = vadd.f32 %v3781, %v3846
    %v3848 = vpop.f32.mrf.mxu0
    %v3849 = vadd.f32 %v3781, %v3848
    %3850 = vmatmul.bf16.gmra.mxu0 %v3815
    %v3851 = vpop.f32.mrf.mxu0
    %v3852 = vadd.f32 %v3781, %v3851
    %v3853 = vpop.f32.mrf.mxu0
    %v3854 = vadd.f32 %v3781, %v3853
    %3855 = vmatmul.bf16.gmra.mxu0 %v3818
    %v3856 = vpop.f32.mrf.mxu0
    %v3857 = vadd.f32 %v3781, %v3856
    %v3858 = vpop.f32.mrf.mxu0
    %v3859 = vadd.f32 %v3781, %v3858
    %3860 = vmatmul.bf16.gmra.mxu0 %v3821
    %v3861 = vpop.f32.mrf.mxu0
    %v3862 = vadd.f32 %v3781, %v3861
    %v3863 = vpop.f32.mrf.mxu0
    %v3864 = vadd.f32 %v3781, %v3863
    %3865 = vmatmul.bf16.gmra.mxu0 %v3824
    %v3866 = vpop.f32.mrf.mxu0
    %v3867 = vadd.f32 %v3781, %v3866
    %v3868 = vpop.f32.mrf.mxu0
    %v3869 = vadd.f32 %v3781, %v3868
    %3870 = vmatmul.bf16.gmra.mxu0 %v3827
    %v3871 = vpop.f32.mrf.mxu0
    %v3872 = vadd.f32 %v3781, %v3871
    %v3873 = vpop.f32.mrf.mxu0
    %v3874 = vadd.f32 %v3781, %v3873
    %3875 = vmatmul.bf16.gmra.mxu0 %v3830
    %v3876 = vpop.f32.mrf.mxu0
    %v3877 = vadd.f32 %v3781, %v3876
    %v3878 = vpop.f32.mrf.mxu0
    %v3879 = vadd.f32 %v3781, %v3878
    %3880 = vdwg.mxu0
    %v3881 = vadd.f32 %v3842, %v3502
    %v3882 = vadd.f32 %v3844, %v3503
    %v3883 = vadd.f32 %v3847, %v3504
    %v3884 = vadd.f32 %v3849, %v3505
    %v3885 = vadd.f32 %v3852, %v3506
    %v3886 = vadd.f32 %v3854, %v3507
    %v3887 = vadd.f32 %v3857, %v3508
    %v3888 = vadd.f32 %v3859, %v3509
    %v3889 = vadd.f32 %v3862, %v3510
    %v3890 = vadd.f32 %v3864, %v3511
    %v3891 = vadd.f32 %v3867, %v3512
    %v3892 = vadd.f32 %v3869, %v3513
    %v3893 = vadd.f32 %v3872, %v3514
    %v3894 = vadd.f32 %v3874, %v3515
    %v3895 = vadd.f32 %v3877, %v3516
    %v3896 = vadd.f32 %v3879, %v3517
    %v3897 = vld [vmem:[%s14] sm:$0x1]
    %v3898 = vld [vmem:[#allocation15] sm:$0x1]
    %v3899 = vsel %vm235, %v3881, 0.0
    %3900 = vadd.xlane.f32.xlu0 %v3899
    %v3901 = vpop.xlane.xlu0 %3900
    %v3902 = vsel %vm235, %v3882, 0.0
    %3903 = vadd.xlane.f32.xlu0 %v3902
    %v3904 = vpop.xlane.xlu0 %3903
    %v3905 = vsel %vm235, %v3883, 0.0
    %3906 = vadd.xlane.f32.xlu0 %v3905
    %v3907 = vpop.xlane.xlu0 %3906
    %v3908 = vsel %vm235, %v3884, 0.0
    %3909 = vadd.xlane.f32.xlu0 %v3908
    %v3910 = vpop.xlane.xlu0 %3909
    %v3911 = vsel %vm235, %v3885, 0.0
    %3912 = vadd.xlane.f32.xlu0 %v3911
    %v3913 = vpop.xlane.xlu0 %3912
    %v3914 = vsel %vm235, %v3886, 0.0
    %3915 = vadd.xlane.f32.xlu0 %v3914
    %v3916 = vpop.xlane.xlu0 %3915
    %v3917 = vsel %vm235, %v3887, 0.0
    %3918 = vadd.xlane.f32.xlu0 %v3917
    %v3919 = vpop.xlane.xlu0 %3918
    %v3920 = vsel %vm235, %v3888, 0.0
    %3921 = vadd.xlane.f32.xlu0 %v3920
    %v3922 = vpop.xlane.xlu0 %3921
    %v3923 = vsel %vm235, %v3889, 0.0
    %3924 = vadd.xlane.f32.xlu0 %v3923
    %v3925 = vpop.xlane.xlu0 %3924
    %v3926 = vsel %vm235, %v3890, 0.0
    %3927 = vadd.xlane.f32.xlu0 %v3926
    %v3928 = vpop.xlane.xlu0 %3927
    %v3929 = vsel %vm235, %v3891, 0.0
    %3930 = vadd.xlane.f32.xlu0 %v3929
    %v3931 = vpop.xlane.xlu0 %3930
    %v3932 = vsel %vm235, %v3892, 0.0
    %3933 = vadd.xlane.f32.xlu0 %v3932
    %v3934 = vpop.xlane.xlu0 %3933
    %v3935 = vsel %vm235, %v3893, 0.0
    %3936 = vadd.xlane.f32.xlu0 %v3935
    %v3937 = vpop.xlane.xlu0 %3936
    %v3938 = vsel %vm235, %v3894, 0.0
    %3939 = vadd.xlane.f32.xlu0 %v3938
    %v3940 = vpop.xlane.xlu0 %3939
    %v3941 = vsel %vm235, %v3895, 0.0
    %3942 = vadd.xlane.f32.xlu0 %v3941
    %v3943 = vpop.xlane.xlu0 %3942
    %v3944 = vsel %vm235, %v3896, 0.0
    %3945 = vadd.xlane.f32.xlu0 %v3944
    %v3946 = vpop.xlane.xlu0 %3945
    %v3947 = vmul.f32 %v3901, %v290
    %v3948 = vmul.f32 %v3904, %v290
    %v3949 = vmul.f32 %v3907, %v290
    %v3950 = vmul.f32 %v3910, %v290
    %v3951 = vmul.f32 %v3913, %v290
    %v3952 = vmul.f32 %v3916, %v290
    %v3953 = vmul.f32 %v3919, %v290
    %v3954 = vmul.f32 %v3922, %v290
    %v3955 = vmul.f32 %v3925, %v290
    %v3956 = vmul.f32 %v3928, %v290
    %v3957 = vmul.f32 %v3931, %v290
    %v3958 = vmul.f32 %v3934, %v290
    %v3959 = vmul.f32 %v3937, %v290
    %v3960 = vmul.f32 %v3940, %v290
    %v3961 = vmul.f32 %v3943, %v290
    %v3962 = vmul.f32 %v3946, %v290
    %v3963 = vsub.f32 %v3881, %v3947
    %v3964 = vsub.f32 %v3882, %v3948
    %v3965 = vsub.f32 %v3883, %v3949
    %v3966 = vsub.f32 %v3884, %v3950
    %v3967 = vsub.f32 %v3885, %v3951
    %v3968 = vsub.f32 %v3886, %v3952
    %v3969 = vsub.f32 %v3887, %v3953
    %v3970 = vsub.f32 %v3888, %v3954
    %v3971 = vsub.f32 %v3889, %v3955
    %v3972 = vsub.f32 %v3890, %v3956
    %v3973 = vsub.f32 %v3891, %v3957
    %v3974 = vsub.f32 %v3892, %v3958
    %v3975 = vsub.f32 %v3893, %v3959
    %v3976 = vsub.f32 %v3894, %v3960
    %v3977 = vsub.f32 %v3895, %v3961
    %v3978 = vsub.f32 %v3896, %v3962
    %v3979 = vmul.f32 %v3963, %v3963
    %v3980 = vmul.f32 %v3964, %v3964
    %v3981 = vmul.f32 %v3965, %v3965
    %v3982 = vmul.f32 %v3966, %v3966
    %v3983 = vmul.f32 %v3967, %v3967
    %v3984 = vmul.f32 %v3968, %v3968
    %v3985 = vmul.f32 %v3969, %v3969
    %v3986 = vmul.f32 %v3970, %v3970
    %v3987 = vmul.f32 %v3971, %v3971
    %v3988 = vmul.f32 %v3972, %v3972
    %v3989 = vmul.f32 %v3973, %v3973
    %v3990 = vmul.f32 %v3974, %v3974
    %v3991 = vmul.f32 %v3975, %v3975
    %v3992 = vmul.f32 %v3976, %v3976
    %v3993 = vmul.f32 %v3977, %v3977
    %v3994 = vmul.f32 %v3978, %v3978
    %v3995 = vsel %vm235, %v3979, 0.0
    %3996 = vadd.xlane.f32.xlu0 %v3995
    %v3997 = vpop.xlane.xlu0 %3996
    %v3998 = vsel %vm235, %v3980, 0.0
    %3999 = vadd.xlane.f32.xlu0 %v3998
    %v4000 = vpop.xlane.xlu0 %3999
    %v4001 = vsel %vm235, %v3981, 0.0
    %4002 = vadd.xlane.f32.xlu0 %v4001
    %v4003 = vpop.xlane.xlu0 %4002
    %v4004 = vsel %vm235, %v3982, 0.0
    %4005 = vadd.xlane.f32.xlu0 %v4004
    %v4006 = vpop.xlane.xlu0 %4005
    %v4007 = vsel %vm235, %v3983, 0.0
    %4008 = vadd.xlane.f32.xlu0 %v4007
    %v4009 = vpop.xlane.xlu0 %4008
    %v4010 = vsel %vm235, %v3984, 0.0
    %4011 = vadd.xlane.f32.xlu0 %v4010
    %v4012 = vpop.xlane.xlu0 %4011
    %v4013 = vsel %vm235, %v3985, 0.0
    %4014 = vadd.xlane.f32.xlu0 %v4013
    %v4015 = vpop.xlane.xlu0 %4014
    %v4016 = vsel %vm235, %v3986, 0.0
    %4017 = vadd.xlane.f32.xlu0 %v4016
    %v4018 = vpop.xlane.xlu0 %4017
    %v4019 = vsel %vm235, %v3987, 0.0
    %4020 = vadd.xlane.f32.xlu0 %v4019
    %v4021 = vpop.xlane.xlu0 %4020
    %v4022 = vsel %vm235, %v3988, 0.0
    %4023 = vadd.xlane.f32.xlu0 %v4022
    %v4024 = vpop.xlane.xlu0 %4023
    %v4025 = vsel %vm235, %v3989, 0.0
    %4026 = vadd.xlane.f32.xlu0 %v4025
    %v4027 = vpop.xlane.xlu0 %4026
    %v4028 = vsel %vm235, %v3990, 0.0
    %4029 = vadd.xlane.f32.xlu0 %v4028
    %v4030 = vpop.xlane.xlu0 %4029
    %v4031 = vsel %vm235, %v3991, 0.0
    %4032 = vadd.xlane.f32.xlu0 %v4031
    %v4033 = vpop.xlane.xlu0 %4032
    %v4034 = vsel %vm235, %v3992, 0.0
    %4035 = vadd.xlane.f32.xlu0 %v4034
    %v4036 = vpop.xlane.xlu0 %4035
    %v4037 = vsel %vm235, %v3993, 0.0
    %4038 = vadd.xlane.f32.xlu0 %v4037
    %v4039 = vpop.xlane.xlu0 %4038
    %v4040 = vsel %vm235, %v3994, 0.0
    %4041 = vadd.xlane.f32.xlu0 %v4040
    %v4042 = vpop.xlane.xlu0 %4041
    %v4043 = vmul.f32 %v3997, %v290
    %v4044 = vmul.f32 %v4000, %v290
    %v4045 = vmul.f32 %v4003, %v290
    %v4046 = vmul.f32 %v4006, %v290
    %v4047 = vmul.f32 %v4009, %v290
    %v4048 = vmul.f32 %v4012, %v290
    %v4049 = vmul.f32 %v4015, %v290
    %v4050 = vmul.f32 %v4018, %v290
    %v4051 = vmul.f32 %v4021, %v290
    %v4052 = vmul.f32 %v4024, %v290
    %v4053 = vmul.f32 %v4027, %v290
    %v4054 = vmul.f32 %v4030, %v290
    %v4055 = vmul.f32 %v4033, %v290
    %v4056 = vmul.f32 %v4036, %v290
    %v4057 = vmul.f32 %v4039, %v290
    %v4058 = vmul.f32 %v4042, %v290
    %v4059 = vadd.f32 %v4043, 1e-12
    %v4060 = vadd.f32 %v4044, 1e-12
    %v4061 = vadd.f32 %v4045, 1e-12
    %v4062 = vadd.f32 %v4046, 1e-12
    %v4063 = vadd.f32 %v4047, 1e-12
    %v4064 = vadd.f32 %v4048, 1e-12
    %v4065 = vadd.f32 %v4049, 1e-12
    %v4066 = vadd.f32 %v4050, 1e-12
    %v4067 = vadd.f32 %v4051, 1e-12
    %v4068 = vadd.f32 %v4052, 1e-12
    %v4069 = vadd.f32 %v4053, 1e-12
    %v4070 = vadd.f32 %v4054, 1e-12
    %v4071 = vadd.f32 %v4055, 1e-12
    %v4072 = vadd.f32 %v4056, 1e-12
    %v4073 = vadd.f32 %v4057, 1e-12
    %v4074 = vadd.f32 %v4058, 1e-12
    %v4075 = vrsqrt.pop %v4059
    %v4076 = vmul.f32 %v4075, %v4059
    %v4077 = vmul.f32 %v4076, %v4075
    %v4078 = vmul.f32 0.5, %v4077
    %v4079 = vsub.f32 1.5, %v4078
    %v4080 = vmul.f32 %v4075, %v4079
    %vm4081 = vweird.f32 %v4059
    %vm4082 = vweird.f32 %v4075
    %vm4083 = vmor %vm4081, %vm4082
    %v4084 = vsel %vm4083, %v4075, %v4080
    %v4085 = vrsqrt.pop %v4060
    %v4086 = vmul.f32 %v4085, %v4060
    %v4087 = vmul.f32 %v4086, %v4085
    %v4088 = vmul.f32 0.5, %v4087
    %v4089 = vsub.f32 1.5, %v4088
    %v4090 = vmul.f32 %v4085, %v4089
    %vm4091 = vweird.f32 %v4060
    %vm4092 = vweird.f32 %v4085
    %vm4093 = vmor %vm4091, %vm4092
    %v4094 = vsel %vm4093, %v4085, %v4090
    %v4095 = vrsqrt.pop %v4061
    %v4096 = vmul.f32 %v4095, %v4061
    %v4097 = vmul.f32 %v4096, %v4095
    %v4098 = vmul.f32 0.5, %v4097
    %v4099 = vsub.f32 1.5, %v4098
    %v4100 = vmul.f32 %v4095, %v4099
    %vm4101 = vweird.f32 %v4061
    %vm4102 = vweird.f32 %v4095
    %vm4103 = vmor %vm4101, %vm4102
    %v4104 = vsel %vm4103, %v4095, %v4100
    %v4105 = vrsqrt.pop %v4062
    %v4106 = vmul.f32 %v4105, %v4062
    %v4107 = vmul.f32 %v4106, %v4105
    %v4108 = vmul.f32 0.5, %v4107
    %v4109 = vsub.f32 1.5, %v4108
    %v4110 = vmul.f32 %v4105, %v4109
    %vm4111 = vweird.f32 %v4062
    %vm4112 = vweird.f32 %v4105
    %vm4113 = vmor %vm4111, %vm4112
    %v4114 = vsel %vm4113, %v4105, %v4110
    %v4115 = vrsqrt.pop %v4063
    %v4116 = vmul.f32 %v4115, %v4063
    %v4117 = vmul.f32 %v4116, %v4115
    %v4118 = vmul.f32 0.5, %v4117
    %v4119 = vsub.f32 1.5, %v4118
    %v4120 = vmul.f32 %v4115, %v4119
    %vm4121 = vweird.f32 %v4063
    %vm4122 = vweird.f32 %v4115
    %vm4123 = vmor %vm4121, %vm4122
    %v4124 = vsel %vm4123, %v4115, %v4120
    %v4125 = vrsqrt.pop %v4064
    %v4126 = vmul.f32 %v4125, %v4064
    %v4127 = vmul.f32 %v4126, %v4125
    %v4128 = vmul.f32 0.5, %v4127
    %v4129 = vsub.f32 1.5, %v4128
    %v4130 = vmul.f32 %v4125, %v4129
    %vm4131 = vweird.f32 %v4064
    %vm4132 = vweird.f32 %v4125
    %vm4133 = vmor %vm4131, %vm4132
    %v4134 = vsel %vm4133, %v4125, %v4130
    %v4135 = vrsqrt.pop %v4065
    %v4136 = vmul.f32 %v4135, %v4065
    %v4137 = vmul.f32 %v4136, %v4135
    %v4138 = vmul.f32 0.5, %v4137
    %v4139 = vsub.f32 1.5, %v4138
    %v4140 = vmul.f32 %v4135, %v4139
    %vm4141 = vweird.f32 %v4065
    %vm4142 = vweird.f32 %v4135
    %vm4143 = vmor %vm4141, %vm4142
    %v4144 = vsel %vm4143, %v4135, %v4140
    %v4145 = vrsqrt.pop %v4066
    %v4146 = vmul.f32 %v4145, %v4066
    %v4147 = vmul.f32 %v4146, %v4145
    %v4148 = vmul.f32 0.5, %v4147
    %v4149 = vsub.f32 1.5, %v4148
    %v4150 = vmul.f32 %v4145, %v4149
    %vm4151 = vweird.f32 %v4066
    %vm4152 = vweird.f32 %v4145
    %vm4153 = vmor %vm4151, %vm4152
    %v4154 = vsel %vm4153, %v4145, %v4150
    %v4155 = vrsqrt.pop %v4067
    %v4156 = vmul.f32 %v4155, %v4067
    %v4157 = vmul.f32 %v4156, %v4155
    %v4158 = vmul.f32 0.5, %v4157
    %v4159 = vsub.f32 1.5, %v4158
    %v4160 = vmul.f32 %v4155, %v4159
    %vm4161 = vweird.f32 %v4067
    %vm4162 = vweird.f32 %v4155
    %vm4163 = vmor %vm4161, %vm4162
    %v4164 = vsel %vm4163, %v4155, %v4160
    %v4165 = vrsqrt.pop %v4068
    %v4166 = vmul.f32 %v4165, %v4068
    %v4167 = vmul.f32 %v4166, %v4165
    %v4168 = vmul.f32 0.5, %v4167
    %v4169 = vsub.f32 1.5, %v4168
    %v4170 = vmul.f32 %v4165, %v4169
    %vm4171 = vweird.f32 %v4068
    %vm4172 = vweird.f32 %v4165
    %vm4173 = vmor %vm4171, %vm4172
    %v4174 = vsel %vm4173, %v4165, %v4170
    %v4175 = vrsqrt.pop %v4069
    %v4176 = vmul.f32 %v4175, %v4069
    %v4177 = vmul.f32 %v4176, %v4175
    %v4178 = vmul.f32 0.5, %v4177
    %v4179 = vsub.f32 1.5, %v4178
    %v4180 = vmul.f32 %v4175, %v4179
    %vm4181 = vweird.f32 %v4069
    %vm4182 = vweird.f32 %v4175
    %vm4183 = vmor %vm4181, %vm4182
    %v4184 = vsel %vm4183, %v4175, %v4180
    %v4185 = vrsqrt.pop %v4070
    %v4186 = vmul.f32 %v4185, %v4070
    %v4187 = vmul.f32 %v4186, %v4185
    %v4188 = vmul.f32 0.5, %v4187
    %v4189 = vsub.f32 1.5, %v4188
    %v4190 = vmul.f32 %v4185, %v4189
    %vm4191 = vweird.f32 %v4070
    %vm4192 = vweird.f32 %v4185
    %vm4193 = vmor %vm4191, %vm4192
    %v4194 = vsel %vm4193, %v4185, %v4190
    %v4195 = vrsqrt.pop %v4071
    %v4196 = vmul.f32 %v4195, %v4071
    %v4197 = vmul.f32 %v4196, %v4195
    %v4198 = vmul.f32 0.5, %v4197
    %v4199 = vsub.f32 1.5, %v4198
    %v4200 = vmul.f32 %v4195, %v4199
    %vm4201 = vweird.f32 %v4071
    %vm4202 = vweird.f32 %v4195
    %vm4203 = vmor %vm4201, %vm4202
    %v4204 = vsel %vm4203, %v4195, %v4200
    %v4205 = vrsqrt.pop %v4072
    %v4206 = vmul.f32 %v4205, %v4072
    %v4207 = vmul.f32 %v4206, %v4205
    %v4208 = vmul.f32 0.5, %v4207
    %v4209 = vsub.f32 1.5, %v4208
    %v4210 = vmul.f32 %v4205, %v4209
    %vm4211 = vweird.f32 %v4072
    %vm4212 = vweird.f32 %v4205
    %vm4213 = vmor %vm4211, %vm4212
    %v4214 = vsel %vm4213, %v4205, %v4210
    %v4215 = vrsqrt.pop %v4073
    %v4216 = vmul.f32 %v4215, %v4073
    %v4217 = vmul.f32 %v4216, %v4215
    %v4218 = vmul.f32 0.5, %v4217
    %v4219 = vsub.f32 1.5, %v4218
    %v4220 = vmul.f32 %v4215, %v4219
    %vm4221 = vweird.f32 %v4073
    %vm4222 = vweird.f32 %v4215
    %vm4223 = vmor %vm4221, %vm4222
    %v4224 = vsel %vm4223, %v4215, %v4220
    %v4225 = vrsqrt.pop %v4074
    %v4226 = vmul.f32 %v4225, %v4074
    %v4227 = vmul.f32 %v4226, %v4225
    %v4228 = vmul.f32 0.5, %v4227
    %v4229 = vsub.f32 1.5, %v4228
    %v4230 = vmul.f32 %v4225, %v4229
    %vm4231 = vweird.f32 %v4074
    %vm4232 = vweird.f32 %v4225
    %vm4233 = vmor %vm4231, %vm4232
    %v4234 = vsel %vm4233, %v4225, %v4230
    %v4235 = vmul.f32 %v3963, %v4084
    %v4236 = vmul.f32 %v3964, %v4094
    %v4237 = vmul.f32 %v3965, %v4104
    %v4238 = vmul.f32 %v3966, %v4114
    %v4239 = vmul.f32 %v3967, %v4124
    %v4240 = vmul.f32 %v3968, %v4134
    %v4241 = vmul.f32 %v3969, %v4144
    %v4242 = vmul.f32 %v3970, %v4154
    %v4243 = vmul.f32 %v3971, %v4164
    %v4244 = vmul.f32 %v3972, %v4174
    %v4245 = vmul.f32 %v3973, %v4184
    %v4246 = vmul.f32 %v3974, %v4194
    %v4247 = vmul.f32 %v3975, %v4204
    %v4248 = vmul.f32 %v3976, %v4214
    %v4249 = vmul.f32 %v3977, %v4224
    %v4250 = vmul.f32 %v3978, %v4234
    %v4252 = vperm.slane %v3897, 0
    %v4254 = vmul.f32 %v4235, %v4252
    %v4255 = vmul.f32 %v4236, %v4252
    %v4256 = vmul.f32 %v4237, %v4252
    %v4257 = vmul.f32 %v4238, %v4252
    %v4258 = vmul.f32 %v4239, %v4252
    %v4259 = vmul.f32 %v4240, %v4252
    %v4260 = vmul.f32 %v4241, %v4252
    %v4261 = vmul.f32 %v4242, %v4252
    %v4262 = vmul.f32 %v4243, %v4252
    %v4263 = vmul.f32 %v4244, %v4252
    %v4264 = vmul.f32 %v4245, %v4252
    %v4265 = vmul.f32 %v4246, %v4252
    %v4266 = vmul.f32 %v4247, %v4252
    %v4267 = vmul.f32 %v4248, %v4252
    %v4268 = vmul.f32 %v4249, %v4252
    %v4269 = vmul.f32 %v4250, %v4252
    %v4271 = vperm.slane %v3898, 0
    %v4273 = vadd.f32 %v4254, %v4271
    %v4274 = vadd.f32 %v4255, %v4271
    %v4275 = vadd.f32 %v4256, %v4271
    %v4276 = vadd.f32 %v4257, %v4271
    %v4277 = vadd.f32 %v4258, %v4271
    %v4278 = vadd.f32 %v4259, %v4271
    %v4279 = vadd.f32 %v4260, %v4271
    %v4280 = vadd.f32 %v4261, %v4271
    %v4281 = vadd.f32 %v4262, %v4271
    %v4282 = vadd.f32 %v4263, %v4271
    %v4283 = vadd.f32 %v4264, %v4271
    %v4284 = vadd.f32 %v4265, %v4271
    %v4285 = vadd.f32 %v4266, %v4271
    %v4286 = vadd.f32 %v4267, %v4271
    %v4287 = vadd.f32 %v4268, %v4271
    %v4288 = vadd.f32 %v4269, %v4271
    %v4289 = vpack.c.bf16 %v4274, %v4273
    %v4290 = vpack.c.bf16 %v4276, %v4275
    %v4291 = vpack.c.bf16 %v4278, %v4277
    %v4292 = vpack.c.bf16 %v4280, %v4279
    %v4293 = vpack.c.bf16 %v4282, %v4281
    %v4294 = vpack.c.bf16 %v4284, %v4283
    %v4295 = vpack.c.bf16 %v4286, %v4285
    %v4296 = vpack.c.bf16 %v4288, %v4287
    %s4297 = scalar_lea.vmem %s4, 16
    %v4298 = vld [vmem:[%s4297] sm:$0xf]
    %v4299 = vld [vmem:[%s4297 + $0x4] sm:$0xf]
    %v4300 = vld [vmem:[%s4297 + $0x8] sm:$0xf]
    %v4301 = vld [vmem:[%s4297 + $0xc] sm:$0xf]
    %s4302 = scalar_lea.vmem %s5, 1
    %v4303 = vld [vmem:[%s4302] sm:$0x1]
    %v4305 = vperm.slane %v4303, 0
    %v4311 = vunpack.c.l.b16 %v4298
    %v4312 = vunpack.c.l.b16 %v4299
    %v4313 = vunpack.c.l.b16 %v4300
    %v4314 = vunpack.c.l.b16 %v4301
    %v4315 = vpack.c.b16 %v4312, %v4311
    %v4316 = vpack.c.b16 %v4314, %v4313
    %v4320 = vsel %vm235, %v4289, 0
    %v4323 = vsel %vm235, %v4290, 0
    %v4326 = vsel %vm235, %v4291, 0
    %v4329 = vsel %vm235, %v4292, 0
    %v4332 = vsel %vm235, %v4293, 0
    %v4335 = vsel %vm235, %v4294, 0
    %v4338 = vsel %vm235, %v4295, 0
    %v4341 = vsel %vm235, %v4296, 0
    %4343 = vmatpush.bf16.msra.mxu0 0
    %4344 = vmatpush.bf16.msra.mxu0 0
    %4345 = vmatpush.bf16.msra.mxu0 0
    %4346 = vmatpush.bf16.msra.mxu0 0
    %4347 = vmatpush.bf16.msra.mxu0 0
    %4348 = vmatpush.bf16.msra.mxu0 0
    %4349 = vmatpush.bf16.msra.mxu0 %v4316
    %4350 = vmatpush.bf16.msra.mxu0 %v4315
    %4351 = vmatmul.bf16.gmra.mxu0 %v4320
    %v4352 = vpop.f32.mrf.mxu0
    %v4353 = vadd.f32 %v4305, %v4352
    %v4354 = vpop.f32.mrf.mxu0
    %v4355 = vadd.f32 %v4305, %v4354
    %4356 = vmatmul.bf16.gmra.mxu0 %v4323
    %v4357 = vpop.f32.mrf.mxu0
    %v4358 = vadd.f32 %v4305, %v4357
    %v4359 = vpop.f32.mrf.mxu0
    %v4360 = vadd.f32 %v4305, %v4359
    %4361 = vmatmul.bf16.gmra.mxu0 %v4326
    %v4362 = vpop.f32.mrf.mxu0
    %v4363 = vadd.f32 %v4305, %v4362
    %v4364 = vpop.f32.mrf.mxu0
    %v4365 = vadd.f32 %v4305, %v4364
    %4366 = vmatmul.bf16.gmra.mxu0 %v4329
    %v4367 = vpop.f32.mrf.mxu0
    %v4368 = vadd.f32 %v4305, %v4367
    %v4369 = vpop.f32.mrf.mxu0
    %v4370 = vadd.f32 %v4305, %v4369
    %4371 = vmatmul.bf16.gmra.mxu0 %v4332
    %v4372 = vpop.f32.mrf.mxu0
    %v4373 = vadd.f32 %v4305, %v4372
    %v4374 = vpop.f32.mrf.mxu0
    %v4375 = vadd.f32 %v4305, %v4374
    %4376 = vmatmul.bf16.gmra.mxu0 %v4335
    %v4377 = vpop.f32.mrf.mxu0
    %v4378 = vadd.f32 %v4305, %v4377
    %v4379 = vpop.f32.mrf.mxu0
    %v4380 = vadd.f32 %v4305, %v4379
    %4381 = vmatmul.bf16.gmra.mxu0 %v4338
    %v4382 = vpop.f32.mrf.mxu0
    %v4383 = vadd.f32 %v4305, %v4382
    %v4384 = vpop.f32.mrf.mxu0
    %v4385 = vadd.f32 %v4305, %v4384
    %4386 = vmatmul.bf16.gmra.mxu0 %v4341
    %v4387 = vpop.f32.mrf.mxu0
    %v4388 = vadd.f32 %v4305, %v4387
    %v4389 = vpop.f32.mrf.mxu0
    %v4390 = vadd.f32 %v4305, %v4389
    %4391 = vdwg.mxu0
    %s4392 = scalar_lea.vmem [#allocation8], 1
    %v4393 = vld [vmem:[%s4392] sm:$0x1]
    %v4395 = vperm.slane %v4393, 0
    %v4397 = vadd.f32 %v4273, %v4395
    %v4398 = vadd.f32 %v4274, %v4395
    %v4399 = vadd.f32 %v4275, %v4395
    %v4400 = vadd.f32 %v4276, %v4395
    %v4401 = vadd.f32 %v4277, %v4395
    %v4402 = vadd.f32 %v4278, %v4395
    %v4403 = vadd.f32 %v4279, %v4395
    %v4404 = vadd.f32 %v4280, %v4395
    %v4405 = vadd.f32 %v4281, %v4395
    %v4406 = vadd.f32 %v4282, %v4395
    %v4407 = vadd.f32 %v4283, %v4395
    %v4408 = vadd.f32 %v4284, %v4395
    %v4409 = vadd.f32 %v4285, %v4395
    %v4410 = vadd.f32 %v4286, %v4395
    %v4411 = vadd.f32 %v4287, %v4395
    %v4412 = vadd.f32 %v4288, %v4395
    %4414 = vrot.lane.b32.xlu0 %v4353, 96
    %v4415 = vpop.permute.xlu0 %4414
    %v4416 = vsel %vm757, %v4353, 0
    %v4418 = vsel %vm757, %v4415, 0
    %4420 = vmatpush.xpose.msra.mxu0 0.0
    %4421 = vmatpush.xpose.msra.mxu0 0.0
    %4422 = vmatpush.xpose.msra.mxu0 0.0
    %4423 = vmatpush.xpose.msra.mxu0 0.0
    %4424 = vmatpush.xpose.msra.mxu0 0.0
    %4425 = vmatpush.xpose.msra.mxu0 0.0
    %4426 = vmatpush.xpose.msra.mxu0 0.0
    %4427 = vmatpush.xpose.msra.mxu0 0.0
    %4428 = vmatpush.xpose.msra.mxu0 0.0
    %4429 = vmatpush.xpose.msra.mxu0 0.0
    %4430 = vmatpush.xpose.msra.mxu0 0.0
    %4431 = vmatpush.xpose.msra.mxu0 0.0
    %4432 = vmatpush.xpose.msra.mxu0 0.0
    %4433 = vmatpush.xpose.msra.mxu0 0.0
    %4434 = vmatpush.xpose.msra.mxu0 0.0
    %4435 = vmatpush.xpose.msra.mxu0 %v4418
    %4436 = vmatmul.f32.gmra.mxu0 %v4416
    %v4437 = vpop.f32.mrf.mxu0
    %v4438 = vadd.f32 0.0, %v4437
    %4439 = vdwg.mxu0
    %4441 = vrot.lane.b32.xlu0 %v4355, 96
    %v4442 = vpop.permute.xlu0 %4441
    %v4443 = vsel %vm757, %v4355, 0
    %v4445 = vsel %vm757, %v4442, 0
    %4447 = vmatpush.xpose.msra.mxu0 0.0
    %4448 = vmatpush.xpose.msra.mxu0 0.0
    %4449 = vmatpush.xpose.msra.mxu0 0.0
    %4450 = vmatpush.xpose.msra.mxu0 0.0
    %4451 = vmatpush.xpose.msra.mxu0 0.0
    %4452 = vmatpush.xpose.msra.mxu0 0.0
    %4453 = vmatpush.xpose.msra.mxu0 0.0
    %4454 = vmatpush.xpose.msra.mxu0 0.0
    %4455 = vmatpush.xpose.msra.mxu0 0.0
    %4456 = vmatpush.xpose.msra.mxu0 0.0
    %4457 = vmatpush.xpose.msra.mxu0 0.0
    %4458 = vmatpush.xpose.msra.mxu0 0.0
    %4459 = vmatpush.xpose.msra.mxu0 0.0
    %4460 = vmatpush.xpose.msra.mxu0 0.0
    %4461 = vmatpush.xpose.msra.mxu0 0.0
    %4462 = vmatpush.xpose.msra.mxu0 %v4445
    %4463 = vmatmul.f32.gmra.mxu0 %v4443
    %v4464 = vpop.f32.mrf.mxu0
    %v4465 = vadd.f32 0.0, %v4464
    %4466 = vdwg.mxu0
    %4468 = vrot.lane.b32.xlu0 %v4358, 96
    %v4469 = vpop.permute.xlu0 %4468
    %v4470 = vsel %vm757, %v4358, 0
    %v4472 = vsel %vm757, %v4469, 0
    %4474 = vmatpush.xpose.msra.mxu0 0.0
    %4475 = vmatpush.xpose.msra.mxu0 0.0
    %4476 = vmatpush.xpose.msra.mxu0 0.0
    %4477 = vmatpush.xpose.msra.mxu0 0.0
    %4478 = vmatpush.xpose.msra.mxu0 0.0
    %4479 = vmatpush.xpose.msra.mxu0 0.0
    %4480 = vmatpush.xpose.msra.mxu0 0.0
    %4481 = vmatpush.xpose.msra.mxu0 0.0
    %4482 = vmatpush.xpose.msra.mxu0 0.0
    %4483 = vmatpush.xpose.msra.mxu0 0.0
    %4484 = vmatpush.xpose.msra.mxu0 0.0
    %4485 = vmatpush.xpose.msra.mxu0 0.0
    %4486 = vmatpush.xpose.msra.mxu0 0.0
    %4487 = vmatpush.xpose.msra.mxu0 0.0
    %4488 = vmatpush.xpose.msra.mxu0 0.0
    %4489 = vmatpush.xpose.msra.mxu0 %v4472
    %4490 = vmatmul.f32.gmra.mxu0 %v4470
    %v4491 = vpop.f32.mrf.mxu0
    %v4492 = vadd.f32 0.0, %v4491
    %4493 = vdwg.mxu0
    %4495 = vrot.lane.b32.xlu0 %v4360, 96
    %v4496 = vpop.permute.xlu0 %4495
    %v4497 = vsel %vm757, %v4360, 0
    %v4499 = vsel %vm757, %v4496, 0
    %4501 = vmatpush.xpose.msra.mxu0 0.0
    %4502 = vmatpush.xpose.msra.mxu0 0.0
    %4503 = vmatpush.xpose.msra.mxu0 0.0
    %4504 = vmatpush.xpose.msra.mxu0 0.0
    %4505 = vmatpush.xpose.msra.mxu0 0.0
    %4506 = vmatpush.xpose.msra.mxu0 0.0
    %4507 = vmatpush.xpose.msra.mxu0 0.0
    %4508 = vmatpush.xpose.msra.mxu0 0.0
    %4509 = vmatpush.xpose.msra.mxu0 0.0
    %4510 = vmatpush.xpose.msra.mxu0 0.0
    %4511 = vmatpush.xpose.msra.mxu0 0.0
    %4512 = vmatpush.xpose.msra.mxu0 0.0
    %4513 = vmatpush.xpose.msra.mxu0 0.0
    %4514 = vmatpush.xpose.msra.mxu0 0.0
    %4515 = vmatpush.xpose.msra.mxu0 0.0
    %4516 = vmatpush.xpose.msra.mxu0 %v4499
    %4517 = vmatmul.f32.gmra.mxu0 %v4497
    %v4518 = vpop.f32.mrf.mxu0
    %v4519 = vadd.f32 0.0, %v4518
    %4520 = vdwg.mxu0
    %4522 = vrot.lane.b32.xlu0 %v4363, 96
    %v4523 = vpop.permute.xlu0 %4522
    %v4524 = vsel %vm757, %v4363, 0
    %v4526 = vsel %vm757, %v4523, 0
    %4528 = vmatpush.xpose.msra.mxu0 0.0
    %4529 = vmatpush.xpose.msra.mxu0 0.0
    %4530 = vmatpush.xpose.msra.mxu0 0.0
    %4531 = vmatpush.xpose.msra.mxu0 0.0
    %4532 = vmatpush.xpose.msra.mxu0 0.0
    %4533 = vmatpush.xpose.msra.mxu0 0.0
    %4534 = vmatpush.xpose.msra.mxu0 0.0
    %4535 = vmatpush.xpose.msra.mxu0 0.0
    %4536 = vmatpush.xpose.msra.mxu0 0.0
    %4537 = vmatpush.xpose.msra.mxu0 0.0
    %4538 = vmatpush.xpose.msra.mxu0 0.0
    %4539 = vmatpush.xpose.msra.mxu0 0.0
    %4540 = vmatpush.xpose.msra.mxu0 0.0
    %4541 = vmatpush.xpose.msra.mxu0 0.0
    %4542 = vmatpush.xpose.msra.mxu0 0.0
    %4543 = vmatpush.xpose.msra.mxu0 %v4526
    %4544 = vmatmul.f32.gmra.mxu0 %v4524
    %v4545 = vpop.f32.mrf.mxu0
    %v4546 = vadd.f32 0.0, %v4545
    %4547 = vdwg.mxu0
    %4549 = vrot.lane.b32.xlu0 %v4365, 96
    %v4550 = vpop.permute.xlu0 %4549
    %v4551 = vsel %vm757, %v4365, 0
    %v4553 = vsel %vm757, %v4550, 0
    %4555 = vmatpush.xpose.msra.mxu0 0.0
    %4556 = vmatpush.xpose.msra.mxu0 0.0
    %4557 = vmatpush.xpose.msra.mxu0 0.0
    %4558 = vmatpush.xpose.msra.mxu0 0.0
    %4559 = vmatpush.xpose.msra.mxu0 0.0
    %4560 = vmatpush.xpose.msra.mxu0 0.0
    %4561 = vmatpush.xpose.msra.mxu0 0.0
    %4562 = vmatpush.xpose.msra.mxu0 0.0
    %4563 = vmatpush.xpose.msra.mxu0 0.0
    %4564 = vmatpush.xpose.msra.mxu0 0.0
    %4565 = vmatpush.xpose.msra.mxu0 0.0
    %4566 = vmatpush.xpose.msra.mxu0 0.0
    %4567 = vmatpush.xpose.msra.mxu0 0.0
    %4568 = vmatpush.xpose.msra.mxu0 0.0
    %4569 = vmatpush.xpose.msra.mxu0 0.0
    %4570 = vmatpush.xpose.msra.mxu0 %v4553
    %4571 = vmatmul.f32.gmra.mxu0 %v4551
    %v4572 = vpop.f32.mrf.mxu0
    %v4573 = vadd.f32 0.0, %v4572
    %4574 = vdwg.mxu0
    %4576 = vrot.lane.b32.xlu0 %v4368, 96
    %v4577 = vpop.permute.xlu0 %4576
    %v4578 = vsel %vm757, %v4368, 0
    %v4580 = vsel %vm757, %v4577, 0
    %4582 = vmatpush.xpose.msra.mxu0 0.0
    %4583 = vmatpush.xpose.msra.mxu0 0.0
    %4584 = vmatpush.xpose.msra.mxu0 0.0
    %4585 = vmatpush.xpose.msra.mxu0 0.0
    %4586 = vmatpush.xpose.msra.mxu0 0.0
    %4587 = vmatpush.xpose.msra.mxu0 0.0
    %4588 = vmatpush.xpose.msra.mxu0 0.0
    %4589 = vmatpush.xpose.msra.mxu0 0.0
    %4590 = vmatpush.xpose.msra.mxu0 0.0
    %4591 = vmatpush.xpose.msra.mxu0 0.0
    %4592 = vmatpush.xpose.msra.mxu0 0.0
    %4593 = vmatpush.xpose.msra.mxu0 0.0
    %4594 = vmatpush.xpose.msra.mxu0 0.0
    %4595 = vmatpush.xpose.msra.mxu0 0.0
    %4596 = vmatpush.xpose.msra.mxu0 0.0
    %4597 = vmatpush.xpose.msra.mxu0 %v4580
    %4598 = vmatmul.f32.gmra.mxu0 %v4578
    %v4599 = vpop.f32.mrf.mxu0
    %v4600 = vadd.f32 0.0, %v4599
    %4601 = vdwg.mxu0
    %4603 = vrot.lane.b32.xlu0 %v4370, 96
    %v4604 = vpop.permute.xlu0 %4603
    %v4605 = vsel %vm757, %v4370, 0
    %v4607 = vsel %vm757, %v4604, 0
    %4609 = vmatpush.xpose.msra.mxu0 0.0
    %4610 = vmatpush.xpose.msra.mxu0 0.0
    %4611 = vmatpush.xpose.msra.mxu0 0.0
    %4612 = vmatpush.xpose.msra.mxu0 0.0
    %4613 = vmatpush.xpose.msra.mxu0 0.0
    %4614 = vmatpush.xpose.msra.mxu0 0.0
    %4615 = vmatpush.xpose.msra.mxu0 0.0
    %4616 = vmatpush.xpose.msra.mxu0 0.0
    %4617 = vmatpush.xpose.msra.mxu0 0.0
    %4618 = vmatpush.xpose.msra.mxu0 0.0
    %4619 = vmatpush.xpose.msra.mxu0 0.0
    %4620 = vmatpush.xpose.msra.mxu0 0.0
    %4621 = vmatpush.xpose.msra.mxu0 0.0
    %4622 = vmatpush.xpose.msra.mxu0 0.0
    %4623 = vmatpush.xpose.msra.mxu0 0.0
    %4624 = vmatpush.xpose.msra.mxu0 %v4607
    %4625 = vmatmul.f32.gmra.mxu0 %v4605
    %v4626 = vpop.f32.mrf.mxu0
    %v4627 = vadd.f32 0.0, %v4626
    %4628 = vdwg.mxu0
    %4630 = vrot.lane.b32.xlu0 %v4373, 96
    %v4631 = vpop.permute.xlu0 %4630
    %v4632 = vsel %vm757, %v4373, 0
    %v4634 = vsel %vm757, %v4631, 0
    %4636 = vmatpush.xpose.msra.mxu0 0.0
    %4637 = vmatpush.xpose.msra.mxu0 0.0
    %4638 = vmatpush.xpose.msra.mxu0 0.0
    %4639 = vmatpush.xpose.msra.mxu0 0.0
    %4640 = vmatpush.xpose.msra.mxu0 0.0
    %4641 = vmatpush.xpose.msra.mxu0 0.0
    %4642 = vmatpush.xpose.msra.mxu0 0.0
    %4643 = vmatpush.xpose.msra.mxu0 0.0
    %4644 = vmatpush.xpose.msra.mxu0 0.0
    %4645 = vmatpush.xpose.msra.mxu0 0.0
    %4646 = vmatpush.xpose.msra.mxu0 0.0
    %4647 = vmatpush.xpose.msra.mxu0 0.0
    %4648 = vmatpush.xpose.msra.mxu0 0.0
    %4649 = vmatpush.xpose.msra.mxu0 0.0
    %4650 = vmatpush.xpose.msra.mxu0 0.0
    %4651 = vmatpush.xpose.msra.mxu0 %v4634
    %4652 = vmatmul.f32.gmra.mxu0 %v4632
    %v4653 = vpop.f32.mrf.mxu0
    %v4654 = vadd.f32 0.0, %v4653
    %4655 = vdwg.mxu0
    %4657 = vrot.lane.b32.xlu0 %v4375, 96
    %v4658 = vpop.permute.xlu0 %4657
    %v4659 = vsel %vm757, %v4375, 0
    %v4661 = vsel %vm757, %v4658, 0
    %4663 = vmatpush.xpose.msra.mxu0 0.0
    %4664 = vmatpush.xpose.msra.mxu0 0.0
    %4665 = vmatpush.xpose.msra.mxu0 0.0
    %4666 = vmatpush.xpose.msra.mxu0 0.0
    %4667 = vmatpush.xpose.msra.mxu0 0.0
    %4668 = vmatpush.xpose.msra.mxu0 0.0
    %4669 = vmatpush.xpose.msra.mxu0 0.0
    %4670 = vmatpush.xpose.msra.mxu0 0.0
    %4671 = vmatpush.xpose.msra.mxu0 0.0
    %4672 = vmatpush.xpose.msra.mxu0 0.0
    %4673 = vmatpush.xpose.msra.mxu0 0.0
    %4674 = vmatpush.xpose.msra.mxu0 0.0
    %4675 = vmatpush.xpose.msra.mxu0 0.0
    %4676 = vmatpush.xpose.msra.mxu0 0.0
    %4677 = vmatpush.xpose.msra.mxu0 0.0
    %4678 = vmatpush.xpose.msra.mxu0 %v4661
    %4679 = vmatmul.f32.gmra.mxu0 %v4659
    %v4680 = vpop.f32.mrf.mxu0
    %v4681 = vadd.f32 0.0, %v4680
    %4682 = vdwg.mxu0
    %4684 = vrot.lane.b32.xlu0 %v4378, 96
    %v4685 = vpop.permute.xlu0 %4684
    %v4686 = vsel %vm757, %v4378, 0
    %v4688 = vsel %vm757, %v4685, 0
    %4690 = vmatpush.xpose.msra.mxu0 0.0
    %4691 = vmatpush.xpose.msra.mxu0 0.0
    %4692 = vmatpush.xpose.msra.mxu0 0.0
    %4693 = vmatpush.xpose.msra.mxu0 0.0
    %4694 = vmatpush.xpose.msra.mxu0 0.0
    %4695 = vmatpush.xpose.msra.mxu0 0.0
    %4696 = vmatpush.xpose.msra.mxu0 0.0
    %4697 = vmatpush.xpose.msra.mxu0 0.0
    %4698 = vmatpush.xpose.msra.mxu0 0.0
    %4699 = vmatpush.xpose.msra.mxu0 0.0
    %4700 = vmatpush.xpose.msra.mxu0 0.0
    %4701 = vmatpush.xpose.msra.mxu0 0.0
    %4702 = vmatpush.xpose.msra.mxu0 0.0
    %4703 = vmatpush.xpose.msra.mxu0 0.0
    %4704 = vmatpush.xpose.msra.mxu0 0.0
    %4705 = vmatpush.xpose.msra.mxu0 %v4688
    %4706 = vmatmul.f32.gmra.mxu0 %v4686
    %v4707 = vpop.f32.mrf.mxu0
    %v4708 = vadd.f32 0.0, %v4707
    %4709 = vdwg.mxu0
    %4711 = vrot.lane.b32.xlu0 %v4380, 96
    %v4712 = vpop.permute.xlu0 %4711
    %v4713 = vsel %vm757, %v4380, 0
    %v4715 = vsel %vm757, %v4712, 0
    %4717 = vmatpush.xpose.msra.mxu0 0.0
    %4718 = vmatpush.xpose.msra.mxu0 0.0
    %4719 = vmatpush.xpose.msra.mxu0 0.0
    %4720 = vmatpush.xpose.msra.mxu0 0.0
    %4721 = vmatpush.xpose.msra.mxu0 0.0
    %4722 = vmatpush.xpose.msra.mxu0 0.0
    %4723 = vmatpush.xpose.msra.mxu0 0.0
    %4724 = vmatpush.xpose.msra.mxu0 0.0
    %4725 = vmatpush.xpose.msra.mxu0 0.0
    %4726 = vmatpush.xpose.msra.mxu0 0.0
    %4727 = vmatpush.xpose.msra.mxu0 0.0
    %4728 = vmatpush.xpose.msra.mxu0 0.0
    %4729 = vmatpush.xpose.msra.mxu0 0.0
    %4730 = vmatpush.xpose.msra.mxu0 0.0
    %4731 = vmatpush.xpose.msra.mxu0 0.0
    %4732 = vmatpush.xpose.msra.mxu0 %v4715
    %4733 = vmatmul.f32.gmra.mxu0 %v4713
    %v4734 = vpop.f32.mrf.mxu0
    %v4735 = vadd.f32 0.0, %v4734
    %4736 = vdwg.mxu0
    %4738 = vrot.lane.b32.xlu0 %v4383, 96
    %v4739 = vpop.permute.xlu0 %4738
    %v4740 = vsel %vm757, %v4383, 0
    %v4742 = vsel %vm757, %v4739, 0
    %4744 = vmatpush.xpose.msra.mxu0 0.0
    %4745 = vmatpush.xpose.msra.mxu0 0.0
    %4746 = vmatpush.xpose.msra.mxu0 0.0
    %4747 = vmatpush.xpose.msra.mxu0 0.0
    %4748 = vmatpush.xpose.msra.mxu0 0.0
    %4749 = vmatpush.xpose.msra.mxu0 0.0
    %4750 = vmatpush.xpose.msra.mxu0 0.0
    %4751 = vmatpush.xpose.msra.mxu0 0.0
    %4752 = vmatpush.xpose.msra.mxu0 0.0
    %4753 = vmatpush.xpose.msra.mxu0 0.0
    %4754 = vmatpush.xpose.msra.mxu0 0.0
    %4755 = vmatpush.xpose.msra.mxu0 0.0
    %4756 = vmatpush.xpose.msra.mxu0 0.0
    %4757 = vmatpush.xpose.msra.mxu0 0.0
    %4758 = vmatpush.xpose.msra.mxu0 0.0
    %4759 = vmatpush.xpose.msra.mxu0 %v4742
    %4760 = vmatmul.f32.gmra.mxu0 %v4740
    %v4761 = vpop.f32.mrf.mxu0
    %v4762 = vadd.f32 0.0, %v4761
    %4763 = vdwg.mxu0
    %4765 = vrot.lane.b32.xlu0 %v4385, 96
    %v4766 = vpop.permute.xlu0 %4765
    %v4767 = vsel %vm757, %v4385, 0
    %v4769 = vsel %vm757, %v4766, 0
    %4771 = vmatpush.xpose.msra.mxu0 0.0
    %4772 = vmatpush.xpose.msra.mxu0 0.0
    %4773 = vmatpush.xpose.msra.mxu0 0.0
    %4774 = vmatpush.xpose.msra.mxu0 0.0
    %4775 = vmatpush.xpose.msra.mxu0 0.0
    %4776 = vmatpush.xpose.msra.mxu0 0.0
    %4777 = vmatpush.xpose.msra.mxu0 0.0
    %4778 = vmatpush.xpose.msra.mxu0 0.0
    %4779 = vmatpush.xpose.msra.mxu0 0.0
    %4780 = vmatpush.xpose.msra.mxu0 0.0
    %4781 = vmatpush.xpose.msra.mxu0 0.0
    %4782 = vmatpush.xpose.msra.mxu0 0.0
    %4783 = vmatpush.xpose.msra.mxu0 0.0
    %4784 = vmatpush.xpose.msra.mxu0 0.0
    %4785 = vmatpush.xpose.msra.mxu0 0.0
    %4786 = vmatpush.xpose.msra.mxu0 %v4769
    %4787 = vmatmul.f32.gmra.mxu0 %v4767
    %v4788 = vpop.f32.mrf.mxu0
    %v4789 = vadd.f32 0.0, %v4788
    %4790 = vdwg.mxu0
    %4792 = vrot.lane.b32.xlu0 %v4388, 96
    %v4793 = vpop.permute.xlu0 %4792
    %v4794 = vsel %vm757, %v4388, 0
    %v4796 = vsel %vm757, %v4793, 0
    %4798 = vmatpush.xpose.msra.mxu0 0.0
    %4799 = vmatpush.xpose.msra.mxu0 0.0
    %4800 = vmatpush.xpose.msra.mxu0 0.0
    %4801 = vmatpush.xpose.msra.mxu0 0.0
    %4802 = vmatpush.xpose.msra.mxu0 0.0
    %4803 = vmatpush.xpose.msra.mxu0 0.0
    %4804 = vmatpush.xpose.msra.mxu0 0.0
    %4805 = vmatpush.xpose.msra.mxu0 0.0
    %4806 = vmatpush.xpose.msra.mxu0 0.0
    %4807 = vmatpush.xpose.msra.mxu0 0.0
    %4808 = vmatpush.xpose.msra.mxu0 0.0
    %4809 = vmatpush.xpose.msra.mxu0 0.0
    %4810 = vmatpush.xpose.msra.mxu0 0.0
    %4811 = vmatpush.xpose.msra.mxu0 0.0
    %4812 = vmatpush.xpose.msra.mxu0 0.0
    %4813 = vmatpush.xpose.msra.mxu0 %v4796
    %4814 = vmatmul.f32.gmra.mxu0 %v4794
    %v4815 = vpop.f32.mrf.mxu0
    %v4816 = vadd.f32 0.0, %v4815
    %4817 = vdwg.mxu0
    %4819 = vrot.lane.b32.xlu0 %v4390, 96
    %v4820 = vpop.permute.xlu0 %4819
    %v4821 = vsel %vm757, %v4390, 0
    %v4823 = vsel %vm757, %v4820, 0
    %4825 = vmatpush.xpose.msra.mxu0 0.0
    %4826 = vmatpush.xpose.msra.mxu0 0.0
    %4827 = vmatpush.xpose.msra.mxu0 0.0
    %4828 = vmatpush.xpose.msra.mxu0 0.0
    %4829 = vmatpush.xpose.msra.mxu0 0.0
    %4830 = vmatpush.xpose.msra.mxu0 0.0
    %4831 = vmatpush.xpose.msra.mxu0 0.0
    %4832 = vmatpush.xpose.msra.mxu0 0.0
    %4833 = vmatpush.xpose.msra.mxu0 0.0
    %4834 = vmatpush.xpose.msra.mxu0 0.0
    %4835 = vmatpush.xpose.msra.mxu0 0.0
    %4836 = vmatpush.xpose.msra.mxu0 0.0
    %4837 = vmatpush.xpose.msra.mxu0 0.0
    %4838 = vmatpush.xpose.msra.mxu0 0.0
    %4839 = vmatpush.xpose.msra.mxu0 0.0
    %4840 = vmatpush.xpose.msra.mxu0 %v4823
    %4841 = vmatmul.f32.gmra.mxu0 %v4821
    %v4842 = vpop.f32.mrf.mxu0
    %v4843 = vadd.f32 0.0, %v4842
    %4844 = vdwg.mxu0
    %v4845 = vmul.f32 %v4438, 0.25
    %v4846 = vmul.f32 %v4465, 0.25
    %v4847 = vmul.f32 %v4492, 0.25
    %v4848 = vmul.f32 %v4519, 0.25
    %v4849 = vmul.f32 %v4546, 0.25
    %v4850 = vmul.f32 %v4573, 0.25
    %v4851 = vmul.f32 %v4600, 0.25
    %v4852 = vmul.f32 %v4627, 0.25
    %v4853 = vmul.f32 %v4654, 0.25
    %v4854 = vmul.f32 %v4681, 0.25
    %v4855 = vmul.f32 %v4708, 0.25
    %v4856 = vmul.f32 %v4735, 0.25
    %v4857 = vmul.f32 %v4762, 0.25
    %v4858 = vmul.f32 %v4789, 0.25
    %v4859 = vmul.f32 %v4816, 0.25
    %v4860 = vmul.f32 %v4843, 0.25
    %v4861 = vadd.f32 %v4845, %v1203
    %v4862 = vadd.f32 %v4846, %v1204
    %v4863 = vadd.f32 %v4847, %v1205
    %v4864 = vadd.f32 %v4848, %v1206
    %v4865 = vadd.f32 %v4849, %v1207
    %v4866 = vadd.f32 %v4850, %v1208
    %v4867 = vadd.f32 %v4851, %v1209
    %v4868 = vadd.f32 %v4852, %v1210
    %v4869 = vadd.f32 %v4853, %v1211
    %v4870 = vadd.f32 %v4854, %v1212
    %v4871 = vadd.f32 %v4855, %v1213
    %v4872 = vadd.f32 %v4856, %v1214
    %v4873 = vadd.f32 %v4857, %v1215
    %v4874 = vadd.f32 %v4858, %v1216
    %v4875 = vadd.f32 %v4859, %v1217
    %v4876 = vadd.f32 %v4860, %v1218
    %v4877 = vsel %vm1251, %v4861, -inf
    %4878 = vmax.xlane.f32.xlu0 %v4877
    %v4879 = vpop.xlane.xlu0 %4878
    %v4880 = vsel %vm1251, %v4862, -inf
    %4881 = vmax.xlane.f32.xlu0 %v4880
    %v4882 = vpop.xlane.xlu0 %4881
    %v4883 = vsel %vm1251, %v4863, -inf
    %4884 = vmax.xlane.f32.xlu0 %v4883
    %v4885 = vpop.xlane.xlu0 %4884
    %v4886 = vsel %vm1251, %v4864, -inf
    %4887 = vmax.xlane.f32.xlu0 %v4886
    %v4888 = vpop.xlane.xlu0 %4887
    %v4889 = vsel %vm1251, %v4865, -inf
    %4890 = vmax.xlane.f32.xlu0 %v4889
    %v4891 = vpop.xlane.xlu0 %4890
    %v4892 = vsel %vm1251, %v4866, -inf
    %4893 = vmax.xlane.f32.xlu0 %v4892
    %v4894 = vpop.xlane.xlu0 %4893
    %v4895 = vsel %vm1251, %v4867, -inf
    %4896 = vmax.xlane.f32.xlu0 %v4895
    %v4897 = vpop.xlane.xlu0 %4896
    %v4898 = vsel %vm1251, %v4868, -inf
    %4899 = vmax.xlane.f32.xlu0 %v4898
    %v4900 = vpop.xlane.xlu0 %4899
    %v4901 = vsel %vm1251, %v4869, -inf
    %4902 = vmax.xlane.f32.xlu0 %v4901
    %v4903 = vpop.xlane.xlu0 %4902
    %v4904 = vsel %vm1251, %v4870, -inf
    %4905 = vmax.xlane.f32.xlu0 %v4904
    %v4906 = vpop.xlane.xlu0 %4905
    %v4907 = vsel %vm1251, %v4871, -inf
    %4908 = vmax.xlane.f32.xlu0 %v4907
    %v4909 = vpop.xlane.xlu0 %4908
    %v4910 = vsel %vm1251, %v4872, -inf
    %4911 = vmax.xlane.f32.xlu0 %v4910
    %v4912 = vpop.xlane.xlu0 %4911
    %v4913 = vsel %vm1251, %v4873, -inf
    %4914 = vmax.xlane.f32.xlu0 %v4913
    %v4915 = vpop.xlane.xlu0 %4914
    %v4916 = vsel %vm1251, %v4874, -inf
    %4917 = vmax.xlane.f32.xlu0 %v4916
    %v4918 = vpop.xlane.xlu0 %4917
    %v4919 = vsel %vm1251, %v4875, -inf
    %4920 = vmax.xlane.f32.xlu0 %v4919
    %v4921 = vpop.xlane.xlu0 %4920
    %v4922 = vsel %vm1251, %v4876, -inf
    %4923 = vmax.xlane.f32.xlu0 %v4922
    %v4924 = vpop.xlane.xlu0 %4923
    %v4925 = vsub.f32 %v4861, %v4879
    %v4926 = vsub.f32 %v4862, %v4882
    %v4927 = vsub.f32 %v4863, %v4885
    %v4928 = vsub.f32 %v4864, %v4888
    %v4929 = vsub.f32 %v4865, %v4891
    %v4930 = vsub.f32 %v4866, %v4894
    %v4931 = vsub.f32 %v4867, %v4897
    %v4932 = vsub.f32 %v4868, %v4900
    %v4933 = vsub.f32 %v4869, %v4903
    %v4934 = vsub.f32 %v4870, %v4906
    %v4935 = vsub.f32 %v4871, %v4909
    %v4936 = vsub.f32 %v4872, %v4912
    %v4937 = vsub.f32 %v4873, %v4915
    %v4938 = vsub.f32 %v4874, %v4918
    %v4939 = vsub.f32 %v4875, %v4921
    %v4940 = vsub.f32 %v4876, %v4924
    %v4941 = vmul.f32 %v4925, 1.442695
    %v4942 = vpow.pop %v4941
    %v4943 = vmul.f32 %v4926, 1.442695
    %v4944 = vpow.pop %v4943
    %v4945 = vmul.f32 %v4927, 1.442695
    %v4946 = vpow.pop %v4945
    %v4947 = vmul.f32 %v4928, 1.442695
    %v4948 = vpow.pop %v4947
    %v4949 = vmul.f32 %v4929, 1.442695
    %v4950 = vpow.pop %v4949
    %v4951 = vmul.f32 %v4930, 1.442695
    %v4952 = vpow.pop %v4951
    %v4953 = vmul.f32 %v4931, 1.442695
    %v4954 = vpow.pop %v4953
    %v4955 = vmul.f32 %v4932, 1.442695
    %v4956 = vpow.pop %v4955
    %v4957 = vmul.f32 %v4933, 1.442695
    %v4958 = vpow.pop %v4957
    %v4959 = vmul.f32 %v4934, 1.442695
    %v4960 = vpow.pop %v4959
    %v4961 = vmul.f32 %v4935, 1.442695
    %v4962 = vpow.pop %v4961
    %v4963 = vmul.f32 %v4936, 1.442695
    %v4964 = vpow.pop %v4963
    %v4965 = vmul.f32 %v4937, 1.442695
    %v4966 = vpow.pop %v4965
    %v4967 = vmul.f32 %v4938, 1.442695
    %v4968 = vpow.pop %v4967
    %v4969 = vmul.f32 %v4939, 1.442695
    %v4970 = vpow.pop %v4969
    %v4971 = vmul.f32 %v4940, 1.442695
    %v4972 = vpow.pop %v4971
    %v4973 = vsel %vm1251, %v4942, 0.0
    %4974 = vadd.xlane.f32.xlu0 %v4973
    %v4975 = vpop.xlane.xlu0 %4974
    %v4976 = vsel %vm1251, %v4944, 0.0
    %4977 = vadd.xlane.f32.xlu0 %v4976
    %v4978 = vpop.xlane.xlu0 %4977
    %v4979 = vsel %vm1251, %v4946, 0.0
    %4980 = vadd.xlane.f32.xlu0 %v4979
    %v4981 = vpop.xlane.xlu0 %4980
    %v4982 = vsel %vm1251, %v4948, 0.0
    %4983 = vadd.xlane.f32.xlu0 %v4982
    %v4984 = vpop.xlane.xlu0 %4983
    %v4985 = vsel %vm1251, %v4950, 0.0
    %4986 = vadd.xlane.f32.xlu0 %v4985
    %v4987 = vpop.xlane.xlu0 %4986
    %v4988 = vsel %vm1251, %v4952, 0.0
    %4989 = vadd.xlane.f32.xlu0 %v4988
    %v4990 = vpop.xlane.xlu0 %4989
    %v4991 = vsel %vm1251, %v4954, 0.0
    %4992 = vadd.xlane.f32.xlu0 %v4991
    %v4993 = vpop.xlane.xlu0 %4992
    %v4994 = vsel %vm1251, %v4956, 0.0
    %4995 = vadd.xlane.f32.xlu0 %v4994
    %v4996 = vpop.xlane.xlu0 %4995
    %v4997 = vsel %vm1251, %v4958, 0.0
    %4998 = vadd.xlane.f32.xlu0 %v4997
    %v4999 = vpop.xlane.xlu0 %4998
    %v5000 = vsel %vm1251, %v4960, 0.0
    %5001 = vadd.xlane.f32.xlu0 %v5000
    %v5002 = vpop.xlane.xlu0 %5001
    %v5003 = vsel %vm1251, %v4962, 0.0
    %5004 = vadd.xlane.f32.xlu0 %v5003
    %v5005 = vpop.xlane.xlu0 %5004
    %v5006 = vsel %vm1251, %v4964, 0.0
    %5007 = vadd.xlane.f32.xlu0 %v5006
    %v5008 = vpop.xlane.xlu0 %5007
    %v5009 = vsel %vm1251, %v4966, 0.0
    %5010 = vadd.xlane.f32.xlu0 %v5009
    %v5011 = vpop.xlane.xlu0 %5010
    %v5012 = vsel %vm1251, %v4968, 0.0
    %5013 = vadd.xlane.f32.xlu0 %v5012
    %v5014 = vpop.xlane.xlu0 %5013
    %v5015 = vsel %vm1251, %v4970, 0.0
    %5016 = vadd.xlane.f32.xlu0 %v5015
    %v5017 = vpop.xlane.xlu0 %5016
    %v5018 = vsel %vm1251, %v4972, 0.0
    %5019 = vadd.xlane.f32.xlu0 %v5018
    %v5020 = vpop.xlane.xlu0 %5019
    %v5021 = vrcp.pop %v4975
    %v5022 = vrcp.pop %v4978
    %v5023 = vrcp.pop %v4981
    %v5024 = vrcp.pop %v4984
    %v5025 = vrcp.pop %v4987
    %v5026 = vrcp.pop %v4990
    %v5027 = vrcp.pop %v4993
    %v5028 = vrcp.pop %v4996
    %v5029 = vrcp.pop %v4999
    %v5030 = vrcp.pop %v5002
    %v5031 = vrcp.pop %v5005
    %v5032 = vrcp.pop %v5008
    %v5033 = vrcp.pop %v5011
    %v5034 = vrcp.pop %v5014
    %v5035 = vrcp.pop %v5017
    %v5036 = vrcp.pop %v5020
    %v5037 = vmul.f32 %v4942, %v5021
    %v5038 = vmul.f32 %v4944, %v5022
    %v5039 = vmul.f32 %v4946, %v5023
    %v5040 = vmul.f32 %v4948, %v5024
    %v5041 = vmul.f32 %v4950, %v5025
    %v5042 = vmul.f32 %v4952, %v5026
    %v5043 = vmul.f32 %v4954, %v5027
    %v5044 = vmul.f32 %v4956, %v5028
    %v5045 = vmul.f32 %v4958, %v5029
    %v5046 = vmul.f32 %v4960, %v5030
    %v5047 = vmul.f32 %v4962, %v5031
    %v5048 = vmul.f32 %v4964, %v5032
    %v5049 = vmul.f32 %v4966, %v5033
    %v5050 = vmul.f32 %v4968, %v5034
    %v5051 = vmul.f32 %v4970, %v5035
    %v5052 = vmul.f32 %v4972, %v5036
    %5053 = vrot.lane.b32.xlu0 %v4353, 64
    %v5054 = vpop.permute.xlu0 %5053
    %v5057 = vsel %vm1251, %v5037, 0
    %5059 = vmatpush.msra.mxu0 0.0
    %5060 = vmatpush.msra.mxu0 0.0
    %5061 = vmatpush.msra.mxu0 0.0
    %5062 = vmatpush.msra.mxu0 0.0
    %5063 = vmatpush.msra.mxu0 0.0
    %5064 = vmatpush.msra.mxu0 0.0
    %5065 = vmatpush.msra.mxu0 0.0
    %5066 = vmatpush.msra.mxu0 0.0
    %5067 = vmatpush.msra.mxu0 0.0
    %5068 = vmatpush.msra.mxu0 0.0
    %5069 = vmatpush.msra.mxu0 0.0
    %5070 = vmatpush.msra.mxu0 0.0
    %5071 = vmatpush.msra.mxu0 0.0
    %5072 = vmatpush.msra.mxu0 0.0
    %5073 = vmatpush.msra.mxu0 0.0
    %5074 = vmatpush.msra.mxu0 %v5054
    %5075 = vmatmul.f32.gmra.mxu0 %v5057
    %v5076 = vpop.f32.mrf.mxu0
    %v5077 = vadd.f32 0.0, %v5076
    %5078 = vdwg.mxu0
    %5079 = vrot.lane.b32.xlu0 %v4355, 64
    %v5080 = vpop.permute.xlu0 %5079
    %v5083 = vsel %vm1251, %v5038, 0
    %5085 = vmatpush.msra.mxu0 0.0
    %5086 = vmatpush.msra.mxu0 0.0
    %5087 = vmatpush.msra.mxu0 0.0
    %5088 = vmatpush.msra.mxu0 0.0
    %5089 = vmatpush.msra.mxu0 0.0
    %5090 = vmatpush.msra.mxu0 0.0
    %5091 = vmatpush.msra.mxu0 0.0
    %5092 = vmatpush.msra.mxu0 0.0
    %5093 = vmatpush.msra.mxu0 0.0
    %5094 = vmatpush.msra.mxu0 0.0
    %5095 = vmatpush.msra.mxu0 0.0
    %5096 = vmatpush.msra.mxu0 0.0
    %5097 = vmatpush.msra.mxu0 0.0
    %5098 = vmatpush.msra.mxu0 0.0
    %5099 = vmatpush.msra.mxu0 0.0
    %5100 = vmatpush.msra.mxu0 %v5080
    %5101 = vmatmul.f32.gmra.mxu0 %v5083
    %v5102 = vpop.f32.mrf.mxu0
    %v5103 = vadd.f32 0.0, %v5102
    %5104 = vdwg.mxu0
    %5105 = vrot.lane.b32.xlu0 %v4358, 64
    %v5106 = vpop.permute.xlu0 %5105
    %v5109 = vsel %vm1251, %v5039, 0
    %5111 = vmatpush.msra.mxu0 0.0
    %5112 = vmatpush.msra.mxu0 0.0
    %5113 = vmatpush.msra.mxu0 0.0
    %5114 = vmatpush.msra.mxu0 0.0
    %5115 = vmatpush.msra.mxu0 0.0
    %5116 = vmatpush.msra.mxu0 0.0
    %5117 = vmatpush.msra.mxu0 0.0
    %5118 = vmatpush.msra.mxu0 0.0
    %5119 = vmatpush.msra.mxu0 0.0
    %5120 = vmatpush.msra.mxu0 0.0
    %5121 = vmatpush.msra.mxu0 0.0
    %5122 = vmatpush.msra.mxu0 0.0
    %5123 = vmatpush.msra.mxu0 0.0
    %5124 = vmatpush.msra.mxu0 0.0
    %5125 = vmatpush.msra.mxu0 0.0
    %5126 = vmatpush.msra.mxu0 %v5106
    %5127 = vmatmul.f32.gmra.mxu0 %v5109
    %v5128 = vpop.f32.mrf.mxu0
    %v5129 = vadd.f32 0.0, %v5128
    %5130 = vdwg.mxu0
    %5131 = vrot.lane.b32.xlu0 %v4360, 64
    %v5132 = vpop.permute.xlu0 %5131
    %v5135 = vsel %vm1251, %v5040, 0
    %5137 = vmatpush.msra.mxu0 0.0
    %5138 = vmatpush.msra.mxu0 0.0
    %5139 = vmatpush.msra.mxu0 0.0
    %5140 = vmatpush.msra.mxu0 0.0
    %5141 = vmatpush.msra.mxu0 0.0
    %5142 = vmatpush.msra.mxu0 0.0
    %5143 = vmatpush.msra.mxu0 0.0
    %5144 = vmatpush.msra.mxu0 0.0
    %5145 = vmatpush.msra.mxu0 0.0
    %5146 = vmatpush.msra.mxu0 0.0
    %5147 = vmatpush.msra.mxu0 0.0
    %5148 = vmatpush.msra.mxu0 0.0
    %5149 = vmatpush.msra.mxu0 0.0
    %5150 = vmatpush.msra.mxu0 0.0
    %5151 = vmatpush.msra.mxu0 0.0
    %5152 = vmatpush.msra.mxu0 %v5132
    %5153 = vmatmul.f32.gmra.mxu0 %v5135
    %v5154 = vpop.f32.mrf.mxu0
    %v5155 = vadd.f32 0.0, %v5154
    %5156 = vdwg.mxu0
    %5157 = vrot.lane.b32.xlu0 %v4363, 64
    %v5158 = vpop.permute.xlu0 %5157
    %v5161 = vsel %vm1251, %v5041, 0
    %5163 = vmatpush.msra.mxu0 0.0
    %5164 = vmatpush.msra.mxu0 0.0
    %5165 = vmatpush.msra.mxu0 0.0
    %5166 = vmatpush.msra.mxu0 0.0
    %5167 = vmatpush.msra.mxu0 0.0
    %5168 = vmatpush.msra.mxu0 0.0
    %5169 = vmatpush.msra.mxu0 0.0
    %5170 = vmatpush.msra.mxu0 0.0
    %5171 = vmatpush.msra.mxu0 0.0
    %5172 = vmatpush.msra.mxu0 0.0
    %5173 = vmatpush.msra.mxu0 0.0
    %5174 = vmatpush.msra.mxu0 0.0
    %5175 = vmatpush.msra.mxu0 0.0
    %5176 = vmatpush.msra.mxu0 0.0
    %5177 = vmatpush.msra.mxu0 0.0
    %5178 = vmatpush.msra.mxu0 %v5158
    %5179 = vmatmul.f32.gmra.mxu0 %v5161
    %v5180 = vpop.f32.mrf.mxu0
    %v5181 = vadd.f32 0.0, %v5180
    %5182 = vdwg.mxu0
    %5183 = vrot.lane.b32.xlu0 %v4365, 64
    %v5184 = vpop.permute.xlu0 %5183
    %v5187 = vsel %vm1251, %v5042, 0
    %5189 = vmatpush.msra.mxu0 0.0
    %5190 = vmatpush.msra.mxu0 0.0
    %5191 = vmatpush.msra.mxu0 0.0
    %5192 = vmatpush.msra.mxu0 0.0
    %5193 = vmatpush.msra.mxu0 0.0
    %5194 = vmatpush.msra.mxu0 0.0
    %5195 = vmatpush.msra.mxu0 0.0
    %5196 = vmatpush.msra.mxu0 0.0
    %5197 = vmatpush.msra.mxu0 0.0
    %5198 = vmatpush.msra.mxu0 0.0
    %5199 = vmatpush.msra.mxu0 0.0
    %5200 = vmatpush.msra.mxu0 0.0
    %5201 = vmatpush.msra.mxu0 0.0
    %5202 = vmatpush.msra.mxu0 0.0
    %5203 = vmatpush.msra.mxu0 0.0
    %5204 = vmatpush.msra.mxu0 %v5184
    %5205 = vmatmul.f32.gmra.mxu0 %v5187
    %v5206 = vpop.f32.mrf.mxu0
    %v5207 = vadd.f32 0.0, %v5206
    %5208 = vdwg.mxu0
    %5209 = vrot.lane.b32.xlu0 %v4368, 64
    %v5210 = vpop.permute.xlu0 %5209
    %v5213 = vsel %vm1251, %v5043, 0
    %5215 = vmatpush.msra.mxu0 0.0
    %5216 = vmatpush.msra.mxu0 0.0
    %5217 = vmatpush.msra.mxu0 0.0
    %5218 = vmatpush.msra.mxu0 0.0
    %5219 = vmatpush.msra.mxu0 0.0
    %5220 = vmatpush.msra.mxu0 0.0
    %5221 = vmatpush.msra.mxu0 0.0
    %5222 = vmatpush.msra.mxu0 0.0
    %5223 = vmatpush.msra.mxu0 0.0
    %5224 = vmatpush.msra.mxu0 0.0
    %5225 = vmatpush.msra.mxu0 0.0
    %5226 = vmatpush.msra.mxu0 0.0
    %5227 = vmatpush.msra.mxu0 0.0
    %5228 = vmatpush.msra.mxu0 0.0
    %5229 = vmatpush.msra.mxu0 0.0
    %5230 = vmatpush.msra.mxu0 %v5210
    %5231 = vmatmul.f32.gmra.mxu0 %v5213
    %v5232 = vpop.f32.mrf.mxu0
    %v5233 = vadd.f32 0.0, %v5232
    %5234 = vdwg.mxu0
    %5235 = vrot.lane.b32.xlu0 %v4370, 64
    %v5236 = vpop.permute.xlu0 %5235
    %v5239 = vsel %vm1251, %v5044, 0
    %5241 = vmatpush.msra.mxu0 0.0
    %5242 = vmatpush.msra.mxu0 0.0
    %5243 = vmatpush.msra.mxu0 0.0
    %5244 = vmatpush.msra.mxu0 0.0
    %5245 = vmatpush.msra.mxu0 0.0
    %5246 = vmatpush.msra.mxu0 0.0
    %5247 = vmatpush.msra.mxu0 0.0
    %5248 = vmatpush.msra.mxu0 0.0
    %5249 = vmatpush.msra.mxu0 0.0
    %5250 = vmatpush.msra.mxu0 0.0
    %5251 = vmatpush.msra.mxu0 0.0
    %5252 = vmatpush.msra.mxu0 0.0
    %5253 = vmatpush.msra.mxu0 0.0
    %5254 = vmatpush.msra.mxu0 0.0
    %5255 = vmatpush.msra.mxu0 0.0
    %5256 = vmatpush.msra.mxu0 %v5236
    %5257 = vmatmul.f32.gmra.mxu0 %v5239
    %v5258 = vpop.f32.mrf.mxu0
    %v5259 = vadd.f32 0.0, %v5258
    %5260 = vdwg.mxu0
    %5261 = vrot.lane.b32.xlu0 %v4373, 64
    %v5262 = vpop.permute.xlu0 %5261
    %v5265 = vsel %vm1251, %v5045, 0
    %5267 = vmatpush.msra.mxu0 0.0
    %5268 = vmatpush.msra.mxu0 0.0
    %5269 = vmatpush.msra.mxu0 0.0
    %5270 = vmatpush.msra.mxu0 0.0
    %5271 = vmatpush.msra.mxu0 0.0
    %5272 = vmatpush.msra.mxu0 0.0
    %5273 = vmatpush.msra.mxu0 0.0
    %5274 = vmatpush.msra.mxu0 0.0
    %5275 = vmatpush.msra.mxu0 0.0
    %5276 = vmatpush.msra.mxu0 0.0
    %5277 = vmatpush.msra.mxu0 0.0
    %5278 = vmatpush.msra.mxu0 0.0
    %5279 = vmatpush.msra.mxu0 0.0
    %5280 = vmatpush.msra.mxu0 0.0
    %5281 = vmatpush.msra.mxu0 0.0
    %5282 = vmatpush.msra.mxu0 %v5262
    %5283 = vmatmul.f32.gmra.mxu0 %v5265
    %v5284 = vpop.f32.mrf.mxu0
    %v5285 = vadd.f32 0.0, %v5284
    %5286 = vdwg.mxu0
    %5287 = vrot.lane.b32.xlu0 %v4375, 64
    %v5288 = vpop.permute.xlu0 %5287
    %v5291 = vsel %vm1251, %v5046, 0
    %5293 = vmatpush.msra.mxu0 0.0
    %5294 = vmatpush.msra.mxu0 0.0
    %5295 = vmatpush.msra.mxu0 0.0
    %5296 = vmatpush.msra.mxu0 0.0
    %5297 = vmatpush.msra.mxu0 0.0
    %5298 = vmatpush.msra.mxu0 0.0
    %5299 = vmatpush.msra.mxu0 0.0
    %5300 = vmatpush.msra.mxu0 0.0
    %5301 = vmatpush.msra.mxu0 0.0
    %5302 = vmatpush.msra.mxu0 0.0
    %5303 = vmatpush.msra.mxu0 0.0
    %5304 = vmatpush.msra.mxu0 0.0
    %5305 = vmatpush.msra.mxu0 0.0
    %5306 = vmatpush.msra.mxu0 0.0
    %5307 = vmatpush.msra.mxu0 0.0
    %5308 = vmatpush.msra.mxu0 %v5288
    %5309 = vmatmul.f32.gmra.mxu0 %v5291
    %v5310 = vpop.f32.mrf.mxu0
    %v5311 = vadd.f32 0.0, %v5310
    %5312 = vdwg.mxu0
    %5313 = vrot.lane.b32.xlu0 %v4378, 64
    %v5314 = vpop.permute.xlu0 %5313
    %v5317 = vsel %vm1251, %v5047, 0
    %5319 = vmatpush.msra.mxu0 0.0
    %5320 = vmatpush.msra.mxu0 0.0
    %5321 = vmatpush.msra.mxu0 0.0
    %5322 = vmatpush.msra.mxu0 0.0
    %5323 = vmatpush.msra.mxu0 0.0
    %5324 = vmatpush.msra.mxu0 0.0
    %5325 = vmatpush.msra.mxu0 0.0
    %5326 = vmatpush.msra.mxu0 0.0
    %5327 = vmatpush.msra.mxu0 0.0
    %5328 = vmatpush.msra.mxu0 0.0
    %5329 = vmatpush.msra.mxu0 0.0
    %5330 = vmatpush.msra.mxu0 0.0
    %5331 = vmatpush.msra.mxu0 0.0
    %5332 = vmatpush.msra.mxu0 0.0
    %5333 = vmatpush.msra.mxu0 0.0
    %5334 = vmatpush.msra.mxu0 %v5314
    %5335 = vmatmul.f32.gmra.mxu0 %v5317
    %v5336 = vpop.f32.mrf.mxu0
    %v5337 = vadd.f32 0.0, %v5336
    %5338 = vdwg.mxu0
    %5339 = vrot.lane.b32.xlu0 %v4380, 64
    %v5340 = vpop.permute.xlu0 %5339
    %v5343 = vsel %vm1251, %v5048, 0
    %5345 = vmatpush.msra.mxu0 0.0
    %5346 = vmatpush.msra.mxu0 0.0
    %5347 = vmatpush.msra.mxu0 0.0
    %5348 = vmatpush.msra.mxu0 0.0
    %5349 = vmatpush.msra.mxu0 0.0
    %5350 = vmatpush.msra.mxu0 0.0
    %5351 = vmatpush.msra.mxu0 0.0
    %5352 = vmatpush.msra.mxu0 0.0
    %5353 = vmatpush.msra.mxu0 0.0
    %5354 = vmatpush.msra.mxu0 0.0
    %5355 = vmatpush.msra.mxu0 0.0
    %5356 = vmatpush.msra.mxu0 0.0
    %5357 = vmatpush.msra.mxu0 0.0
    %5358 = vmatpush.msra.mxu0 0.0
    %5359 = vmatpush.msra.mxu0 0.0
    %5360 = vmatpush.msra.mxu0 %v5340
    %5361 = vmatmul.f32.gmra.mxu0 %v5343
    %v5362 = vpop.f32.mrf.mxu0
    %v5363 = vadd.f32 0.0, %v5362
    %5364 = vdwg.mxu0
    %5365 = vrot.lane.b32.xlu0 %v4383, 64
    %v5366 = vpop.permute.xlu0 %5365
    %v5369 = vsel %vm1251, %v5049, 0
    %5371 = vmatpush.msra.mxu0 0.0
    %5372 = vmatpush.msra.mxu0 0.0
    %5373 = vmatpush.msra.mxu0 0.0
    %5374 = vmatpush.msra.mxu0 0.0
    %5375 = vmatpush.msra.mxu0 0.0
    %5376 = vmatpush.msra.mxu0 0.0
    %5377 = vmatpush.msra.mxu0 0.0
    %5378 = vmatpush.msra.mxu0 0.0
    %5379 = vmatpush.msra.mxu0 0.0
    %5380 = vmatpush.msra.mxu0 0.0
    %5381 = vmatpush.msra.mxu0 0.0
    %5382 = vmatpush.msra.mxu0 0.0
    %5383 = vmatpush.msra.mxu0 0.0
    %5384 = vmatpush.msra.mxu0 0.0
    %5385 = vmatpush.msra.mxu0 0.0
    %5386 = vmatpush.msra.mxu0 %v5366
    %5387 = vmatmul.f32.gmra.mxu0 %v5369
    %v5388 = vpop.f32.mrf.mxu0
    %v5389 = vadd.f32 0.0, %v5388
    %5390 = vdwg.mxu0
    %5391 = vrot.lane.b32.xlu0 %v4385, 64
    %v5392 = vpop.permute.xlu0 %5391
    %v5395 = vsel %vm1251, %v5050, 0
    %5397 = vmatpush.msra.mxu0 0.0
    %5398 = vmatpush.msra.mxu0 0.0
    %5399 = vmatpush.msra.mxu0 0.0
    %5400 = vmatpush.msra.mxu0 0.0
    %5401 = vmatpush.msra.mxu0 0.0
    %5402 = vmatpush.msra.mxu0 0.0
    %5403 = vmatpush.msra.mxu0 0.0
    %5404 = vmatpush.msra.mxu0 0.0
    %5405 = vmatpush.msra.mxu0 0.0
    %5406 = vmatpush.msra.mxu0 0.0
    %5407 = vmatpush.msra.mxu0 0.0
    %5408 = vmatpush.msra.mxu0 0.0
    %5409 = vmatpush.msra.mxu0 0.0
    %5410 = vmatpush.msra.mxu0 0.0
    %5411 = vmatpush.msra.mxu0 0.0
    %5412 = vmatpush.msra.mxu0 %v5392
    %5413 = vmatmul.f32.gmra.mxu0 %v5395
    %v5414 = vpop.f32.mrf.mxu0
    %v5415 = vadd.f32 0.0, %v5414
    %5416 = vdwg.mxu0
    %5417 = vrot.lane.b32.xlu0 %v4388, 64
    %v5418 = vpop.permute.xlu0 %5417
    %v5421 = vsel %vm1251, %v5051, 0
    %5423 = vmatpush.msra.mxu0 0.0
    %5424 = vmatpush.msra.mxu0 0.0
    %5425 = vmatpush.msra.mxu0 0.0
    %5426 = vmatpush.msra.mxu0 0.0
    %5427 = vmatpush.msra.mxu0 0.0
    %5428 = vmatpush.msra.mxu0 0.0
    %5429 = vmatpush.msra.mxu0 0.0
    %5430 = vmatpush.msra.mxu0 0.0
    %5431 = vmatpush.msra.mxu0 0.0
    %5432 = vmatpush.msra.mxu0 0.0
    %5433 = vmatpush.msra.mxu0 0.0
    %5434 = vmatpush.msra.mxu0 0.0
    %5435 = vmatpush.msra.mxu0 0.0
    %5436 = vmatpush.msra.mxu0 0.0
    %5437 = vmatpush.msra.mxu0 0.0
    %5438 = vmatpush.msra.mxu0 %v5418
    %5439 = vmatmul.f32.gmra.mxu0 %v5421
    %v5440 = vpop.f32.mrf.mxu0
    %v5441 = vadd.f32 0.0, %v5440
    %5442 = vdwg.mxu0
    %5443 = vrot.lane.b32.xlu0 %v4390, 64
    %v5444 = vpop.permute.xlu0 %5443
    %v5447 = vsel %vm1251, %v5052, 0
    %5449 = vmatpush.msra.mxu0 0.0
    %5450 = vmatpush.msra.mxu0 0.0
    %5451 = vmatpush.msra.mxu0 0.0
    %5452 = vmatpush.msra.mxu0 0.0
    %5453 = vmatpush.msra.mxu0 0.0
    %5454 = vmatpush.msra.mxu0 0.0
    %5455 = vmatpush.msra.mxu0 0.0
    %5456 = vmatpush.msra.mxu0 0.0
    %5457 = vmatpush.msra.mxu0 0.0
    %5458 = vmatpush.msra.mxu0 0.0
    %5459 = vmatpush.msra.mxu0 0.0
    %5460 = vmatpush.msra.mxu0 0.0
    %5461 = vmatpush.msra.mxu0 0.0
    %5462 = vmatpush.msra.mxu0 0.0
    %5463 = vmatpush.msra.mxu0 0.0
    %5464 = vmatpush.msra.mxu0 %v5444
    %5465 = vmatmul.f32.gmra.mxu0 %v5447
    %v5466 = vpop.f32.mrf.mxu0
    %v5467 = vadd.f32 0.0, %v5466
    %5468 = vdwg.mxu0
    %v5469 = vpack.c.bf16 %v5103, %v5077
    %v5470 = vpack.c.bf16 %v5155, %v5129
    %v5471 = vpack.c.bf16 %v5207, %v5181
    %v5472 = vpack.c.bf16 %v5259, %v5233
    %v5473 = vpack.c.bf16 %v5311, %v5285
    %v5474 = vpack.c.bf16 %v5363, %v5337
    %v5475 = vpack.c.bf16 %v5415, %v5389
    %v5476 = vpack.c.bf16 %v5467, %v5441
    %s5477 = scalar_lea.vmem %s6, 16
    %v5478 = vld [vmem:[%s5477] sm:$0xf]
    %v5479 = vld [vmem:[%s5477 + $0x4] sm:$0xf]
    %v5482 = vunpack.c.l.b16 %v5478
    %v5483 = vunpack.c.l.b16 %v5479
    %v5484 = vpack.c.b16 %v5483, %v5482
    %v5487 = vsel %vm757, %v5469, 0
    %v5490 = vsel %vm757, %v5470, 0
    %v5493 = vsel %vm757, %v5471, 0
    %v5496 = vsel %vm757, %v5472, 0
    %v5499 = vsel %vm757, %v5473, 0
    %v5502 = vsel %vm757, %v5474, 0
    %v5505 = vsel %vm757, %v5475, 0
    %v5508 = vsel %vm757, %v5476, 0
    %5510 = vmatpush.bf16.msra.mxu0 0
    %5511 = vmatpush.bf16.msra.mxu0 0
    %5512 = vmatpush.bf16.msra.mxu0 0
    %5513 = vmatpush.bf16.msra.mxu0 0
    %5514 = vmatpush.bf16.msra.mxu0 0
    %5515 = vmatpush.bf16.msra.mxu0 0
    %5516 = vmatpush.bf16.msra.mxu0 0
    %5517 = vmatpush.bf16.msra.mxu0 %v5484
    %5518 = vmatmul.bf16.gmra.mxu0 %v5487
    %v5519 = vpop.f32.mrf.mxu0
    %v5520 = vadd.f32 0.0, %v5519
    %v5521 = vpop.f32.mrf.mxu0
    %v5522 = vadd.f32 0.0, %v5521
    %5523 = vmatmul.bf16.gmra.mxu0 %v5490
    %v5524 = vpop.f32.mrf.mxu0
    %v5525 = vadd.f32 0.0, %v5524
    %v5526 = vpop.f32.mrf.mxu0
    %v5527 = vadd.f32 0.0, %v5526
    %5528 = vmatmul.bf16.gmra.mxu0 %v5493
    %v5529 = vpop.f32.mrf.mxu0
    %v5530 = vadd.f32 0.0, %v5529
    %v5531 = vpop.f32.mrf.mxu0
    %v5532 = vadd.f32 0.0, %v5531
    %5533 = vmatmul.bf16.gmra.mxu0 %v5496
    %v5534 = vpop.f32.mrf.mxu0
    %v5535 = vadd.f32 0.0, %v5534
    %v5536 = vpop.f32.mrf.mxu0
    %v5537 = vadd.f32 0.0, %v5536
    %5538 = vmatmul.bf16.gmra.mxu0 %v5499
    %v5539 = vpop.f32.mrf.mxu0
    %v5540 = vadd.f32 0.0, %v5539
    %v5541 = vpop.f32.mrf.mxu0
    %v5542 = vadd.f32 0.0, %v5541
    %5543 = vmatmul.bf16.gmra.mxu0 %v5502
    %v5544 = vpop.f32.mrf.mxu0
    %v5545 = vadd.f32 0.0, %v5544
    %v5546 = vpop.f32.mrf.mxu0
    %v5547 = vadd.f32 0.0, %v5546
    %5548 = vmatmul.bf16.gmra.mxu0 %v5505
    %v5549 = vpop.f32.mrf.mxu0
    %v5550 = vadd.f32 0.0, %v5549
    %v5551 = vpop.f32.mrf.mxu0
    %v5552 = vadd.f32 0.0, %v5551
    %5553 = vmatmul.bf16.gmra.mxu0 %v5508
    %v5554 = vpop.f32.mrf.mxu0
    %v5555 = vadd.f32 0.0, %v5554
    %v5556 = vpop.f32.mrf.mxu0
    %v5557 = vadd.f32 0.0, %v5556
    %5558 = vdwg.mxu0
    %v5559 = vadd.f32 %v4397, %v5520
    %v5560 = vadd.f32 %v4398, %v5522
    %v5561 = vadd.f32 %v4399, %v5525
    %v5562 = vadd.f32 %v4400, %v5527
    %v5563 = vadd.f32 %v4401, %v5530
    %v5564 = vadd.f32 %v4402, %v5532
    %v5565 = vadd.f32 %v4403, %v5535
    %v5566 = vadd.f32 %v4404, %v5537
    %v5567 = vadd.f32 %v4405, %v5540
    %v5568 = vadd.f32 %v4406, %v5542
    %v5569 = vadd.f32 %v4407, %v5545
    %v5570 = vadd.f32 %v4408, %v5547
    %v5571 = vadd.f32 %v4409, %v5550
    %v5572 = vadd.f32 %v4410, %v5552
    %v5573 = vadd.f32 %v4411, %v5555
    %v5574 = vadd.f32 %v4412, %v5557
    %5575 = vrot.lane.b32.xlu0 %v4353, 112
    %v5576 = vpop.permute.xlu0 %5575
    %5577 = vrot.lane.b32.xlu0 %v4353, 80
    %v5578 = vpop.permute.xlu0 %5577
    %v5579 = vsel %vm757, %v5576, 0
    %v5581 = vsel %vm757, %v5578, 0
    %5583 = vmatpush.xpose.msra.mxu0 0.0
    %5584 = vmatpush.xpose.msra.mxu0 0.0
    %5585 = vmatpush.xpose.msra.mxu0 0.0
    %5586 = vmatpush.xpose.msra.mxu0 0.0
    %5587 = vmatpush.xpose.msra.mxu0 0.0
    %5588 = vmatpush.xpose.msra.mxu0 0.0
    %5589 = vmatpush.xpose.msra.mxu0 0.0
    %5590 = vmatpush.xpose.msra.mxu0 0.0
    %5591 = vmatpush.xpose.msra.mxu0 0.0
    %5592 = vmatpush.xpose.msra.mxu0 0.0
    %5593 = vmatpush.xpose.msra.mxu0 0.0
    %5594 = vmatpush.xpose.msra.mxu0 0.0
    %5595 = vmatpush.xpose.msra.mxu0 0.0
    %5596 = vmatpush.xpose.msra.mxu0 0.0
    %5597 = vmatpush.xpose.msra.mxu0 0.0
    %5598 = vmatpush.xpose.msra.mxu0 %v5581
    %5599 = vmatmul.f32.gmra.mxu0 %v5579
    %v5600 = vpop.f32.mrf.mxu0
    %v5601 = vadd.f32 0.0, %v5600
    %5602 = vdwg.mxu0
    %5603 = vrot.lane.b32.xlu0 %v4355, 112
    %v5604 = vpop.permute.xlu0 %5603
    %5605 = vrot.lane.b32.xlu0 %v4355, 80
    %v5606 = vpop.permute.xlu0 %5605
    %v5607 = vsel %vm757, %v5604, 0
    %v5609 = vsel %vm757, %v5606, 0
    %5611 = vmatpush.xpose.msra.mxu0 0.0
    %5612 = vmatpush.xpose.msra.mxu0 0.0
    %5613 = vmatpush.xpose.msra.mxu0 0.0
    %5614 = vmatpush.xpose.msra.mxu0 0.0
    %5615 = vmatpush.xpose.msra.mxu0 0.0
    %5616 = vmatpush.xpose.msra.mxu0 0.0
    %5617 = vmatpush.xpose.msra.mxu0 0.0
    %5618 = vmatpush.xpose.msra.mxu0 0.0
    %5619 = vmatpush.xpose.msra.mxu0 0.0
    %5620 = vmatpush.xpose.msra.mxu0 0.0
    %5621 = vmatpush.xpose.msra.mxu0 0.0
    %5622 = vmatpush.xpose.msra.mxu0 0.0
    %5623 = vmatpush.xpose.msra.mxu0 0.0
    %5624 = vmatpush.xpose.msra.mxu0 0.0
    %5625 = vmatpush.xpose.msra.mxu0 0.0
    %5626 = vmatpush.xpose.msra.mxu0 %v5609
    %5627 = vmatmul.f32.gmra.mxu0 %v5607
    %v5628 = vpop.f32.mrf.mxu0
    %v5629 = vadd.f32 0.0, %v5628
    %5630 = vdwg.mxu0
    %5631 = vrot.lane.b32.xlu0 %v4358, 112
    %v5632 = vpop.permute.xlu0 %5631
    %5633 = vrot.lane.b32.xlu0 %v4358, 80
    %v5634 = vpop.permute.xlu0 %5633
    %v5635 = vsel %vm757, %v5632, 0
    %v5637 = vsel %vm757, %v5634, 0
    %5639 = vmatpush.xpose.msra.mxu0 0.0
    %5640 = vmatpush.xpose.msra.mxu0 0.0
    %5641 = vmatpush.xpose.msra.mxu0 0.0
    %5642 = vmatpush.xpose.msra.mxu0 0.0
    %5643 = vmatpush.xpose.msra.mxu0 0.0
    %5644 = vmatpush.xpose.msra.mxu0 0.0
    %5645 = vmatpush.xpose.msra.mxu0 0.0
    %5646 = vmatpush.xpose.msra.mxu0 0.0
    %5647 = vmatpush.xpose.msra.mxu0 0.0
    %5648 = vmatpush.xpose.msra.mxu0 0.0
    %5649 = vmatpush.xpose.msra.mxu0 0.0
    %5650 = vmatpush.xpose.msra.mxu0 0.0
    %5651 = vmatpush.xpose.msra.mxu0 0.0
    %5652 = vmatpush.xpose.msra.mxu0 0.0
    %5653 = vmatpush.xpose.msra.mxu0 0.0
    %5654 = vmatpush.xpose.msra.mxu0 %v5637
    %5655 = vmatmul.f32.gmra.mxu0 %v5635
    %v5656 = vpop.f32.mrf.mxu0
    %v5657 = vadd.f32 0.0, %v5656
    %5658 = vdwg.mxu0
    %5659 = vrot.lane.b32.xlu0 %v4360, 112
    %v5660 = vpop.permute.xlu0 %5659
    %5661 = vrot.lane.b32.xlu0 %v4360, 80
    %v5662 = vpop.permute.xlu0 %5661
    %v5663 = vsel %vm757, %v5660, 0
    %v5665 = vsel %vm757, %v5662, 0
    %5667 = vmatpush.xpose.msra.mxu0 0.0
    %5668 = vmatpush.xpose.msra.mxu0 0.0
    %5669 = vmatpush.xpose.msra.mxu0 0.0
    %5670 = vmatpush.xpose.msra.mxu0 0.0
    %5671 = vmatpush.xpose.msra.mxu0 0.0
    %5672 = vmatpush.xpose.msra.mxu0 0.0
    %5673 = vmatpush.xpose.msra.mxu0 0.0
    %5674 = vmatpush.xpose.msra.mxu0 0.0
    %5675 = vmatpush.xpose.msra.mxu0 0.0
    %5676 = vmatpush.xpose.msra.mxu0 0.0
    %5677 = vmatpush.xpose.msra.mxu0 0.0
    %5678 = vmatpush.xpose.msra.mxu0 0.0
    %5679 = vmatpush.xpose.msra.mxu0 0.0
    %5680 = vmatpush.xpose.msra.mxu0 0.0
    %5681 = vmatpush.xpose.msra.mxu0 0.0
    %5682 = vmatpush.xpose.msra.mxu0 %v5665
    %5683 = vmatmul.f32.gmra.mxu0 %v5663
    %v5684 = vpop.f32.mrf.mxu0
    %v5685 = vadd.f32 0.0, %v5684
    %5686 = vdwg.mxu0
    %5687 = vrot.lane.b32.xlu0 %v4363, 112
    %v5688 = vpop.permute.xlu0 %5687
    %5689 = vrot.lane.b32.xlu0 %v4363, 80
    %v5690 = vpop.permute.xlu0 %5689
    %v5691 = vsel %vm757, %v5688, 0
    %v5693 = vsel %vm757, %v5690, 0
    %5695 = vmatpush.xpose.msra.mxu0 0.0
    %5696 = vmatpush.xpose.msra.mxu0 0.0
    %5697 = vmatpush.xpose.msra.mxu0 0.0
    %5698 = vmatpush.xpose.msra.mxu0 0.0
    %5699 = vmatpush.xpose.msra.mxu0 0.0
    %5700 = vmatpush.xpose.msra.mxu0 0.0
    %5701 = vmatpush.xpose.msra.mxu0 0.0
    %5702 = vmatpush.xpose.msra.mxu0 0.0
    %5703 = vmatpush.xpose.msra.mxu0 0.0
    %5704 = vmatpush.xpose.msra.mxu0 0.0
    %5705 = vmatpush.xpose.msra.mxu0 0.0
    %5706 = vmatpush.xpose.msra.mxu0 0.0
    %5707 = vmatpush.xpose.msra.mxu0 0.0
    %5708 = vmatpush.xpose.msra.mxu0 0.0
    %5709 = vmatpush.xpose.msra.mxu0 0.0
    %5710 = vmatpush.xpose.msra.mxu0 %v5693
    %5711 = vmatmul.f32.gmra.mxu0 %v5691
    %v5712 = vpop.f32.mrf.mxu0
    %v5713 = vadd.f32 0.0, %v5712
    %5714 = vdwg.mxu0
    %5715 = vrot.lane.b32.xlu0 %v4365, 112
    %v5716 = vpop.permute.xlu0 %5715
    %5717 = vrot.lane.b32.xlu0 %v4365, 80
    %v5718 = vpop.permute.xlu0 %5717
    %v5719 = vsel %vm757, %v5716, 0
    %v5721 = vsel %vm757, %v5718, 0
    %5723 = vmatpush.xpose.msra.mxu0 0.0
    %5724 = vmatpush.xpose.msra.mxu0 0.0
    %5725 = vmatpush.xpose.msra.mxu0 0.0
    %5726 = vmatpush.xpose.msra.mxu0 0.0
    %5727 = vmatpush.xpose.msra.mxu0 0.0
    %5728 = vmatpush.xpose.msra.mxu0 0.0
    %5729 = vmatpush.xpose.msra.mxu0 0.0
    %5730 = vmatpush.xpose.msra.mxu0 0.0
    %5731 = vmatpush.xpose.msra.mxu0 0.0
    %5732 = vmatpush.xpose.msra.mxu0 0.0
    %5733 = vmatpush.xpose.msra.mxu0 0.0
    %5734 = vmatpush.xpose.msra.mxu0 0.0
    %5735 = vmatpush.xpose.msra.mxu0 0.0
    %5736 = vmatpush.xpose.msra.mxu0 0.0
    %5737 = vmatpush.xpose.msra.mxu0 0.0
    %5738 = vmatpush.xpose.msra.mxu0 %v5721
    %5739 = vmatmul.f32.gmra.mxu0 %v5719
    %v5740 = vpop.f32.mrf.mxu0
    %v5741 = vadd.f32 0.0, %v5740
    %5742 = vdwg.mxu0
    %5743 = vrot.lane.b32.xlu0 %v4368, 112
    %v5744 = vpop.permute.xlu0 %5743
    %5745 = vrot.lane.b32.xlu0 %v4368, 80
    %v5746 = vpop.permute.xlu0 %5745
    %v5747 = vsel %vm757, %v5744, 0
    %v5749 = vsel %vm757, %v5746, 0
    %5751 = vmatpush.xpose.msra.mxu0 0.0
    %5752 = vmatpush.xpose.msra.mxu0 0.0
    %5753 = vmatpush.xpose.msra.mxu0 0.0
    %5754 = vmatpush.xpose.msra.mxu0 0.0
    %5755 = vmatpush.xpose.msra.mxu0 0.0
    %5756 = vmatpush.xpose.msra.mxu0 0.0
    %5757 = vmatpush.xpose.msra.mxu0 0.0
    %5758 = vmatpush.xpose.msra.mxu0 0.0
    %5759 = vmatpush.xpose.msra.mxu0 0.0
    %5760 = vmatpush.xpose.msra.mxu0 0.0
    %5761 = vmatpush.xpose.msra.mxu0 0.0
    %5762 = vmatpush.xpose.msra.mxu0 0.0
    %5763 = vmatpush.xpose.msra.mxu0 0.0
    %5764 = vmatpush.xpose.msra.mxu0 0.0
    %5765 = vmatpush.xpose.msra.mxu0 0.0
    %5766 = vmatpush.xpose.msra.mxu0 %v5749
    %5767 = vmatmul.f32.gmra.mxu0 %v5747
    %v5768 = vpop.f32.mrf.mxu0
    %v5769 = vadd.f32 0.0, %v5768
    %5770 = vdwg.mxu0
    %5771 = vrot.lane.b32.xlu0 %v4370, 112
    %v5772 = vpop.permute.xlu0 %5771
    %5773 = vrot.lane.b32.xlu0 %v4370, 80
    %v5774 = vpop.permute.xlu0 %5773
    %v5775 = vsel %vm757, %v5772, 0
    %v5777 = vsel %vm757, %v5774, 0
    %5779 = vmatpush.xpose.msra.mxu0 0.0
    %5780 = vmatpush.xpose.msra.mxu0 0.0
    %5781 = vmatpush.xpose.msra.mxu0 0.0
    %5782 = vmatpush.xpose.msra.mxu0 0.0
    %5783 = vmatpush.xpose.msra.mxu0 0.0
    %5784 = vmatpush.xpose.msra.mxu0 0.0
    %5785 = vmatpush.xpose.msra.mxu0 0.0
    %5786 = vmatpush.xpose.msra.mxu0 0.0
    %5787 = vmatpush.xpose.msra.mxu0 0.0
    %5788 = vmatpush.xpose.msra.mxu0 0.0
    %5789 = vmatpush.xpose.msra.mxu0 0.0
    %5790 = vmatpush.xpose.msra.mxu0 0.0
    %5791 = vmatpush.xpose.msra.mxu0 0.0
    %5792 = vmatpush.xpose.msra.mxu0 0.0
    %5793 = vmatpush.xpose.msra.mxu0 0.0
    %5794 = vmatpush.xpose.msra.mxu0 %v5777
    %5795 = vmatmul.f32.gmra.mxu0 %v5775
    %v5796 = vpop.f32.mrf.mxu0
    %v5797 = vadd.f32 0.0, %v5796
    %5798 = vdwg.mxu0
    %5799 = vrot.lane.b32.xlu0 %v4373, 112
    %v5800 = vpop.permute.xlu0 %5799
    %5801 = vrot.lane.b32.xlu0 %v4373, 80
    %v5802 = vpop.permute.xlu0 %5801
    %v5803 = vsel %vm757, %v5800, 0
    %v5805 = vsel %vm757, %v5802, 0
    %5807 = vmatpush.xpose.msra.mxu0 0.0
    %5808 = vmatpush.xpose.msra.mxu0 0.0
    %5809 = vmatpush.xpose.msra.mxu0 0.0
    %5810 = vmatpush.xpose.msra.mxu0 0.0
    %5811 = vmatpush.xpose.msra.mxu0 0.0
    %5812 = vmatpush.xpose.msra.mxu0 0.0
    %5813 = vmatpush.xpose.msra.mxu0 0.0
    %5814 = vmatpush.xpose.msra.mxu0 0.0
    %5815 = vmatpush.xpose.msra.mxu0 0.0
    %5816 = vmatpush.xpose.msra.mxu0 0.0
    %5817 = vmatpush.xpose.msra.mxu0 0.0
    %5818 = vmatpush.xpose.msra.mxu0 0.0
    %5819 = vmatpush.xpose.msra.mxu0 0.0
    %5820 = vmatpush.xpose.msra.mxu0 0.0
    %5821 = vmatpush.xpose.msra.mxu0 0.0
    %5822 = vmatpush.xpose.msra.mxu0 %v5805
    %5823 = vmatmul.f32.gmra.mxu0 %v5803
    %v5824 = vpop.f32.mrf.mxu0
    %v5825 = vadd.f32 0.0, %v5824
    %5826 = vdwg.mxu0
    %5827 = vrot.lane.b32.xlu0 %v4375, 112
    %v5828 = vpop.permute.xlu0 %5827
    %5829 = vrot.lane.b32.xlu0 %v4375, 80
    %v5830 = vpop.permute.xlu0 %5829
    %v5831 = vsel %vm757, %v5828, 0
    %v5833 = vsel %vm757, %v5830, 0
    %5835 = vmatpush.xpose.msra.mxu0 0.0
    %5836 = vmatpush.xpose.msra.mxu0 0.0
    %5837 = vmatpush.xpose.msra.mxu0 0.0
    %5838 = vmatpush.xpose.msra.mxu0 0.0
    %5839 = vmatpush.xpose.msra.mxu0 0.0
    %5840 = vmatpush.xpose.msra.mxu0 0.0
    %5841 = vmatpush.xpose.msra.mxu0 0.0
    %5842 = vmatpush.xpose.msra.mxu0 0.0
    %5843 = vmatpush.xpose.msra.mxu0 0.0
    %5844 = vmatpush.xpose.msra.mxu0 0.0
    %5845 = vmatpush.xpose.msra.mxu0 0.0
    %5846 = vmatpush.xpose.msra.mxu0 0.0
    %5847 = vmatpush.xpose.msra.mxu0 0.0
    %5848 = vmatpush.xpose.msra.mxu0 0.0
    %5849 = vmatpush.xpose.msra.mxu0 0.0
    %5850 = vmatpush.xpose.msra.mxu0 %v5833
    %5851 = vmatmul.f32.gmra.mxu0 %v5831
    %v5852 = vpop.f32.mrf.mxu0
    %v5853 = vadd.f32 0.0, %v5852
    %5854 = vdwg.mxu0
    %5855 = vrot.lane.b32.xlu0 %v4378, 112
    %v5856 = vpop.permute.xlu0 %5855
    %5857 = vrot.lane.b32.xlu0 %v4378, 80
    %v5858 = vpop.permute.xlu0 %5857
    %v5859 = vsel %vm757, %v5856, 0
    %v5861 = vsel %vm757, %v5858, 0
    %5863 = vmatpush.xpose.msra.mxu0 0.0
    %5864 = vmatpush.xpose.msra.mxu0 0.0
    %5865 = vmatpush.xpose.msra.mxu0 0.0
    %5866 = vmatpush.xpose.msra.mxu0 0.0
    %5867 = vmatpush.xpose.msra.mxu0 0.0
    %5868 = vmatpush.xpose.msra.mxu0 0.0
    %5869 = vmatpush.xpose.msra.mxu0 0.0
    %5870 = vmatpush.xpose.msra.mxu0 0.0
    %5871 = vmatpush.xpose.msra.mxu0 0.0
    %5872 = vmatpush.xpose.msra.mxu0 0.0
    %5873 = vmatpush.xpose.msra.mxu0 0.0
    %5874 = vmatpush.xpose.msra.mxu0 0.0
    %5875 = vmatpush.xpose.msra.mxu0 0.0
    %5876 = vmatpush.xpose.msra.mxu0 0.0
    %5877 = vmatpush.xpose.msra.mxu0 0.0
    %5878 = vmatpush.xpose.msra.mxu0 %v5861
    %5879 = vmatmul.f32.gmra.mxu0 %v5859
    %v5880 = vpop.f32.mrf.mxu0
    %v5881 = vadd.f32 0.0, %v5880
    %5882 = vdwg.mxu0
    %5883 = vrot.lane.b32.xlu0 %v4380, 112
    %v5884 = vpop.permute.xlu0 %5883
    %5885 = vrot.lane.b32.xlu0 %v4380, 80
    %v5886 = vpop.permute.xlu0 %5885
    %v5887 = vsel %vm757, %v5884, 0
    %v5889 = vsel %vm757, %v5886, 0
    %5891 = vmatpush.xpose.msra.mxu0 0.0
    %5892 = vmatpush.xpose.msra.mxu0 0.0
    %5893 = vmatpush.xpose.msra.mxu0 0.0
    %5894 = vmatpush.xpose.msra.mxu0 0.0
    %5895 = vmatpush.xpose.msra.mxu0 0.0
    %5896 = vmatpush.xpose.msra.mxu0 0.0
    %5897 = vmatpush.xpose.msra.mxu0 0.0
    %5898 = vmatpush.xpose.msra.mxu0 0.0
    %5899 = vmatpush.xpose.msra.mxu0 0.0
    %5900 = vmatpush.xpose.msra.mxu0 0.0
    %5901 = vmatpush.xpose.msra.mxu0 0.0
    %5902 = vmatpush.xpose.msra.mxu0 0.0
    %5903 = vmatpush.xpose.msra.mxu0 0.0
    %5904 = vmatpush.xpose.msra.mxu0 0.0
    %5905 = vmatpush.xpose.msra.mxu0 0.0
    %5906 = vmatpush.xpose.msra.mxu0 %v5889
    %5907 = vmatmul.f32.gmra.mxu0 %v5887
    %v5908 = vpop.f32.mrf.mxu0
    %v5909 = vadd.f32 0.0, %v5908
    %5910 = vdwg.mxu0
    %5911 = vrot.lane.b32.xlu0 %v4383, 112
    %v5912 = vpop.permute.xlu0 %5911
    %5913 = vrot.lane.b32.xlu0 %v4383, 80
    %v5914 = vpop.permute.xlu0 %5913
    %v5915 = vsel %vm757, %v5912, 0
    %v5917 = vsel %vm757, %v5914, 0
    %5919 = vmatpush.xpose.msra.mxu0 0.0
    %5920 = vmatpush.xpose.msra.mxu0 0.0
    %5921 = vmatpush.xpose.msra.mxu0 0.0
    %5922 = vmatpush.xpose.msra.mxu0 0.0
    %5923 = vmatpush.xpose.msra.mxu0 0.0
    %5924 = vmatpush.xpose.msra.mxu0 0.0
    %5925 = vmatpush.xpose.msra.mxu0 0.0
    %5926 = vmatpush.xpose.msra.mxu0 0.0
    %5927 = vmatpush.xpose.msra.mxu0 0.0
    %5928 = vmatpush.xpose.msra.mxu0 0.0
    %5929 = vmatpush.xpose.msra.mxu0 0.0
    %5930 = vmatpush.xpose.msra.mxu0 0.0
    %5931 = vmatpush.xpose.msra.mxu0 0.0
    %5932 = vmatpush.xpose.msra.mxu0 0.0
    %5933 = vmatpush.xpose.msra.mxu0 0.0
    %5934 = vmatpush.xpose.msra.mxu0 %v5917
    %5935 = vmatmul.f32.gmra.mxu0 %v5915
    %v5936 = vpop.f32.mrf.mxu0
    %v5937 = vadd.f32 0.0, %v5936
    %5938 = vdwg.mxu0
    %5939 = vrot.lane.b32.xlu0 %v4385, 112
    %v5940 = vpop.permute.xlu0 %5939
    %5941 = vrot.lane.b32.xlu0 %v4385, 80
    %v5942 = vpop.permute.xlu0 %5941
    %v5943 = vsel %vm757, %v5940, 0
    %v5945 = vsel %vm757, %v5942, 0
    %5947 = vmatpush.xpose.msra.mxu0 0.0
    %5948 = vmatpush.xpose.msra.mxu0 0.0
    %5949 = vmatpush.xpose.msra.mxu0 0.0
    %5950 = vmatpush.xpose.msra.mxu0 0.0
    %5951 = vmatpush.xpose.msra.mxu0 0.0
    %5952 = vmatpush.xpose.msra.mxu0 0.0
    %5953 = vmatpush.xpose.msra.mxu0 0.0
    %5954 = vmatpush.xpose.msra.mxu0 0.0
    %5955 = vmatpush.xpose.msra.mxu0 0.0
    %5956 = vmatpush.xpose.msra.mxu0 0.0
    %5957 = vmatpush.xpose.msra.mxu0 0.0
    %5958 = vmatpush.xpose.msra.mxu0 0.0
    %5959 = vmatpush.xpose.msra.mxu0 0.0
    %5960 = vmatpush.xpose.msra.mxu0 0.0
    %5961 = vmatpush.xpose.msra.mxu0 0.0
    %5962 = vmatpush.xpose.msra.mxu0 %v5945
    %5963 = vmatmul.f32.gmra.mxu0 %v5943
    %v5964 = vpop.f32.mrf.mxu0
    %v5965 = vadd.f32 0.0, %v5964
    %5966 = vdwg.mxu0
    %5967 = vrot.lane.b32.xlu0 %v4388, 112
    %v5968 = vpop.permute.xlu0 %5967
    %5969 = vrot.lane.b32.xlu0 %v4388, 80
    %v5970 = vpop.permute.xlu0 %5969
    %v5971 = vsel %vm757, %v5968, 0
    %v5973 = vsel %vm757, %v5970, 0
    %5975 = vmatpush.xpose.msra.mxu0 0.0
    %5976 = vmatpush.xpose.msra.mxu0 0.0
    %5977 = vmatpush.xpose.msra.mxu0 0.0
    %5978 = vmatpush.xpose.msra.mxu0 0.0
    %5979 = vmatpush.xpose.msra.mxu0 0.0
    %5980 = vmatpush.xpose.msra.mxu0 0.0
    %5981 = vmatpush.xpose.msra.mxu0 0.0
    %5982 = vmatpush.xpose.msra.mxu0 0.0
    %5983 = vmatpush.xpose.msra.mxu0 0.0
    %5984 = vmatpush.xpose.msra.mxu0 0.0
    %5985 = vmatpush.xpose.msra.mxu0 0.0
    %5986 = vmatpush.xpose.msra.mxu0 0.0
    %5987 = vmatpush.xpose.msra.mxu0 0.0
    %5988 = vmatpush.xpose.msra.mxu0 0.0
    %5989 = vmatpush.xpose.msra.mxu0 0.0
    %5990 = vmatpush.xpose.msra.mxu0 %v5973
    %5991 = vmatmul.f32.gmra.mxu0 %v5971
    %v5992 = vpop.f32.mrf.mxu0
    %v5993 = vadd.f32 0.0, %v5992
    %5994 = vdwg.mxu0
    %5995 = vrot.lane.b32.xlu0 %v4390, 112
    %v5996 = vpop.permute.xlu0 %5995
    %5997 = vrot.lane.b32.xlu0 %v4390, 80
    %v5998 = vpop.permute.xlu0 %5997
    %v5999 = vsel %vm757, %v5996, 0
    %v6001 = vsel %vm757, %v5998, 0
    %6003 = vmatpush.xpose.msra.mxu0 0.0
    %6004 = vmatpush.xpose.msra.mxu0 0.0
    %6005 = vmatpush.xpose.msra.mxu0 0.0
    %6006 = vmatpush.xpose.msra.mxu0 0.0
    %6007 = vmatpush.xpose.msra.mxu0 0.0
    %6008 = vmatpush.xpose.msra.mxu0 0.0
    %6009 = vmatpush.xpose.msra.mxu0 0.0
    %6010 = vmatpush.xpose.msra.mxu0 0.0
    %6011 = vmatpush.xpose.msra.mxu0 0.0
    %6012 = vmatpush.xpose.msra.mxu0 0.0
    %6013 = vmatpush.xpose.msra.mxu0 0.0
    %6014 = vmatpush.xpose.msra.mxu0 0.0
    %6015 = vmatpush.xpose.msra.mxu0 0.0
    %6016 = vmatpush.xpose.msra.mxu0 0.0
    %6017 = vmatpush.xpose.msra.mxu0 0.0
    %6018 = vmatpush.xpose.msra.mxu0 %v6001
    %6019 = vmatmul.f32.gmra.mxu0 %v5999
    %v6020 = vpop.f32.mrf.mxu0
    %v6021 = vadd.f32 0.0, %v6020
    %6022 = vdwg.mxu0
    %v6023 = vmul.f32 %v5601, 0.25
    %v6024 = vmul.f32 %v5629, 0.25
    %v6025 = vmul.f32 %v5657, 0.25
    %v6026 = vmul.f32 %v5685, 0.25
    %v6027 = vmul.f32 %v5713, 0.25
    %v6028 = vmul.f32 %v5741, 0.25
    %v6029 = vmul.f32 %v5769, 0.25
    %v6030 = vmul.f32 %v5797, 0.25
    %v6031 = vmul.f32 %v5825, 0.25
    %v6032 = vmul.f32 %v5853, 0.25
    %v6033 = vmul.f32 %v5881, 0.25
    %v6034 = vmul.f32 %v5909, 0.25
    %v6035 = vmul.f32 %v5937, 0.25
    %v6036 = vmul.f32 %v5965, 0.25
    %v6037 = vmul.f32 %v5993, 0.25
    %v6038 = vmul.f32 %v6021, 0.25
    %v6039 = vadd.f32 %v6023, %v1203
    %v6040 = vadd.f32 %v6024, %v1204
    %v6041 = vadd.f32 %v6025, %v1205
    %v6042 = vadd.f32 %v6026, %v1206
    %v6043 = vadd.f32 %v6027, %v1207
    %v6044 = vadd.f32 %v6028, %v1208
    %v6045 = vadd.f32 %v6029, %v1209
    %v6046 = vadd.f32 %v6030, %v1210
    %v6047 = vadd.f32 %v6031, %v1211
    %v6048 = vadd.f32 %v6032, %v1212
    %v6049 = vadd.f32 %v6033, %v1213
    %v6050 = vadd.f32 %v6034, %v1214
    %v6051 = vadd.f32 %v6035, %v1215
    %v6052 = vadd.f32 %v6036, %v1216
    %v6053 = vadd.f32 %v6037, %v1217
    %v6054 = vadd.f32 %v6038, %v1218
    %v6055 = vsel %vm1251, %v6039, -inf
    %6056 = vmax.xlane.f32.xlu0 %v6055
    %v6057 = vpop.xlane.xlu0 %6056
    %v6058 = vsel %vm1251, %v6040, -inf
    %6059 = vmax.xlane.f32.xlu0 %v6058
    %v6060 = vpop.xlane.xlu0 %6059
    %v6061 = vsel %vm1251, %v6041, -inf
    %6062 = vmax.xlane.f32.xlu0 %v6061
    %v6063 = vpop.xlane.xlu0 %6062
    %v6064 = vsel %vm1251, %v6042, -inf
    %6065 = vmax.xlane.f32.xlu0 %v6064
    %v6066 = vpop.xlane.xlu0 %6065
    %v6067 = vsel %vm1251, %v6043, -inf
    %6068 = vmax.xlane.f32.xlu0 %v6067
    %v6069 = vpop.xlane.xlu0 %6068
    %v6070 = vsel %vm1251, %v6044, -inf
    %6071 = vmax.xlane.f32.xlu0 %v6070
    %v6072 = vpop.xlane.xlu0 %6071
    %v6073 = vsel %vm1251, %v6045, -inf
    %6074 = vmax.xlane.f32.xlu0 %v6073
    %v6075 = vpop.xlane.xlu0 %6074
    %v6076 = vsel %vm1251, %v6046, -inf
    %6077 = vmax.xlane.f32.xlu0 %v6076
    %v6078 = vpop.xlane.xlu0 %6077
    %v6079 = vsel %vm1251, %v6047, -inf
    %6080 = vmax.xlane.f32.xlu0 %v6079
    %v6081 = vpop.xlane.xlu0 %6080
    %v6082 = vsel %vm1251, %v6048, -inf
    %6083 = vmax.xlane.f32.xlu0 %v6082
    %v6084 = vpop.xlane.xlu0 %6083
    %v6085 = vsel %vm1251, %v6049, -inf
    %6086 = vmax.xlane.f32.xlu0 %v6085
    %v6087 = vpop.xlane.xlu0 %6086
    %v6088 = vsel %vm1251, %v6050, -inf
    %6089 = vmax.xlane.f32.xlu0 %v6088
    %v6090 = vpop.xlane.xlu0 %6089
    %v6091 = vsel %vm1251, %v6051, -inf
    %6092 = vmax.xlane.f32.xlu0 %v6091
    %v6093 = vpop.xlane.xlu0 %6092
    %v6094 = vsel %vm1251, %v6052, -inf
    %6095 = vmax.xlane.f32.xlu0 %v6094
    %v6096 = vpop.xlane.xlu0 %6095
    %v6097 = vsel %vm1251, %v6053, -inf
    %6098 = vmax.xlane.f32.xlu0 %v6097
    %v6099 = vpop.xlane.xlu0 %6098
    %v6100 = vsel %vm1251, %v6054, -inf
    %6101 = vmax.xlane.f32.xlu0 %v6100
    %v6102 = vpop.xlane.xlu0 %6101
    %v6103 = vsub.f32 %v6039, %v6057
    %v6104 = vsub.f32 %v6040, %v6060
    %v6105 = vsub.f32 %v6041, %v6063
    %v6106 = vsub.f32 %v6042, %v6066
    %v6107 = vsub.f32 %v6043, %v6069
    %v6108 = vsub.f32 %v6044, %v6072
    %v6109 = vsub.f32 %v6045, %v6075
    %v6110 = vsub.f32 %v6046, %v6078
    %v6111 = vsub.f32 %v6047, %v6081
    %v6112 = vsub.f32 %v6048, %v6084
    %v6113 = vsub.f32 %v6049, %v6087
    %v6114 = vsub.f32 %v6050, %v6090
    %v6115 = vsub.f32 %v6051, %v6093
    %v6116 = vsub.f32 %v6052, %v6096
    %v6117 = vsub.f32 %v6053, %v6099
    %v6118 = vsub.f32 %v6054, %v6102
    %v6119 = vmul.f32 %v6103, 1.442695
    %v6120 = vpow.pop %v6119
    %v6121 = vmul.f32 %v6104, 1.442695
    %v6122 = vpow.pop %v6121
    %v6123 = vmul.f32 %v6105, 1.442695
    %v6124 = vpow.pop %v6123
    %v6125 = vmul.f32 %v6106, 1.442695
    %v6126 = vpow.pop %v6125
    %v6127 = vmul.f32 %v6107, 1.442695
    %v6128 = vpow.pop %v6127
    %v6129 = vmul.f32 %v6108, 1.442695
    %v6130 = vpow.pop %v6129
    %v6131 = vmul.f32 %v6109, 1.442695
    %v6132 = vpow.pop %v6131
    %v6133 = vmul.f32 %v6110, 1.442695
    %v6134 = vpow.pop %v6133
    %v6135 = vmul.f32 %v6111, 1.442695
    %v6136 = vpow.pop %v6135
    %v6137 = vmul.f32 %v6112, 1.442695
    %v6138 = vpow.pop %v6137
    %v6139 = vmul.f32 %v6113, 1.442695
    %v6140 = vpow.pop %v6139
    %v6141 = vmul.f32 %v6114, 1.442695
    %v6142 = vpow.pop %v6141
    %v6143 = vmul.f32 %v6115, 1.442695
    %v6144 = vpow.pop %v6143
    %v6145 = vmul.f32 %v6116, 1.442695
    %v6146 = vpow.pop %v6145
    %v6147 = vmul.f32 %v6117, 1.442695
    %v6148 = vpow.pop %v6147
    %v6149 = vmul.f32 %v6118, 1.442695
    %v6150 = vpow.pop %v6149
    %v6151 = vsel %vm1251, %v6120, 0.0
    %6152 = vadd.xlane.f32.xlu0 %v6151
    %v6153 = vpop.xlane.xlu0 %6152
    %v6154 = vsel %vm1251, %v6122, 0.0
    %6155 = vadd.xlane.f32.xlu0 %v6154
    %v6156 = vpop.xlane.xlu0 %6155
    %v6157 = vsel %vm1251, %v6124, 0.0
    %6158 = vadd.xlane.f32.xlu0 %v6157
    %v6159 = vpop.xlane.xlu0 %6158
    %v6160 = vsel %vm1251, %v6126, 0.0
    %6161 = vadd.xlane.f32.xlu0 %v6160
    %v6162 = vpop.xlane.xlu0 %6161
    %v6163 = vsel %vm1251, %v6128, 0.0
    %6164 = vadd.xlane.f32.xlu0 %v6163
    %v6165 = vpop.xlane.xlu0 %6164
    %v6166 = vsel %vm1251, %v6130, 0.0
    %6167 = vadd.xlane.f32.xlu0 %v6166
    %v6168 = vpop.xlane.xlu0 %6167
    %v6169 = vsel %vm1251, %v6132, 0.0
    %6170 = vadd.xlane.f32.xlu0 %v6169
    %v6171 = vpop.xlane.xlu0 %6170
    %v6172 = vsel %vm1251, %v6134, 0.0
    %6173 = vadd.xlane.f32.xlu0 %v6172
    %v6174 = vpop.xlane.xlu0 %6173
    %v6175 = vsel %vm1251, %v6136, 0.0
    %6176 = vadd.xlane.f32.xlu0 %v6175
    %v6177 = vpop.xlane.xlu0 %6176
    %v6178 = vsel %vm1251, %v6138, 0.0
    %6179 = vadd.xlane.f32.xlu0 %v6178
    %v6180 = vpop.xlane.xlu0 %6179
    %v6181 = vsel %vm1251, %v6140, 0.0
    %6182 = vadd.xlane.f32.xlu0 %v6181
    %v6183 = vpop.xlane.xlu0 %6182
    %v6184 = vsel %vm1251, %v6142, 0.0
    %6185 = vadd.xlane.f32.xlu0 %v6184
    %v6186 = vpop.xlane.xlu0 %6185
    %v6187 = vsel %vm1251, %v6144, 0.0
    %6188 = vadd.xlane.f32.xlu0 %v6187
    %v6189 = vpop.xlane.xlu0 %6188
    %v6190 = vsel %vm1251, %v6146, 0.0
    %6191 = vadd.xlane.f32.xlu0 %v6190
    %v6192 = vpop.xlane.xlu0 %6191
    %v6193 = vsel %vm1251, %v6148, 0.0
    %6194 = vadd.xlane.f32.xlu0 %v6193
    %v6195 = vpop.xlane.xlu0 %6194
    %v6196 = vsel %vm1251, %v6150, 0.0
    %6197 = vadd.xlane.f32.xlu0 %v6196
    %v6198 = vpop.xlane.xlu0 %6197
    %v6199 = vrcp.pop %v6153
    %v6200 = vrcp.pop %v6156
    %v6201 = vrcp.pop %v6159
    %v6202 = vrcp.pop %v6162
    %v6203 = vrcp.pop %v6165
    %v6204 = vrcp.pop %v6168
    %v6205 = vrcp.pop %v6171
    %v6206 = vrcp.pop %v6174
    %v6207 = vrcp.pop %v6177
    %v6208 = vrcp.pop %v6180
    %v6209 = vrcp.pop %v6183
    %v6210 = vrcp.pop %v6186
    %v6211 = vrcp.pop %v6189
    %v6212 = vrcp.pop %v6192
    %v6213 = vrcp.pop %v6195
    %v6214 = vrcp.pop %v6198
    %v6215 = vmul.f32 %v6120, %v6199
    %v6216 = vmul.f32 %v6122, %v6200
    %v6217 = vmul.f32 %v6124, %v6201
    %v6218 = vmul.f32 %v6126, %v6202
    %v6219 = vmul.f32 %v6128, %v6203
    %v6220 = vmul.f32 %v6130, %v6204
    %v6221 = vmul.f32 %v6132, %v6205
    %v6222 = vmul.f32 %v6134, %v6206
    %v6223 = vmul.f32 %v6136, %v6207
    %v6224 = vmul.f32 %v6138, %v6208
    %v6225 = vmul.f32 %v6140, %v6209
    %v6226 = vmul.f32 %v6142, %v6210
    %v6227 = vmul.f32 %v6144, %v6211
    %v6228 = vmul.f32 %v6146, %v6212
    %v6229 = vmul.f32 %v6148, %v6213
    %v6230 = vmul.f32 %v6150, %v6214
    %6231 = vrot.lane.b32.xlu0 %v4353, 48
    %v6232 = vpop.permute.xlu0 %6231
    %v6235 = vsel %vm1251, %v6215, 0
    %6237 = vmatpush.msra.mxu0 0.0
    %6238 = vmatpush.msra.mxu0 0.0
    %6239 = vmatpush.msra.mxu0 0.0
    %6240 = vmatpush.msra.mxu0 0.0
    %6241 = vmatpush.msra.mxu0 0.0
    %6242 = vmatpush.msra.mxu0 0.0
    %6243 = vmatpush.msra.mxu0 0.0
    %6244 = vmatpush.msra.mxu0 0.0
    %6245 = vmatpush.msra.mxu0 0.0
    %6246 = vmatpush.msra.mxu0 0.0
    %6247 = vmatpush.msra.mxu0 0.0
    %6248 = vmatpush.msra.mxu0 0.0
    %6249 = vmatpush.msra.mxu0 0.0
    %6250 = vmatpush.msra.mxu0 0.0
    %6251 = vmatpush.msra.mxu0 0.0
    %6252 = vmatpush.msra.mxu0 %v6232
    %6253 = vmatmul.f32.gmra.mxu0 %v6235
    %v6254 = vpop.f32.mrf.mxu0
    %v6255 = vadd.f32 0.0, %v6254
    %6256 = vdwg.mxu0
    %6257 = vrot.lane.b32.xlu0 %v4355, 48
    %v6258 = vpop.permute.xlu0 %6257
    %v6261 = vsel %vm1251, %v6216, 0
    %6263 = vmatpush.msra.mxu0 0.0
    %6264 = vmatpush.msra.mxu0 0.0
    %6265 = vmatpush.msra.mxu0 0.0
    %6266 = vmatpush.msra.mxu0 0.0
    %6267 = vmatpush.msra.mxu0 0.0
    %6268 = vmatpush.msra.mxu0 0.0
    %6269 = vmatpush.msra.mxu0 0.0
    %6270 = vmatpush.msra.mxu0 0.0
    %6271 = vmatpush.msra.mxu0 0.0
    %6272 = vmatpush.msra.mxu0 0.0
    %6273 = vmatpush.msra.mxu0 0.0
    %6274 = vmatpush.msra.mxu0 0.0
    %6275 = vmatpush.msra.mxu0 0.0
    %6276 = vmatpush.msra.mxu0 0.0
    %6277 = vmatpush.msra.mxu0 0.0
    %6278 = vmatpush.msra.mxu0 %v6258
    %6279 = vmatmul.f32.gmra.mxu0 %v6261
    %v6280 = vpop.f32.mrf.mxu0
    %v6281 = vadd.f32 0.0, %v6280
    %6282 = vdwg.mxu0
    %6283 = vrot.lane.b32.xlu0 %v4358, 48
    %v6284 = vpop.permute.xlu0 %6283
    %v6287 = vsel %vm1251, %v6217, 0
    %6289 = vmatpush.msra.mxu0 0.0
    %6290 = vmatpush.msra.mxu0 0.0
    %6291 = vmatpush.msra.mxu0 0.0
    %6292 = vmatpush.msra.mxu0 0.0
    %6293 = vmatpush.msra.mxu0 0.0
    %6294 = vmatpush.msra.mxu0 0.0
    %6295 = vmatpush.msra.mxu0 0.0
    %6296 = vmatpush.msra.mxu0 0.0
    %6297 = vmatpush.msra.mxu0 0.0
    %6298 = vmatpush.msra.mxu0 0.0
    %6299 = vmatpush.msra.mxu0 0.0
    %6300 = vmatpush.msra.mxu0 0.0
    %6301 = vmatpush.msra.mxu0 0.0
    %6302 = vmatpush.msra.mxu0 0.0
    %6303 = vmatpush.msra.mxu0 0.0
    %6304 = vmatpush.msra.mxu0 %v6284
    %6305 = vmatmul.f32.gmra.mxu0 %v6287
    %v6306 = vpop.f32.mrf.mxu0
    %v6307 = vadd.f32 0.0, %v6306
    %6308 = vdwg.mxu0
    %6309 = vrot.lane.b32.xlu0 %v4360, 48
    %v6310 = vpop.permute.xlu0 %6309
    %v6313 = vsel %vm1251, %v6218, 0
    %6315 = vmatpush.msra.mxu0 0.0
    %6316 = vmatpush.msra.mxu0 0.0
    %6317 = vmatpush.msra.mxu0 0.0
    %6318 = vmatpush.msra.mxu0 0.0
    %6319 = vmatpush.msra.mxu0 0.0
    %6320 = vmatpush.msra.mxu0 0.0
    %6321 = vmatpush.msra.mxu0 0.0
    %6322 = vmatpush.msra.mxu0 0.0
    %6323 = vmatpush.msra.mxu0 0.0
    %6324 = vmatpush.msra.mxu0 0.0
    %6325 = vmatpush.msra.mxu0 0.0
    %6326 = vmatpush.msra.mxu0 0.0
    %6327 = vmatpush.msra.mxu0 0.0
    %6328 = vmatpush.msra.mxu0 0.0
    %6329 = vmatpush.msra.mxu0 0.0
    %6330 = vmatpush.msra.mxu0 %v6310
    %6331 = vmatmul.f32.gmra.mxu0 %v6313
    %v6332 = vpop.f32.mrf.mxu0
    %v6333 = vadd.f32 0.0, %v6332
    %6334 = vdwg.mxu0
    %6335 = vrot.lane.b32.xlu0 %v4363, 48
    %v6336 = vpop.permute.xlu0 %6335
    %v6339 = vsel %vm1251, %v6219, 0
    %6341 = vmatpush.msra.mxu0 0.0
    %6342 = vmatpush.msra.mxu0 0.0
    %6343 = vmatpush.msra.mxu0 0.0
    %6344 = vmatpush.msra.mxu0 0.0
    %6345 = vmatpush.msra.mxu0 0.0
    %6346 = vmatpush.msra.mxu0 0.0
    %6347 = vmatpush.msra.mxu0 0.0
    %6348 = vmatpush.msra.mxu0 0.0
    %6349 = vmatpush.msra.mxu0 0.0
    %6350 = vmatpush.msra.mxu0 0.0
    %6351 = vmatpush.msra.mxu0 0.0
    %6352 = vmatpush.msra.mxu0 0.0
    %6353 = vmatpush.msra.mxu0 0.0
    %6354 = vmatpush.msra.mxu0 0.0
    %6355 = vmatpush.msra.mxu0 0.0
    %6356 = vmatpush.msra.mxu0 %v6336
    %6357 = vmatmul.f32.gmra.mxu0 %v6339
    %v6358 = vpop.f32.mrf.mxu0
    %v6359 = vadd.f32 0.0, %v6358
    %6360 = vdwg.mxu0
    %6361 = vrot.lane.b32.xlu0 %v4365, 48
    %v6362 = vpop.permute.xlu0 %6361
    %v6365 = vsel %vm1251, %v6220, 0
    %6367 = vmatpush.msra.mxu0 0.0
    %6368 = vmatpush.msra.mxu0 0.0
    %6369 = vmatpush.msra.mxu0 0.0
    %6370 = vmatpush.msra.mxu0 0.0
    %6371 = vmatpush.msra.mxu0 0.0
    %6372 = vmatpush.msra.mxu0 0.0
    %6373 = vmatpush.msra.mxu0 0.0
    %6374 = vmatpush.msra.mxu0 0.0
    %6375 = vmatpush.msra.mxu0 0.0
    %6376 = vmatpush.msra.mxu0 0.0
    %6377 = vmatpush.msra.mxu0 0.0
    %6378 = vmatpush.msra.mxu0 0.0
    %6379 = vmatpush.msra.mxu0 0.0
    %6380 = vmatpush.msra.mxu0 0.0
    %6381 = vmatpush.msra.mxu0 0.0
    %6382 = vmatpush.msra.mxu0 %v6362
    %6383 = vmatmul.f32.gmra.mxu0 %v6365
    %v6384 = vpop.f32.mrf.mxu0
    %v6385 = vadd.f32 0.0, %v6384
    %6386 = vdwg.mxu0
    %6387 = vrot.lane.b32.xlu0 %v4368, 48
    %v6388 = vpop.permute.xlu0 %6387
    %v6391 = vsel %vm1251, %v6221, 0
    %6393 = vmatpush.msra.mxu0 0.0
    %6394 = vmatpush.msra.mxu0 0.0
    %6395 = vmatpush.msra.mxu0 0.0
    %6396 = vmatpush.msra.mxu0 0.0
    %6397 = vmatpush.msra.mxu0 0.0
    %6398 = vmatpush.msra.mxu0 0.0
    %6399 = vmatpush.msra.mxu0 0.0
    %6400 = vmatpush.msra.mxu0 0.0
    %6401 = vmatpush.msra.mxu0 0.0
    %6402 = vmatpush.msra.mxu0 0.0
    %6403 = vmatpush.msra.mxu0 0.0
    %6404 = vmatpush.msra.mxu0 0.0
    %6405 = vmatpush.msra.mxu0 0.0
    %6406 = vmatpush.msra.mxu0 0.0
    %6407 = vmatpush.msra.mxu0 0.0
    %6408 = vmatpush.msra.mxu0 %v6388
    %6409 = vmatmul.f32.gmra.mxu0 %v6391
    %v6410 = vpop.f32.mrf.mxu0
    %v6411 = vadd.f32 0.0, %v6410
    %6412 = vdwg.mxu0
    %6413 = vrot.lane.b32.xlu0 %v4370, 48
    %v6414 = vpop.permute.xlu0 %6413
    %v6417 = vsel %vm1251, %v6222, 0
    %6419 = vmatpush.msra.mxu0 0.0
    %6420 = vmatpush.msra.mxu0 0.0
    %6421 = vmatpush.msra.mxu0 0.0
    %6422 = vmatpush.msra.mxu0 0.0
    %6423 = vmatpush.msra.mxu0 0.0
    %6424 = vmatpush.msra.mxu0 0.0
    %6425 = vmatpush.msra.mxu0 0.0
    %6426 = vmatpush.msra.mxu0 0.0
    %6427 = vmatpush.msra.mxu0 0.0
    %6428 = vmatpush.msra.mxu0 0.0
    %6429 = vmatpush.msra.mxu0 0.0
    %6430 = vmatpush.msra.mxu0 0.0
    %6431 = vmatpush.msra.mxu0 0.0
    %6432 = vmatpush.msra.mxu0 0.0
    %6433 = vmatpush.msra.mxu0 0.0
    %6434 = vmatpush.msra.mxu0 %v6414
    %6435 = vmatmul.f32.gmra.mxu0 %v6417
    %v6436 = vpop.f32.mrf.mxu0
    %v6437 = vadd.f32 0.0, %v6436
    %6438 = vdwg.mxu0
    %6439 = vrot.lane.b32.xlu0 %v4373, 48
    %v6440 = vpop.permute.xlu0 %6439
    %v6443 = vsel %vm1251, %v6223, 0
    %6445 = vmatpush.msra.mxu0 0.0
    %6446 = vmatpush.msra.mxu0 0.0
    %6447 = vmatpush.msra.mxu0 0.0
    %6448 = vmatpush.msra.mxu0 0.0
    %6449 = vmatpush.msra.mxu0 0.0
    %6450 = vmatpush.msra.mxu0 0.0
    %6451 = vmatpush.msra.mxu0 0.0
    %6452 = vmatpush.msra.mxu0 0.0
    %6453 = vmatpush.msra.mxu0 0.0
    %6454 = vmatpush.msra.mxu0 0.0
    %6455 = vmatpush.msra.mxu0 0.0
    %6456 = vmatpush.msra.mxu0 0.0
    %6457 = vmatpush.msra.mxu0 0.0
    %6458 = vmatpush.msra.mxu0 0.0
    %6459 = vmatpush.msra.mxu0 0.0
    %6460 = vmatpush.msra.mxu0 %v6440
    %6461 = vmatmul.f32.gmra.mxu0 %v6443
    %v6462 = vpop.f32.mrf.mxu0
    %v6463 = vadd.f32 0.0, %v6462
    %6464 = vdwg.mxu0
    %6465 = vrot.lane.b32.xlu0 %v4375, 48
    %v6466 = vpop.permute.xlu0 %6465
    %v6469 = vsel %vm1251, %v6224, 0
    %6471 = vmatpush.msra.mxu0 0.0
    %6472 = vmatpush.msra.mxu0 0.0
    %6473 = vmatpush.msra.mxu0 0.0
    %6474 = vmatpush.msra.mxu0 0.0
    %6475 = vmatpush.msra.mxu0 0.0
    %6476 = vmatpush.msra.mxu0 0.0
    %6477 = vmatpush.msra.mxu0 0.0
    %6478 = vmatpush.msra.mxu0 0.0
    %6479 = vmatpush.msra.mxu0 0.0
    %6480 = vmatpush.msra.mxu0 0.0
    %6481 = vmatpush.msra.mxu0 0.0
    %6482 = vmatpush.msra.mxu0 0.0
    %6483 = vmatpush.msra.mxu0 0.0
    %6484 = vmatpush.msra.mxu0 0.0
    %6485 = vmatpush.msra.mxu0 0.0
    %6486 = vmatpush.msra.mxu0 %v6466
    %6487 = vmatmul.f32.gmra.mxu0 %v6469
    %v6488 = vpop.f32.mrf.mxu0
    %v6489 = vadd.f32 0.0, %v6488
    %6490 = vdwg.mxu0
    %6491 = vrot.lane.b32.xlu0 %v4378, 48
    %v6492 = vpop.permute.xlu0 %6491
    %v6495 = vsel %vm1251, %v6225, 0
    %6497 = vmatpush.msra.mxu0 0.0
    %6498 = vmatpush.msra.mxu0 0.0
    %6499 = vmatpush.msra.mxu0 0.0
    %6500 = vmatpush.msra.mxu0 0.0
    %6501 = vmatpush.msra.mxu0 0.0
    %6502 = vmatpush.msra.mxu0 0.0
    %6503 = vmatpush.msra.mxu0 0.0
    %6504 = vmatpush.msra.mxu0 0.0
    %6505 = vmatpush.msra.mxu0 0.0
    %6506 = vmatpush.msra.mxu0 0.0
    %6507 = vmatpush.msra.mxu0 0.0
    %6508 = vmatpush.msra.mxu0 0.0
    %6509 = vmatpush.msra.mxu0 0.0
    %6510 = vmatpush.msra.mxu0 0.0
    %6511 = vmatpush.msra.mxu0 0.0
    %6512 = vmatpush.msra.mxu0 %v6492
    %6513 = vmatmul.f32.gmra.mxu0 %v6495
    %v6514 = vpop.f32.mrf.mxu0
    %v6515 = vadd.f32 0.0, %v6514
    %6516 = vdwg.mxu0
    %6517 = vrot.lane.b32.xlu0 %v4380, 48
    %v6518 = vpop.permute.xlu0 %6517
    %v6521 = vsel %vm1251, %v6226, 0
    %6523 = vmatpush.msra.mxu0 0.0
    %6524 = vmatpush.msra.mxu0 0.0
    %6525 = vmatpush.msra.mxu0 0.0
    %6526 = vmatpush.msra.mxu0 0.0
    %6527 = vmatpush.msra.mxu0 0.0
    %6528 = vmatpush.msra.mxu0 0.0
    %6529 = vmatpush.msra.mxu0 0.0
    %6530 = vmatpush.msra.mxu0 0.0
    %6531 = vmatpush.msra.mxu0 0.0
    %6532 = vmatpush.msra.mxu0 0.0
    %6533 = vmatpush.msra.mxu0 0.0
    %6534 = vmatpush.msra.mxu0 0.0
    %6535 = vmatpush.msra.mxu0 0.0
    %6536 = vmatpush.msra.mxu0 0.0
    %6537 = vmatpush.msra.mxu0 0.0
    %6538 = vmatpush.msra.mxu0 %v6518
    %6539 = vmatmul.f32.gmra.mxu0 %v6521
    %v6540 = vpop.f32.mrf.mxu0
    %v6541 = vadd.f32 0.0, %v6540
    %6542 = vdwg.mxu0
    %6543 = vrot.lane.b32.xlu0 %v4383, 48
    %v6544 = vpop.permute.xlu0 %6543
    %v6547 = vsel %vm1251, %v6227, 0
    %6549 = vmatpush.msra.mxu0 0.0
    %6550 = vmatpush.msra.mxu0 0.0
    %6551 = vmatpush.msra.mxu0 0.0
    %6552 = vmatpush.msra.mxu0 0.0
    %6553 = vmatpush.msra.mxu0 0.0
    %6554 = vmatpush.msra.mxu0 0.0
    %6555 = vmatpush.msra.mxu0 0.0
    %6556 = vmatpush.msra.mxu0 0.0
    %6557 = vmatpush.msra.mxu0 0.0
    %6558 = vmatpush.msra.mxu0 0.0
    %6559 = vmatpush.msra.mxu0 0.0
    %6560 = vmatpush.msra.mxu0 0.0
    %6561 = vmatpush.msra.mxu0 0.0
    %6562 = vmatpush.msra.mxu0 0.0
    %6563 = vmatpush.msra.mxu0 0.0
    %6564 = vmatpush.msra.mxu0 %v6544
    %6565 = vmatmul.f32.gmra.mxu0 %v6547
    %v6566 = vpop.f32.mrf.mxu0
    %v6567 = vadd.f32 0.0, %v6566
    %6568 = vdwg.mxu0
    %6569 = vrot.lane.b32.xlu0 %v4385, 48
    %v6570 = vpop.permute.xlu0 %6569
    %v6573 = vsel %vm1251, %v6228, 0
    %6575 = vmatpush.msra.mxu0 0.0
    %6576 = vmatpush.msra.mxu0 0.0
    %6577 = vmatpush.msra.mxu0 0.0
    %6578 = vmatpush.msra.mxu0 0.0
    %6579 = vmatpush.msra.mxu0 0.0
    %6580 = vmatpush.msra.mxu0 0.0
    %6581 = vmatpush.msra.mxu0 0.0
    %6582 = vmatpush.msra.mxu0 0.0
    %6583 = vmatpush.msra.mxu0 0.0
    %6584 = vmatpush.msra.mxu0 0.0
    %6585 = vmatpush.msra.mxu0 0.0
    %6586 = vmatpush.msra.mxu0 0.0
    %6587 = vmatpush.msra.mxu0 0.0
    %6588 = vmatpush.msra.mxu0 0.0
    %6589 = vmatpush.msra.mxu0 0.0
    %6590 = vmatpush.msra.mxu0 %v6570
    %6591 = vmatmul.f32.gmra.mxu0 %v6573
    %v6592 = vpop.f32.mrf.mxu0
    %v6593 = vadd.f32 0.0, %v6592
    %6594 = vdwg.mxu0
    %6595 = vrot.lane.b32.xlu0 %v4388, 48
    %v6596 = vpop.permute.xlu0 %6595
    %v6599 = vsel %vm1251, %v6229, 0
    %6601 = vmatpush.msra.mxu0 0.0
    %6602 = vmatpush.msra.mxu0 0.0
    %6603 = vmatpush.msra.mxu0 0.0
    %6604 = vmatpush.msra.mxu0 0.0
    %6605 = vmatpush.msra.mxu0 0.0
    %6606 = vmatpush.msra.mxu0 0.0
    %6607 = vmatpush.msra.mxu0 0.0
    %6608 = vmatpush.msra.mxu0 0.0
    %6609 = vmatpush.msra.mxu0 0.0
    %6610 = vmatpush.msra.mxu0 0.0
    %6611 = vmatpush.msra.mxu0 0.0
    %6612 = vmatpush.msra.mxu0 0.0
    %6613 = vmatpush.msra.mxu0 0.0
    %6614 = vmatpush.msra.mxu0 0.0
    %6615 = vmatpush.msra.mxu0 0.0
    %6616 = vmatpush.msra.mxu0 %v6596
    %6617 = vmatmul.f32.gmra.mxu0 %v6599
    %v6618 = vpop.f32.mrf.mxu0
    %v6619 = vadd.f32 0.0, %v6618
    %6620 = vdwg.mxu0
    %6621 = vrot.lane.b32.xlu0 %v4390, 48
    %v6622 = vpop.permute.xlu0 %6621
    %v6625 = vsel %vm1251, %v6230, 0
    %6627 = vmatpush.msra.mxu0 0.0
    %6628 = vmatpush.msra.mxu0 0.0
    %6629 = vmatpush.msra.mxu0 0.0
    %6630 = vmatpush.msra.mxu0 0.0
    %6631 = vmatpush.msra.mxu0 0.0
    %6632 = vmatpush.msra.mxu0 0.0
    %6633 = vmatpush.msra.mxu0 0.0
    %6634 = vmatpush.msra.mxu0 0.0
    %6635 = vmatpush.msra.mxu0 0.0
    %6636 = vmatpush.msra.mxu0 0.0
    %6637 = vmatpush.msra.mxu0 0.0
    %6638 = vmatpush.msra.mxu0 0.0
    %6639 = vmatpush.msra.mxu0 0.0
    %6640 = vmatpush.msra.mxu0 0.0
    %6641 = vmatpush.msra.mxu0 0.0
    %6642 = vmatpush.msra.mxu0 %v6622
    %6643 = vmatmul.f32.gmra.mxu0 %v6625
    %v6644 = vpop.f32.mrf.mxu0
    %v6645 = vadd.f32 0.0, %v6644
    %6646 = vdwg.mxu0
    %v6647 = vpack.c.bf16 %v6281, %v6255
    %v6648 = vpack.c.bf16 %v6333, %v6307
    %v6649 = vpack.c.bf16 %v6385, %v6359
    %v6650 = vpack.c.bf16 %v6437, %v6411
    %v6651 = vpack.c.bf16 %v6489, %v6463
    %v6652 = vpack.c.bf16 %v6541, %v6515
    %v6653 = vpack.c.bf16 %v6593, %v6567
    %v6654 = vpack.c.bf16 %v6645, %v6619
    %v6655 = vld [vmem:[%s5477 + $0x8] sm:$0xf]
    %v6656 = vld [vmem:[%s5477 + $0xc] sm:$0xf]
    %v6659 = vunpack.c.l.b16 %v6655
    %v6660 = vunpack.c.l.b16 %v6656
    %v6661 = vpack.c.b16 %v6660, %v6659
    %v6664 = vsel %vm757, %v6647, 0
    %v6667 = vsel %vm757, %v6648, 0
    %v6670 = vsel %vm757, %v6649, 0
    %v6673 = vsel %vm757, %v6650, 0
    %v6676 = vsel %vm757, %v6651, 0
    %v6679 = vsel %vm757, %v6652, 0
    %v6682 = vsel %vm757, %v6653, 0
    %v6685 = vsel %vm757, %v6654, 0
    %6687 = vmatpush.bf16.msra.mxu0 0
    %6688 = vmatpush.bf16.msra.mxu0 0
    %6689 = vmatpush.bf16.msra.mxu0 0
    %6690 = vmatpush.bf16.msra.mxu0 0
    %6691 = vmatpush.bf16.msra.mxu0 0
    %6692 = vmatpush.bf16.msra.mxu0 0
    %6693 = vmatpush.bf16.msra.mxu0 0
    %6694 = vmatpush.bf16.msra.mxu0 %v6661
    %6695 = vmatmul.bf16.gmra.mxu0 %v6664
    %v6696 = vpop.f32.mrf.mxu0
    %v6697 = vadd.f32 0.0, %v6696
    %v6698 = vpop.f32.mrf.mxu0
    %v6699 = vadd.f32 0.0, %v6698
    %6700 = vmatmul.bf16.gmra.mxu0 %v6667
    %v6701 = vpop.f32.mrf.mxu0
    %v6702 = vadd.f32 0.0, %v6701
    %v6703 = vpop.f32.mrf.mxu0
    %v6704 = vadd.f32 0.0, %v6703
    %6705 = vmatmul.bf16.gmra.mxu0 %v6670
    %v6706 = vpop.f32.mrf.mxu0
    %v6707 = vadd.f32 0.0, %v6706
    %v6708 = vpop.f32.mrf.mxu0
    %v6709 = vadd.f32 0.0, %v6708
    %6710 = vmatmul.bf16.gmra.mxu0 %v6673
    %v6711 = vpop.f32.mrf.mxu0
    %v6712 = vadd.f32 0.0, %v6711
    %v6713 = vpop.f32.mrf.mxu0
    %v6714 = vadd.f32 0.0, %v6713
    %6715 = vmatmul.bf16.gmra.mxu0 %v6676
    %v6716 = vpop.f32.mrf.mxu0
    %v6717 = vadd.f32 0.0, %v6716
    %v6718 = vpop.f32.mrf.mxu0
    %v6719 = vadd.f32 0.0, %v6718
    %6720 = vmatmul.bf16.gmra.mxu0 %v6679
    %v6721 = vpop.f32.mrf.mxu0
    %v6722 = vadd.f32 0.0, %v6721
    %v6723 = vpop.f32.mrf.mxu0
    %v6724 = vadd.f32 0.0, %v6723
    %6725 = vmatmul.bf16.gmra.mxu0 %v6682
    %v6726 = vpop.f32.mrf.mxu0
    %v6727 = vadd.f32 0.0, %v6726
    %v6728 = vpop.f32.mrf.mxu0
    %v6729 = vadd.f32 0.0, %v6728
    %6730 = vmatmul.bf16.gmra.mxu0 %v6685
    %v6731 = vpop.f32.mrf.mxu0
    %v6732 = vadd.f32 0.0, %v6731
    %v6733 = vpop.f32.mrf.mxu0
    %v6734 = vadd.f32 0.0, %v6733
    %6735 = vdwg.mxu0
    %v6736 = vadd.f32 %v5559, %v6697
    %v6737 = vadd.f32 %v5560, %v6699
    %v6738 = vadd.f32 %v5561, %v6702
    %v6739 = vadd.f32 %v5562, %v6704
    %v6740 = vadd.f32 %v5563, %v6707
    %v6741 = vadd.f32 %v5564, %v6709
    %v6742 = vadd.f32 %v5565, %v6712
    %v6743 = vadd.f32 %v5566, %v6714
    %v6744 = vadd.f32 %v5567, %v6717
    %v6745 = vadd.f32 %v5568, %v6719
    %v6746 = vadd.f32 %v5569, %v6722
    %v6747 = vadd.f32 %v5570, %v6724
    %v6748 = vadd.f32 %v5571, %v6727
    %v6749 = vadd.f32 %v5572, %v6729
    %v6750 = vadd.f32 %v5573, %v6732
    %v6751 = vadd.f32 %v5574, %v6734
    %s6752 = scalar_lea.vmem [#allocation9], 1
    %v6753 = vld [vmem:[%s6752] sm:$0x1]
    %s6754 = scalar_lea.vmem [#allocation11], 1
    %v6755 = vld [vmem:[%s6754] sm:$0x1]
    %v6756 = vsel %vm235, %v6736, 0.0
    %6757 = vadd.xlane.f32.xlu0 %v6756
    %v6758 = vpop.xlane.xlu0 %6757
    %v6759 = vsel %vm235, %v6737, 0.0
    %6760 = vadd.xlane.f32.xlu0 %v6759
    %v6761 = vpop.xlane.xlu0 %6760
    %v6762 = vsel %vm235, %v6738, 0.0
    %6763 = vadd.xlane.f32.xlu0 %v6762
    %v6764 = vpop.xlane.xlu0 %6763
    %v6765 = vsel %vm235, %v6739, 0.0
    %6766 = vadd.xlane.f32.xlu0 %v6765
    %v6767 = vpop.xlane.xlu0 %6766
    %v6768 = vsel %vm235, %v6740, 0.0
    %6769 = vadd.xlane.f32.xlu0 %v6768
    %v6770 = vpop.xlane.xlu0 %6769
    %v6771 = vsel %vm235, %v6741, 0.0
    %6772 = vadd.xlane.f32.xlu0 %v6771
    %v6773 = vpop.xlane.xlu0 %6772
    %v6774 = vsel %vm235, %v6742, 0.0
    %6775 = vadd.xlane.f32.xlu0 %v6774
    %v6776 = vpop.xlane.xlu0 %6775
    %v6777 = vsel %vm235, %v6743, 0.0
    %6778 = vadd.xlane.f32.xlu0 %v6777
    %v6779 = vpop.xlane.xlu0 %6778
    %v6780 = vsel %vm235, %v6744, 0.0
    %6781 = vadd.xlane.f32.xlu0 %v6780
    %v6782 = vpop.xlane.xlu0 %6781
    %v6783 = vsel %vm235, %v6745, 0.0
    %6784 = vadd.xlane.f32.xlu0 %v6783
    %v6785 = vpop.xlane.xlu0 %6784
    %v6786 = vsel %vm235, %v6746, 0.0
    %6787 = vadd.xlane.f32.xlu0 %v6786
    %v6788 = vpop.xlane.xlu0 %6787
    %v6789 = vsel %vm235, %v6747, 0.0
    %6790 = vadd.xlane.f32.xlu0 %v6789
    %v6791 = vpop.xlane.xlu0 %6790
    %v6792 = vsel %vm235, %v6748, 0.0
    %6793 = vadd.xlane.f32.xlu0 %v6792
    %v6794 = vpop.xlane.xlu0 %6793
    %v6795 = vsel %vm235, %v6749, 0.0
    %6796 = vadd.xlane.f32.xlu0 %v6795
    %v6797 = vpop.xlane.xlu0 %6796
    %v6798 = vsel %vm235, %v6750, 0.0
    %6799 = vadd.xlane.f32.xlu0 %v6798
    %v6800 = vpop.xlane.xlu0 %6799
    %v6801 = vsel %vm235, %v6751, 0.0
    %6802 = vadd.xlane.f32.xlu0 %v6801
    %v6803 = vpop.xlane.xlu0 %6802
    %v6804 = vmul.f32 %v6758, %v290
    %v6805 = vmul.f32 %v6761, %v290
    %v6806 = vmul.f32 %v6764, %v290
    %v6807 = vmul.f32 %v6767, %v290
    %v6808 = vmul.f32 %v6770, %v290
    %v6809 = vmul.f32 %v6773, %v290
    %v6810 = vmul.f32 %v6776, %v290
    %v6811 = vmul.f32 %v6779, %v290
    %v6812 = vmul.f32 %v6782, %v290
    %v6813 = vmul.f32 %v6785, %v290
    %v6814 = vmul.f32 %v6788, %v290
    %v6815 = vmul.f32 %v6791, %v290
    %v6816 = vmul.f32 %v6794, %v290
    %v6817 = vmul.f32 %v6797, %v290
    %v6818 = vmul.f32 %v6800, %v290
    %v6819 = vmul.f32 %v6803, %v290
    %v6820 = vsub.f32 %v6736, %v6804
    %v6821 = vsub.f32 %v6737, %v6805
    %v6822 = vsub.f32 %v6738, %v6806
    %v6823 = vsub.f32 %v6739, %v6807
    %v6824 = vsub.f32 %v6740, %v6808
    %v6825 = vsub.f32 %v6741, %v6809
    %v6826 = vsub.f32 %v6742, %v6810
    %v6827 = vsub.f32 %v6743, %v6811
    %v6828 = vsub.f32 %v6744, %v6812
    %v6829 = vsub.f32 %v6745, %v6813
    %v6830 = vsub.f32 %v6746, %v6814
    %v6831 = vsub.f32 %v6747, %v6815
    %v6832 = vsub.f32 %v6748, %v6816
    %v6833 = vsub.f32 %v6749, %v6817
    %v6834 = vsub.f32 %v6750, %v6818
    %v6835 = vsub.f32 %v6751, %v6819
    %v6836 = vmul.f32 %v6820, %v6820
    %v6837 = vmul.f32 %v6821, %v6821
    %v6838 = vmul.f32 %v6822, %v6822
    %v6839 = vmul.f32 %v6823, %v6823
    %v6840 = vmul.f32 %v6824, %v6824
    %v6841 = vmul.f32 %v6825, %v6825
    %v6842 = vmul.f32 %v6826, %v6826
    %v6843 = vmul.f32 %v6827, %v6827
    %v6844 = vmul.f32 %v6828, %v6828
    %v6845 = vmul.f32 %v6829, %v6829
    %v6846 = vmul.f32 %v6830, %v6830
    %v6847 = vmul.f32 %v6831, %v6831
    %v6848 = vmul.f32 %v6832, %v6832
    %v6849 = vmul.f32 %v6833, %v6833
    %v6850 = vmul.f32 %v6834, %v6834
    %v6851 = vmul.f32 %v6835, %v6835
    %v6852 = vsel %vm235, %v6836, 0.0
    %6853 = vadd.xlane.f32.xlu0 %v6852
    %v6854 = vpop.xlane.xlu0 %6853
    %v6855 = vsel %vm235, %v6837, 0.0
    %6856 = vadd.xlane.f32.xlu0 %v6855
    %v6857 = vpop.xlane.xlu0 %6856
    %v6858 = vsel %vm235, %v6838, 0.0
    %6859 = vadd.xlane.f32.xlu0 %v6858
    %v6860 = vpop.xlane.xlu0 %6859
    %v6861 = vsel %vm235, %v6839, 0.0
    %6862 = vadd.xlane.f32.xlu0 %v6861
    %v6863 = vpop.xlane.xlu0 %6862
    %v6864 = vsel %vm235, %v6840, 0.0
    %6865 = vadd.xlane.f32.xlu0 %v6864
    %v6866 = vpop.xlane.xlu0 %6865
    %v6867 = vsel %vm235, %v6841, 0.0
    %6868 = vadd.xlane.f32.xlu0 %v6867
    %v6869 = vpop.xlane.xlu0 %6868
    %v6870 = vsel %vm235, %v6842, 0.0
    %6871 = vadd.xlane.f32.xlu0 %v6870
    %v6872 = vpop.xlane.xlu0 %6871
    %v6873 = vsel %vm235, %v6843, 0.0
    %6874 = vadd.xlane.f32.xlu0 %v6873
    %v6875 = vpop.xlane.xlu0 %6874
    %v6876 = vsel %vm235, %v6844, 0.0
    %6877 = vadd.xlane.f32.xlu0 %v6876
    %v6878 = vpop.xlane.xlu0 %6877
    %v6879 = vsel %vm235, %v6845, 0.0
    %6880 = vadd.xlane.f32.xlu0 %v6879
    %v6881 = vpop.xlane.xlu0 %6880
    %v6882 = vsel %vm235, %v6846, 0.0
    %6883 = vadd.xlane.f32.xlu0 %v6882
    %v6884 = vpop.xlane.xlu0 %6883
    %v6885 = vsel %vm235, %v6847, 0.0
    %6886 = vadd.xlane.f32.xlu0 %v6885
    %v6887 = vpop.xlane.xlu0 %6886
    %v6888 = vsel %vm235, %v6848, 0.0
    %6889 = vadd.xlane.f32.xlu0 %v6888
    %v6890 = vpop.xlane.xlu0 %6889
    %v6891 = vsel %vm235, %v6849, 0.0
    %6892 = vadd.xlane.f32.xlu0 %v6891
    %v6893 = vpop.xlane.xlu0 %6892
    %v6894 = vsel %vm235, %v6850, 0.0
    %6895 = vadd.xlane.f32.xlu0 %v6894
    %v6896 = vpop.xlane.xlu0 %6895
    %v6897 = vsel %vm235, %v6851, 0.0
    %6898 = vadd.xlane.f32.xlu0 %v6897
    %v6899 = vpop.xlane.xlu0 %6898
    %v6900 = vmul.f32 %v6854, %v290
    %v6901 = vmul.f32 %v6857, %v290
    %v6902 = vmul.f32 %v6860, %v290
    %v6903 = vmul.f32 %v6863, %v290
    %v6904 = vmul.f32 %v6866, %v290
    %v6905 = vmul.f32 %v6869, %v290
    %v6906 = vmul.f32 %v6872, %v290
    %v6907 = vmul.f32 %v6875, %v290
    %v6908 = vmul.f32 %v6878, %v290
    %v6909 = vmul.f32 %v6881, %v290
    %v6910 = vmul.f32 %v6884, %v290
    %v6911 = vmul.f32 %v6887, %v290
    %v6912 = vmul.f32 %v6890, %v290
    %v6913 = vmul.f32 %v6893, %v290
    %v6914 = vmul.f32 %v6896, %v290
    %v6915 = vmul.f32 %v6899, %v290
    %v6916 = vadd.f32 %v6900, 1e-12
    %v6917 = vadd.f32 %v6901, 1e-12
    %v6918 = vadd.f32 %v6902, 1e-12
    %v6919 = vadd.f32 %v6903, 1e-12
    %v6920 = vadd.f32 %v6904, 1e-12
    %v6921 = vadd.f32 %v6905, 1e-12
    %v6922 = vadd.f32 %v6906, 1e-12
    %v6923 = vadd.f32 %v6907, 1e-12
    %v6924 = vadd.f32 %v6908, 1e-12
    %v6925 = vadd.f32 %v6909, 1e-12
    %v6926 = vadd.f32 %v6910, 1e-12
    %v6927 = vadd.f32 %v6911, 1e-12
    %v6928 = vadd.f32 %v6912, 1e-12
    %v6929 = vadd.f32 %v6913, 1e-12
    %v6930 = vadd.f32 %v6914, 1e-12
    %v6931 = vadd.f32 %v6915, 1e-12
    %v6932 = vrsqrt.pop %v6916
    %v6933 = vmul.f32 %v6932, %v6916
    %v6934 = vmul.f32 %v6933, %v6932
    %v6935 = vmul.f32 0.5, %v6934
    %v6936 = vsub.f32 1.5, %v6935
    %v6937 = vmul.f32 %v6932, %v6936
    %vm6938 = vweird.f32 %v6916
    %vm6939 = vweird.f32 %v6932
    %vm6940 = vmor %vm6938, %vm6939
    %v6941 = vsel %vm6940, %v6932, %v6937
    %v6942 = vrsqrt.pop %v6917
    %v6943 = vmul.f32 %v6942, %v6917
    %v6944 = vmul.f32 %v6943, %v6942
    %v6945 = vmul.f32 0.5, %v6944
    %v6946 = vsub.f32 1.5, %v6945
    %v6947 = vmul.f32 %v6942, %v6946
    %vm6948 = vweird.f32 %v6917
    %vm6949 = vweird.f32 %v6942
    %vm6950 = vmor %vm6948, %vm6949
    %v6951 = vsel %vm6950, %v6942, %v6947
    %v6952 = vrsqrt.pop %v6918
    %v6953 = vmul.f32 %v6952, %v6918
    %v6954 = vmul.f32 %v6953, %v6952
    %v6955 = vmul.f32 0.5, %v6954
    %v6956 = vsub.f32 1.5, %v6955
    %v6957 = vmul.f32 %v6952, %v6956
    %vm6958 = vweird.f32 %v6918
    %vm6959 = vweird.f32 %v6952
    %vm6960 = vmor %vm6958, %vm6959
    %v6961 = vsel %vm6960, %v6952, %v6957
    %v6962 = vrsqrt.pop %v6919
    %v6963 = vmul.f32 %v6962, %v6919
    %v6964 = vmul.f32 %v6963, %v6962
    %v6965 = vmul.f32 0.5, %v6964
    %v6966 = vsub.f32 1.5, %v6965
    %v6967 = vmul.f32 %v6962, %v6966
    %vm6968 = vweird.f32 %v6919
    %vm6969 = vweird.f32 %v6962
    %vm6970 = vmor %vm6968, %vm6969
    %v6971 = vsel %vm6970, %v6962, %v6967
    %v6972 = vrsqrt.pop %v6920
    %v6973 = vmul.f32 %v6972, %v6920
    %v6974 = vmul.f32 %v6973, %v6972
    %v6975 = vmul.f32 0.5, %v6974
    %v6976 = vsub.f32 1.5, %v6975
    %v6977 = vmul.f32 %v6972, %v6976
    %vm6978 = vweird.f32 %v6920
    %vm6979 = vweird.f32 %v6972
    %vm6980 = vmor %vm6978, %vm6979
    %v6981 = vsel %vm6980, %v6972, %v6977
    %v6982 = vrsqrt.pop %v6921
    %v6983 = vmul.f32 %v6982, %v6921
    %v6984 = vmul.f32 %v6983, %v6982
    %v6985 = vmul.f32 0.5, %v6984
    %v6986 = vsub.f32 1.5, %v6985
    %v6987 = vmul.f32 %v6982, %v6986
    %vm6988 = vweird.f32 %v6921
    %vm6989 = vweird.f32 %v6982
    %vm6990 = vmor %vm6988, %vm6989
    %v6991 = vsel %vm6990, %v6982, %v6987
    %v6992 = vrsqrt.pop %v6922
    %v6993 = vmul.f32 %v6992, %v6922
    %v6994 = vmul.f32 %v6993, %v6992
    %v6995 = vmul.f32 0.5, %v6994
    %v6996 = vsub.f32 1.5, %v6995
    %v6997 = vmul.f32 %v6992, %v6996
    %vm6998 = vweird.f32 %v6922
    %vm6999 = vweird.f32 %v6992
    %vm7000 = vmor %vm6998, %vm6999
    %v7001 = vsel %vm7000, %v6992, %v6997
    %v7002 = vrsqrt.pop %v6923
    %v7003 = vmul.f32 %v7002, %v6923
    %v7004 = vmul.f32 %v7003, %v7002
    %v7005 = vmul.f32 0.5, %v7004
    %v7006 = vsub.f32 1.5, %v7005
    %v7007 = vmul.f32 %v7002, %v7006
    %vm7008 = vweird.f32 %v6923
    %vm7009 = vweird.f32 %v7002
    %vm7010 = vmor %vm7008, %vm7009
    %v7011 = vsel %vm7010, %v7002, %v7007
    %v7012 = vrsqrt.pop %v6924
    %v7013 = vmul.f32 %v7012, %v6924
    %v7014 = vmul.f32 %v7013, %v7012
    %v7015 = vmul.f32 0.5, %v7014
    %v7016 = vsub.f32 1.5, %v7015
    %v7017 = vmul.f32 %v7012, %v7016
    %vm7018 = vweird.f32 %v6924
    %vm7019 = vweird.f32 %v7012
    %vm7020 = vmor %vm7018, %vm7019
    %v7021 = vsel %vm7020, %v7012, %v7017
    %v7022 = vrsqrt.pop %v6925
    %v7023 = vmul.f32 %v7022, %v6925
    %v7024 = vmul.f32 %v7023, %v7022
    %v7025 = vmul.f32 0.5, %v7024
    %v7026 = vsub.f32 1.5, %v7025
    %v7027 = vmul.f32 %v7022, %v7026
    %vm7028 = vweird.f32 %v6925
    %vm7029 = vweird.f32 %v7022
    %vm7030 = vmor %vm7028, %vm7029
    %v7031 = vsel %vm7030, %v7022, %v7027
    %v7032 = vrsqrt.pop %v6926
    %v7033 = vmul.f32 %v7032, %v6926
    %v7034 = vmul.f32 %v7033, %v7032
    %v7035 = vmul.f32 0.5, %v7034
    %v7036 = vsub.f32 1.5, %v7035
    %v7037 = vmul.f32 %v7032, %v7036
    %vm7038 = vweird.f32 %v6926
    %vm7039 = vweird.f32 %v7032
    %vm7040 = vmor %vm7038, %vm7039
    %v7041 = vsel %vm7040, %v7032, %v7037
    %v7042 = vrsqrt.pop %v6927
    %v7043 = vmul.f32 %v7042, %v6927
    %v7044 = vmul.f32 %v7043, %v7042
    %v7045 = vmul.f32 0.5, %v7044
    %v7046 = vsub.f32 1.5, %v7045
    %v7047 = vmul.f32 %v7042, %v7046
    %vm7048 = vweird.f32 %v6927
    %vm7049 = vweird.f32 %v7042
    %vm7050 = vmor %vm7048, %vm7049
    %v7051 = vsel %vm7050, %v7042, %v7047
    %v7052 = vrsqrt.pop %v6928
    %v7053 = vmul.f32 %v7052, %v6928
    %v7054 = vmul.f32 %v7053, %v7052
    %v7055 = vmul.f32 0.5, %v7054
    %v7056 = vsub.f32 1.5, %v7055
    %v7057 = vmul.f32 %v7052, %v7056
    %vm7058 = vweird.f32 %v6928
    %vm7059 = vweird.f32 %v7052
    %vm7060 = vmor %vm7058, %vm7059
    %v7061 = vsel %vm7060, %v7052, %v7057
    %v7062 = vrsqrt.pop %v6929
    %v7063 = vmul.f32 %v7062, %v6929
    %v7064 = vmul.f32 %v7063, %v7062
    %v7065 = vmul.f32 0.5, %v7064
    %v7066 = vsub.f32 1.5, %v7065
    %v7067 = vmul.f32 %v7062, %v7066
    %vm7068 = vweird.f32 %v6929
    %vm7069 = vweird.f32 %v7062
    %vm7070 = vmor %vm7068, %vm7069
    %v7071 = vsel %vm7070, %v7062, %v7067
    %v7072 = vrsqrt.pop %v6930
    %v7073 = vmul.f32 %v7072, %v6930
    %v7074 = vmul.f32 %v7073, %v7072
    %v7075 = vmul.f32 0.5, %v7074
    %v7076 = vsub.f32 1.5, %v7075
    %v7077 = vmul.f32 %v7072, %v7076
    %vm7078 = vweird.f32 %v6930
    %vm7079 = vweird.f32 %v7072
    %vm7080 = vmor %vm7078, %vm7079
    %v7081 = vsel %vm7080, %v7072, %v7077
    %v7082 = vrsqrt.pop %v6931
    %v7083 = vmul.f32 %v7082, %v6931
    %v7084 = vmul.f32 %v7083, %v7082
    %v7085 = vmul.f32 0.5, %v7084
    %v7086 = vsub.f32 1.5, %v7085
    %v7087 = vmul.f32 %v7082, %v7086
    %vm7088 = vweird.f32 %v6931
    %vm7089 = vweird.f32 %v7082
    %vm7090 = vmor %vm7088, %vm7089
    %v7091 = vsel %vm7090, %v7082, %v7087
    %v7092 = vmul.f32 %v6820, %v6941
    %v7093 = vmul.f32 %v6821, %v6951
    %v7094 = vmul.f32 %v6822, %v6961
    %v7095 = vmul.f32 %v6823, %v6971
    %v7096 = vmul.f32 %v6824, %v6981
    %v7097 = vmul.f32 %v6825, %v6991
    %v7098 = vmul.f32 %v6826, %v7001
    %v7099 = vmul.f32 %v6827, %v7011
    %v7100 = vmul.f32 %v6828, %v7021
    %v7101 = vmul.f32 %v6829, %v7031
    %v7102 = vmul.f32 %v6830, %v7041
    %v7103 = vmul.f32 %v6831, %v7051
    %v7104 = vmul.f32 %v6832, %v7061
    %v7105 = vmul.f32 %v6833, %v7071
    %v7106 = vmul.f32 %v6834, %v7081
    %v7107 = vmul.f32 %v6835, %v7091
    %v7109 = vperm.slane %v6753, 0
    %v7111 = vmul.f32 %v7092, %v7109
    %v7112 = vmul.f32 %v7093, %v7109
    %v7113 = vmul.f32 %v7094, %v7109
    %v7114 = vmul.f32 %v7095, %v7109
    %v7115 = vmul.f32 %v7096, %v7109
    %v7116 = vmul.f32 %v7097, %v7109
    %v7117 = vmul.f32 %v7098, %v7109
    %v7118 = vmul.f32 %v7099, %v7109
    %v7119 = vmul.f32 %v7100, %v7109
    %v7120 = vmul.f32 %v7101, %v7109
    %v7121 = vmul.f32 %v7102, %v7109
    %v7122 = vmul.f32 %v7103, %v7109
    %v7123 = vmul.f32 %v7104, %v7109
    %v7124 = vmul.f32 %v7105, %v7109
    %v7125 = vmul.f32 %v7106, %v7109
    %v7126 = vmul.f32 %v7107, %v7109
    %v7128 = vperm.slane %v6755, 0
    %v7130 = vadd.f32 %v7111, %v7128
    %v7131 = vadd.f32 %v7112, %v7128
    %v7132 = vadd.f32 %v7113, %v7128
    %v7133 = vadd.f32 %v7114, %v7128
    %v7134 = vadd.f32 %v7115, %v7128
    %v7135 = vadd.f32 %v7116, %v7128
    %v7136 = vadd.f32 %v7117, %v7128
    %v7137 = vadd.f32 %v7118, %v7128
    %v7138 = vadd.f32 %v7119, %v7128
    %v7139 = vadd.f32 %v7120, %v7128
    %v7140 = vadd.f32 %v7121, %v7128
    %v7141 = vadd.f32 %v7122, %v7128
    %v7142 = vadd.f32 %v7123, %v7128
    %v7143 = vadd.f32 %v7124, %v7128
    %v7144 = vadd.f32 %v7125, %v7128
    %v7145 = vadd.f32 %v7126, %v7128
    %v7146 = vpack.c.bf16 %v7131, %v7130
    %v7147 = vpack.c.bf16 %v7133, %v7132
    %v7148 = vpack.c.bf16 %v7135, %v7134
    %v7149 = vpack.c.bf16 %v7137, %v7136
    %v7150 = vpack.c.bf16 %v7139, %v7138
    %v7151 = vpack.c.bf16 %v7141, %v7140
    %v7152 = vpack.c.bf16 %v7143, %v7142
    %v7153 = vpack.c.bf16 %v7145, %v7144
    %s7154 = scalar_lea.vmem %s10, 16
    %v7155 = vld [vmem:[%s7154] sm:$0xf]
    %v7156 = vld [vmem:[%s7154 + $0x4] sm:$0xf]
    %v7157 = vld [vmem:[%s7154 + $0x8] sm:$0xf]
    %v7158 = vld [vmem:[%s7154 + $0xc] sm:$0xf]
    %s7159 = scalar_lea.vmem [#allocation12], 1
    %v7160 = vld [vmem:[%s7159] sm:$0x1]
    %v7162 = vperm.slane %v7160, 0
    %v7168 = vunpack.c.l.b16 %v7155
    %v7169 = vunpack.c.l.b16 %v7156
    %v7170 = vunpack.c.l.b16 %v7157
    %v7171 = vunpack.c.l.b16 %v7158
    %v7172 = vpack.c.b16 %v7169, %v7168
    %v7173 = vpack.c.b16 %v7171, %v7170
    %v7177 = vsel %vm235, %v7146, 0
    %v7180 = vsel %vm235, %v7147, 0
    %v7183 = vsel %vm235, %v7148, 0
    %v7186 = vsel %vm235, %v7149, 0
    %v7189 = vsel %vm235, %v7150, 0
    %v7192 = vsel %vm235, %v7151, 0
    %v7195 = vsel %vm235, %v7152, 0
    %v7198 = vsel %vm235, %v7153, 0
    %7200 = vmatpush.bf16.msra.mxu0 0
    %7201 = vmatpush.bf16.msra.mxu0 0
    %7202 = vmatpush.bf16.msra.mxu0 0
    %7203 = vmatpush.bf16.msra.mxu0 0
    %7204 = vmatpush.bf16.msra.mxu0 0
    %7205 = vmatpush.bf16.msra.mxu0 0
    %7206 = vmatpush.bf16.msra.mxu0 %v7173
    %7207 = vmatpush.bf16.msra.mxu0 %v7172
    %7208 = vmatmul.bf16.gmra.mxu0 %v7177
    %v7209 = vpop.f32.mrf.mxu0
    %v7210 = vadd.f32 %v7162, %v7209
    %v7211 = vpop.f32.mrf.mxu0
    %v7212 = vadd.f32 %v7162, %v7211
    %7213 = vmatmul.bf16.gmra.mxu0 %v7180
    %v7214 = vpop.f32.mrf.mxu0
    %v7215 = vadd.f32 %v7162, %v7214
    %v7216 = vpop.f32.mrf.mxu0
    %v7217 = vadd.f32 %v7162, %v7216
    %7218 = vmatmul.bf16.gmra.mxu0 %v7183
    %v7219 = vpop.f32.mrf.mxu0
    %v7220 = vadd.f32 %v7162, %v7219
    %v7221 = vpop.f32.mrf.mxu0
    %v7222 = vadd.f32 %v7162, %v7221
    %7223 = vmatmul.bf16.gmra.mxu0 %v7186
    %v7224 = vpop.f32.mrf.mxu0
    %v7225 = vadd.f32 %v7162, %v7224
    %v7226 = vpop.f32.mrf.mxu0
    %v7227 = vadd.f32 %v7162, %v7226
    %7228 = vmatmul.bf16.gmra.mxu0 %v7189
    %v7229 = vpop.f32.mrf.mxu0
    %v7230 = vadd.f32 %v7162, %v7229
    %v7231 = vpop.f32.mrf.mxu0
    %v7232 = vadd.f32 %v7162, %v7231
    %7233 = vmatmul.bf16.gmra.mxu0 %v7192
    %v7234 = vpop.f32.mrf.mxu0
    %v7235 = vadd.f32 %v7162, %v7234
    %v7236 = vpop.f32.mrf.mxu0
    %v7237 = vadd.f32 %v7162, %v7236
    %7238 = vmatmul.bf16.gmra.mxu0 %v7195
    %v7239 = vpop.f32.mrf.mxu0
    %v7240 = vadd.f32 %v7162, %v7239
    %v7241 = vpop.f32.mrf.mxu0
    %v7242 = vadd.f32 %v7162, %v7241
    %7243 = vmatmul.bf16.gmra.mxu0 %v7198
    %v7244 = vpop.f32.mrf.mxu0
    %v7245 = vadd.f32 %v7162, %v7244
    %v7246 = vpop.f32.mrf.mxu0
    %v7247 = vadd.f32 %v7162, %v7246
    %7248 = vdwg.mxu0
    %v7249 = vmul.f32 %v7210, %v7210
    %v7250 = vmul.f32 %v7212, %v7212
    %v7251 = vmul.f32 %v7215, %v7215
    %v7252 = vmul.f32 %v7217, %v7217
    %v7253 = vmul.f32 %v7220, %v7220
    %v7254 = vmul.f32 %v7222, %v7222
    %v7255 = vmul.f32 %v7225, %v7225
    %v7256 = vmul.f32 %v7227, %v7227
    %v7257 = vmul.f32 %v7230, %v7230
    %v7258 = vmul.f32 %v7232, %v7232
    %v7259 = vmul.f32 %v7235, %v7235
    %v7260 = vmul.f32 %v7237, %v7237
    %v7261 = vmul.f32 %v7240, %v7240
    %v7262 = vmul.f32 %v7242, %v7242
    %v7263 = vmul.f32 %v7245, %v7245
    %v7264 = vmul.f32 %v7247, %v7247
    %v7265 = vmul.f32 %v7210, %v7249
    %v7266 = vmul.f32 %v7212, %v7250
    %v7267 = vmul.f32 %v7215, %v7251
    %v7268 = vmul.f32 %v7217, %v7252
    %v7269 = vmul.f32 %v7220, %v7253
    %v7270 = vmul.f32 %v7222, %v7254
    %v7271 = vmul.f32 %v7225, %v7255
    %v7272 = vmul.f32 %v7227, %v7256
    %v7273 = vmul.f32 %v7230, %v7257
    %v7274 = vmul.f32 %v7232, %v7258
    %v7275 = vmul.f32 %v7235, %v7259
    %v7276 = vmul.f32 %v7237, %v7260
    %v7277 = vmul.f32 %v7240, %v7261
    %v7278 = vmul.f32 %v7242, %v7262
    %v7279 = vmul.f32 %v7245, %v7263
    %v7280 = vmul.f32 %v7247, %v7264
    %v7281 = vmul.f32 %v7265, 0.044715
    %v7282 = vmul.f32 %v7266, 0.044715
    %v7283 = vmul.f32 %v7267, 0.044715
    %v7284 = vmul.f32 %v7268, 0.044715
    %v7285 = vmul.f32 %v7269, 0.044715
    %v7286 = vmul.f32 %v7270, 0.044715
    %v7287 = vmul.f32 %v7271, 0.044715
    %v7288 = vmul.f32 %v7272, 0.044715
    %v7289 = vmul.f32 %v7273, 0.044715
    %v7290 = vmul.f32 %v7274, 0.044715
    %v7291 = vmul.f32 %v7275, 0.044715
    %v7292 = vmul.f32 %v7276, 0.044715
    %v7293 = vmul.f32 %v7277, 0.044715
    %v7294 = vmul.f32 %v7278, 0.044715
    %v7295 = vmul.f32 %v7279, 0.044715
    %v7296 = vmul.f32 %v7280, 0.044715
    %v7297 = vadd.f32 %v7210, %v7281
    %v7298 = vadd.f32 %v7212, %v7282
    %v7299 = vadd.f32 %v7215, %v7283
    %v7300 = vadd.f32 %v7217, %v7284
    %v7301 = vadd.f32 %v7220, %v7285
    %v7302 = vadd.f32 %v7222, %v7286
    %v7303 = vadd.f32 %v7225, %v7287
    %v7304 = vadd.f32 %v7227, %v7288
    %v7305 = vadd.f32 %v7230, %v7289
    %v7306 = vadd.f32 %v7232, %v7290
    %v7307 = vadd.f32 %v7235, %v7291
    %v7308 = vadd.f32 %v7237, %v7292
    %v7309 = vadd.f32 %v7240, %v7293
    %v7310 = vadd.f32 %v7242, %v7294
    %v7311 = vadd.f32 %v7245, %v7295
    %v7312 = vadd.f32 %v7247, %v7296
    %v7313 = vmul.f32 %v7297, 0.7978846
    %v7314 = vmul.f32 %v7298, 0.7978846
    %v7315 = vmul.f32 %v7299, 0.7978846
    %v7316 = vmul.f32 %v7300, 0.7978846
    %v7317 = vmul.f32 %v7301, 0.7978846
    %v7318 = vmul.f32 %v7302, 0.7978846
    %v7319 = vmul.f32 %v7303, 0.7978846
    %v7320 = vmul.f32 %v7304, 0.7978846
    %v7321 = vmul.f32 %v7305, 0.7978846
    %v7322 = vmul.f32 %v7306, 0.7978846
    %v7323 = vmul.f32 %v7307, 0.7978846
    %v7324 = vmul.f32 %v7308, 0.7978846
    %v7325 = vmul.f32 %v7309, 0.7978846
    %v7326 = vmul.f32 %v7310, 0.7978846
    %v7327 = vmul.f32 %v7311, 0.7978846
    %v7328 = vmul.f32 %v7312, 0.7978846
    %v7329 = vtanh.pop %v7313
    %v7330 = vtanh.pop %v7314
    %v7331 = vtanh.pop %v7315
    %v7332 = vtanh.pop %v7316
    %v7333 = vtanh.pop %v7317
    %v7334 = vtanh.pop %v7318
    %v7335 = vtanh.pop %v7319
    %v7336 = vtanh.pop %v7320
    %v7337 = vtanh.pop %v7321
    %v7338 = vtanh.pop %v7322
    %v7339 = vtanh.pop %v7323
    %v7340 = vtanh.pop %v7324
    %v7341 = vtanh.pop %v7325
    %v7342 = vtanh.pop %v7326
    %v7343 = vtanh.pop %v7327
    %v7344 = vtanh.pop %v7328
    %v7345 = vadd.f32 %v7329, 1.0
    %v7346 = vadd.f32 %v7330, 1.0
    %v7347 = vadd.f32 %v7331, 1.0
    %v7348 = vadd.f32 %v7332, 1.0
    %v7349 = vadd.f32 %v7333, 1.0
    %v7350 = vadd.f32 %v7334, 1.0
    %v7351 = vadd.f32 %v7335, 1.0
    %v7352 = vadd.f32 %v7336, 1.0
    %v7353 = vadd.f32 %v7337, 1.0
    %v7354 = vadd.f32 %v7338, 1.0
    %v7355 = vadd.f32 %v7339, 1.0
    %v7356 = vadd.f32 %v7340, 1.0
    %v7357 = vadd.f32 %v7341, 1.0
    %v7358 = vadd.f32 %v7342, 1.0
    %v7359 = vadd.f32 %v7343, 1.0
    %v7360 = vadd.f32 %v7344, 1.0
    %v7361 = vmul.f32 %v7345, 0.5
    %v7362 = vmul.f32 %v7346, 0.5
    %v7363 = vmul.f32 %v7347, 0.5
    %v7364 = vmul.f32 %v7348, 0.5
    %v7365 = vmul.f32 %v7349, 0.5
    %v7366 = vmul.f32 %v7350, 0.5
    %v7367 = vmul.f32 %v7351, 0.5
    %v7368 = vmul.f32 %v7352, 0.5
    %v7369 = vmul.f32 %v7353, 0.5
    %v7370 = vmul.f32 %v7354, 0.5
    %v7371 = vmul.f32 %v7355, 0.5
    %v7372 = vmul.f32 %v7356, 0.5
    %v7373 = vmul.f32 %v7357, 0.5
    %v7374 = vmul.f32 %v7358, 0.5
    %v7375 = vmul.f32 %v7359, 0.5
    %v7376 = vmul.f32 %v7360, 0.5
    %v7377 = vmul.f32 %v7210, %v7361
    %v7378 = vmul.f32 %v7212, %v7362
    %v7379 = vmul.f32 %v7215, %v7363
    %v7380 = vmul.f32 %v7217, %v7364
    %v7381 = vmul.f32 %v7220, %v7365
    %v7382 = vmul.f32 %v7222, %v7366
    %v7383 = vmul.f32 %v7225, %v7367
    %v7384 = vmul.f32 %v7227, %v7368
    %v7385 = vmul.f32 %v7230, %v7369
    %v7386 = vmul.f32 %v7232, %v7370
    %v7387 = vmul.f32 %v7235, %v7371
    %v7388 = vmul.f32 %v7237, %v7372
    %v7389 = vmul.f32 %v7240, %v7373
    %v7390 = vmul.f32 %v7242, %v7374
    %v7391 = vmul.f32 %v7245, %v7375
    %v7392 = vmul.f32 %v7247, %v7376
    %v7393 = vpack.c.bf16 %v7378, %v7377
    %v7394 = vpack.c.bf16 %v7380, %v7379
    %v7395 = vpack.c.bf16 %v7382, %v7381
    %v7396 = vpack.c.bf16 %v7384, %v7383
    %v7397 = vpack.c.bf16 %v7386, %v7385
    %v7398 = vpack.c.bf16 %v7388, %v7387
    %v7399 = vpack.c.bf16 %v7390, %v7389
    %v7400 = vpack.c.bf16 %v7392, %v7391
    %s7401 = scalar_lea.vmem %s12, 32
    %v7402 = vld [vmem:[%s7401] sm:$0xf]
    %v7403 = vld [vmem:[%s7401 + $0x4] sm:$0xf]
    %v7404 = vld [vmem:[%s7401 + $0x8] sm:$0xf]
    %v7405 = vld [vmem:[%s7401 + $0xc] sm:$0xf]
    %v7406 = vld [vmem:[%s7401 + $0x10] sm:$0xf]
    %v7407 = vld [vmem:[%s7401 + $0x14] sm:$0xf]
    %v7408 = vld [vmem:[%s7401 + $0x18] sm:$0xf]
    %v7409 = vld [vmem:[%s7401 + $0x1c] sm:$0xf]
    %s7410 = scalar_lea.vmem [#allocation14], 1
    %v7411 = vld [vmem:[%s7410] sm:$0x1]
    %v7413 = vperm.slane %v7411, 0
    %v7423 = vunpack.c.l.b16 %v7402
    %v7424 = vunpack.c.l.b16 %v7403
    %v7425 = vunpack.c.l.b16 %v7404
    %v7426 = vunpack.c.l.b16 %v7405
    %v7427 = vunpack.c.l.b16 %v7406
    %v7428 = vunpack.c.l.b16 %v7407
    %v7429 = vunpack.c.l.b16 %v7408
    %v7430 = vunpack.c.l.b16 %v7409
    %v7431 = vpack.c.b16 %v7424, %v7423
    %v7432 = vpack.c.b16 %v7426, %v7425
    %v7433 = vpack.c.b16 %v7428, %v7427
    %v7434 = vpack.c.b16 %v7430, %v7429
    %v7440 = vsel %vm3807, %v7393, 0
    %v7443 = vsel %vm3807, %v7394, 0
    %v7446 = vsel %vm3807, %v7395, 0
    %v7449 = vsel %vm3807, %v7396, 0
    %v7452 = vsel %vm3807, %v7397, 0
    %v7455 = vsel %vm3807, %v7398, 0
    %v7458 = vsel %vm3807, %v7399, 0
    %v7461 = vsel %vm3807, %v7400, 0
    %7463 = vmatpush.bf16.msra.mxu0 0
    %7464 = vmatpush.bf16.msra.mxu0 0
    %7465 = vmatpush.bf16.msra.mxu0 0
    %7466 = vmatpush.bf16.msra.mxu0 0
    %7467 = vmatpush.bf16.msra.mxu0 %v7434
    %7468 = vmatpush.bf16.msra.mxu0 %v7433
    %7469 = vmatpush.bf16.msra.mxu0 %v7432
    %7470 = vmatpush.bf16.msra.mxu0 %v7431
    %7471 = vmatmul.bf16.gmra.mxu0 %v7440
    %v7472 = vpop.f32.mrf.mxu0
    %v7473 = vadd.f32 %v7413, %v7472
    %v7474 = vpop.f32.mrf.mxu0
    %v7475 = vadd.f32 %v7413, %v7474
    %7476 = vmatmul.bf16.gmra.mxu0 %v7443
    %v7477 = vpop.f32.mrf.mxu0
    %v7478 = vadd.f32 %v7413, %v7477
    %v7479 = vpop.f32.mrf.mxu0
    %v7480 = vadd.f32 %v7413, %v7479
    %7481 = vmatmul.bf16.gmra.mxu0 %v7446
    %v7482 = vpop.f32.mrf.mxu0
    %v7483 = vadd.f32 %v7413, %v7482
    %v7484 = vpop.f32.mrf.mxu0
    %v7485 = vadd.f32 %v7413, %v7484
    %7486 = vmatmul.bf16.gmra.mxu0 %v7449
    %v7487 = vpop.f32.mrf.mxu0
    %v7488 = vadd.f32 %v7413, %v7487
    %v7489 = vpop.f32.mrf.mxu0
    %v7490 = vadd.f32 %v7413, %v7489
    %7491 = vmatmul.bf16.gmra.mxu0 %v7452
    %v7492 = vpop.f32.mrf.mxu0
    %v7493 = vadd.f32 %v7413, %v7492
    %v7494 = vpop.f32.mrf.mxu0
    %v7495 = vadd.f32 %v7413, %v7494
    %7496 = vmatmul.bf16.gmra.mxu0 %v7455
    %v7497 = vpop.f32.mrf.mxu0
    %v7498 = vadd.f32 %v7413, %v7497
    %v7499 = vpop.f32.mrf.mxu0
    %v7500 = vadd.f32 %v7413, %v7499
    %7501 = vmatmul.bf16.gmra.mxu0 %v7458
    %v7502 = vpop.f32.mrf.mxu0
    %v7503 = vadd.f32 %v7413, %v7502
    %v7504 = vpop.f32.mrf.mxu0
    %v7505 = vadd.f32 %v7413, %v7504
    %7506 = vmatmul.bf16.gmra.mxu0 %v7461
    %v7507 = vpop.f32.mrf.mxu0
    %v7508 = vadd.f32 %v7413, %v7507
    %v7509 = vpop.f32.mrf.mxu0
    %v7510 = vadd.f32 %v7413, %v7509
    %7511 = vdwg.mxu0
    %v7512 = vadd.f32 %v7473, %v7130
    %v7513 = vadd.f32 %v7475, %v7131
    %v7514 = vadd.f32 %v7478, %v7132
    %v7515 = vadd.f32 %v7480, %v7133
    %v7516 = vadd.f32 %v7483, %v7134
    %v7517 = vadd.f32 %v7485, %v7135
    %v7518 = vadd.f32 %v7488, %v7136
    %v7519 = vadd.f32 %v7490, %v7137
    %v7520 = vadd.f32 %v7493, %v7138
    %v7521 = vadd.f32 %v7495, %v7139
    %v7522 = vadd.f32 %v7498, %v7140
    %v7523 = vadd.f32 %v7500, %v7141
    %v7524 = vadd.f32 %v7503, %v7142
    %v7525 = vadd.f32 %v7505, %v7143
    %v7526 = vadd.f32 %v7508, %v7144
    %v7527 = vadd.f32 %v7510, %v7145
    %s7528 = scalar_lea.vmem %s14, 1
    %v7529 = vld [vmem:[%s7528] sm:$0x1]
    %s7530 = scalar_lea.vmem [#allocation15], 1
    %v7531 = vld [vmem:[%s7530] sm:$0x1]
    %v7532 = vsel %vm235, %v7512, 0.0
    %7533 = vadd.xlane.f32.xlu0 %v7532
    %v7534 = vpop.xlane.xlu0 %7533
    %v7535 = vsel %vm235, %v7513, 0.0
    %7536 = vadd.xlane.f32.xlu0 %v7535
    %v7537 = vpop.xlane.xlu0 %7536
    %v7538 = vsel %vm235, %v7514, 0.0
    %7539 = vadd.xlane.f32.xlu0 %v7538
    %v7540 = vpop.xlane.xlu0 %7539
    %v7541 = vsel %vm235, %v7515, 0.0
    %7542 = vadd.xlane.f32.xlu0 %v7541
    %v7543 = vpop.xlane.xlu0 %7542
    %v7544 = vsel %vm235, %v7516, 0.0
    %7545 = vadd.xlane.f32.xlu0 %v7544
    %v7546 = vpop.xlane.xlu0 %7545
    %v7547 = vsel %vm235, %v7517, 0.0
    %7548 = vadd.xlane.f32.xlu0 %v7547
    %v7549 = vpop.xlane.xlu0 %7548
    %v7550 = vsel %vm235, %v7518, 0.0
    %7551 = vadd.xlane.f32.xlu0 %v7550
    %v7552 = vpop.xlane.xlu0 %7551
    %v7553 = vsel %vm235, %v7519, 0.0
    %7554 = vadd.xlane.f32.xlu0 %v7553
    %v7555 = vpop.xlane.xlu0 %7554
    %v7556 = vsel %vm235, %v7520, 0.0
    %7557 = vadd.xlane.f32.xlu0 %v7556
    %v7558 = vpop.xlane.xlu0 %7557
    %v7559 = vsel %vm235, %v7521, 0.0
    %7560 = vadd.xlane.f32.xlu0 %v7559
    %v7561 = vpop.xlane.xlu0 %7560
    %v7562 = vsel %vm235, %v7522, 0.0
    %7563 = vadd.xlane.f32.xlu0 %v7562
    %v7564 = vpop.xlane.xlu0 %7563
    %v7565 = vsel %vm235, %v7523, 0.0
    %7566 = vadd.xlane.f32.xlu0 %v7565
    %v7567 = vpop.xlane.xlu0 %7566
    %v7568 = vsel %vm235, %v7524, 0.0
    %7569 = vadd.xlane.f32.xlu0 %v7568
    %v7570 = vpop.xlane.xlu0 %7569
    %v7571 = vsel %vm235, %v7525, 0.0
    %7572 = vadd.xlane.f32.xlu0 %v7571
    %v7573 = vpop.xlane.xlu0 %7572
    %v7574 = vsel %vm235, %v7526, 0.0
    %7575 = vadd.xlane.f32.xlu0 %v7574
    %v7576 = vpop.xlane.xlu0 %7575
    %v7577 = vsel %vm235, %v7527, 0.0
    %7578 = vadd.xlane.f32.xlu0 %v7577
    %v7579 = vpop.xlane.xlu0 %7578
    %v7580 = vmul.f32 %v7534, %v290
    %v7581 = vmul.f32 %v7537, %v290
    %v7582 = vmul.f32 %v7540, %v290
    %v7583 = vmul.f32 %v7543, %v290
    %v7584 = vmul.f32 %v7546, %v290
    %v7585 = vmul.f32 %v7549, %v290
    %v7586 = vmul.f32 %v7552, %v290
    %v7587 = vmul.f32 %v7555, %v290
    %v7588 = vmul.f32 %v7558, %v290
    %v7589 = vmul.f32 %v7561, %v290
    %v7590 = vmul.f32 %v7564, %v290
    %v7591 = vmul.f32 %v7567, %v290
    %v7592 = vmul.f32 %v7570, %v290
    %v7593 = vmul.f32 %v7573, %v290
    %v7594 = vmul.f32 %v7576, %v290
    %v7595 = vmul.f32 %v7579, %v290
    %v7596 = vsub.f32 %v7512, %v7580
    %v7597 = vsub.f32 %v7513, %v7581
    %v7598 = vsub.f32 %v7514, %v7582
    %v7599 = vsub.f32 %v7515, %v7583
    %v7600 = vsub.f32 %v7516, %v7584
    %v7601 = vsub.f32 %v7517, %v7585
    %v7602 = vsub.f32 %v7518, %v7586
    %v7603 = vsub.f32 %v7519, %v7587
    %v7604 = vsub.f32 %v7520, %v7588
    %v7605 = vsub.f32 %v7521, %v7589
    %v7606 = vsub.f32 %v7522, %v7590
    %v7607 = vsub.f32 %v7523, %v7591
    %v7608 = vsub.f32 %v7524, %v7592
    %v7609 = vsub.f32 %v7525, %v7593
    %v7610 = vsub.f32 %v7526, %v7594
    %v7611 = vsub.f32 %v7527, %v7595
    %v7612 = vmul.f32 %v7596, %v7596
    %v7613 = vmul.f32 %v7597, %v7597
    %v7614 = vmul.f32 %v7598, %v7598
    %v7615 = vmul.f32 %v7599, %v7599
    %v7616 = vmul.f32 %v7600, %v7600
    %v7617 = vmul.f32 %v7601, %v7601
    %v7618 = vmul.f32 %v7602, %v7602
    %v7619 = vmul.f32 %v7603, %v7603
    %v7620 = vmul.f32 %v7604, %v7604
    %v7621 = vmul.f32 %v7605, %v7605
    %v7622 = vmul.f32 %v7606, %v7606
    %v7623 = vmul.f32 %v7607, %v7607
    %v7624 = vmul.f32 %v7608, %v7608
    %v7625 = vmul.f32 %v7609, %v7609
    %v7626 = vmul.f32 %v7610, %v7610
    %v7627 = vmul.f32 %v7611, %v7611
    %v7628 = vsel %vm235, %v7612, 0.0
    %7629 = vadd.xlane.f32.xlu0 %v7628
    %v7630 = vpop.xlane.xlu0 %7629
    %v7631 = vsel %vm235, %v7613, 0.0
    %7632 = vadd.xlane.f32.xlu0 %v7631
    %v7633 = vpop.xlane.xlu0 %7632
    %v7634 = vsel %vm235, %v7614, 0.0
    %7635 = vadd.xlane.f32.xlu0 %v7634
    %v7636 = vpop.xlane.xlu0 %7635
    %v7637 = vsel %vm235, %v7615, 0.0
    %7638 = vadd.xlane.f32.xlu0 %v7637
    %v7639 = vpop.xlane.xlu0 %7638
    %v7640 = vsel %vm235, %v7616, 0.0
    %7641 = vadd.xlane.f32.xlu0 %v7640
    %v7642 = vpop.xlane.xlu0 %7641
    %v7643 = vsel %vm235, %v7617, 0.0
    %7644 = vadd.xlane.f32.xlu0 %v7643
    %v7645 = vpop.xlane.xlu0 %7644
    %v7646 = vsel %vm235, %v7618, 0.0
    %7647 = vadd.xlane.f32.xlu0 %v7646
    %v7648 = vpop.xlane.xlu0 %7647
    %v7649 = vsel %vm235, %v7619, 0.0
    %7650 = vadd.xlane.f32.xlu0 %v7649
    %v7651 = vpop.xlane.xlu0 %7650
    %v7652 = vsel %vm235, %v7620, 0.0
    %7653 = vadd.xlane.f32.xlu0 %v7652
    %v7654 = vpop.xlane.xlu0 %7653
    %v7655 = vsel %vm235, %v7621, 0.0
    %7656 = vadd.xlane.f32.xlu0 %v7655
    %v7657 = vpop.xlane.xlu0 %7656
    %v7658 = vsel %vm235, %v7622, 0.0
    %7659 = vadd.xlane.f32.xlu0 %v7658
    %v7660 = vpop.xlane.xlu0 %7659
    %v7661 = vsel %vm235, %v7623, 0.0
    %7662 = vadd.xlane.f32.xlu0 %v7661
    %v7663 = vpop.xlane.xlu0 %7662
    %v7664 = vsel %vm235, %v7624, 0.0
    %7665 = vadd.xlane.f32.xlu0 %v7664
    %v7666 = vpop.xlane.xlu0 %7665
    %v7667 = vsel %vm235, %v7625, 0.0
    %7668 = vadd.xlane.f32.xlu0 %v7667
    %v7669 = vpop.xlane.xlu0 %7668
    %v7670 = vsel %vm235, %v7626, 0.0
    %7671 = vadd.xlane.f32.xlu0 %v7670
    %v7672 = vpop.xlane.xlu0 %7671
    %v7673 = vsel %vm235, %v7627, 0.0
    %7674 = vadd.xlane.f32.xlu0 %v7673
    %v7675 = vpop.xlane.xlu0 %7674
    %v7676 = vmul.f32 %v7630, %v290
    %v7677 = vmul.f32 %v7633, %v290
    %v7678 = vmul.f32 %v7636, %v290
    %v7679 = vmul.f32 %v7639, %v290
    %v7680 = vmul.f32 %v7642, %v290
    %v7681 = vmul.f32 %v7645, %v290
    %v7682 = vmul.f32 %v7648, %v290
    %v7683 = vmul.f32 %v7651, %v290
    %v7684 = vmul.f32 %v7654, %v290
    %v7685 = vmul.f32 %v7657, %v290
    %v7686 = vmul.f32 %v7660, %v290
    %v7687 = vmul.f32 %v7663, %v290
    %v7688 = vmul.f32 %v7666, %v290
    %v7689 = vmul.f32 %v7669, %v290
    %v7690 = vmul.f32 %v7672, %v290
    %v7691 = vmul.f32 %v7675, %v290
    %v7692 = vadd.f32 %v7676, 1e-12
    %v7693 = vadd.f32 %v7677, 1e-12
    %v7694 = vadd.f32 %v7678, 1e-12
    %v7695 = vadd.f32 %v7679, 1e-12
    %v7696 = vadd.f32 %v7680, 1e-12
    %v7697 = vadd.f32 %v7681, 1e-12
    %v7698 = vadd.f32 %v7682, 1e-12
    %v7699 = vadd.f32 %v7683, 1e-12
    %v7700 = vadd.f32 %v7684, 1e-12
    %v7701 = vadd.f32 %v7685, 1e-12
    %v7702 = vadd.f32 %v7686, 1e-12
    %v7703 = vadd.f32 %v7687, 1e-12
    %v7704 = vadd.f32 %v7688, 1e-12
    %v7705 = vadd.f32 %v7689, 1e-12
    %v7706 = vadd.f32 %v7690, 1e-12
    %v7707 = vadd.f32 %v7691, 1e-12
    %v7708 = vrsqrt.pop %v7692
    %v7709 = vmul.f32 %v7708, %v7692
    %v7710 = vmul.f32 %v7709, %v7708
    %v7711 = vmul.f32 0.5, %v7710
    %v7712 = vsub.f32 1.5, %v7711
    %v7713 = vmul.f32 %v7708, %v7712
    %vm7714 = vweird.f32 %v7692
    %vm7715 = vweird.f32 %v7708
    %vm7716 = vmor %vm7714, %vm7715
    %v7717 = vsel %vm7716, %v7708, %v7713
    %v7718 = vrsqrt.pop %v7693
    %v7719 = vmul.f32 %v7718, %v7693
    %v7720 = vmul.f32 %v7719, %v7718
    %v7721 = vmul.f32 0.5, %v7720
    %v7722 = vsub.f32 1.5, %v7721
    %v7723 = vmul.f32 %v7718, %v7722
    %vm7724 = vweird.f32 %v7693
    %vm7725 = vweird.f32 %v7718
    %vm7726 = vmor %vm7724, %vm7725
    %v7727 = vsel %vm7726, %v7718, %v7723
    %v7728 = vrsqrt.pop %v7694
    %v7729 = vmul.f32 %v7728, %v7694
    %v7730 = vmul.f32 %v7729, %v7728
    %v7731 = vmul.f32 0.5, %v7730
    %v7732 = vsub.f32 1.5, %v7731
    %v7733 = vmul.f32 %v7728, %v7732
    %vm7734 = vweird.f32 %v7694
    %vm7735 = vweird.f32 %v7728
    %vm7736 = vmor %vm7734, %vm7735
    %v7737 = vsel %vm7736, %v7728, %v7733
    %v7738 = vrsqrt.pop %v7695
    %v7739 = vmul.f32 %v7738, %v7695
    %v7740 = vmul.f32 %v7739, %v7738
    %v7741 = vmul.f32 0.5, %v7740
    %v7742 = vsub.f32 1.5, %v7741
    %v7743 = vmul.f32 %v7738, %v7742
    %vm7744 = vweird.f32 %v7695
    %vm7745 = vweird.f32 %v7738
    %vm7746 = vmor %vm7744, %vm7745
    %v7747 = vsel %vm7746, %v7738, %v7743
    %v7748 = vrsqrt.pop %v7696
    %v7749 = vmul.f32 %v7748, %v7696
    %v7750 = vmul.f32 %v7749, %v7748
    %v7751 = vmul.f32 0.5, %v7750
    %v7752 = vsub.f32 1.5, %v7751
    %v7753 = vmul.f32 %v7748, %v7752
    %vm7754 = vweird.f32 %v7696
    %vm7755 = vweird.f32 %v7748
    %vm7756 = vmor %vm7754, %vm7755
    %v7757 = vsel %vm7756, %v7748, %v7753
    %v7758 = vrsqrt.pop %v7697
    %v7759 = vmul.f32 %v7758, %v7697
    %v7760 = vmul.f32 %v7759, %v7758
    %v7761 = vmul.f32 0.5, %v7760
    %v7762 = vsub.f32 1.5, %v7761
    %v7763 = vmul.f32 %v7758, %v7762
    %vm7764 = vweird.f32 %v7697
    %vm7765 = vweird.f32 %v7758
    %vm7766 = vmor %vm7764, %vm7765
    %v7767 = vsel %vm7766, %v7758, %v7763
    %v7768 = vrsqrt.pop %v7698
    %v7769 = vmul.f32 %v7768, %v7698
    %v7770 = vmul.f32 %v7769, %v7768
    %v7771 = vmul.f32 0.5, %v7770
    %v7772 = vsub.f32 1.5, %v7771
    %v7773 = vmul.f32 %v7768, %v7772
    %vm7774 = vweird.f32 %v7698
    %vm7775 = vweird.f32 %v7768
    %vm7776 = vmor %vm7774, %vm7775
    %v7777 = vsel %vm7776, %v7768, %v7773
    %v7778 = vrsqrt.pop %v7699
    %v7779 = vmul.f32 %v7778, %v7699
    %v7780 = vmul.f32 %v7779, %v7778
    %v7781 = vmul.f32 0.5, %v7780
    %v7782 = vsub.f32 1.5, %v7781
    %v7783 = vmul.f32 %v7778, %v7782
    %vm7784 = vweird.f32 %v7699
    %vm7785 = vweird.f32 %v7778
    %vm7786 = vmor %vm7784, %vm7785
    %v7787 = vsel %vm7786, %v7778, %v7783
    %v7788 = vrsqrt.pop %v7700
    %v7789 = vmul.f32 %v7788, %v7700
    %v7790 = vmul.f32 %v7789, %v7788
    %v7791 = vmul.f32 0.5, %v7790
    %v7792 = vsub.f32 1.5, %v7791
    %v7793 = vmul.f32 %v7788, %v7792
    %vm7794 = vweird.f32 %v7700
    %vm7795 = vweird.f32 %v7788
    %vm7796 = vmor %vm7794, %vm7795
    %v7797 = vsel %vm7796, %v7788, %v7793
    %v7798 = vrsqrt.pop %v7701
    %v7799 = vmul.f32 %v7798, %v7701
    %v7800 = vmul.f32 %v7799, %v7798
    %v7801 = vmul.f32 0.5, %v7800
    %v7802 = vsub.f32 1.5, %v7801
    %v7803 = vmul.f32 %v7798, %v7802
    %vm7804 = vweird.f32 %v7701
    %vm7805 = vweird.f32 %v7798
    %vm7806 = vmor %vm7804, %vm7805
    %v7807 = vsel %vm7806, %v7798, %v7803
    %v7808 = vrsqrt.pop %v7702
    %v7809 = vmul.f32 %v7808, %v7702
    %v7810 = vmul.f32 %v7809, %v7808
    %v7811 = vmul.f32 0.5, %v7810
    %v7812 = vsub.f32 1.5, %v7811
    %v7813 = vmul.f32 %v7808, %v7812
    %vm7814 = vweird.f32 %v7702
    %vm7815 = vweird.f32 %v7808
    %vm7816 = vmor %vm7814, %vm7815
    %v7817 = vsel %vm7816, %v7808, %v7813
    %v7818 = vrsqrt.pop %v7703
    %v7819 = vmul.f32 %v7818, %v7703
    %v7820 = vmul.f32 %v7819, %v7818
    %v7821 = vmul.f32 0.5, %v7820
    %v7822 = vsub.f32 1.5, %v7821
    %v7823 = vmul.f32 %v7818, %v7822
    %vm7824 = vweird.f32 %v7703
    %vm7825 = vweird.f32 %v7818
    %vm7826 = vmor %vm7824, %vm7825
    %v7827 = vsel %vm7826, %v7818, %v7823
    %v7828 = vrsqrt.pop %v7704
    %v7829 = vmul.f32 %v7828, %v7704
    %v7830 = vmul.f32 %v7829, %v7828
    %v7831 = vmul.f32 0.5, %v7830
    %v7832 = vsub.f32 1.5, %v7831
    %v7833 = vmul.f32 %v7828, %v7832
    %vm7834 = vweird.f32 %v7704
    %vm7835 = vweird.f32 %v7828
    %vm7836 = vmor %vm7834, %vm7835
    %v7837 = vsel %vm7836, %v7828, %v7833
    %v7838 = vrsqrt.pop %v7705
    %v7839 = vmul.f32 %v7838, %v7705
    %v7840 = vmul.f32 %v7839, %v7838
    %v7841 = vmul.f32 0.5, %v7840
    %v7842 = vsub.f32 1.5, %v7841
    %v7843 = vmul.f32 %v7838, %v7842
    %vm7844 = vweird.f32 %v7705
    %vm7845 = vweird.f32 %v7838
    %vm7846 = vmor %vm7844, %vm7845
    %v7847 = vsel %vm7846, %v7838, %v7843
    %v7848 = vrsqrt.pop %v7706
    %v7849 = vmul.f32 %v7848, %v7706
    %v7850 = vmul.f32 %v7849, %v7848
    %v7851 = vmul.f32 0.5, %v7850
    %v7852 = vsub.f32 1.5, %v7851
    %v7853 = vmul.f32 %v7848, %v7852
    %vm7854 = vweird.f32 %v7706
    %vm7855 = vweird.f32 %v7848
    %vm7856 = vmor %vm7854, %vm7855
    %v7857 = vsel %vm7856, %v7848, %v7853
    %v7858 = vrsqrt.pop %v7707
    %v7859 = vmul.f32 %v7858, %v7707
    %v7860 = vmul.f32 %v7859, %v7858
    %v7861 = vmul.f32 0.5, %v7860
    %v7862 = vsub.f32 1.5, %v7861
    %v7863 = vmul.f32 %v7858, %v7862
    %vm7864 = vweird.f32 %v7707
    %vm7865 = vweird.f32 %v7858
    %vm7866 = vmor %vm7864, %vm7865
    %v7867 = vsel %vm7866, %v7858, %v7863
    %v7868 = vmul.f32 %v7596, %v7717
    %v7869 = vmul.f32 %v7597, %v7727
    %v7870 = vmul.f32 %v7598, %v7737
    %v7871 = vmul.f32 %v7599, %v7747
    %v7872 = vmul.f32 %v7600, %v7757
    %v7873 = vmul.f32 %v7601, %v7767
    %v7874 = vmul.f32 %v7602, %v7777
    %v7875 = vmul.f32 %v7603, %v7787
    %v7876 = vmul.f32 %v7604, %v7797
    %v7877 = vmul.f32 %v7605, %v7807
    %v7878 = vmul.f32 %v7606, %v7817
    %v7879 = vmul.f32 %v7607, %v7827
    %v7880 = vmul.f32 %v7608, %v7837
    %v7881 = vmul.f32 %v7609, %v7847
    %v7882 = vmul.f32 %v7610, %v7857
    %v7883 = vmul.f32 %v7611, %v7867
    %v7885 = vperm.slane %v7529, 0
    %v7887 = vmul.f32 %v7868, %v7885
    %v7888 = vmul.f32 %v7869, %v7885
    %v7889 = vmul.f32 %v7870, %v7885
    %v7890 = vmul.f32 %v7871, %v7885
    %v7891 = vmul.f32 %v7872, %v7885
    %v7892 = vmul.f32 %v7873, %v7885
    %v7893 = vmul.f32 %v7874, %v7885
    %v7894 = vmul.f32 %v7875, %v7885
    %v7895 = vmul.f32 %v7876, %v7885
    %v7896 = vmul.f32 %v7877, %v7885
    %v7897 = vmul.f32 %v7878, %v7885
    %v7898 = vmul.f32 %v7879, %v7885
    %v7899 = vmul.f32 %v7880, %v7885
    %v7900 = vmul.f32 %v7881, %v7885
    %v7901 = vmul.f32 %v7882, %v7885
    %v7902 = vmul.f32 %v7883, %v7885
    %v7904 = vperm.slane %v7531, 0
    %v7906 = vadd.f32 %v7887, %v7904
    %v7907 = vadd.f32 %v7888, %v7904
    %v7908 = vadd.f32 %v7889, %v7904
    %v7909 = vadd.f32 %v7890, %v7904
    %v7910 = vadd.f32 %v7891, %v7904
    %v7911 = vadd.f32 %v7892, %v7904
    %v7912 = vadd.f32 %v7893, %v7904
    %v7913 = vadd.f32 %v7894, %v7904
    %v7914 = vadd.f32 %v7895, %v7904
    %v7915 = vadd.f32 %v7896, %v7904
    %v7916 = vadd.f32 %v7897, %v7904
    %v7917 = vadd.f32 %v7898, %v7904
    %v7918 = vadd.f32 %v7899, %v7904
    %v7919 = vadd.f32 %v7900, %v7904
    %v7920 = vadd.f32 %v7901, %v7904
    %v7921 = vadd.f32 %v7902, %v7904
    %7922 = vst.msk [vmem:[#allocation2] sm:$0xff] %vm235, %v7906
    %7923 = vst.msk [vmem:[#allocation2 + $0x8] sm:$0xff] %vm235, %v7907
    %7924 = vst.msk [vmem:[#allocation2 + $0x10] sm:$0xff] %vm235, %v7908
    %7925 = vst.msk [vmem:[#allocation2 + $0x18] sm:$0xff] %vm235, %v7909
    %7926 = vst.msk [vmem:[#allocation2 + $0x20] sm:$0xff] %vm235, %v7910
    %7927 = vst.msk [vmem:[#allocation2 + $0x28] sm:$0xff] %vm235, %v7911
    %7928 = vst.msk [vmem:[#allocation2 + $0x30] sm:$0xff] %vm235, %v7912
    %7929 = vst.msk [vmem:[#allocation2 + $0x38] sm:$0xff] %vm235, %v7913
    %7930 = vst.msk [vmem:[#allocation2 + $0x40] sm:$0xff] %vm235, %v7914
    %7931 = vst.msk [vmem:[#allocation2 + $0x48] sm:$0xff] %vm235, %v7915
    %7932 = vst.msk [vmem:[#allocation2 + $0x50] sm:$0xff] %vm235, %v7916
    %7933 = vst.msk [vmem:[#allocation2 + $0x58] sm:$0xff] %vm235, %v7917
    %7934 = vst.msk [vmem:[#allocation2 + $0x60] sm:$0xff] %vm235, %v7918
    %7935 = vst.msk [vmem:[#allocation2 + $0x68] sm:$0xff] %vm235, %v7919
    %7936 = vst.msk [vmem:[#allocation2 + $0x70] sm:$0xff] %vm235, %v7920
    %7937 = vst.msk [vmem:[#allocation2 + $0x78] sm:$0xff] %vm235, %v7921
    %v7938 = vld [vmem:[#allocation2] sm:$0x1]
    %v7939 = vld [vmem:[#allocation2 + $0x8] sm:$0x1]
    %v7940 = vld [vmem:[#allocation2 + $0x10] sm:$0x1]
    %v7941 = vld [vmem:[#allocation2 + $0x18] sm:$0x1]
    %v7942 = vld [vmem:[#allocation2 + $0x20] sm:$0x1]
    %v7943 = vld [vmem:[#allocation2 + $0x28] sm:$0x1]
    %v7944 = vld [vmem:[#allocation2 + $0x30] sm:$0x1]
    %v7945 = vld [vmem:[#allocation2 + $0x38] sm:$0x1]
    %v7946 = vld [vmem:[#allocation2 + $0x40] sm:$0x1]
    %v7947 = vld [vmem:[#allocation2 + $0x48] sm:$0x1]
    %v7948 = vld [vmem:[#allocation2 + $0x50] sm:$0x1]
    %v7949 = vld [vmem:[#allocation2 + $0x58] sm:$0x1]
    %v7950 = vld [vmem:[#allocation2 + $0x60] sm:$0x1]
    %v7951 = vld [vmem:[#allocation2 + $0x68] sm:$0x1]
    %v7952 = vld [vmem:[#allocation2 + $0x70] sm:$0x1]
    %v7953 = vld [vmem:[#allocation2 + $0x78] sm:$0x1]
    %v7954 = vpack.c.bf16 %v7938, %v7938
    %v7955 = vpack.c.bf16 %v7939, %v7939
    %v7956 = vpack.c.bf16 %v7940, %v7940
    %v7957 = vpack.c.bf16 %v7941, %v7941
    %v7958 = vpack.c.bf16 %v7942, %v7942
    %v7959 = vpack.c.bf16 %v7943, %v7943
    %v7960 = vpack.c.bf16 %v7944, %v7944
    %v7961 = vpack.c.bf16 %v7945, %v7945
    %v7962 = vpack.c.bf16 %v7946, %v7946
    %v7963 = vpack.c.bf16 %v7947, %v7947
    %v7964 = vpack.c.bf16 %v7948, %v7948
    %v7965 = vpack.c.bf16 %v7949, %v7949
    %v7966 = vpack.c.bf16 %v7950, %v7950
    %v7967 = vpack.c.bf16 %v7951, %v7951
    %v7968 = vpack.c.bf16 %v7952, %v7952
    %v7969 = vpack.c.bf16 %v7953, %v7953
    %v7970 = vld [vmem:[#allocation17] sm:$0xf]
    %v7971 = vld [vmem:[#allocation17 + $0x4] sm:$0xf]
    %v7972 = vld [vmem:[#allocation17 + $0x8] sm:$0xf]
    %v7973 = vld [vmem:[#allocation17 + $0xc] sm:$0xf]
    %v7974 = vld [vmem:[%s17] sm:$0x1]
    %v7976 = vperm.slane %v7974, 0
    %v7994 = vunpack.c.l.b16 %v7954
    %v7995 = vunpack.c.l.b16 %v7955
    %v7996 = vunpack.c.l.b16 %v7956
    %v7997 = vunpack.c.l.b16 %v7957
    %v7998 = vunpack.c.l.b16 %v7958
    %v7999 = vunpack.c.l.b16 %v7959
    %v8000 = vunpack.c.l.b16 %v7960
    %v8001 = vunpack.c.l.b16 %v7961
    %v8002 = vunpack.c.l.b16 %v7962
    %v8003 = vunpack.c.l.b16 %v7963
    %v8004 = vunpack.c.l.b16 %v7964
    %v8005 = vunpack.c.l.b16 %v7965
    %v8006 = vunpack.c.l.b16 %v7966
    %v8007 = vunpack.c.l.b16 %v7967
    %v8008 = vunpack.c.l.b16 %v7968
    %v8009 = vunpack.c.l.b16 %v7969
    %v8010 = vrot.slane %v7995, 7
    %vm8011 = vcmask 1041409
    %v8012 = vsel %vm8011, %v8010, %v7994
    %v8013 = vrot.slane %v7996, 6
    %vm8014 = vcmask 1042434
    %v8015 = vsel %vm8014, %v8013, %v8012
    %v8016 = vrot.slane %v7997, 5
    %vm8017 = vcmask 1043459
    %v8018 = vsel %vm8017, %v8016, %v8015
    %v8019 = vrot.slane %v7998, 4
    %vm8020 = vcmask 1044484
    %v8021 = vsel %vm8020, %v8019, %v8018
    %v8022 = vrot.slane %v7999, 3
    %vm8023 = vcmask 1045509
    %v8024 = vsel %vm8023, %v8022, %v8021
    %v8025 = vrot.slane %v8000, 2
    %vm8026 = vcmask 1046534
    %v8027 = vsel %vm8026, %v8025, %v8024
    %v8028 = vrot.slane %v8001, 1
    %vm8029 = vcmask 1047559
    %v8030 = vsel %vm8029, %v8028, %v8027
    %v8031 = vrot.slane %v8003, 7
    %v8032 = vsel %vm8011, %v8031, %v8002
    %v8033 = vrot.slane %v8004, 6
    %v8034 = vsel %vm8014, %v8033, %v8032
    %v8035 = vrot.slane %v8005, 5
    %v8036 = vsel %vm8017, %v8035, %v8034
    %v8037 = vrot.slane %v8006, 4
    %v8038 = vsel %vm8020, %v8037, %v8036
    %v8039 = vrot.slane %v8007, 3
    %v8040 = vsel %vm8023, %v8039, %v8038
    %v8041 = vrot.slane %v8008, 2
    %v8042 = vsel %vm8026, %v8041, %v8040
    %v8043 = vrot.slane %v8009, 1
    %v8044 = vsel %vm8029, %v8043, %v8042
    %v8045 = vpack.c.b16 %v8044, %v8030
    %v8050 = vunpack.c.l.b16 %v7970
    %v8051 = vunpack.c.l.b16 %v7971
    %v8052 = vunpack.c.l.b16 %v7972
    %v8053 = vunpack.c.l.b16 %v7973
    %v8054 = vpack.c.b16 %v8051, %v8050
    %v8055 = vpack.c.b16 %v8053, %v8052
    %v8059 = vsel %vm235, %v8045, 0
    %8061 = vmatpush.bf16.msra.mxu0 0
    %8062 = vmatpush.bf16.msra.mxu0 0
    %8063 = vmatpush.bf16.msra.mxu0 0
    %8064 = vmatpush.bf16.msra.mxu0 0
    %8065 = vmatpush.bf16.msra.mxu0 0
    %8066 = vmatpush.bf16.msra.mxu0 0
    %8067 = vmatpush.bf16.msra.mxu0 %v8055
    %8068 = vmatpush.bf16.msra.mxu0 %v8054
    %8069 = vmatmul.bf16.gmra.mxu0 %v8059
    %v8070 = vpop.f32.mrf.mxu0
    %v8071 = vadd.f32 %v7976, %v8070
    %v8072 = vpop.f32.mrf.mxu0
    %v8073 = vadd.f32 %v7976, %v8072
    %8074 = vdwg.mxu0
    %v8075 = vlaneseq
    %v8076 = vand.u32 %v8075, 127
    %vm8077 = vcmp.eq.s32.totalorder %v8076, 32
    %v8078 = vxor.u32 %v8071, 2147483648
    %v8079 = vxor.u32 %v8073, 2147483648
    %v8080 = vmul.f32 %v8078, 1.442695
    %v8081 = vpow.pop %v8080
    %v8082 = vmul.f32 %v8079, 1.442695
    %v8083 = vpow.pop %v8082
    %v8084 = vadd.f32 %v8081, 1.0
    %v8085 = vadd.f32 %v8083, 1.0
    %v8086 = vrcp.pop %v8084
    %v8087 = vmul.f32 %v8084, %v8086
    %v8088 = vsub.f32 1.0, %v8087
    %v8089 = vmul.f32 %v8086, %v8088
    %v8090 = vadd.f32 %v8086, %v8089
    %vm8091 = vweird.f32 %v8084
    %vm8092 = vweird.f32 %v8086
    %vm8093 = vmor %vm8091, %vm8092
    %v8094 = vsel %vm8093, %v8086, %v8090
    %v8095 = vand.u32 2147483647, %v8084
    %vm8096 = vcmp.eq.f32.partialorder %v8095, 8.507059e+37
    %v8097 = vand.u32 %v8084, 2147483648
    %v8098 = vor.u32 1.1754944e-38, %v8097
    %v8099 = vsel %vm8096, %v8098, %v8094
    %v8100 = vmul.f32 1.0, %v8099
    %v8101 = vrcp.pop %v8085
    %v8102 = vmul.f32 %v8085, %v8101
    %v8103 = vsub.f32 1.0, %v8102
    %v8104 = vmul.f32 %v8101, %v8103
    %v8105 = vadd.f32 %v8101, %v8104
    %vm8106 = vweird.f32 %v8085
    %vm8107 = vweird.f32 %v8101
    %vm8108 = vmor %vm8106, %vm8107
    %v8109 = vsel %vm8108, %v8101, %v8105
    %v8110 = vand.u32 2147483647, %v8085
    %vm8111 = vcmp.eq.f32.partialorder %v8110, 8.507059e+37
    %v8112 = vand.u32 %v8085, 2147483648
    %v8113 = vor.u32 1.1754944e-38, %v8112
    %v8114 = vsel %vm8111, %v8113, %v8109
    %v8115 = vmul.f32 1.0, %v8114
    %v8116 = vsel %vm8077, %v8100, %v8071
    %v8117 = vsel %vm8077, %v8115, %v8073
    %8118 = vst [vmem:[#allocation18] sm:$0xff] %v8116
    %8119 = vst [vmem:[#allocation18 + $0x8] sm:$0xff] %v8117
    // Predicated region
    $region110: #{tpu_custom_call.1} parent=1 // pred_check
      _
    $region111: #{tpu_custom_call.1} parent=1 // pred_check_branch
      %8121 = sbr.rel (0) target = $region113
    $region112: #{tpu_custom_call.1} parent=1 // pred_region
      %8123 = vsyncadd [#allocation5], 0
      %s8124 = sshll.u32 [#allocation18], 4
      %s8125 = int_to_ptr.vmem [resolvable:$true] %s8124
      %s8126 = sshll.u32 %s18, 4
      %s8127 = int_to_ptr.hbm [resolvable:$true] %s8126
      %8132 = dma.vmem_to_hbm [thread:$0]  %s8125, 256, %s8127, [#allocation5], 128, 128, 8
    $region113: #{tpu_custom_call.1} parent=1 // pred_fallthru
      _
    // Predicated region
    $region114: #{tpu_custom_call.1} parent=1 // pred_check
      _
    $region115: #{tpu_custom_call.1} parent=1 // pred_check_branch
      %8134 = sbr.rel (0) target = $region117
    $region116: #{tpu_custom_call.1} parent=1 // pred_region
      %8136 = dma.done [#allocation5], 256
    $region117: #{tpu_custom_call.1} parent=1 // pred_fallthru
      _
    %8137 = vsyncpa [#allocation4], 1
    %8138 = vsyncpa [#allocation7], 1
    %8139 = vsyncpa [#allocation10], 1
    %8140 = vsyncpa [#allocation13], 1
    %8141 = vsyncpa [#allocation16], 1
    %8142 = vsyncpa [#allocation5], 1

</llo_original>
